<compile_context>
chip_gen: v7x
topology: tpu7x:2x2x1
jax: 0.10.0
libtpu: 0.0.40
codegen_flags: <defaults>
</compile_context>

<pallas_src>
import functools
import math

import jax
import jax.numpy as jnp
from jax.experimental import pallas as pl
from jax.experimental.pallas import tpu as pltpu


# ------------------------------ tiling helper -------------------------------

def _pick_tile(dim, candidates=(512, 256, 128)):
    """Largest 128-aligned tile that divides `dim`; fall back to full dim."""
    for t in candidates:
        if dim >= t and dim % t == 0:
            return t
    return dim


# ----------------------------- Pallas kernels ------------------------------

def _ln_linear_kernel(*refs, use_ln, activation, has_residual, eps):
    idx = 0
    x_ref = refs[idx]; idx += 1
    if use_ln:
        g_ref, bln_ref = refs[idx], refs[idx + 1]; idx += 2
    w_ref, b_ref = refs[idx], refs[idx + 1]; idx += 2
    if has_residual:
        r_ref = refs[idx]; idx += 1
    o_ref = refs[idx]

    x = x_ref[...]
    if use_ln:
        mu = jnp.mean(x, axis=-1, keepdims=True)
        var = jnp.mean((x - mu) * (x - mu), axis=-1, keepdims=True)
        x = (x - mu) * jax.lax.rsqrt(var + eps) * g_ref[...] + bln_ref[...]

    y = jnp.dot(x.astype(jnp.bfloat16), w_ref[...].astype(jnp.bfloat16),
                preferred_element_type=jnp.float32)
    y = y + b_ref[...]
    if activation == "relu":
        y = jnp.maximum(y, 0.0)
    if has_residual:
        y = y + r_ref[...]
    o_ref[...] = y


def ln_linear(x2d, w, b, *, ln=None, residual=None, activation=None, eps=1e-5):
    """y = [residual +] act(LN?(x2d) @ w + b).  x2d: [N, Din], w: [Din, Dout]."""
    n, d_in = x2d.shape
    d_out = w.shape[1]
    tm = _pick_tile(n)
    tn = _pick_tile(d_out)
    grid = (n // tm, d_out // tn)

    use_ln = ln is not None
    has_res = residual is not None

    in_specs = [pl.BlockSpec((tm, d_in), lambda i, j: (i, 0))]
    args = [x2d]
    if use_ln:
        g, bt = ln
        in_specs += [pl.BlockSpec((1, d_in), lambda i, j: (0, 0)),
                     pl.BlockSpec((1, d_in), lambda i, j: (0, 0))]
        args += [g.reshape(1, d_in), bt.reshape(1, d_in)]
    in_specs += [pl.BlockSpec((d_in, tn), lambda i, j: (0, j)),
                 pl.BlockSpec((1, tn), lambda i, j: (0, j))]
    args += [w, b.reshape(1, d_out)]
    if has_res:
        in_specs.append(pl.BlockSpec((tm, tn), lambda i, j: (i, j)))
        args.append(residual)

    return pl.pallas_call(
        functools.partial(_ln_linear_kernel, use_ln=use_ln, activation=activation,
                          has_residual=has_res, eps=eps),
        out_shape=jax.ShapeDtypeStruct((n, d_out), jnp.float32),
        grid=grid,
        in_specs=in_specs,
        out_specs=pl.BlockSpec((tm, tn), lambda i, j: (i, j)),
        compiler_params=pltpu.CompilerParams(
            dimension_semantics=("parallel", "parallel")),
    )(*args)


def _ffn_kernel(x_ref, g_ref, bln_ref, w1_ref, b1_ref, w2_ref, b2_ref,
                o_ref, acc_ref, *, eps):
    f = pl.program_id(1)
    x = x_ref[...]

    @pl.when(f == 0)
    def _():
        acc_ref[...] = x + b2_ref[...]          # residual + final bias

    mu = jnp.mean(x, axis=-1, keepdims=True)
    var = jnp.mean((x - mu) * (x - mu), axis=-1, keepdims=True)
    z = (x - mu) * jax.lax.rsqrt(var + eps) * g_ref[...] + bln_ref[...]

    h = jnp.dot(z.astype(jnp.bfloat16), w1_ref[...].astype(jnp.bfloat16),
                preferred_element_type=jnp.float32)
    h = jnp.maximum(h + b1_ref[...], 0.0)
    acc_ref[...] += jnp.dot(h.astype(jnp.bfloat16), w2_ref[...].astype(jnp.bfloat16),
                            preferred_element_type=jnp.float32)

    @pl.when(f == pl.num_programs(1) - 1)
    def _():
        o_ref[...] = acc_ref[...]


def ffn(x2d, g, bln, w1, b1, w2, b2, eps=1e-5):
    """x + W2 @ relu(W1 @ LN(x) + b1) + b2, fused; x2d: [N, D]."""
    n, d = x2d.shape
    d_ff = w1.shape[1]
    tm = _pick_tile(n)
    tf = _pick_tile(d_ff)
    grid = (n // tm, d_ff // tf)
    return pl.pallas_call(
        functools.partial(_ffn_kernel, eps=eps),
        out_shape=jax.ShapeDtypeStruct((n, d), jnp.float32),
        grid=grid,
        in_specs=[
            pl.BlockSpec((tm, d), lambda i, f: (i, 0)),
            pl.BlockSpec((1, d), lambda i, f: (0, 0)),
            pl.BlockSpec((1, d), lambda i, f: (0, 0)),
            pl.BlockSpec((d, tf), lambda i, f: (0, f)),
            pl.BlockSpec((1, tf), lambda i, f: (0, f)),
            pl.BlockSpec((tf, d), lambda i, f: (f, 0)),
            pl.BlockSpec((1, d), lambda i, f: (0, 0)),
        ],
        out_specs=pl.BlockSpec((tm, d), lambda i, f: (i, 0)),
        scratch_shapes=[pltpu.VMEM((tm, d), jnp.float32)],
        compiler_params=pltpu.CompilerParams(
            dimension_semantics=("parallel", "arbitrary")),
    )(x2d, g.reshape(1, d), bln.reshape(1, d), w1, b1.reshape(1, d_ff),
      w2, b2.reshape(1, d))


def _attn_kernel(q_ref, kv_ref, o_ref, *, n_heads, d_k, m_len, scale):
    s = q_ref.shape[1]
    t = kv_ref.shape[1]
    hdk = n_heads * d_k

    q = q_ref[0].reshape(s, n_heads, d_k)
    kv = kv_ref[0]
    k = kv[:, :hdk].reshape(t, n_heads, d_k)
    v = kv[:, hdk:].reshape(t, n_heads, d_k)

    scores = jnp.einsum('qhd,khd->hqk', q.astype(jnp.bfloat16), k.astype(jnp.bfloat16),
                        preferred_element_type=jnp.float32) * scale        # [H, S, T]

    # causal mask over the x part; memory (first m_len keys) always attendable.
    q_idx = jax.lax.broadcasted_iota(jnp.int32, (s, t), 0)
    k_idx = jax.lax.broadcasted_iota(jnp.int32, (s, t), 1)
    valid = k_idx <= (q_idx + m_len)
    scores = jnp.where(valid[None, :, :], scores, jnp.float32(-1e30))

    m = jnp.max(scores, axis=-1, keepdims=True)
    p = jnp.exp(scores - m)
    denom = jnp.sum(p, axis=-1, keepdims=True)
    p = p * pl.reciprocal(denom, approx=True)

    ctx = jnp.einsum('hqk,khd->qhd', p.astype(jnp.bfloat16), v.astype(jnp.bfloat16),
                     preferred_element_type=jnp.float32)                   # [S, H, dk]
    o_ref[0] = ctx.reshape(s, hdk)


def attention(q3, kv3, n_heads, d_k, m_len):
    """q3: [B, S, H*dk], kv3: [B, T, 2*H*dk] -> [B, S, H*dk]."""
    b, s, hdk = q3.shape
    t = kv3.shape[1]
    scale = 1.0 / math.sqrt(d_k)
    return pl.pallas_call(
        functools.partial(_attn_kernel, n_heads=n_heads, d_k=d_k,
                          m_len=m_len, scale=scale),
        out_shape=jax.ShapeDtypeStruct((b, s, hdk), jnp.float32),
        grid=(b,),
        in_specs=[
            pl.BlockSpec((1, s, hdk), lambda i: (i, 0, 0)),
            pl.BlockSpec((1, t, 2 * hdk), lambda i: (i, 0, 0)),
        ],
        out_specs=pl.BlockSpec((1, s, hdk), lambda i: (i, 0, 0)),
        compiler_params=pltpu.CompilerParams(dimension_semantics=("parallel",)),
    )(q3, kv3)


# --------------------------- model (glue in JAX) ---------------------------

def transformer_layer(x_bm, mem_i, cmem_i, lp, n_heads, d_k):
    """x_bm: [B, S, D] batch-major; mem_i/cmem_i: [B, L, D] or None."""
    b, s, d = x_bm.shape
    hdk = n_heads * d_k

    parts = []
    if cmem_i is not None:
        parts.append(cmem_i)
    if mem_i is not None:
        parts.append(mem_i)
    m_len = sum(p.shape[1] for p in parts)
    mz = jnp.concatenate(parts + [x_bm], axis=1) if parts else x_bm        # [B, T, D]
    t = mz.shape[1]

    x2 = x_bm.reshape(b * s, d)
    mz2 = mz.reshape(b * t, d)

    # fused LN1 + Q projection, and fused LN1 + (K|V) projection
    q = ln_linear(x2, lp["wq"], lp["bq"], ln=(lp["ln1_g"], lp["ln1_b"]))    # [B*S, H*dk]
    kv = ln_linear(mz2, lp["wkv"], lp["bkv"], ln=(lp["ln1_g"], lp["ln1_b"]))  # [B*T, 2*H*dk]

    ctx = attention(q.reshape(b, s, hdk), kv.reshape(b, t, 2 * hdk),
                    n_heads, d_k, m_len)                                    # [B, S, H*dk]

    # output projection with fused residual add (dropout is identity at eval)
    x2 = ln_linear(ctx.reshape(b * s, hdk), lp["wo"], lp["bo"], residual=x2)

    # fused LN2 + FFN + residual
    x2 = ffn(x2, lp["ln2_g"], lp["ln2_b"], lp["w1"], lp["b1"], lp["w2"], lp["b2"])
    return x2.reshape(b, s, d)


def autoregressive_forward(tokens, mem, c_mem, params, *, n_heads, d_k):
    """tokens: [S, B] int32; mem/c_mem: tuples (len n_layers) of [L, B, D] or ()."""
    s, b = tokens.shape

    # embedding lookup (gather glue) in batch-major layout
    x = jnp.take(params["embed"], tokens.T, axis=0)                         # [B, S, D]

    new_mem = []
    for i, lp in enumerate(params["layers"]):
        new_mem.append(x)                                                   # .detach() no-op
        mem_i = mem[i].transpose(1, 0, 2) if mem else None                  # [B, L, D]
        cmem_i = c_mem[i].transpose(1, 0, 2) if c_mem else None
        x = transformer_layer(x, mem_i, cmem_i, lp, n_heads, d_k)

    d = x.shape[-1]
    # final LayerNorm fused into the generator projection (vocab tiled on N)
    logits = ln_linear(x.reshape(b * s, d), params["w_gen"], params["b_gen"],
                       ln=(params["lnf_g"], params["lnf_b"]))
    logits = logits.reshape(b, s, -1).transpose(1, 0, 2)                    # [S, B, V]
    new_mem = [m.transpose(1, 0, 2) for m in new_mem]                       # [S, B, D]
    return logits, new_mem


# ------------------------------ param init ---------------------------------

def init_params(key, n_vocab, d_model, n_heads, d_k, d_ff, n_layers):
    keys = jax.random.split(key, 4 + 8 * n_layers)
    ki = iter(range(len(keys)))

    def nrm(shape, dtype=jnp.float32):
        return (0.02 * jax.random.normal(keys[next(ki)], shape, jnp.float32)).astype(dtype)

    h = n_heads * d_k
    params = {
        "embed": nrm((n_vocab, d_model)),
        "w_gen": nrm((d_model, n_vocab), jnp.bfloat16),
        "b_gen": jnp.zeros((n_vocab,), jnp.float32),
        "lnf_g": jnp.ones((d_model,), jnp.float32),
        "lnf_b": jnp.zeros((d_model,), jnp.float32),
        "layers": [],
    }
    for _ in range(n_layers):
        lp = {
            "ln1_g": jnp.ones((d_model,), jnp.float32),
            "ln1_b": jnp.zeros((d_model,), jnp.float32),
            "ln2_g": jnp.ones((d_model,), jnp.float32),
            "ln2_b": jnp.zeros((d_model,), jnp.float32),
            "wq": nrm((d_model, h), jnp.bfloat16),
            "bq": jnp.zeros((h,), jnp.float32),
            "wkv": nrm((d_model, 2 * h), jnp.bfloat16),       # fused K and V weights
            "bkv": jnp.zeros((2 * h,), jnp.float32),
            "wo": nrm((h, d_model), jnp.bfloat16),
            "bo": jnp.zeros((d_model,), jnp.float32),
            "w1": nrm((d_model, d_ff), jnp.bfloat16),
            "b1": jnp.zeros((d_ff,), jnp.float32),
            "w2": nrm((d_ff, d_model), jnp.bfloat16),
            "b2": jnp.zeros((d_model,), jnp.float32),
        }
        params["layers"].append(lp)
    return params


# --------------------------------- main -------------------------------------

if __name__ == "__main__":
    n_vocab, d_model, n_heads, d_k, d_ff, n_layers = 256, 128, 4, 32, 256, 2
    S, B, mem_len, c_mem_len = 16, 2, 16, 8

    key = jax.random.PRNGKey(0)
    k_tok, k_par, k_mem, k_cmem = jax.random.split(key, 4)

    tokens = jax.random.randint(k_tok, (S, B), 0, n_vocab, dtype=jnp.int32)
    params = init_params(k_par, n_vocab, d_model, n_heads, d_k, d_ff, n_layers)

    mem_keys = jax.random.split(k_mem, n_layers)
    cmem_keys = jax.random.split(k_cmem, n_layers)
    mem = tuple(0.1 * jax.random.normal(mem_keys[i], (mem_len, B, d_model), jnp.float32)
                for i in range(n_layers))
    c_mem = tuple(0.1 * jax.random.normal(cmem_keys[i], (c_mem_len, B, d_model), jnp.float32)
                  for i in range(n_layers))

    forward = jax.jit(functools.partial(autoregressive_forward,
                                        n_heads=n_heads, d_k=d_k))
    logits, new_mem = forward(tokens, mem, c_mem, params)

    jax.block_until_ready(logits)
    jax.block_until_ready(new_mem)

    assert logits.shape == (S, B, n_vocab)
    assert len(new_mem) == n_layers and new_mem[0].shape == (S, B, d_model)
    print("KERNEL_OK")
</pallas_src>

<mosaic_0001>
module attributes {stable_mosaic.version = 11 : i64} {
  func.func @_ln_linear_kernel(%arg0: i32, %arg1: i32, %arg2: memref<80x128xf32, #tpu.memory_space<vmem>>, %arg3: memref<1x128xf32, #tpu.memory_space<vmem>>, %arg4: memref<1x128xf32, #tpu.memory_space<vmem>>, %arg5: memref<128x256xbf16, #tpu.memory_space<vmem>>, %arg6: memref<1x256xf32, #tpu.memory_space<vmem>>, %arg7: memref<80x256xf32, #tpu.memory_space<vmem>>) attributes {dimension_semantics = [#tpu.dimension_semantics<parallel>, #tpu.dimension_semantics<parallel>], iteration_bounds = array<i64: 1, 1>, scalar_prefetch = 0 : i64, scratch_operands = 0 : i64, tpu.core_type = #tpu.core_type<tc>, window_params = [{transform_indices = @transform_0, window_bounds = array<i64: 80, 128>}, {pipeline_mode = #tpu.pipeline_mode<synchronous>, transform_indices = @transform_1, window_bounds = array<i64: 1, 128>}, {pipeline_mode = #tpu.pipeline_mode<synchronous>, transform_indices = @transform_2, window_bounds = array<i64: 1, 128>}, {transform_indices = @transform_3, window_bounds = array<i64: 128, 256>}, {transform_indices = @transform_4, window_bounds = array<i64: 1, 256>}, {transform_indices = @transform_5, window_bounds = array<i64: 80, 256>}]} {
    %c0 = arith.constant 0 : index
    %c0_0 = arith.constant 0 : index
    %0 = vector.load %arg2[%c0, %c0_0] : memref<80x128xf32, #tpu.memory_space<vmem>>, vector<80x128xf32>
    %cst = arith.constant dense<0.000000e+00> : vector<80xf32>
    %1 = vector.multi_reduction <add>, %0, %cst [1] : vector<80x128xf32> to vector<80xf32>
    %2 = vector.shape_cast %1 : vector<80xf32> to vector<80x1xf32>
    %cst_1 = arith.constant 1.280000e+02 : f32
    %3 = vector.broadcast %cst_1 : f32 to vector<80x1xf32>
    %4 = arith.divf %2, %3 : vector<80x1xf32>
    %5 = vector.broadcast %4 : vector<80x1xf32> to vector<80x128xf32>
    %6 = arith.subf %0, %5 : vector<80x128xf32>
    %7 = vector.broadcast %4 : vector<80x1xf32> to vector<80x128xf32>
    %8 = arith.subf %0, %7 : vector<80x128xf32>
    %9 = arith.mulf %6, %8 : vector<80x128xf32>
    %cst_2 = arith.constant dense<0.000000e+00> : vector<80xf32>
    %10 = vector.multi_reduction <add>, %9, %cst_2 [1] : vector<80x128xf32> to vector<80xf32>
    %11 = vector.shape_cast %10 : vector<80xf32> to vector<80x1xf32>
    %cst_3 = arith.constant 1.280000e+02 : f32
    %12 = vector.broadcast %cst_3 : f32 to vector<80x1xf32>
    %13 = arith.divf %11, %12 : vector<80x1xf32>
    %14 = vector.broadcast %4 : vector<80x1xf32> to vector<80x128xf32>
    %15 = arith.subf %0, %14 : vector<80x128xf32>
    %cst_4 = arith.constant 9.99999974E-6 : f32
    %16 = vector.broadcast %cst_4 : f32 to vector<80x1xf32>
    %17 = arith.addf %13, %16 : vector<80x1xf32>
    %18 = math.rsqrt %17 : vector<80x1xf32>
    %19 = vector.broadcast %18 : vector<80x1xf32> to vector<80x128xf32>
    %20 = arith.mulf %15, %19 : vector<80x128xf32>
    %c0_5 = arith.constant 0 : index
    %c0_6 = arith.constant 0 : index
    %21 = vector.load %arg3[%c0_5, %c0_6] : memref<1x128xf32, #tpu.memory_space<vmem>>, vector<1x128xf32>
    %22 = vector.broadcast %21 : vector<1x128xf32> to vector<80x128xf32>
    %23 = arith.mulf %20, %22 : vector<80x128xf32>
    %c0_7 = arith.constant 0 : index
    %c0_8 = arith.constant 0 : index
    %24 = vector.load %arg4[%c0_7, %c0_8] : memref<1x128xf32, #tpu.memory_space<vmem>>, vector<1x128xf32>
    %25 = vector.broadcast %24 : vector<1x128xf32> to vector<80x128xf32>
    %26 = arith.addf %23, %25 : vector<80x128xf32>
    %27 = arith.truncf %26 : vector<80x128xf32> to vector<80x128xbf16>
    %c0_9 = arith.constant 0 : index
    %c0_10 = arith.constant 0 : index
    %28 = vector.load %arg5[%c0_9, %c0_10] : memref<128x256xbf16, #tpu.memory_space<vmem>>, vector<128x256xbf16>
    %cst_11 = arith.constant dense<0.000000e+00> : vector<80x256xf32>
    %29 = tpu.matmul %27, %28, %cst_11 {dimension_numbers = #tpu.dot_dimension_numbers<[1], [0], [0], [1], [0, 0, 1, 1], [], []>} : vector<80x128xbf16>, vector<128x256xbf16>, vector<80x256xf32> -> vector<80x256xf32>
    %c0_12 = arith.constant 0 : index
    %c0_13 = arith.constant 0 : index
    %30 = vector.load %arg6[%c0_12, %c0_13] : memref<1x256xf32, #tpu.memory_space<vmem>>, vector<1x256xf32>
    %31 = vector.broadcast %30 : vector<1x256xf32> to vector<80x256xf32>
    %32 = arith.addf %29, %31 : vector<80x256xf32>
    %c0_14 = arith.constant 0 : index
    %c0_15 = arith.constant 0 : index
    %33 = vector.load %arg7[%c0_14, %c0_15] : memref<80x256xf32, #tpu.memory_space<vmem>>, vector<80x256xf32>
    tpu.vector_store %arg7[%c0_14, %c0_15], %32 {strides = array<i32>} : memref<80x256xf32, #tpu.memory_space<vmem>>, vector<80x256xf32>,
    return
  }
  func.func @transform_0(%arg0: i32, %arg1: i32) -> (i32, i32) {
    %c0_i32 = arith.constant 0 : i32
    %c0_i32_0 = arith.constant 0 : i32
    return %arg0, %c0_i32 : i32, i32
  }
  func.func @transform_1(%arg0: i32, %arg1: i32) -> (i32, i32) {
    %c0_i32 = arith.constant 0 : i32
    %c0_i32_0 = arith.constant 0 : i32
    %c0_i32_1 = arith.constant 0 : i32
    return %c0_i32, %c0_i32_0 : i32, i32
  }
  func.func @transform_2(%arg0: i32, %arg1: i32) -> (i32, i32) {
    %c0_i32 = arith.constant 0 : i32
    %c0_i32_0 = arith.constant 0 : i32
    %c0_i32_1 = arith.constant 0 : i32
    return %c0_i32, %c0_i32_0 : i32, i32
  }
  func.func @transform_3(%arg0: i32, %arg1: i32) -> (i32, i32) {
    %c0_i32 = arith.constant 0 : i32
    %c0_i32_0 = arith.constant 0 : i32
    return %c0_i32, %arg1 : i32, i32
  }
  func.func @transform_4(%arg0: i32, %arg1: i32) -> (i32, i32) {
    %c0_i32 = arith.constant 0 : i32
    %c0_i32_0 = arith.constant 0 : i32
    return %c0_i32, %arg1 : i32, i32
  }
  func.func @transform_5(%arg0: i32, %arg1: i32) -> (i32, i32) {
    %c0_i32 = arith.constant 0 : i32
    return %arg0, %arg1 : i32, i32
  }
}

module attributes {stable_mosaic.version = 11 : i64} {
  func.func @_ln_linear_kernel(%arg0: i32, %arg1: i32, %arg2: memref<32x128xf32, #tpu.memory_space<vmem>>, %arg3: memref<1x128xf32, #tpu.memory_space<vmem>>, %arg4: memref<1x128xf32, #tpu.memory_space<vmem>>, %arg5: memref<128x128xbf16, #tpu.memory_space<vmem>>, %arg6: memref<1x128xf32, #tpu.memory_space<vmem>>, %arg7: memref<32x128xf32, #tpu.memory_space<vmem>>) attributes {dimension_semantics = [#tpu.dimension_semantics<parallel>, #tpu.dimension_semantics<parallel>], iteration_bounds = array<i64: 1, 1>, scalar_prefetch = 0 : i64, scratch_operands = 0 : i64, tpu.core_type = #tpu.core_type<tc>, window_params = [{transform_indices = @transform_0, window_bounds = array<i64: 32, 128>}, {pipeline_mode = #tpu.pipeline_mode<synchronous>, transform_indices = @transform_1, window_bounds = array<i64: 1, 128>}, {pipeline_mode = #tpu.pipeline_mode<synchronous>, transform_indices = @transform_2, window_bounds = array<i64: 1, 128>}, {transform_indices = @transform_3, window_bounds = array<i64: 128, 128>}, {transform_indices = @transform_4, window_bounds = array<i64: 1, 128>}, {transform_indices = @transform_5, window_bounds = array<i64: 32, 128>}]} {
    %c0 = arith.constant 0 : index
    %c0_0 = arith.constant 0 : index
    %0 = vector.load %arg2[%c0, %c0_0] : memref<32x128xf32, #tpu.memory_space<vmem>>, vector<32x128xf32>
    %cst = arith.constant dense<0.000000e+00> : vector<32xf32>
    %1 = vector.multi_reduction <add>, %0, %cst [1] : vector<32x128xf32> to vector<32xf32>
    %2 = vector.shape_cast %1 : vector<32xf32> to vector<32x1xf32>
    %cst_1 = arith.constant 1.280000e+02 : f32
    %3 = vector.broadcast %cst_1 : f32 to vector<32x1xf32>
    %4 = arith.divf %2, %3 : vector<32x1xf32>
    %5 = vector.broadcast %4 : vector<32x1xf32> to vector<32x128xf32>
    %6 = arith.subf %0, %5 : vector<32x128xf32>
    %7 = vector.broadcast %4 : vector<32x1xf32> to vector<32x128xf32>
    %8 = arith.subf %0, %7 : vector<32x128xf32>
    %9 = arith.mulf %6, %8 : vector<32x128xf32>
    %cst_2 = arith.constant dense<0.000000e+00> : vector<32xf32>
    %10 = vector.multi_reduction <add>, %9, %cst_2 [1] : vector<32x128xf32> to vector<32xf32>
    %11 = vector.shape_cast %10 : vector<32xf32> to vector<32x1xf32>
    %cst_3 = arith.constant 1.280000e+02 : f32
    %12 = vector.broadcast %cst_3 : f32 to vector<32x1xf32>
    %13 = arith.divf %11, %12 : vector<32x1xf32>
    %14 = vector.broadcast %4 : vector<32x1xf32> to vector<32x128xf32>
    %15 = arith.subf %0, %14 : vector<32x128xf32>
    %cst_4 = arith.constant 9.99999974E-6 : f32
    %16 = vector.broadcast %cst_4 : f32 to vector<32x1xf32>
    %17 = arith.addf %13, %16 : vector<32x1xf32>
    %18 = math.rsqrt %17 : vector<32x1xf32>
    %19 = vector.broadcast %18 : vector<32x1xf32> to vector<32x128xf32>
    %20 = arith.mulf %15, %19 : vector<32x128xf32>
    %c0_5 = arith.constant 0 : index
    %c0_6 = arith.constant 0 : index
    %21 = vector.load %arg3[%c0_5, %c0_6] : memref<1x128xf32, #tpu.memory_space<vmem>>, vector<1x128xf32>
    %22 = vector.broadcast %21 : vector<1x128xf32> to vector<32x128xf32>
    %23 = arith.mulf %20, %22 : vector<32x128xf32>
    %c0_7 = arith.constant 0 : index
    %c0_8 = arith.constant 0 : index
    %24 = vector.load %arg4[%c0_7, %c0_8] : memref<1x128xf32, #tpu.memory_space<vmem>>, vector<1x128xf32>
    %25 = vector.broadcast %24 : vector<1x128xf32> to vector<32x128xf32>
    %26 = arith.addf %23, %25 : vector<32x128xf32>
    %27 = arith.truncf %26 : vector<32x128xf32> to vector<32x128xbf16>
    %c0_9 = arith.constant 0 : index
    %c0_10 = arith.constant 0 : index
    %28 = vector.load %arg5[%c0_9, %c0_10] : memref<128x128xbf16, #tpu.memory_space<vmem>>, vector<128x128xbf16>
    %cst_11 = arith.constant dense<0.000000e+00> : vector<32x128xf32>
    %29 = tpu.matmul %27, %28, %cst_11 {dimension_numbers = #tpu.dot_dimension_numbers<[1], [0], [0], [1], [0, 0, 1, 1], [], []>} : vector<32x128xbf16>, vector<128x128xbf16>, vector<32x128xf32> -> vector<32x128xf32>
    %c0_12 = arith.constant 0 : index
    %c0_13 = arith.constant 0 : index
    %30 = vector.load %arg6[%c0_12, %c0_13] : memref<1x128xf32, #tpu.memory_space<vmem>>, vector<1x128xf32>
    %31 = vector.broadcast %30 : vector<1x128xf32> to vector<32x128xf32>
    %32 = arith.addf %29, %31 : vector<32x128xf32>
    %c0_14 = arith.constant 0 : index
    %c0_15 = arith.constant 0 : index
    %33 = vector.load %arg7[%c0_14, %c0_15] : memref<32x128xf32, #tpu.memory_space<vmem>>, vector<32x128xf32>
    tpu.vector_store %arg7[%c0_14, %c0_15], %32 {strides = array<i32>} : memref<32x128xf32, #tpu.memory_space<vmem>>, vector<32x128xf32>,
    return
  }
  func.func @transform_0(%arg0: i32, %arg1: i32) -> (i32, i32) {
    %c0_i32 = arith.constant 0 : i32
    %c0_i32_0 = arith.constant 0 : i32
    return %arg0, %c0_i32 : i32, i32
  }
  func.func @transform_1(%arg0: i32, %arg1: i32) -> (i32, i32) {
    %c0_i32 = arith.constant 0 : i32
    %c0_i32_0 = arith.constant 0 : i32
    %c0_i32_1 = arith.constant 0 : i32
    return %c0_i32, %c0_i32_0 : i32, i32
  }
  func.func @transform_2(%arg0: i32, %arg1: i32) -> (i32, i32) {
    %c0_i32 = arith.constant 0 : i32
    %c0_i32_0 = arith.constant 0 : i32
    %c0_i32_1 = arith.constant 0 : i32
    return %c0_i32, %c0_i32_0 : i32, i32
  }
  func.func @transform_3(%arg0: i32, %arg1: i32) -> (i32, i32) {
    %c0_i32 = arith.constant 0 : i32
    %c0_i32_0 = arith.constant 0 : i32
    return %c0_i32, %arg1 : i32, i32
  }
  func.func @transform_4(%arg0: i32, %arg1: i32) -> (i32, i32) {
    %c0_i32 = arith.constant 0 : i32
    %c0_i32_0 = arith.constant 0 : i32
    return %c0_i32, %arg1 : i32, i32
  }
  func.func @transform_5(%arg0: i32, %arg1: i32) -> (i32, i32) {
    %c0_i32 = arith.constant 0 : i32
    return %arg0, %arg1 : i32, i32
  }
}

module attributes {stable_mosaic.version = 11 : i64} {
  func.func @_ln_linear_kernel(%arg0: i32, %arg1: i32, %arg2: memref<32x128xf32, #tpu.memory_space<vmem>>, %arg3: memref<128x128xbf16, #tpu.memory_space<vmem>>, %arg4: memref<1x128xf32, #tpu.memory_space<vmem>>, %arg5: memref<32x128xf32, #tpu.memory_space<vmem>>, %arg6: memref<32x128xf32, #tpu.memory_space<vmem>>) attributes {dimension_semantics = [#tpu.dimension_semantics<parallel>, #tpu.dimension_semantics<parallel>], iteration_bounds = array<i64: 1, 1>, scalar_prefetch = 0 : i64, scratch_operands = 0 : i64, tpu.core_type = #tpu.core_type<tc>, window_params = [{transform_indices = @transform_0, window_bounds = array<i64: 32, 128>}, {transform_indices = @transform_1, window_bounds = array<i64: 128, 128>}, {transform_indices = @transform_2, window_bounds = array<i64: 1, 128>}, {transform_indices = @transform_3, window_bounds = array<i64: 32, 128>}, {transform_indices = @transform_4, window_bounds = array<i64: 32, 128>}]} {
    %c0 = arith.constant 0 : index
    %c0_0 = arith.constant 0 : index
    %0 = vector.load %arg2[%c0, %c0_0] : memref<32x128xf32, #tpu.memory_space<vmem>>, vector<32x128xf32>
    %1 = arith.truncf %0 : vector<32x128xf32> to vector<32x128xbf16>
    %c0_1 = arith.constant 0 : index
    %c0_2 = arith.constant 0 : index
    %2 = vector.load %arg3[%c0_1, %c0_2] : memref<128x128xbf16, #tpu.memory_space<vmem>>, vector<128x128xbf16>
    %cst = arith.constant dense<0.000000e+00> : vector<32x128xf32>
    %3 = tpu.matmul %1, %2, %cst {dimension_numbers = #tpu.dot_dimension_numbers<[1], [0], [0], [1], [0, 0, 1, 1], [], []>} : vector<32x128xbf16>, vector<128x128xbf16>, vector<32x128xf32> -> vector<32x128xf32>
    %c0_3 = arith.constant 0 : index
    %c0_4 = arith.constant 0 : index
    %4 = vector.load %arg4[%c0_3, %c0_4] : memref<1x128xf32, #tpu.memory_space<vmem>>, vector<1x128xf32>
    %5 = vector.broadcast %4 : vector<1x128xf32> to vector<32x128xf32>
    %6 = arith.addf %3, %5 : vector<32x128xf32>
    %c0_5 = arith.constant 0 : index
    %c0_6 = arith.constant 0 : index
    %7 = vector.load %arg5[%c0_5, %c0_6] : memref<32x128xf32, #tpu.memory_space<vmem>>, vector<32x128xf32>
    %8 = arith.addf %6, %7 : vector<32x128xf32>
    %c0_7 = arith.constant 0 : index
    %c0_8 = arith.constant 0 : index
    %9 = vector.load %arg6[%c0_7, %c0_8] : memref<32x128xf32, #tpu.memory_space<vmem>>, vector<32x128xf32>
    tpu.vector_store %arg6[%c0_7, %c0_8], %8 {strides = array<i32>} : memref<32x128xf32, #tpu.memory_space<vmem>>, vector<32x128xf32>,
    return
  }
  func.func @transform_0(%arg0: i32, %arg1: i32) -> (i32, i32) {
    %c0_i32 = arith.constant 0 : i32
    %c0_i32_0 = arith.constant 0 : i32
    return %arg0, %c0_i32 : i32, i32
  }
  func.func @transform_1(%arg0: i32, %arg1: i32) -> (i32, i32) {
    %c0_i32 = arith.constant 0 : i32
    %c0_i32_0 = arith.constant 0 : i32
    return %c0_i32, %arg1 : i32, i32
  }
  func.func @transform_2(%arg0: i32, %arg1: i32) -> (i32, i32) {
    %c0_i32 = arith.constant 0 : i32
    %c0_i32_0 = arith.constant 0 : i32
    return %c0_i32, %arg1 : i32, i32
  }
  func.func @transform_3(%arg0: i32, %arg1: i32) -> (i32, i32) {
    %c0_i32 = arith.constant 0 : i32
    return %arg0, %arg1 : i32, i32
  }
  func.func @transform_4(%arg0: i32, %arg1: i32) -> (i32, i32) {
    %c0_i32 = arith.constant 0 : i32
    return %arg0, %arg1 : i32, i32
  }
}

module attributes {stable_mosaic.version = 11 : i64} {
  func.func @_attn_kernel(%arg0: i32, %arg1: memref<1x16x128xf32, #tpu.memory_space<vmem>>, %arg2: memref<1x40x256xf32, #tpu.memory_space<vmem>>, %arg3: memref<1x16x128xf32, #tpu.memory_space<vmem>>) attributes {dimension_semantics = [#tpu.dimension_semantics<parallel>], iteration_bounds = array<i64: 2>, scalar_prefetch = 0 : i64, scratch_operands = 0 : i64, tpu.core_type = #tpu.core_type<tc>, window_params = [{transform_indices = @transform_0, window_bounds = array<i64: 1, 16, 128>}, {transform_indices = @transform_1, window_bounds = array<i64: 1, 40, 256>}, {transform_indices = @transform_2, window_bounds = array<i64: 1, 16, 128>}]} {
    %c0 = arith.constant 0 : index
    %c0_0 = arith.constant 0 : index
    %c0_1 = arith.constant 0 : index
    %0 = vector.load %arg1[%c0, %c0_0, %c0_1] : memref<1x16x128xf32, #tpu.memory_space<vmem>>, vector<1x16x128xf32>
    %1 = vector.shape_cast %0 : vector<1x16x128xf32> to vector<16x128xf32>
    %2 = vector.shape_cast %1 : vector<16x128xf32> to vector<16x4x32xf32>
    %c0_2 = arith.constant 0 : index
    %c0_3 = arith.constant 0 : index
    %c0_4 = arith.constant 0 : index
    %3 = vector.load %arg2[%c0_2, %c0_3, %c0_4] : memref<1x40x256xf32, #tpu.memory_space<vmem>>, vector<1x40x256xf32>
    %4 = vector.shape_cast %3 : vector<1x40x256xf32> to vector<40x256xf32>
    %5 = vector.extract_strided_slice %4 {offsets = [0, 0], sizes = [40, 128], strides = [1, 1]} : vector<40x256xf32> to vector<40x128xf32>
    %6 = vector.shape_cast %5 : vector<40x128xf32> to vector<40x4x32xf32>
    %7 = vector.extract_strided_slice %4 {offsets = [0, 128], sizes = [40, 128], strides = [1, 1]} : vector<40x256xf32> to vector<40x128xf32>
    %8 = vector.shape_cast %7 : vector<40x128xf32> to vector<40x4x32xf32>
    %9 = arith.truncf %2 : vector<16x4x32xf32> to vector<16x4x32xbf16>
    %10 = arith.truncf %6 : vector<40x4x32xf32> to vector<40x4x32xbf16>
    "tpu.trace_start"() <{level = 10 : i32, message = "qhd,khd->hqk"}> : () -> ()
    %cst = arith.constant dense<0.000000e+00> : vector<4x16x40xf32>
    %11 = tpu.matmul %9, %10, %cst {dimension_numbers = #tpu.dot_dimension_numbers<[2], [2], [0], [0], [0, 1, 0, 0, 1, 0], [1], [1]>} : vector<16x4x32xbf16>, vector<40x4x32xbf16>, vector<4x16x40xf32> -> vector<4x16x40xf32>
    "tpu.trace_stop"() : () -> ()
    %cst_5 = arith.constant 0.176776692 : f32
    %12 = vector.broadcast %cst_5 : f32 to vector<4x16x40xf32>
    %13 = arith.mulf %11, %12 : vector<4x16x40xf32>
    %14 = tpu.iota {dimensions = array<i32: 0>} : vector<16x40xi32>
    %15 = tpu.iota {dimensions = array<i32: 1>} : vector<16x40xi32>
    %c24_i32 = arith.constant 24 : i32
    %16 = vector.broadcast %c24_i32 : i32 to vector<16x40xi32>
    %17 = arith.addi %14, %16 : vector<16x40xi32>
    %18 = arith.cmpi sle, %15, %17 : vector<16x40xi32>
    %19 = vector.shape_cast %18 : vector<16x40xi1> to vector<1x16x40xi1>
    %cst_6 = arith.constant -1.000000e+30 : f32
    %20 = vector.shape_cast %19 : vector<1x16x40xi1> to vector<1x16x40xi1>
    %21 = vector.broadcast %20 : vector<1x16x40xi1> to vector<4x16x40xi1>
    %22 = vector.broadcast %cst_6 : f32 to vector<4x16x40xf32>
    %23 = arith.select %21, %13, %22 : vector<4x16x40xi1>, vector<4x16x40xf32>
    %cst_7 = arith.constant dense<0xFF800000> : vector<4x16xf32>
    %24 = vector.multi_reduction <maximumf>, %23, %cst_7 [2] : vector<4x16x40xf32> to vector<4x16xf32>
    %25 = vector.shape_cast %24 : vector<4x16xf32> to vector<4x16x1xf32>
    %26 = vector.broadcast %25 : vector<4x16x1xf32> to vector<4x16x40xf32>
    %27 = arith.subf %23, %26 : vector<4x16x40xf32>
    %28 = math.exp %27 : vector<4x16x40xf32>
    %cst_8 = arith.constant dense<0.000000e+00> : vector<4x16xf32>
    %29 = vector.multi_reduction <add>, %28, %cst_8 [2] : vector<4x16x40xf32> to vector<4x16xf32>
    %30 = vector.shape_cast %29 : vector<4x16xf32> to vector<4x16x1xf32>
    %31 = tpu.reciprocal %30 {approx = true} : vector<4x16x1xf32> -> vector<4x16x1xf32>
    %32 = vector.broadcast %31 : vector<4x16x1xf32> to vector<4x16x40xf32>
    %33 = arith.mulf %28, %32 : vector<4x16x40xf32>
    %34 = arith.truncf %33 : vector<4x16x40xf32> to vector<4x16x40xbf16>
    %35 = arith.truncf %8 : vector<40x4x32xf32> to vector<40x4x32xbf16>
    "tpu.trace_start"() <{level = 10 : i32, message = "hqk,khd->qhd"}> : () -> ()
    %cst_9 = arith.constant dense<0.000000e+00> : vector<4x32x16xf32>
    %36 = tpu.matmul %35, %34, %cst_9 {dimension_numbers = #tpu.dot_dimension_numbers<[0], [2], [2], [1], [0, 1, 0, 2, 1, 1], [1], [0]>} : vector<40x4x32xbf16>, vector<4x16x40xbf16>, vector<4x32x16xf32> -> vector<4x32x16xf32>
    %37 = tpu.transpose %36, [2, 0, 1] : vector<4x32x16xf32> -> vector<16x4x32xf32>
    "tpu.trace_stop"() : () -> ()
    %38 = vector.shape_cast %37 : vector<16x4x32xf32> to vector<16x128xf32>
    %c0_10 = arith.constant 0 : index
    %c0_11 = arith.constant 0 : index
    %c0_12 = arith.constant 0 : index
    %39 = vector.load %arg3[%c0_10, %c0_11, %c0_12] : memref<1x16x128xf32, #tpu.memory_space<vmem>>, vector<1x16x128xf32>
    %40 = vector.shape_cast %39 : vector<1x16x128xf32> to vector<16x128xf32>
    %41 = vector.shape_cast %38 : vector<16x128xf32> to vector<1x16x128xf32>
    tpu.vector_store %arg3[%c0_10, %c0_11, %c0_12], %41 {strides = array<i32>} : memref<1x16x128xf32, #tpu.memory_space<vmem>>, vector<1x16x128xf32>,
    return
  }
  func.func @transform_0(%arg0: i32) -> (i32, i32, i32) {
    %c0_i32 = arith.constant 0 : i32
    %c0_i32_0 = arith.constant 0 : i32
    %c0_i32_1 = arith.constant 0 : i32
    return %arg0, %c0_i32, %c0_i32_0 : i32, i32, i32
  }
  func.func @transform_1(%arg0: i32) -> (i32, i32, i32) {
    %c0_i32 = arith.constant 0 : i32
    %c0_i32_0 = arith.constant 0 : i32
    %c0_i32_1 = arith.constant 0 : i32
    return %arg0, %c0_i32, %c0_i32_0 : i32, i32, i32
  }
  func.func @transform_2(%arg0: i32) -> (i32, i32, i32) {
    %c0_i32 = arith.constant 0 : i32
    %c0_i32_0 = arith.constant 0 : i32
    %c0_i32_1 = arith.constant 0 : i32
    return %arg0, %c0_i32, %c0_i32_0 : i32, i32, i32
  }
}

module attributes {stable_mosaic.version = 11 : i64} {
  func.func @_ffn_kernel(%arg0: i32, %arg1: i32, %arg2: memref<32x128xf32, #tpu.memory_space<vmem>>, %arg3: memref<1x128xf32, #tpu.memory_space<vmem>>, %arg4: memref<1x128xf32, #tpu.memory_space<vmem>>, %arg5: memref<128x256xbf16, #tpu.memory_space<vmem>>, %arg6: memref<1x256xf32, #tpu.memory_space<vmem>>, %arg7: memref<256x128xbf16, #tpu.memory_space<vmem>>, %arg8: memref<1x128xf32, #tpu.memory_space<vmem>>, %arg9: memref<32x128xf32, #tpu.memory_space<vmem>>, %arg10: memref<32x128xf32, #tpu.memory_space<vmem>>) attributes {dimension_semantics = [#tpu.dimension_semantics<parallel>, #tpu.dimension_semantics<arbitrary>], iteration_bounds = array<i64: 1, 1>, scalar_prefetch = 0 : i64, scratch_operands = 1 : i64, tpu.core_type = #tpu.core_type<tc>, window_params = [{transform_indices = @transform_0, window_bounds = array<i64: 32, 128>}, {pipeline_mode = #tpu.pipeline_mode<synchronous>, transform_indices = @transform_1, window_bounds = array<i64: 1, 128>}, {pipeline_mode = #tpu.pipeline_mode<synchronous>, transform_indices = @transform_2, window_bounds = array<i64: 1, 128>}, {transform_indices = @transform_3, window_bounds = array<i64: 128, 256>}, {transform_indices = @transform_4, window_bounds = array<i64: 1, 256>}, {transform_indices = @transform_5, window_bounds = array<i64: 256, 128>}, {pipeline_mode = #tpu.pipeline_mode<synchronous>, transform_indices = @transform_6, window_bounds = array<i64: 1, 128>}, {transform_indices = @transform_7, window_bounds = array<i64: 32, 128>}]} {
    %c0 = arith.constant 0 : index
    %c0_0 = arith.constant 0 : index
    %0 = vector.load %arg2[%c0, %c0_0] : memref<32x128xf32, #tpu.memory_space<vmem>>, vector<32x128xf32>
    %c0_i32 = arith.constant 0 : i32
    %1 = arith.cmpi eq, %arg1, %c0_i32 : i32
    %2 = arith.extui %1 : i1 to i32
    %c0_i32_1 = arith.constant 0 : i32
    %3 = arith.cmpi ne, %2, %c0_i32_1 : i32
    scf.if %3 {
      %c0_25 = arith.constant 0 : index
      %c0_26 = arith.constant 0 : index
      %47 = vector.load %arg8[%c0_25, %c0_26] : memref<1x128xf32, #tpu.memory_space<vmem>>, vector<1x128xf32>
      %48 = vector.broadcast %47 : vector<1x128xf32> to vector<32x128xf32>
      %49 = arith.addf %0, %48 : vector<32x128xf32>
      %c0_27 = arith.constant 0 : index
      %c0_28 = arith.constant 0 : index
      %50 = vector.load %arg10[%c0_27, %c0_28] : memref<32x128xf32, #tpu.memory_space<vmem>>, vector<32x128xf32>
      tpu.vector_store %arg10[%c0_27, %c0_28], %49 {strides = array<i32>} : memref<32x128xf32, #tpu.memory_space<vmem>>, vector<32x128xf32>,
    } else {
    }
    %cst = arith.constant dense<0.000000e+00> : vector<32xf32>
    %4 = vector.multi_reduction <add>, %0, %cst [1] : vector<32x128xf32> to vector<32xf32>
    %5 = vector.shape_cast %4 : vector<32xf32> to vector<32x1xf32>
    %cst_2 = arith.constant 1.280000e+02 : f32
    %6 = vector.broadcast %cst_2 : f32 to vector<32x1xf32>
    %7 = arith.divf %5, %6 : vector<32x1xf32>
    %8 = vector.broadcast %7 : vector<32x1xf32> to vector<32x128xf32>
    %9 = arith.subf %0, %8 : vector<32x128xf32>
    %10 = vector.broadcast %7 : vector<32x1xf32> to vector<32x128xf32>
    %11 = arith.subf %0, %10 : vector<32x128xf32>
    %12 = arith.mulf %9, %11 : vector<32x128xf32>
    %cst_3 = arith.constant dense<0.000000e+00> : vector<32xf32>
    %13 = vector.multi_reduction <add>, %12, %cst_3 [1] : vector<32x128xf32> to vector<32xf32>
    %14 = vector.shape_cast %13 : vector<32xf32> to vector<32x1xf32>
    %cst_4 = arith.constant 1.280000e+02 : f32
    %15 = vector.broadcast %cst_4 : f32 to vector<32x1xf32>
    %16 = arith.divf %14, %15 : vector<32x1xf32>
    %17 = vector.broadcast %7 : vector<32x1xf32> to vector<32x128xf32>
    %18 = arith.subf %0, %17 : vector<32x128xf32>
    %cst_5 = arith.constant 9.99999974E-6 : f32
    %19 = vector.broadcast %cst_5 : f32 to vector<32x1xf32>
    %20 = arith.addf %16, %19 : vector<32x1xf32>
    %21 = math.rsqrt %20 : vector<32x1xf32>
    %22 = vector.broadcast %21 : vector<32x1xf32> to vector<32x128xf32>
    %23 = arith.mulf %18, %22 : vector<32x128xf32>
    %c0_6 = arith.constant 0 : index
    %c0_7 = arith.constant 0 : index
    %24 = vector.load %arg3[%c0_6, %c0_7] : memref<1x128xf32, #tpu.memory_space<vmem>>, vector<1x128xf32>
    %25 = vector.broadcast %24 : vector<1x128xf32> to vector<32x128xf32>
    %26 = arith.mulf %23, %25 : vector<32x128xf32>
    %c0_8 = arith.constant 0 : index
    %c0_9 = arith.constant 0 : index
    %27 = vector.load %arg4[%c0_8, %c0_9] : memref<1x128xf32, #tpu.memory_space<vmem>>, vector<1x128xf32>
    %28 = vector.broadcast %27 : vector<1x128xf32> to vector<32x128xf32>
    %29 = arith.addf %26, %28 : vector<32x128xf32>
    %30 = arith.truncf %29 : vector<32x128xf32> to vector<32x128xbf16>
    %c0_10 = arith.constant 0 : index
    %c0_11 = arith.constant 0 : index
    %31 = vector.load %arg5[%c0_10, %c0_11] : memref<128x256xbf16, #tpu.memory_space<vmem>>, vector<128x256xbf16>
    %cst_12 = arith.constant dense<0.000000e+00> : vector<32x256xf32>
    %32 = tpu.matmul %30, %31, %cst_12 {dimension_numbers = #tpu.dot_dimension_numbers<[1], [0], [0], [1], [0, 0, 1, 1], [], []>} : vector<32x128xbf16>, vector<128x256xbf16>, vector<32x256xf32> -> vector<32x256xf32>
    %c0_13 = arith.constant 0 : index
    %c0_14 = arith.constant 0 : index
    %33 = vector.load %arg6[%c0_13, %c0_14] : memref<1x256xf32, #tpu.memory_space<vmem>>, vector<1x256xf32>
    %34 = vector.broadcast %33 : vector<1x256xf32> to vector<32x256xf32>
    %35 = arith.addf %32, %34 : vector<32x256xf32>
    %cst_15 = arith.constant 0.000000e+00 : f32
    %36 = vector.broadcast %cst_15 : f32 to vector<32x256xf32>
    %37 = arith.maximumf %35, %36 : vector<32x256xf32>
    %c0_16 = arith.constant 0 : index
    %c0_17 = arith.constant 0 : index
    %38 = vector.load %arg10[%c0_16, %c0_17] : memref<32x128xf32, #tpu.memory_space<vmem>>, vector<32x128xf32>
    %39 = arith.truncf %37 : vector<32x256xf32> to vector<32x256xbf16>
    %c0_18 = arith.constant 0 : index
    %c0_19 = arith.constant 0 : index
    %40 = vector.load %arg7[%c0_18, %c0_19] : memref<256x128xbf16, #tpu.memory_space<vmem>>, vector<256x128xbf16>
    %cst_20 = arith.constant dense<0.000000e+00> : vector<32x128xf32>
    %41 = tpu.matmul %39, %40, %cst_20 {dimension_numbers = #tpu.dot_dimension_numbers<[1], [0], [0], [1], [0, 0, 1, 1], [], []>} : vector<32x256xbf16>, vector<256x128xbf16>, vector<32x128xf32> -> vector<32x128xf32>
    %42 = arith.addf %38, %41 : vector<32x128xf32>
    %c0_21 = arith.constant 0 : index
    %c0_22 = arith.constant 0 : index
    %43 = vector.load %arg10[%c0_21, %c0_22] : memref<32x128xf32, #tpu.memory_space<vmem>>, vector<32x128xf32>
    tpu.vector_store %arg10[%c0_21, %c0_22], %42 {strides = array<i32>} : memref<32x128xf32, #tpu.memory_space<vmem>>, vector<32x128xf32>,
    %c0_i32_23 = arith.constant 0 : i32
    %44 = arith.cmpi eq, %arg1, %c0_i32_23 : i32
    %45 = arith.extui %44 : i1 to i32
    %c0_i32_24 = arith.constant 0 : i32
    %46 = arith.cmpi ne, %45, %c0_i32_24 : i32
    scf.if %46 {
      %c0_25 = arith.constant 0 : index
      %c0_26 = arith.constant 0 : index
      %47 = vector.load %arg10[%c0_25, %c0_26] : memref<32x128xf32, #tpu.memory_space<vmem>>, vector<32x128xf32>
      %c0_27 = arith.constant 0 : index
      %c0_28 = arith.constant 0 : index
      %48 = vector.load %arg9[%c0_27, %c0_28] : memref<32x128xf32, #tpu.memory_space<vmem>>, vector<32x128xf32>
      tpu.vector_store %arg9[%c0_27, %c0_28], %47 {strides = array<i32>} : memref<32x128xf32, #tpu.memory_space<vmem>>, vector<32x128xf32>,
    } else {
    }
    return
  }
  func.func @transform_0(%arg0: i32, %arg1: i32) -> (i32, i32) {
    %c0_i32 = arith.constant 0 : i32
    %c0_i32_0 = arith.constant 0 : i32
    return %arg0, %c0_i32 : i32, i32
  }
  func.func @transform_1(%arg0: i32, %arg1: i32) -> (i32, i32) {
    %c0_i32 = arith.constant 0 : i32
    %c0_i32_0 = arith.constant 0 : i32
    %c0_i32_1 = arith.constant 0 : i32
    return %c0_i32, %c0_i32_0 : i32, i32
  }
  func.func @transform_2(%arg0: i32, %arg1: i32) -> (i32, i32) {
    %c0_i32 = arith.constant 0 : i32
    %c0_i32_0 = arith.constant 0 : i32
    %c0_i32_1 = arith.constant 0 : i32
    return %c0_i32, %c0_i32_0 : i32, i32
  }
  func.func @transform_3(%arg0: i32, %arg1: i32) -> (i32, i32) {
    %c0_i32 = arith.constant 0 : i32
    %c0_i32_0 = arith.constant 0 : i32
    return %c0_i32, %arg1 : i32, i32
  }
  func.func @transform_4(%arg0: i32, %arg1: i32) -> (i32, i32) {
    %c0_i32 = arith.constant 0 : i32
    %c0_i32_0 = arith.constant 0 : i32
    return %c0_i32, %arg1 : i32, i32
  }
  func.func @transform_5(%arg0: i32, %arg1: i32) -> (i32, i32) {
    %c0_i32 = arith.constant 0 : i32
    %c0_i32_0 = arith.constant 0 : i32
    return %arg1, %c0_i32 : i32, i32
  }
  func.func @transform_6(%arg0: i32, %arg1: i32) -> (i32, i32) {
    %c0_i32 = arith.constant 0 : i32
    %c0_i32_0 = arith.constant 0 : i32
    %c0_i32_1 = arith.constant 0 : i32
    return %c0_i32, %c0_i32_0 : i32, i32
  }
  func.func @transform_7(%arg0: i32, %arg1: i32) -> (i32, i32) {
    %c0_i32 = arith.constant 0 : i32
    %c0_i32_0 = arith.constant 0 : i32
    return %arg0, %c0_i32 : i32, i32
  }
}

module attributes {stable_mosaic.version = 11 : i64} {
  func.func @_ln_linear_kernel(%arg0: i32, %arg1: i32, %arg2: memref<32x128xf32, #tpu.memory_space<vmem>>, %arg3: memref<1x128xf32, #tpu.memory_space<vmem>>, %arg4: memref<1x128xf32, #tpu.memory_space<vmem>>, %arg5: memref<128x256xbf16, #tpu.memory_space<vmem>>, %arg6: memref<1x256xf32, #tpu.memory_space<vmem>>, %arg7: memref<32x256xf32, #tpu.memory_space<vmem>>) attributes {dimension_semantics = [#tpu.dimension_semantics<parallel>, #tpu.dimension_semantics<parallel>], iteration_bounds = array<i64: 1, 1>, scalar_prefetch = 0 : i64, scratch_operands = 0 : i64, tpu.core_type = #tpu.core_type<tc>, window_params = [{transform_indices = @transform_0, window_bounds = array<i64: 32, 128>}, {pipeline_mode = #tpu.pipeline_mode<synchronous>, transform_indices = @transform_1, window_bounds = array<i64: 1, 128>}, {pipeline_mode = #tpu.pipeline_mode<synchronous>, transform_indices = @transform_2, window_bounds = array<i64: 1, 128>}, {transform_indices = @transform_3, window_bounds = array<i64: 128, 256>}, {transform_indices = @transform_4, window_bounds = array<i64: 1, 256>}, {transform_indices = @transform_5, window_bounds = array<i64: 32, 256>}]} {
    %c0 = arith.constant 0 : index
    %c0_0 = arith.constant 0 : index
    %0 = vector.load %arg2[%c0, %c0_0] : memref<32x128xf32, #tpu.memory_space<vmem>>, vector<32x128xf32>
    %cst = arith.constant dense<0.000000e+00> : vector<32xf32>
    %1 = vector.multi_reduction <add>, %0, %cst [1] : vector<32x128xf32> to vector<32xf32>
    %2 = vector.shape_cast %1 : vector<32xf32> to vector<32x1xf32>
    %cst_1 = arith.constant 1.280000e+02 : f32
    %3 = vector.broadcast %cst_1 : f32 to vector<32x1xf32>
    %4 = arith.divf %2, %3 : vector<32x1xf32>
    %5 = vector.broadcast %4 : vector<32x1xf32> to vector<32x128xf32>
    %6 = arith.subf %0, %5 : vector<32x128xf32>
    %7 = vector.broadcast %4 : vector<32x1xf32> to vector<32x128xf32>
    %8 = arith.subf %0, %7 : vector<32x128xf32>
    %9 = arith.mulf %6, %8 : vector<32x128xf32>
    %cst_2 = arith.constant dense<0.000000e+00> : vector<32xf32>
    %10 = vector.multi_reduction <add>, %9, %cst_2 [1] : vector<32x128xf32> to vector<32xf32>
    %11 = vector.shape_cast %10 : vector<32xf32> to vector<32x1xf32>
    %cst_3 = arith.constant 1.280000e+02 : f32
    %12 = vector.broadcast %cst_3 : f32 to vector<32x1xf32>
    %13 = arith.divf %11, %12 : vector<32x1xf32>
    %14 = vector.broadcast %4 : vector<32x1xf32> to vector<32x128xf32>
    %15 = arith.subf %0, %14 : vector<32x128xf32>
    %cst_4 = arith.constant 9.99999974E-6 : f32
    %16 = vector.broadcast %cst_4 : f32 to vector<32x1xf32>
    %17 = arith.addf %13, %16 : vector<32x1xf32>
    %18 = math.rsqrt %17 : vector<32x1xf32>
    %19 = vector.broadcast %18 : vector<32x1xf32> to vector<32x128xf32>
    %20 = arith.mulf %15, %19 : vector<32x128xf32>
    %c0_5 = arith.constant 0 : index
    %c0_6 = arith.constant 0 : index
    %21 = vector.load %arg3[%c0_5, %c0_6] : memref<1x128xf32, #tpu.memory_space<vmem>>, vector<1x128xf32>
    %22 = vector.broadcast %21 : vector<1x128xf32> to vector<32x128xf32>
    %23 = arith.mulf %20, %22 : vector<32x128xf32>
    %c0_7 = arith.constant 0 : index
    %c0_8 = arith.constant 0 : index
    %24 = vector.load %arg4[%c0_7, %c0_8] : memref<1x128xf32, #tpu.memory_space<vmem>>, vector<1x128xf32>
    %25 = vector.broadcast %24 : vector<1x128xf32> to vector<32x128xf32>
    %26 = arith.addf %23, %25 : vector<32x128xf32>
    %27 = arith.truncf %26 : vector<32x128xf32> to vector<32x128xbf16>
    %c0_9 = arith.constant 0 : index
    %c0_10 = arith.constant 0 : index
    %28 = vector.load %arg5[%c0_9, %c0_10] : memref<128x256xbf16, #tpu.memory_space<vmem>>, vector<128x256xbf16>
    %cst_11 = arith.constant dense<0.000000e+00> : vector<32x256xf32>
    %29 = tpu.matmul %27, %28, %cst_11 {dimension_numbers = #tpu.dot_dimension_numbers<[1], [0], [0], [1], [0, 0, 1, 1], [], []>} : vector<32x128xbf16>, vector<128x256xbf16>, vector<32x256xf32> -> vector<32x256xf32>
    %c0_12 = arith.constant 0 : index
    %c0_13 = arith.constant 0 : index
    %30 = vector.load %arg6[%c0_12, %c0_13] : memref<1x256xf32, #tpu.memory_space<vmem>>, vector<1x256xf32>
    %31 = vector.broadcast %30 : vector<1x256xf32> to vector<32x256xf32>
    %32 = arith.addf %29, %31 : vector<32x256xf32>
    %c0_14 = arith.constant 0 : index
    %c0_15 = arith.constant 0 : index
    %33 = vector.load %arg7[%c0_14, %c0_15] : memref<32x256xf32, #tpu.memory_space<vmem>>, vector<32x256xf32>
    tpu.vector_store %arg7[%c0_14, %c0_15], %32 {strides = array<i32>} : memref<32x256xf32, #tpu.memory_space<vmem>>, vector<32x256xf32>,
    return
  }
  func.func @transform_0(%arg0: i32, %arg1: i32) -> (i32, i32) {
    %c0_i32 = arith.constant 0 : i32
    %c0_i32_0 = arith.constant 0 : i32
    return %arg0, %c0_i32 : i32, i32
  }
  func.func @transform_1(%arg0: i32, %arg1: i32) -> (i32, i32) {
    %c0_i32 = arith.constant 0 : i32
    %c0_i32_0 = arith.constant 0 : i32
    %c0_i32_1 = arith.constant 0 : i32
    return %c0_i32, %c0_i32_0 : i32, i32
  }
  func.func @transform_2(%arg0: i32, %arg1: i32) -> (i32, i32) {
    %c0_i32 = arith.constant 0 : i32
    %c0_i32_0 = arith.constant 0 : i32
    %c0_i32_1 = arith.constant 0 : i32
    return %c0_i32, %c0_i32_0 : i32, i32
  }
  func.func @transform_3(%arg0: i32, %arg1: i32) -> (i32, i32) {
    %c0_i32 = arith.constant 0 : i32
    %c0_i32_0 = arith.constant 0 : i32
    return %c0_i32, %arg1 : i32, i32
  }
  func.func @transform_4(%arg0: i32, %arg1: i32) -> (i32, i32) {
    %c0_i32 = arith.constant 0 : i32
    %c0_i32_0 = arith.constant 0 : i32
    return %c0_i32, %arg1 : i32, i32
  }
  func.func @transform_5(%arg0: i32, %arg1: i32) -> (i32, i32) {
    %c0_i32 = arith.constant 0 : i32
    return %arg0, %arg1 : i32, i32
  }
}

</mosaic_0001>

<llo_original>
// kernel: autoregressive_forward.14
$region0: #{autoregressive_forward.14}
  #allocation0 [shape = 'u32[]', space=smem, size = 0x4, offset = 0x4, fixed_abs, tag = 'smem constant byte address 0x4 - core index']
  #allocation1 [shape = 'u32[144,128]{1,0:T(1,128)}', space=vmem, size = 0x12000, scoped, tag = 'internal scratch']
  %s0 = inlined_call_operand.vmem [shape: f32[32,128], index: 0, kind: input, shape index: {}]
  %s1 = inlined_call_operand.vmem [shape: bf16[128,128], index: 1, kind: input, shape index: {}]
  %s2 = inlined_call_operand.vmem [shape: f32[1,128], index: 2, kind: input, shape index: {}]
  %s3 = inlined_call_operand.vmem [shape: f32[32,128], index: 3, kind: input, shape index: {}]
  %s4 = inlined_call_operand.vmem [shape: f32[32,128], index: 4, kind: output, shape index: {}]
  %s5 = sld [smem:[#allocation0]]
  $region26: #{autoregressive_forward.14} parent=0
    _
  %s7 = ssub.s32 1, %s5
  %s8 = scalar_select 0, %s7, %s5
  // Predicated region
  $region2: #{autoregressive_forward.14} parent=0 // pred_check
    _
  $region3: #{autoregressive_forward.14} parent=0 // pred_check_branch
    %10 = sbr.rel (0) target = $region5
  $region4: #{autoregressive_forward.14} parent=0 // pred_region
    _
  $region5: #{autoregressive_forward.14} parent=0 // pred_fallthru
    _
  // Predicated region
  $region6: #{autoregressive_forward.14} parent=0 // pred_check
    _
  $region7: #{autoregressive_forward.14} parent=0 // pred_check_branch
    %12 = sbr.rel (0) target = $region9
  $region8: #{autoregressive_forward.14} parent=0 // pred_region
    _
  $region9: #{autoregressive_forward.14} parent=0 // pred_fallthru
    _
  // Predicated region
  $region10: #{autoregressive_forward.14} parent=0 // pred_check
    _
  $region11: #{autoregressive_forward.14} parent=0 // pred_check_branch
    %14 = sbr.rel (0) target = $region13
  $region12: #{autoregressive_forward.14} parent=0 // pred_region
    _
  $region13: #{autoregressive_forward.14} parent=0 // pred_fallthru
    _
  // Predicated region
  $region14: #{autoregressive_forward.14} parent=0 // pred_check
    _
  $region15: #{autoregressive_forward.14} parent=0 // pred_check_branch
    %16 = sbr.rel (0) target = $region17
  $region16: #{autoregressive_forward.14} parent=0 // pred_region
    _
  $region17: #{autoregressive_forward.14} parent=0 // pred_fallthru
    _
  %v18 = vld [vmem:[%s0] sm:$0xff]
  %v19 = vld [vmem:[%s0 + $0x8] sm:$0xff]
  %v20 = vld [vmem:[%s0 + $0x10] sm:$0xff]
  %v21 = vld [vmem:[%s0 + $0x18] sm:$0xff]
  %v22 = vpack.c.bf16 %v19, %v18
  %v23 = vpack.c.bf16 %v21, %v20
  %v24 = vld [vmem:[%s1] sm:$0xf]
  %v25 = vld [vmem:[%s1 + $0x4] sm:$0xf]
  %v26 = vld [vmem:[%s1 + $0x8] sm:$0xf]
  %v27 = vld [vmem:[%s1 + $0xc] sm:$0xf]
  %v28 = vld [vmem:[%s1 + $0x10] sm:$0xf]
  %v29 = vld [vmem:[%s1 + $0x14] sm:$0xf]
  %v30 = vld [vmem:[%s1 + $0x18] sm:$0xf]
  %v31 = vld [vmem:[%s1 + $0x1c] sm:$0xf]
  %v32 = vld [vmem:[%s1 + $0x20] sm:$0xf]
  %v33 = vld [vmem:[%s1 + $0x24] sm:$0xf]
  %v34 = vld [vmem:[%s1 + $0x28] sm:$0xf]
  %v35 = vld [vmem:[%s1 + $0x2c] sm:$0xf]
  %v36 = vld [vmem:[%s1 + $0x30] sm:$0xf]
  %v37 = vld [vmem:[%s1 + $0x34] sm:$0xf]
  %v38 = vld [vmem:[%s1 + $0x38] sm:$0xf]
  %v39 = vld [vmem:[%s1 + $0x3c] sm:$0xf]
  %v40 = vld [vmem:[%s2] sm:$0x1]
  %v42 = vlaneseq
  %v43 = vshrl.u32 %v42, 7
  %v44 = vsub.s32 0, %v43
  %v45 = vrot.slane %v40, %v44
  %v63 = vunpack.c.l.b16 %v24
  %v64 = vunpack.c.l.b16 %v25
  %v65 = vunpack.c.l.b16 %v26
  %v66 = vunpack.c.l.b16 %v27
  %v67 = vunpack.c.l.b16 %v28
  %v68 = vunpack.c.l.b16 %v29
  %v69 = vunpack.c.l.b16 %v30
  %v70 = vunpack.c.l.b16 %v31
  %v71 = vunpack.c.l.b16 %v32
  %v72 = vunpack.c.l.b16 %v33
  %v73 = vunpack.c.l.b16 %v34
  %v74 = vunpack.c.l.b16 %v35
  %v75 = vunpack.c.l.b16 %v36
  %v76 = vunpack.c.l.b16 %v37
  %v77 = vunpack.c.l.b16 %v38
  %v78 = vunpack.c.l.b16 %v39
  %v79 = vpack.c.b16 %v64, %v63
  %v80 = vpack.c.b16 %v66, %v65
  %v81 = vpack.c.b16 %v68, %v67
  %v82 = vpack.c.b16 %v70, %v69
  %v83 = vpack.c.b16 %v72, %v71
  %v84 = vpack.c.b16 %v74, %v73
  %v85 = vpack.c.b16 %v76, %v75
  %v86 = vpack.c.b16 %v78, %v77
  %95 = vmatprep.subr.bf16.mxu0 0
  %96 = vmatpush1.bf16.msra.mxu0 %v79
  %97 = vmatprep.subr.bf16.mxu0 0
  %98 = vmatpush1.bf16.msra.mxu0 %v80
  %99 = vmatprep.subr.bf16.mxu0 0
  %100 = vmatpush1.bf16.msra.mxu0 %v81
  %101 = vmatprep.subr.bf16.mxu0 0
  %102 = vmatpush1.bf16.msra.mxu0 %v82
  %103 = vmatprep.subr.bf16.mxu0 0
  %104 = vmatpush1.bf16.msra.mxu0 %v83
  %105 = vmatprep.subr.bf16.mxu0 0
  %106 = vmatpush1.bf16.msra.mxu0 %v84
  %107 = vmatprep.subr.bf16.mxu0 0
  %108 = vmatpush1.bf16.msra.mxu0 %v85
  %109 = vmatprep.subr.bf16.mxu0 0
  %110 = vmatpush1.bf16.msra.mxu0 %v86
  %111 = vmatprep.subr.bf16.mxu0 0
  %112 = vmatpush1.bf16.msra.mxu0 0
  %113 = vmatprep.subr.bf16.mxu0 0
  %114 = vmatpush1.bf16.msra.mxu0 0
  %115 = vmatprep.subr.bf16.mxu0 0
  %116 = vmatpush1.bf16.msra.mxu0 0
  %117 = vmatprep.subr.bf16.mxu0 0
  %118 = vmatpush1.bf16.msra.mxu0 0
  %119 = vmatprep.subr.bf16.mxu0 0
  %120 = vmatpush1.bf16.msra.mxu0 0
  %121 = vmatprep.subr.bf16.mxu0 0
  %122 = vmatpush1.bf16.msra.mxu0 0
  %123 = vmatprep.subr.bf16.mxu0 0
  %124 = vmatpush1.bf16.msra.mxu0 0
  %125 = vmatprep.subr.bf16.mxu0 0
  %126 = vmatpush1.bf16.msra.mxu0 0
  %127 = vmatprep.mubr.bf16.mxu0 0
  %128 = vmatmul.mubr.bf16.gmra.mrb[0].mxu0 %v22
  %v129 = vpop.f32.mrb[0].mxu0
  %v130 = vadd.f32 %v45, %v129
  %v131 = vpop.f32.mrb[0].mxu0
  %v132 = vpop.f32.mrb[0].mxu0
  %v133 = vadd.f32 %v45, %v132
  %v134 = vpop.f32.mrb[0].mxu0
  %135 = vmatprep.mubr.bf16.mxu0 0
  %136 = vmatmul.mubr.bf16.gmra.mrb[0].mxu0 %v23
  %v137 = vpop.f32.mrb[0].mxu0
  %v138 = vadd.f32 %v45, %v137
  %v139 = vpop.f32.mrb[0].mxu0
  %v140 = vpop.f32.mrb[0].mxu0
  %v141 = vadd.f32 %v45, %v140
  %v142 = vpop.f32.mrb[0].mxu0
  %143 = vdwg.mxu0
  %v144 = vld [vmem:[%s3] sm:$0xff]
  %v145 = vld [vmem:[%s3 + $0x8] sm:$0xff]
  %v146 = vld [vmem:[%s3 + $0x10] sm:$0xff]
  %v147 = vld [vmem:[%s3 + $0x18] sm:$0xff]
  %v148 = vadd.f32 %v130, %v144
  %v149 = vadd.f32 %v133, %v145
  %v150 = vadd.f32 %v138, %v146
  %v151 = vadd.f32 %v141, %v147
  %152 = vst [vmem:[%s4] sm:$0xff] %v148
  %153 = vst [vmem:[%s4 + $0x8] sm:$0xff] %v149
  %154 = vst [vmem:[%s4 + $0x10] sm:$0xff] %v150
  %155 = vst [vmem:[%s4 + $0x18] sm:$0xff] %v151
  // Predicated region
  $region18: #{autoregressive_forward.14} parent=0 // pred_check
    _
  $region19: #{autoregressive_forward.14} parent=0 // pred_check_branch
    %157 = sbr.rel (0) target = $region21
  $region20: #{autoregressive_forward.14} parent=0 // pred_region
    _
  $region21: #{autoregressive_forward.14} parent=0 // pred_fallthru
    _
  // Predicated region
  $region22: #{autoregressive_forward.14} parent=0 // pred_check
    _
  $region23: #{autoregressive_forward.14} parent=0 // pred_check_branch
    %159 = sbr.rel (0) target = $region25
  $region24: #{autoregressive_forward.14} parent=0 // pred_region
    _
  $region25: #{autoregressive_forward.14} parent=0 // pred_fallthru
    _

// kernel: autoregressive_forward.11
$region0: #{autoregressive_forward.11}
  #allocation0 [shape = 'u32[]', space=smem, size = 0x4, offset = 0x4, fixed_abs, tag = 'smem constant byte address 0x4 - core index']
  #allocation1 [shape = 'u32[144,128]{1,0:T(1,128)}', space=vmem, size = 0x12000, scoped, tag = 'internal scratch']
  %s0 = inlined_call_operand.vmem [shape: f32[32,128], index: 0, kind: input, shape index: {}]
  %s1 = inlined_call_operand.vmem [shape: f32[1,128], index: 1, kind: input, shape index: {}]
  %s2 = inlined_call_operand.vmem [shape: f32[1,128], index: 2, kind: input, shape index: {}]
  %s3 = inlined_call_operand.vmem [shape: bf16[128,128], index: 3, kind: input, shape index: {}]
  %s4 = inlined_call_operand.vmem [shape: f32[1,128], index: 4, kind: input, shape index: {}]
  %s5 = inlined_call_operand.vmem [shape: f32[32,128], index: 5, kind: output, shape index: {}]
  %s6 = sld [smem:[#allocation0]]
  $region30: #{autoregressive_forward.11} parent=0
    _
  %s8 = ssub.s32 1, %s6
  %s9 = scalar_select 0, %s8, %s6
  // Predicated region
  $region2: #{autoregressive_forward.11} parent=0 // pred_check
    _
  $region3: #{autoregressive_forward.11} parent=0 // pred_check_branch
    %11 = sbr.rel (0) target = $region5
  $region4: #{autoregressive_forward.11} parent=0 // pred_region
    _
  $region5: #{autoregressive_forward.11} parent=0 // pred_fallthru
    _
  // Predicated region
  $region6: #{autoregressive_forward.11} parent=0 // pred_check
    _
  $region7: #{autoregressive_forward.11} parent=0 // pred_check_branch
    %13 = sbr.rel (0) target = $region9
  $region8: #{autoregressive_forward.11} parent=0 // pred_region
    _
  $region9: #{autoregressive_forward.11} parent=0 // pred_fallthru
    _
  // Predicated region
  $region10: #{autoregressive_forward.11} parent=0 // pred_check
    _
  $region11: #{autoregressive_forward.11} parent=0 // pred_check_branch
    %15 = sbr.rel (0) target = $region13
  $region12: #{autoregressive_forward.11} parent=0 // pred_region
    _
  $region13: #{autoregressive_forward.11} parent=0 // pred_fallthru
    _
  // Predicated region
  $region14: #{autoregressive_forward.11} parent=0 // pred_check
    _
  $region15: #{autoregressive_forward.11} parent=0 // pred_check_branch
    %17 = sbr.rel (0) target = $region17
  $region16: #{autoregressive_forward.11} parent=0 // pred_region
    _
  $region17: #{autoregressive_forward.11} parent=0 // pred_fallthru
    _
  // Predicated region
  $region18: #{autoregressive_forward.11} parent=0 // pred_check
    _
  $region19: #{autoregressive_forward.11} parent=0 // pred_check_branch
    %19 = sbr.rel (0) target = $region21
  $region20: #{autoregressive_forward.11} parent=0 // pred_region
    _
  $region21: #{autoregressive_forward.11} parent=0 // pred_fallthru
    _
  %v21 = vld [vmem:[%s0] sm:$0xff]
  %v22 = vld [vmem:[%s0 + $0x8] sm:$0xff]
  %v23 = vld [vmem:[%s0 + $0x10] sm:$0xff]
  %v24 = vld [vmem:[%s0 + $0x18] sm:$0xff]
  %25 = vadd.xlane.f32.xlu0 %v21
  %v26 = vpop.xlane.xlu0 %25
  %27 = vadd.xlane.f32.xlu0 %v22
  %v28 = vpop.xlane.xlu0 %27
  %29 = vadd.xlane.f32.xlu0 %v23
  %v30 = vpop.xlane.xlu0 %29
  %31 = vadd.xlane.f32.xlu0 %v24
  %v32 = vpop.xlane.xlu0 %31
  %v33 = vrcp.pop 128.0
  %v34 = vmul.f32 %v26, %v33
  %v35 = vmul.f32 %v28, %v33
  %v36 = vmul.f32 %v30, %v33
  %v37 = vmul.f32 %v32, %v33
  %v38 = vsub.f32 %v21, %v34
  %v39 = vsub.f32 %v22, %v35
  %v40 = vsub.f32 %v23, %v36
  %v41 = vsub.f32 %v24, %v37
  %v42 = vmul.f32 %v38, %v38
  %v43 = vmul.f32 %v39, %v39
  %v44 = vmul.f32 %v40, %v40
  %v45 = vmul.f32 %v41, %v41
  %46 = vadd.xlane.f32.xlu0 %v42
  %v47 = vpop.xlane.xlu0 %46
  %48 = vadd.xlane.f32.xlu0 %v43
  %v49 = vpop.xlane.xlu0 %48
  %50 = vadd.xlane.f32.xlu0 %v44
  %v51 = vpop.xlane.xlu0 %50
  %52 = vadd.xlane.f32.xlu0 %v45
  %v53 = vpop.xlane.xlu0 %52
  %v54 = vmul.f32 %v47, %v33
  %v55 = vmul.f32 %v49, %v33
  %v56 = vmul.f32 %v51, %v33
  %v57 = vmul.f32 %v53, %v33
  %v58 = vadd.f32 %v54, 1e-05
  %v59 = vadd.f32 %v55, 1e-05
  %v60 = vadd.f32 %v56, 1e-05
  %v61 = vadd.f32 %v57, 1e-05
  %v62 = vrsqrt.pop %v58
  %v63 = vrsqrt.pop %v59
  %v64 = vrsqrt.pop %v60
  %v65 = vrsqrt.pop %v61
  %v66 = vmul.f32 %v38, %v62
  %v67 = vmul.f32 %v39, %v63
  %v68 = vmul.f32 %v40, %v64
  %v69 = vmul.f32 %v41, %v65
  %v70 = vld [vmem:[%s1] sm:$0x1]
  %v72 = vlaneseq
  %v73 = vshrl.u32 %v72, 7
  %v74 = vsub.s32 0, %v73
  %v75 = vrot.slane %v70, %v74
  %v77 = vmul.f32 %v66, %v75
  %v78 = vmul.f32 %v67, %v75
  %v79 = vmul.f32 %v68, %v75
  %v80 = vmul.f32 %v69, %v75
  %v81 = vld [vmem:[%s2] sm:$0x1]
  %v83 = vlaneseq
  %v84 = vshrl.u32 %v83, 7
  %v85 = vsub.s32 0, %v84
  %v86 = vrot.slane %v81, %v85
  %v88 = vadd.f32 %v77, %v86
  %v89 = vadd.f32 %v78, %v86
  %v90 = vadd.f32 %v79, %v86
  %v91 = vadd.f32 %v80, %v86
  %v92 = vpack.c.bf16 %v89, %v88
  %v93 = vpack.c.bf16 %v91, %v90
  %v94 = vld [vmem:[%s3] sm:$0xf]
  %v95 = vld [vmem:[%s3 + $0x4] sm:$0xf]
  %v96 = vld [vmem:[%s3 + $0x8] sm:$0xf]
  %v97 = vld [vmem:[%s3 + $0xc] sm:$0xf]
  %v98 = vld [vmem:[%s3 + $0x10] sm:$0xf]
  %v99 = vld [vmem:[%s3 + $0x14] sm:$0xf]
  %v100 = vld [vmem:[%s3 + $0x18] sm:$0xf]
  %v101 = vld [vmem:[%s3 + $0x1c] sm:$0xf]
  %v102 = vld [vmem:[%s3 + $0x20] sm:$0xf]
  %v103 = vld [vmem:[%s3 + $0x24] sm:$0xf]
  %v104 = vld [vmem:[%s3 + $0x28] sm:$0xf]
  %v105 = vld [vmem:[%s3 + $0x2c] sm:$0xf]
  %v106 = vld [vmem:[%s3 + $0x30] sm:$0xf]
  %v107 = vld [vmem:[%s3 + $0x34] sm:$0xf]
  %v108 = vld [vmem:[%s3 + $0x38] sm:$0xf]
  %v109 = vld [vmem:[%s3 + $0x3c] sm:$0xf]
  %v110 = vld [vmem:[%s4] sm:$0x1]
  %v112 = vlaneseq
  %v113 = vshrl.u32 %v112, 7
  %v114 = vsub.s32 0, %v113
  %v115 = vrot.slane %v110, %v114
  %v133 = vunpack.c.l.b16 %v94
  %v134 = vunpack.c.l.b16 %v95
  %v135 = vunpack.c.l.b16 %v96
  %v136 = vunpack.c.l.b16 %v97
  %v137 = vunpack.c.l.b16 %v98
  %v138 = vunpack.c.l.b16 %v99
  %v139 = vunpack.c.l.b16 %v100
  %v140 = vunpack.c.l.b16 %v101
  %v141 = vunpack.c.l.b16 %v102
  %v142 = vunpack.c.l.b16 %v103
  %v143 = vunpack.c.l.b16 %v104
  %v144 = vunpack.c.l.b16 %v105
  %v145 = vunpack.c.l.b16 %v106
  %v146 = vunpack.c.l.b16 %v107
  %v147 = vunpack.c.l.b16 %v108
  %v148 = vunpack.c.l.b16 %v109
  %v149 = vpack.c.b16 %v134, %v133
  %v150 = vpack.c.b16 %v136, %v135
  %v151 = vpack.c.b16 %v138, %v137
  %v152 = vpack.c.b16 %v140, %v139
  %v153 = vpack.c.b16 %v142, %v141
  %v154 = vpack.c.b16 %v144, %v143
  %v155 = vpack.c.b16 %v146, %v145
  %v156 = vpack.c.b16 %v148, %v147
  %165 = vmatprep.subr.bf16.mxu0 0
  %166 = vmatpush1.bf16.msra.mxu0 %v149
  %167 = vmatprep.subr.bf16.mxu0 0
  %168 = vmatpush1.bf16.msra.mxu0 %v150
  %169 = vmatprep.subr.bf16.mxu0 0
  %170 = vmatpush1.bf16.msra.mxu0 %v151
  %171 = vmatprep.subr.bf16.mxu0 0
  %172 = vmatpush1.bf16.msra.mxu0 %v152
  %173 = vmatprep.subr.bf16.mxu0 0
  %174 = vmatpush1.bf16.msra.mxu0 %v153
  %175 = vmatprep.subr.bf16.mxu0 0
  %176 = vmatpush1.bf16.msra.mxu0 %v154
  %177 = vmatprep.subr.bf16.mxu0 0
  %178 = vmatpush1.bf16.msra.mxu0 %v155
  %179 = vmatprep.subr.bf16.mxu0 0
  %180 = vmatpush1.bf16.msra.mxu0 %v156
  %181 = vmatprep.subr.bf16.mxu0 0
  %182 = vmatpush1.bf16.msra.mxu0 0
  %183 = vmatprep.subr.bf16.mxu0 0
  %184 = vmatpush1.bf16.msra.mxu0 0
  %185 = vmatprep.subr.bf16.mxu0 0
  %186 = vmatpush1.bf16.msra.mxu0 0
  %187 = vmatprep.subr.bf16.mxu0 0
  %188 = vmatpush1.bf16.msra.mxu0 0
  %189 = vmatprep.subr.bf16.mxu0 0
  %190 = vmatpush1.bf16.msra.mxu0 0
  %191 = vmatprep.subr.bf16.mxu0 0
  %192 = vmatpush1.bf16.msra.mxu0 0
  %193 = vmatprep.subr.bf16.mxu0 0
  %194 = vmatpush1.bf16.msra.mxu0 0
  %195 = vmatprep.subr.bf16.mxu0 0
  %196 = vmatpush1.bf16.msra.mxu0 0
  %197 = vmatprep.mubr.bf16.mxu0 0
  %198 = vmatmul.mubr.bf16.gmra.mrb[0].mxu0 %v92
  %v199 = vpop.f32.mrb[0].mxu0
  %v200 = vadd.f32 %v115, %v199
  %v201 = vpop.f32.mrb[0].mxu0
  %v202 = vpop.f32.mrb[0].mxu0
  %v203 = vadd.f32 %v115, %v202
  %v204 = vpop.f32.mrb[0].mxu0
  %205 = vmatprep.mubr.bf16.mxu0 0
  %206 = vmatmul.mubr.bf16.gmra.mrb[0].mxu0 %v93
  %v207 = vpop.f32.mrb[0].mxu0
  %v208 = vadd.f32 %v115, %v207
  %v209 = vpop.f32.mrb[0].mxu0
  %v210 = vpop.f32.mrb[0].mxu0
  %v211 = vadd.f32 %v115, %v210
  %v212 = vpop.f32.mrb[0].mxu0
  %213 = vdwg.mxu0
  %214 = vst [vmem:[%s5] sm:$0xff] %v200
  %215 = vst [vmem:[%s5 + $0x8] sm:$0xff] %v203
  %216 = vst [vmem:[%s5 + $0x10] sm:$0xff] %v208
  %217 = vst [vmem:[%s5 + $0x18] sm:$0xff] %v211
  // Predicated region
  $region22: #{autoregressive_forward.11} parent=0 // pred_check
    _
  $region23: #{autoregressive_forward.11} parent=0 // pred_check_branch
    %219 = sbr.rel (0) target = $region25
  $region24: #{autoregressive_forward.11} parent=0 // pred_region
    _
  $region25: #{autoregressive_forward.11} parent=0 // pred_fallthru
    _
  // Predicated region
  $region26: #{autoregressive_forward.11} parent=0 // pred_check
    _
  $region27: #{autoregressive_forward.11} parent=0 // pred_check_branch
    %221 = sbr.rel (0) target = $region29
  $region28: #{autoregressive_forward.11} parent=0 // pred_region
    _
  $region29: #{autoregressive_forward.11} parent=0 // pred_fallthru
    _

// kernel: autoregressive_forward.12
$region0: #{autoregressive_forward.12}
  #allocation0 [shape = 'u32[]', space=smem, size = 0x4, offset = 0x4, fixed_abs, tag = 'smem constant byte address 0x4 - core index']
  #allocation1 [shape = 'u32[144,128]{1,0:T(1,128)}', space=vmem, size = 0x12000, scoped, tag = 'internal scratch']
  %s0 = inlined_call_operand.vmem [shape: f32[80,128], index: 0, kind: input, shape index: {}]
  %s1 = inlined_call_operand.vmem [shape: f32[1,128], index: 1, kind: input, shape index: {}]
  %s2 = inlined_call_operand.vmem [shape: f32[1,128], index: 2, kind: input, shape index: {}]
  %s3 = inlined_call_operand.vmem [shape: bf16[128,256], index: 3, kind: input, shape index: {}]
  %s4 = inlined_call_operand.vmem [shape: f32[1,256], index: 4, kind: input, shape index: {}]
  %s5 = inlined_call_operand.vmem [shape: f32[80,256], index: 5, kind: output, shape index: {}]
  %s6 = sld [smem:[#allocation0]]
  $region30: #{autoregressive_forward.12} parent=0
    _
  %s8 = ssub.s32 1, %s6
  %s9 = scalar_select 0, %s8, %s6
  // Predicated region
  $region2: #{autoregressive_forward.12} parent=0 // pred_check
    _
  $region3: #{autoregressive_forward.12} parent=0 // pred_check_branch
    %11 = sbr.rel (0) target = $region5
  $region4: #{autoregressive_forward.12} parent=0 // pred_region
    _
  $region5: #{autoregressive_forward.12} parent=0 // pred_fallthru
    _
  // Predicated region
  $region6: #{autoregressive_forward.12} parent=0 // pred_check
    _
  $region7: #{autoregressive_forward.12} parent=0 // pred_check_branch
    %13 = sbr.rel (0) target = $region9
  $region8: #{autoregressive_forward.12} parent=0 // pred_region
    _
  $region9: #{autoregressive_forward.12} parent=0 // pred_fallthru
    _
  // Predicated region
  $region10: #{autoregressive_forward.12} parent=0 // pred_check
    _
  $region11: #{autoregressive_forward.12} parent=0 // pred_check_branch
    %15 = sbr.rel (0) target = $region13
  $region12: #{autoregressive_forward.12} parent=0 // pred_region
    _
  $region13: #{autoregressive_forward.12} parent=0 // pred_fallthru
    _
  // Predicated region
  $region14: #{autoregressive_forward.12} parent=0 // pred_check
    _
  $region15: #{autoregressive_forward.12} parent=0 // pred_check_branch
    %17 = sbr.rel (0) target = $region17
  $region16: #{autoregressive_forward.12} parent=0 // pred_region
    _
  $region17: #{autoregressive_forward.12} parent=0 // pred_fallthru
    _
  // Predicated region
  $region18: #{autoregressive_forward.12} parent=0 // pred_check
    _
  $region19: #{autoregressive_forward.12} parent=0 // pred_check_branch
    %19 = sbr.rel (0) target = $region21
  $region20: #{autoregressive_forward.12} parent=0 // pred_region
    _
  $region21: #{autoregressive_forward.12} parent=0 // pred_fallthru
    _
  %v21 = vld [vmem:[%s0] sm:$0xff]
  %v22 = vld [vmem:[%s0 + $0x8] sm:$0xff]
  %v23 = vld [vmem:[%s0 + $0x10] sm:$0xff]
  %v24 = vld [vmem:[%s0 + $0x18] sm:$0xff]
  %v25 = vld [vmem:[%s0 + $0x20] sm:$0xff]
  %v26 = vld [vmem:[%s0 + $0x28] sm:$0xff]
  %v27 = vld [vmem:[%s0 + $0x30] sm:$0xff]
  %v28 = vld [vmem:[%s0 + $0x38] sm:$0xff]
  %v29 = vld [vmem:[%s0 + $0x40] sm:$0xff]
  %v30 = vld [vmem:[%s0 + $0x48] sm:$0xff]
  %31 = vadd.xlane.f32.xlu0 %v21
  %v32 = vpop.xlane.xlu0 %31
  %33 = vadd.xlane.f32.xlu0 %v22
  %v34 = vpop.xlane.xlu0 %33
  %35 = vadd.xlane.f32.xlu0 %v23
  %v36 = vpop.xlane.xlu0 %35
  %37 = vadd.xlane.f32.xlu0 %v24
  %v38 = vpop.xlane.xlu0 %37
  %39 = vadd.xlane.f32.xlu0 %v25
  %v40 = vpop.xlane.xlu0 %39
  %41 = vadd.xlane.f32.xlu0 %v26
  %v42 = vpop.xlane.xlu0 %41
  %43 = vadd.xlane.f32.xlu0 %v27
  %v44 = vpop.xlane.xlu0 %43
  %45 = vadd.xlane.f32.xlu0 %v28
  %v46 = vpop.xlane.xlu0 %45
  %47 = vadd.xlane.f32.xlu0 %v29
  %v48 = vpop.xlane.xlu0 %47
  %49 = vadd.xlane.f32.xlu0 %v30
  %v50 = vpop.xlane.xlu0 %49
  %v51 = vrcp.pop 128.0
  %v52 = vmul.f32 %v32, %v51
  %v53 = vmul.f32 %v34, %v51
  %v54 = vmul.f32 %v36, %v51
  %v55 = vmul.f32 %v38, %v51
  %v56 = vmul.f32 %v40, %v51
  %v57 = vmul.f32 %v42, %v51
  %v58 = vmul.f32 %v44, %v51
  %v59 = vmul.f32 %v46, %v51
  %v60 = vmul.f32 %v48, %v51
  %v61 = vmul.f32 %v50, %v51
  %v62 = vsub.f32 %v21, %v52
  %v63 = vsub.f32 %v22, %v53
  %v64 = vsub.f32 %v23, %v54
  %v65 = vsub.f32 %v24, %v55
  %v66 = vsub.f32 %v25, %v56
  %v67 = vsub.f32 %v26, %v57
  %v68 = vsub.f32 %v27, %v58
  %v69 = vsub.f32 %v28, %v59
  %v70 = vsub.f32 %v29, %v60
  %v71 = vsub.f32 %v30, %v61
  %v72 = vmul.f32 %v62, %v62
  %v73 = vmul.f32 %v63, %v63
  %v74 = vmul.f32 %v64, %v64
  %v75 = vmul.f32 %v65, %v65
  %v76 = vmul.f32 %v66, %v66
  %v77 = vmul.f32 %v67, %v67
  %v78 = vmul.f32 %v68, %v68
  %v79 = vmul.f32 %v69, %v69
  %v80 = vmul.f32 %v70, %v70
  %v81 = vmul.f32 %v71, %v71
  %82 = vadd.xlane.f32.xlu0 %v72
  %v83 = vpop.xlane.xlu0 %82
  %84 = vadd.xlane.f32.xlu0 %v73
  %v85 = vpop.xlane.xlu0 %84
  %86 = vadd.xlane.f32.xlu0 %v74
  %v87 = vpop.xlane.xlu0 %86
  %88 = vadd.xlane.f32.xlu0 %v75
  %v89 = vpop.xlane.xlu0 %88
  %90 = vadd.xlane.f32.xlu0 %v76
  %v91 = vpop.xlane.xlu0 %90
  %92 = vadd.xlane.f32.xlu0 %v77
  %v93 = vpop.xlane.xlu0 %92
  %94 = vadd.xlane.f32.xlu0 %v78
  %v95 = vpop.xlane.xlu0 %94
  %96 = vadd.xlane.f32.xlu0 %v79
  %v97 = vpop.xlane.xlu0 %96
  %98 = vadd.xlane.f32.xlu0 %v80
  %v99 = vpop.xlane.xlu0 %98
  %100 = vadd.xlane.f32.xlu0 %v81
  %v101 = vpop.xlane.xlu0 %100
  %v102 = vmul.f32 %v83, %v51
  %v103 = vmul.f32 %v85, %v51
  %v104 = vmul.f32 %v87, %v51
  %v105 = vmul.f32 %v89, %v51
  %v106 = vmul.f32 %v91, %v51
  %v107 = vmul.f32 %v93, %v51
  %v108 = vmul.f32 %v95, %v51
  %v109 = vmul.f32 %v97, %v51
  %v110 = vmul.f32 %v99, %v51
  %v111 = vmul.f32 %v101, %v51
  %v112 = vadd.f32 %v102, 1e-05
  %v113 = vadd.f32 %v103, 1e-05
  %v114 = vadd.f32 %v104, 1e-05
  %v115 = vadd.f32 %v105, 1e-05
  %v116 = vadd.f32 %v106, 1e-05
  %v117 = vadd.f32 %v107, 1e-05
  %v118 = vadd.f32 %v108, 1e-05
  %v119 = vadd.f32 %v109, 1e-05
  %v120 = vadd.f32 %v110, 1e-05
  %v121 = vadd.f32 %v111, 1e-05
  %v122 = vrsqrt.pop %v112
  %v123 = vrsqrt.pop %v113
  %v124 = vrsqrt.pop %v114
  %v125 = vrsqrt.pop %v115
  %v126 = vrsqrt.pop %v116
  %v127 = vrsqrt.pop %v117
  %v128 = vrsqrt.pop %v118
  %v129 = vrsqrt.pop %v119
  %v130 = vrsqrt.pop %v120
  %v131 = vrsqrt.pop %v121
  %v132 = vmul.f32 %v62, %v122
  %v133 = vmul.f32 %v63, %v123
  %v134 = vmul.f32 %v64, %v124
  %v135 = vmul.f32 %v65, %v125
  %v136 = vmul.f32 %v66, %v126
  %v137 = vmul.f32 %v67, %v127
  %v138 = vmul.f32 %v68, %v128
  %v139 = vmul.f32 %v69, %v129
  %v140 = vmul.f32 %v70, %v130
  %v141 = vmul.f32 %v71, %v131
  %v142 = vld [vmem:[%s1] sm:$0x1]
  %v144 = vlaneseq
  %v145 = vshrl.u32 %v144, 7
  %v146 = vsub.s32 0, %v145
  %v147 = vrot.slane %v142, %v146
  %v149 = vmul.f32 %v132, %v147
  %v150 = vmul.f32 %v133, %v147
  %v151 = vmul.f32 %v134, %v147
  %v152 = vmul.f32 %v135, %v147
  %v153 = vmul.f32 %v136, %v147
  %v154 = vmul.f32 %v137, %v147
  %v155 = vmul.f32 %v138, %v147
  %v156 = vmul.f32 %v139, %v147
  %v157 = vmul.f32 %v140, %v147
  %v158 = vmul.f32 %v141, %v147
  %v159 = vld [vmem:[%s2] sm:$0x1]
  %v161 = vlaneseq
  %v162 = vshrl.u32 %v161, 7
  %v163 = vsub.s32 0, %v162
  %v164 = vrot.slane %v159, %v163
  %v166 = vadd.f32 %v149, %v164
  %v167 = vadd.f32 %v150, %v164
  %v168 = vadd.f32 %v151, %v164
  %v169 = vadd.f32 %v152, %v164
  %v170 = vadd.f32 %v153, %v164
  %v171 = vadd.f32 %v154, %v164
  %v172 = vadd.f32 %v155, %v164
  %v173 = vadd.f32 %v156, %v164
  %v174 = vadd.f32 %v157, %v164
  %v175 = vadd.f32 %v158, %v164
  %v176 = vpack.c.bf16 %v167, %v166
  %v177 = vpack.c.bf16 %v169, %v168
  %v178 = vpack.c.bf16 %v171, %v170
  %v179 = vpack.c.bf16 %v173, %v172
  %v180 = vpack.c.bf16 %v175, %v174
  %v181 = vld [vmem:[%s3] sm:$0xff]
  %v182 = vld [vmem:[%s3 + $0x8] sm:$0xff]
  %v183 = vld [vmem:[%s3 + $0x10] sm:$0xff]
  %v184 = vld [vmem:[%s3 + $0x18] sm:$0xff]
  %v185 = vld [vmem:[%s3 + $0x20] sm:$0xff]
  %v186 = vld [vmem:[%s3 + $0x28] sm:$0xff]
  %v187 = vld [vmem:[%s3 + $0x30] sm:$0xff]
  %v188 = vld [vmem:[%s3 + $0x38] sm:$0xff]
  %v189 = vld [vmem:[%s3 + $0x40] sm:$0xff]
  %v190 = vld [vmem:[%s3 + $0x48] sm:$0xff]
  %v191 = vld [vmem:[%s3 + $0x50] sm:$0xff]
  %v192 = vld [vmem:[%s3 + $0x58] sm:$0xff]
  %v193 = vld [vmem:[%s3 + $0x60] sm:$0xff]
  %v194 = vld [vmem:[%s3 + $0x68] sm:$0xff]
  %v195 = vld [vmem:[%s3 + $0x70] sm:$0xff]
  %v196 = vld [vmem:[%s3 + $0x78] sm:$0xff]
  %v197 = vld [vmem:[%s4] sm:$0x3]
  %v199 = vlaneseq
  %v200 = vshrl.u32 %v199, 7
  %v201 = vsub.s32 0, %v200
  %v202 = vrot.slane %v197, %v201
  %v203 = vlaneseq
  %v204 = vshrl.u32 %v203, 7
  %v205 = vsub.s32 1, %v204
  %v206 = vrot.slane %v197, %v205
  %v225 = vunpack.c.l.b16 %v181
  %v226 = vunpack.c.h.b16 %v181
  %v227 = vunpack.c.l.b16 %v182
  %v228 = vunpack.c.h.b16 %v182
  %v229 = vunpack.c.l.b16 %v183
  %v230 = vunpack.c.h.b16 %v183
  %v231 = vunpack.c.l.b16 %v184
  %v232 = vunpack.c.h.b16 %v184
  %v233 = vunpack.c.l.b16 %v185
  %v234 = vunpack.c.h.b16 %v185
  %v235 = vunpack.c.l.b16 %v186
  %v236 = vunpack.c.h.b16 %v186
  %v237 = vunpack.c.l.b16 %v187
  %v238 = vunpack.c.h.b16 %v187
  %v239 = vunpack.c.l.b16 %v188
  %v240 = vunpack.c.h.b16 %v188
  %v241 = vunpack.c.l.b16 %v189
  %v242 = vunpack.c.h.b16 %v189
  %v243 = vunpack.c.l.b16 %v190
  %v244 = vunpack.c.h.b16 %v190
  %v245 = vunpack.c.l.b16 %v191
  %v246 = vunpack.c.h.b16 %v191
  %v247 = vunpack.c.l.b16 %v192
  %v248 = vunpack.c.h.b16 %v192
  %v249 = vunpack.c.l.b16 %v193
  %v250 = vunpack.c.h.b16 %v193
  %v251 = vunpack.c.l.b16 %v194
  %v252 = vunpack.c.h.b16 %v194
  %v253 = vunpack.c.l.b16 %v195
  %v254 = vunpack.c.h.b16 %v195
  %v255 = vunpack.c.l.b16 %v196
  %v256 = vunpack.c.h.b16 %v196
  %v257 = vpack.c.b16 %v227, %v225
  %v258 = vpack.c.b16 %v228, %v226
  %v259 = vpack.c.b16 %v231, %v229
  %v260 = vpack.c.b16 %v232, %v230
  %v261 = vpack.c.b16 %v235, %v233
  %v262 = vpack.c.b16 %v236, %v234
  %v263 = vpack.c.b16 %v239, %v237
  %v264 = vpack.c.b16 %v240, %v238
  %v265 = vpack.c.b16 %v243, %v241
  %v266 = vpack.c.b16 %v244, %v242
  %v267 = vpack.c.b16 %v247, %v245
  %v268 = vpack.c.b16 %v248, %v246
  %v269 = vpack.c.b16 %v251, %v249
  %v270 = vpack.c.b16 %v252, %v250
  %v271 = vpack.c.b16 %v255, %v253
  %v272 = vpack.c.b16 %v256, %v254
  %289 = vmatprep.subr.bf16.mxu0 %v258
  %290 = vmatpush1.bf16.msra.mxu0 %v257
  %291 = vmatprep.subr.bf16.mxu0 %v260
  %292 = vmatpush1.bf16.msra.mxu0 %v259
  %293 = vmatprep.subr.bf16.mxu0 %v262
  %294 = vmatpush1.bf16.msra.mxu0 %v261
  %295 = vmatprep.subr.bf16.mxu0 %v264
  %296 = vmatpush1.bf16.msra.mxu0 %v263
  %297 = vmatprep.subr.bf16.mxu0 %v266
  %298 = vmatpush1.bf16.msra.mxu0 %v265
  %299 = vmatprep.subr.bf16.mxu0 %v268
  %300 = vmatpush1.bf16.msra.mxu0 %v267
  %301 = vmatprep.subr.bf16.mxu0 %v270
  %302 = vmatpush1.bf16.msra.mxu0 %v269
  %303 = vmatprep.subr.bf16.mxu0 %v272
  %304 = vmatpush1.bf16.msra.mxu0 %v271
  %305 = vmatprep.subr.bf16.mxu0 0
  %306 = vmatpush1.bf16.msra.mxu0 0
  %307 = vmatprep.subr.bf16.mxu0 0
  %308 = vmatpush1.bf16.msra.mxu0 0
  %309 = vmatprep.subr.bf16.mxu0 0
  %310 = vmatpush1.bf16.msra.mxu0 0
  %311 = vmatprep.subr.bf16.mxu0 0
  %312 = vmatpush1.bf16.msra.mxu0 0
  %313 = vmatprep.subr.bf16.mxu0 0
  %314 = vmatpush1.bf16.msra.mxu0 0
  %315 = vmatprep.subr.bf16.mxu0 0
  %316 = vmatpush1.bf16.msra.mxu0 0
  %317 = vmatprep.subr.bf16.mxu0 0
  %318 = vmatpush1.bf16.msra.mxu0 0
  %319 = vmatprep.subr.bf16.mxu0 0
  %320 = vmatpush1.bf16.msra.mxu0 0
  %321 = vmatprep.mubr.bf16.mxu0 0
  %322 = vmatmul.mubr.bf16.gmra.mrb[0].mxu0 %v176
  %v323 = vpop.f32.mrb[0].mxu0
  %v324 = vadd.f32 %v202, %v323
  %v325 = vpop.f32.mrb[0].mxu0
  %v326 = vadd.f32 %v206, %v325
  %v327 = vpop.f32.mrb[0].mxu0
  %v328 = vadd.f32 %v202, %v327
  %v329 = vpop.f32.mrb[0].mxu0
  %v330 = vadd.f32 %v206, %v329
  %331 = vmatprep.mubr.bf16.mxu0 0
  %332 = vmatmul.mubr.bf16.gmra.mrb[0].mxu0 %v177
  %v333 = vpop.f32.mrb[0].mxu0
  %v334 = vadd.f32 %v202, %v333
  %v335 = vpop.f32.mrb[0].mxu0
  %v336 = vadd.f32 %v206, %v335
  %v337 = vpop.f32.mrb[0].mxu0
  %v338 = vadd.f32 %v202, %v337
  %v339 = vpop.f32.mrb[0].mxu0
  %v340 = vadd.f32 %v206, %v339
  %341 = vmatprep.mubr.bf16.mxu0 0
  %342 = vmatmul.mubr.bf16.gmra.mrb[0].mxu0 %v178
  %v343 = vpop.f32.mrb[0].mxu0
  %v344 = vadd.f32 %v202, %v343
  %v345 = vpop.f32.mrb[0].mxu0
  %v346 = vadd.f32 %v206, %v345
  %v347 = vpop.f32.mrb[0].mxu0
  %v348 = vadd.f32 %v202, %v347
  %v349 = vpop.f32.mrb[0].mxu0
  %v350 = vadd.f32 %v206, %v349
  %351 = vmatprep.mubr.bf16.mxu0 0
  %352 = vmatmul.mubr.bf16.gmra.mrb[0].mxu0 %v179
  %v353 = vpop.f32.mrb[0].mxu0
  %v354 = vadd.f32 %v202, %v353
  %v355 = vpop.f32.mrb[0].mxu0
  %v356 = vadd.f32 %v206, %v355
  %v357 = vpop.f32.mrb[0].mxu0
  %v358 = vadd.f32 %v202, %v357
  %v359 = vpop.f32.mrb[0].mxu0
  %v360 = vadd.f32 %v206, %v359
  %361 = vmatprep.mubr.bf16.mxu0 0
  %362 = vmatmul.mubr.bf16.gmra.mrb[0].mxu0 %v180
  %v363 = vpop.f32.mrb[0].mxu0
  %v364 = vadd.f32 %v202, %v363
  %v365 = vpop.f32.mrb[0].mxu0
  %v366 = vadd.f32 %v206, %v365
  %v367 = vpop.f32.mrb[0].mxu0
  %v368 = vadd.f32 %v202, %v367
  %v369 = vpop.f32.mrb[0].mxu0
  %v370 = vadd.f32 %v206, %v369
  %371 = vdwg.mxu0
  %372 = vst [vmem:[%s5] sm:$0xff] %v324
  %373 = vst [vmem:[%s5 + $0x8] sm:$0xff] %v326
  %374 = vst [vmem:[%s5 + $0x10] sm:$0xff] %v328
  %375 = vst [vmem:[%s5 + $0x18] sm:$0xff] %v330
  %376 = vst [vmem:[%s5 + $0x20] sm:$0xff] %v334
  %377 = vst [vmem:[%s5 + $0x28] sm:$0xff] %v336
  %378 = vst [vmem:[%s5 + $0x30] sm:$0xff] %v338
  %379 = vst [vmem:[%s5 + $0x38] sm:$0xff] %v340
  %380 = vst [vmem:[%s5 + $0x40] sm:$0xff] %v344
  %381 = vst [vmem:[%s5 + $0x48] sm:$0xff] %v346
  %382 = vst [vmem:[%s5 + $0x50] sm:$0xff] %v348
  %383 = vst [vmem:[%s5 + $0x58] sm:$0xff] %v350
  %384 = vst [vmem:[%s5 + $0x60] sm:$0xff] %v354
  %385 = vst [vmem:[%s5 + $0x68] sm:$0xff] %v356
  %386 = vst [vmem:[%s5 + $0x70] sm:$0xff] %v358
  %387 = vst [vmem:[%s5 + $0x78] sm:$0xff] %v360
  %388 = vst [vmem:[%s5 + $0x80] sm:$0xff] %v364
  %389 = vst [vmem:[%s5 + $0x88] sm:$0xff] %v366
  %390 = vst [vmem:[%s5 + $0x90] sm:$0xff] %v368
  %391 = vst [vmem:[%s5 + $0x98] sm:$0xff] %v370
  // Predicated region
  $region22: #{autoregressive_forward.12} parent=0 // pred_check
    _
  $region23: #{autoregressive_forward.12} parent=0 // pred_check_branch
    %393 = sbr.rel (0) target = $region25
  $region24: #{autoregressive_forward.12} parent=0 // pred_region
    _
  $region25: #{autoregressive_forward.12} parent=0 // pred_fallthru
    _
  // Predicated region
  $region26: #{autoregressive_forward.12} parent=0 // pred_check
    _
  $region27: #{autoregressive_forward.12} parent=0 // pred_check_branch
    %395 = sbr.rel (0) target = $region29
  $region28: #{autoregressive_forward.12} parent=0 // pred_region
    _
  $region29: #{autoregressive_forward.12} parent=0 // pred_fallthru
    _

// kernel: autoregressive_forward.21
$region0: #{autoregressive_forward.21}
  #allocation0 [shape = 'u32[]', space=smem, size = 0x4, offset = 0x4, fixed_abs, tag = 'smem constant byte address 0x4 - core index']
  #allocation1 [shape = 'u32[144,128]{1,0:T(1,128)}', space=vmem, size = 0x12000, scoped, tag = 'internal scratch']
  %s0 = inlined_call_operand.vmem [shape: f32[32,128], index: 0, kind: input, shape index: {}]
  %s1 = inlined_call_operand.vmem [shape: f32[1,128], index: 1, kind: input, shape index: {}]
  %s2 = inlined_call_operand.vmem [shape: f32[1,128], index: 2, kind: input, shape index: {}]
  %s3 = inlined_call_operand.vmem [shape: bf16[128,256], index: 3, kind: input, shape index: {}]
  %s4 = inlined_call_operand.vmem [shape: f32[1,256], index: 4, kind: input, shape index: {}]
  %s5 = inlined_call_operand.vmem [shape: f32[32,256], index: 5, kind: output, shape index: {}]
  %s6 = sld [smem:[#allocation0]]
  $region30: #{autoregressive_forward.21} parent=0
    _
  %s8 = ssub.s32 1, %s6
  %s9 = scalar_select 0, %s8, %s6
  // Predicated region
  $region2: #{autoregressive_forward.21} parent=0 // pred_check
    _
  $region3: #{autoregressive_forward.21} parent=0 // pred_check_branch
    %11 = sbr.rel (0) target = $region5
  $region4: #{autoregressive_forward.21} parent=0 // pred_region
    _
  $region5: #{autoregressive_forward.21} parent=0 // pred_fallthru
    _
  // Predicated region
  $region6: #{autoregressive_forward.21} parent=0 // pred_check
    _
  $region7: #{autoregressive_forward.21} parent=0 // pred_check_branch
    %13 = sbr.rel (0) target = $region9
  $region8: #{autoregressive_forward.21} parent=0 // pred_region
    _
  $region9: #{autoregressive_forward.21} parent=0 // pred_fallthru
    _
  // Predicated region
  $region10: #{autoregressive_forward.21} parent=0 // pred_check
    _
  $region11: #{autoregressive_forward.21} parent=0 // pred_check_branch
    %15 = sbr.rel (0) target = $region13
  $region12: #{autoregressive_forward.21} parent=0 // pred_region
    _
  $region13: #{autoregressive_forward.21} parent=0 // pred_fallthru
    _
  // Predicated region
  $region14: #{autoregressive_forward.21} parent=0 // pred_check
    _
  $region15: #{autoregressive_forward.21} parent=0 // pred_check_branch
    %17 = sbr.rel (0) target = $region17
  $region16: #{autoregressive_forward.21} parent=0 // pred_region
    _
  $region17: #{autoregressive_forward.21} parent=0 // pred_fallthru
    _
  // Predicated region
  $region18: #{autoregressive_forward.21} parent=0 // pred_check
    _
  $region19: #{autoregressive_forward.21} parent=0 // pred_check_branch
    %19 = sbr.rel (0) target = $region21
  $region20: #{autoregressive_forward.21} parent=0 // pred_region
    _
  $region21: #{autoregressive_forward.21} parent=0 // pred_fallthru
    _
  %v21 = vld [vmem:[%s0] sm:$0xff]
  %v22 = vld [vmem:[%s0 + $0x8] sm:$0xff]
  %v23 = vld [vmem:[%s0 + $0x10] sm:$0xff]
  %v24 = vld [vmem:[%s0 + $0x18] sm:$0xff]
  %25 = vadd.xlane.f32.xlu0 %v21
  %v26 = vpop.xlane.xlu0 %25
  %27 = vadd.xlane.f32.xlu0 %v22
  %v28 = vpop.xlane.xlu0 %27
  %29 = vadd.xlane.f32.xlu0 %v23
  %v30 = vpop.xlane.xlu0 %29
  %31 = vadd.xlane.f32.xlu0 %v24
  %v32 = vpop.xlane.xlu0 %31
  %v33 = vrcp.pop 128.0
  %v34 = vmul.f32 %v26, %v33
  %v35 = vmul.f32 %v28, %v33
  %v36 = vmul.f32 %v30, %v33
  %v37 = vmul.f32 %v32, %v33
  %v38 = vsub.f32 %v21, %v34
  %v39 = vsub.f32 %v22, %v35
  %v40 = vsub.f32 %v23, %v36
  %v41 = vsub.f32 %v24, %v37
  %v42 = vmul.f32 %v38, %v38
  %v43 = vmul.f32 %v39, %v39
  %v44 = vmul.f32 %v40, %v40
  %v45 = vmul.f32 %v41, %v41
  %46 = vadd.xlane.f32.xlu0 %v42
  %v47 = vpop.xlane.xlu0 %46
  %48 = vadd.xlane.f32.xlu0 %v43
  %v49 = vpop.xlane.xlu0 %48
  %50 = vadd.xlane.f32.xlu0 %v44
  %v51 = vpop.xlane.xlu0 %50
  %52 = vadd.xlane.f32.xlu0 %v45
  %v53 = vpop.xlane.xlu0 %52
  %v54 = vmul.f32 %v47, %v33
  %v55 = vmul.f32 %v49, %v33
  %v56 = vmul.f32 %v51, %v33
  %v57 = vmul.f32 %v53, %v33
  %v58 = vadd.f32 %v54, 1e-05
  %v59 = vadd.f32 %v55, 1e-05
  %v60 = vadd.f32 %v56, 1e-05
  %v61 = vadd.f32 %v57, 1e-05
  %v62 = vrsqrt.pop %v58
  %v63 = vrsqrt.pop %v59
  %v64 = vrsqrt.pop %v60
  %v65 = vrsqrt.pop %v61
  %v66 = vmul.f32 %v38, %v62
  %v67 = vmul.f32 %v39, %v63
  %v68 = vmul.f32 %v40, %v64
  %v69 = vmul.f32 %v41, %v65
  %v70 = vld [vmem:[%s1] sm:$0x1]
  %v72 = vlaneseq
  %v73 = vshrl.u32 %v72, 7
  %v74 = vsub.s32 0, %v73
  %v75 = vrot.slane %v70, %v74
  %v77 = vmul.f32 %v66, %v75
  %v78 = vmul.f32 %v67, %v75
  %v79 = vmul.f32 %v68, %v75
  %v80 = vmul.f32 %v69, %v75
  %v81 = vld [vmem:[%s2] sm:$0x1]
  %v83 = vlaneseq
  %v84 = vshrl.u32 %v83, 7
  %v85 = vsub.s32 0, %v84
  %v86 = vrot.slane %v81, %v85
  %v88 = vadd.f32 %v77, %v86
  %v89 = vadd.f32 %v78, %v86
  %v90 = vadd.f32 %v79, %v86
  %v91 = vadd.f32 %v80, %v86
  %v92 = vpack.c.bf16 %v89, %v88
  %v93 = vpack.c.bf16 %v91, %v90
  %v94 = vld [vmem:[%s3] sm:$0xff]
  %v95 = vld [vmem:[%s3 + $0x8] sm:$0xff]
  %v96 = vld [vmem:[%s3 + $0x10] sm:$0xff]
  %v97 = vld [vmem:[%s3 + $0x18] sm:$0xff]
  %v98 = vld [vmem:[%s3 + $0x20] sm:$0xff]
  %v99 = vld [vmem:[%s3 + $0x28] sm:$0xff]
  %v100 = vld [vmem:[%s3 + $0x30] sm:$0xff]
  %v101 = vld [vmem:[%s3 + $0x38] sm:$0xff]
  %v102 = vld [vmem:[%s3 + $0x40] sm:$0xff]
  %v103 = vld [vmem:[%s3 + $0x48] sm:$0xff]
  %v104 = vld [vmem:[%s3 + $0x50] sm:$0xff]
  %v105 = vld [vmem:[%s3 + $0x58] sm:$0xff]
  %v106 = vld [vmem:[%s3 + $0x60] sm:$0xff]
  %v107 = vld [vmem:[%s3 + $0x68] sm:$0xff]
  %v108 = vld [vmem:[%s3 + $0x70] sm:$0xff]
  %v109 = vld [vmem:[%s3 + $0x78] sm:$0xff]
  %v110 = vld [vmem:[%s4] sm:$0x3]
  %v112 = vlaneseq
  %v113 = vshrl.u32 %v112, 7
  %v114 = vsub.s32 0, %v113
  %v115 = vrot.slane %v110, %v114
  %v116 = vlaneseq
  %v117 = vshrl.u32 %v116, 7
  %v118 = vsub.s32 1, %v117
  %v119 = vrot.slane %v110, %v118
  %v138 = vunpack.c.l.b16 %v94
  %v139 = vunpack.c.h.b16 %v94
  %v140 = vunpack.c.l.b16 %v95
  %v141 = vunpack.c.h.b16 %v95
  %v142 = vunpack.c.l.b16 %v96
  %v143 = vunpack.c.h.b16 %v96
  %v144 = vunpack.c.l.b16 %v97
  %v145 = vunpack.c.h.b16 %v97
  %v146 = vunpack.c.l.b16 %v98
  %v147 = vunpack.c.h.b16 %v98
  %v148 = vunpack.c.l.b16 %v99
  %v149 = vunpack.c.h.b16 %v99
  %v150 = vunpack.c.l.b16 %v100
  %v151 = vunpack.c.h.b16 %v100
  %v152 = vunpack.c.l.b16 %v101
  %v153 = vunpack.c.h.b16 %v101
  %v154 = vunpack.c.l.b16 %v102
  %v155 = vunpack.c.h.b16 %v102
  %v156 = vunpack.c.l.b16 %v103
  %v157 = vunpack.c.h.b16 %v103
  %v158 = vunpack.c.l.b16 %v104
  %v159 = vunpack.c.h.b16 %v104
  %v160 = vunpack.c.l.b16 %v105
  %v161 = vunpack.c.h.b16 %v105
  %v162 = vunpack.c.l.b16 %v106
  %v163 = vunpack.c.h.b16 %v106
  %v164 = vunpack.c.l.b16 %v107
  %v165 = vunpack.c.h.b16 %v107
  %v166 = vunpack.c.l.b16 %v108
  %v167 = vunpack.c.h.b16 %v108
  %v168 = vunpack.c.l.b16 %v109
  %v169 = vunpack.c.h.b16 %v109
  %v170 = vpack.c.b16 %v140, %v138
  %v171 = vpack.c.b16 %v141, %v139
  %v172 = vpack.c.b16 %v144, %v142
  %v173 = vpack.c.b16 %v145, %v143
  %v174 = vpack.c.b16 %v148, %v146
  %v175 = vpack.c.b16 %v149, %v147
  %v176 = vpack.c.b16 %v152, %v150
  %v177 = vpack.c.b16 %v153, %v151
  %v178 = vpack.c.b16 %v156, %v154
  %v179 = vpack.c.b16 %v157, %v155
  %v180 = vpack.c.b16 %v160, %v158
  %v181 = vpack.c.b16 %v161, %v159
  %v182 = vpack.c.b16 %v164, %v162
  %v183 = vpack.c.b16 %v165, %v163
  %v184 = vpack.c.b16 %v168, %v166
  %v185 = vpack.c.b16 %v169, %v167
  %202 = vmatprep.subr.bf16.mxu0 %v171
  %203 = vmatpush1.bf16.msra.mxu0 %v170
  %204 = vmatprep.subr.bf16.mxu0 %v173
  %205 = vmatpush1.bf16.msra.mxu0 %v172
  %206 = vmatprep.subr.bf16.mxu0 %v175
  %207 = vmatpush1.bf16.msra.mxu0 %v174
  %208 = vmatprep.subr.bf16.mxu0 %v177
  %209 = vmatpush1.bf16.msra.mxu0 %v176
  %210 = vmatprep.subr.bf16.mxu0 %v179
  %211 = vmatpush1.bf16.msra.mxu0 %v178
  %212 = vmatprep.subr.bf16.mxu0 %v181
  %213 = vmatpush1.bf16.msra.mxu0 %v180
  %214 = vmatprep.subr.bf16.mxu0 %v183
  %215 = vmatpush1.bf16.msra.mxu0 %v182
  %216 = vmatprep.subr.bf16.mxu0 %v185
  %217 = vmatpush1.bf16.msra.mxu0 %v184
  %218 = vmatprep.subr.bf16.mxu0 0
  %219 = vmatpush1.bf16.msra.mxu0 0
  %220 = vmatprep.subr.bf16.mxu0 0
  %221 = vmatpush1.bf16.msra.mxu0 0
  %222 = vmatprep.subr.bf16.mxu0 0
  %223 = vmatpush1.bf16.msra.mxu0 0
  %224 = vmatprep.subr.bf16.mxu0 0
  %225 = vmatpush1.bf16.msra.mxu0 0
  %226 = vmatprep.subr.bf16.mxu0 0
  %227 = vmatpush1.bf16.msra.mxu0 0
  %228 = vmatprep.subr.bf16.mxu0 0
  %229 = vmatpush1.bf16.msra.mxu0 0
  %230 = vmatprep.subr.bf16.mxu0 0
  %231 = vmatpush1.bf16.msra.mxu0 0
  %232 = vmatprep.subr.bf16.mxu0 0
  %233 = vmatpush1.bf16.msra.mxu0 0
  %234 = vmatprep.mubr.bf16.mxu0 0
  %235 = vmatmul.mubr.bf16.gmra.mrb[0].mxu0 %v92
  %v236 = vpop.f32.mrb[0].mxu0
  %v237 = vadd.f32 %v115, %v236
  %v238 = vpop.f32.mrb[0].mxu0
  %v239 = vadd.f32 %v119, %v238
  %v240 = vpop.f32.mrb[0].mxu0
  %v241 = vadd.f32 %v115, %v240
  %v242 = vpop.f32.mrb[0].mxu0
  %v243 = vadd.f32 %v119, %v242
  %244 = vmatprep.mubr.bf16.mxu0 0
  %245 = vmatmul.mubr.bf16.gmra.mrb[0].mxu0 %v93
  %v246 = vpop.f32.mrb[0].mxu0
  %v247 = vadd.f32 %v115, %v246
  %v248 = vpop.f32.mrb[0].mxu0
  %v249 = vadd.f32 %v119, %v248
  %v250 = vpop.f32.mrb[0].mxu0
  %v251 = vadd.f32 %v115, %v250
  %v252 = vpop.f32.mrb[0].mxu0
  %v253 = vadd.f32 %v119, %v252
  %254 = vdwg.mxu0
  %255 = vst [vmem:[%s5] sm:$0xff] %v237
  %256 = vst [vmem:[%s5 + $0x8] sm:$0xff] %v239
  %257 = vst [vmem:[%s5 + $0x10] sm:$0xff] %v241
  %258 = vst [vmem:[%s5 + $0x18] sm:$0xff] %v243
  %259 = vst [vmem:[%s5 + $0x20] sm:$0xff] %v247
  %260 = vst [vmem:[%s5 + $0x28] sm:$0xff] %v249
  %261 = vst [vmem:[%s5 + $0x30] sm:$0xff] %v251
  %262 = vst [vmem:[%s5 + $0x38] sm:$0xff] %v253
  // Predicated region
  $region22: #{autoregressive_forward.21} parent=0 // pred_check
    _
  $region23: #{autoregressive_forward.21} parent=0 // pred_check_branch
    %264 = sbr.rel (0) target = $region25
  $region24: #{autoregressive_forward.21} parent=0 // pred_region
    _
  $region25: #{autoregressive_forward.21} parent=0 // pred_fallthru
    _
  // Predicated region
  $region26: #{autoregressive_forward.21} parent=0 // pred_check
    _
  $region27: #{autoregressive_forward.21} parent=0 // pred_check_branch
    %266 = sbr.rel (0) target = $region29
  $region28: #{autoregressive_forward.21} parent=0 // pred_region
    _
  $region29: #{autoregressive_forward.21} parent=0 // pred_fallthru
    _

// kernel: autoregressive_forward.15
$region0: #{autoregressive_forward.15}
  #allocation0 [shape = 'u32[]', space=smem, size = 0x4, offset = 0x4, fixed_abs, tag = 'smem constant byte address 0x4 - core index']
  #allocation1 [shape = 'u32[144,128]{1,0:T(1,128)}', space=vmem, size = 0x12000, scoped, tag = 'internal scratch']
  #allocation2 [shape = 'f32[32,128]{1,0:T(8,128)}', space=vmem, size = 0x4000, scoped, tag = 'scratch operand']
  %s0 = inlined_call_operand.vmem [shape: f32[32,128], index: 0, kind: input, shape index: {}]
  %s1 = inlined_call_operand.vmem [shape: f32[1,128], index: 1, kind: input, shape index: {}]
  %s2 = inlined_call_operand.vmem [shape: f32[1,128], index: 2, kind: input, shape index: {}]
  %s3 = inlined_call_operand.vmem [shape: bf16[128,256], index: 3, kind: input, shape index: {}]
  %s4 = inlined_call_operand.vmem [shape: f32[1,256], index: 4, kind: input, shape index: {}]
  %s5 = inlined_call_operand.vmem [shape: bf16[256,128], index: 5, kind: input, shape index: {}]
  %s6 = inlined_call_operand.vmem [shape: f32[1,128], index: 6, kind: input, shape index: {}]
  %s7 = inlined_call_operand.vmem [shape: f32[32,128], index: 7, kind: output, shape index: {}]
  %s8 = sld [smem:[#allocation0]]
  $region46: #{autoregressive_forward.15} parent=0
    _
  %s10 = ssub.s32 1, %s8
  %s11 = scalar_select 0, %s10, %s8
  // Predicated region
  $region2: #{autoregressive_forward.15} parent=0 // pred_check
    _
  $region3: #{autoregressive_forward.15} parent=0 // pred_check_branch
    %13 = sbr.rel (0) target = $region5
  $region4: #{autoregressive_forward.15} parent=0 // pred_region
    _
  $region5: #{autoregressive_forward.15} parent=0 // pred_fallthru
    _
  // Predicated region
  $region6: #{autoregressive_forward.15} parent=0 // pred_check
    _
  $region7: #{autoregressive_forward.15} parent=0 // pred_check_branch
    %15 = sbr.rel (0) target = $region9
  $region8: #{autoregressive_forward.15} parent=0 // pred_region
    _
  $region9: #{autoregressive_forward.15} parent=0 // pred_fallthru
    _
  // Predicated region
  $region10: #{autoregressive_forward.15} parent=0 // pred_check
    _
  $region11: #{autoregressive_forward.15} parent=0 // pred_check_branch
    %17 = sbr.rel (0) target = $region13
  $region12: #{autoregressive_forward.15} parent=0 // pred_region
    _
  $region13: #{autoregressive_forward.15} parent=0 // pred_fallthru
    _
  // Predicated region
  $region14: #{autoregressive_forward.15} parent=0 // pred_check
    _
  $region15: #{autoregressive_forward.15} parent=0 // pred_check_branch
    %19 = sbr.rel (0) target = $region17
  $region16: #{autoregressive_forward.15} parent=0 // pred_region
    _
  $region17: #{autoregressive_forward.15} parent=0 // pred_fallthru
    _
  // Predicated region
  $region18: #{autoregressive_forward.15} parent=0 // pred_check
    _
  $region19: #{autoregressive_forward.15} parent=0 // pred_check_branch
    %21 = sbr.rel (0) target = $region21
  $region20: #{autoregressive_forward.15} parent=0 // pred_region
    _
  $region21: #{autoregressive_forward.15} parent=0 // pred_fallthru
    _
  // Predicated region
  $region22: #{autoregressive_forward.15} parent=0 // pred_check
    _
  $region23: #{autoregressive_forward.15} parent=0 // pred_check_branch
    %23 = sbr.rel (0) target = $region25
  $region24: #{autoregressive_forward.15} parent=0 // pred_region
    _
  $region25: #{autoregressive_forward.15} parent=0 // pred_fallthru
    _
  // Predicated region
  $region26: #{autoregressive_forward.15} parent=0 // pred_check
    _
  $region27: #{autoregressive_forward.15} parent=0 // pred_check_branch
    %25 = sbr.rel (0) target = $region29
  $region28: #{autoregressive_forward.15} parent=0 // pred_region
    _
  $region29: #{autoregressive_forward.15} parent=0 // pred_fallthru
    _
  %v27 = vld [vmem:[%s0] sm:$0xff]
  %v28 = vld [vmem:[%s0 + $0x8] sm:$0xff]
  %v29 = vld [vmem:[%s0 + $0x10] sm:$0xff]
  %v30 = vld [vmem:[%s0 + $0x18] sm:$0xff]
  %p31 = scmp.eq.s32.totalorder 0, 0
  // Predicated region
  $region30: #{autoregressive_forward.15} parent=0 // pred_check
    %p32 = pneg %p31
  $region31: #{autoregressive_forward.15} parent=0 // pred_check_branch
    %34 = sbr.rel (%p32) target = $region33
  $region32: #{autoregressive_forward.15} parent=0 // pred_region
    %v35 = vld [vmem:[%s6] sm:$0x1]
    %v37 = vlaneseq
    %v38 = vshrl.u32 %v37, 7
    %v39 = vsub.s32 0, %v38
    %v40 = vrot.slane %v35, %v39
    %v42 = vadd.f32 %v27, %v40
    %v43 = vadd.f32 %v28, %v40
    %v44 = vadd.f32 %v29, %v40
    %v45 = vadd.f32 %v30, %v40
    %46 = vst [vmem:[#allocation2] sm:$0xff] %v42
    %47 = vst [vmem:[#allocation2 + $0x8] sm:$0xff] %v43
    %48 = vst [vmem:[#allocation2 + $0x10] sm:$0xff] %v44
    %49 = vst [vmem:[#allocation2 + $0x18] sm:$0xff] %v45
  $region33: #{autoregressive_forward.15} parent=0 // pred_fallthru
    _
  %50 = vadd.xlane.f32.xlu0 %v27
  %v51 = vpop.xlane.xlu0 %50
  %52 = vadd.xlane.f32.xlu0 %v28
  %v53 = vpop.xlane.xlu0 %52
  %54 = vadd.xlane.f32.xlu0 %v29
  %v55 = vpop.xlane.xlu0 %54
  %56 = vadd.xlane.f32.xlu0 %v30
  %v57 = vpop.xlane.xlu0 %56
  %v58 = vrcp.pop 128.0
  %v59 = vmul.f32 %v51, %v58
  %v60 = vmul.f32 %v53, %v58
  %v61 = vmul.f32 %v55, %v58
  %v62 = vmul.f32 %v57, %v58
  %v63 = vsub.f32 %v27, %v59
  %v64 = vsub.f32 %v28, %v60
  %v65 = vsub.f32 %v29, %v61
  %v66 = vsub.f32 %v30, %v62
  %v67 = vmul.f32 %v63, %v63
  %v68 = vmul.f32 %v64, %v64
  %v69 = vmul.f32 %v65, %v65
  %v70 = vmul.f32 %v66, %v66
  %71 = vadd.xlane.f32.xlu0 %v67
  %v72 = vpop.xlane.xlu0 %71
  %73 = vadd.xlane.f32.xlu0 %v68
  %v74 = vpop.xlane.xlu0 %73
  %75 = vadd.xlane.f32.xlu0 %v69
  %v76 = vpop.xlane.xlu0 %75
  %77 = vadd.xlane.f32.xlu0 %v70
  %v78 = vpop.xlane.xlu0 %77
  %v79 = vmul.f32 %v72, %v58
  %v80 = vmul.f32 %v74, %v58
  %v81 = vmul.f32 %v76, %v58
  %v82 = vmul.f32 %v78, %v58
  %v83 = vadd.f32 %v79, 1e-05
  %v84 = vadd.f32 %v80, 1e-05
  %v85 = vadd.f32 %v81, 1e-05
  %v86 = vadd.f32 %v82, 1e-05
  %v87 = vrsqrt.pop %v83
  %v88 = vrsqrt.pop %v84
  %v89 = vrsqrt.pop %v85
  %v90 = vrsqrt.pop %v86
  %v91 = vmul.f32 %v63, %v87
  %v92 = vmul.f32 %v64, %v88
  %v93 = vmul.f32 %v65, %v89
  %v94 = vmul.f32 %v66, %v90
  %v95 = vld [vmem:[%s1] sm:$0x1]
  %v97 = vlaneseq
  %v98 = vshrl.u32 %v97, 7
  %v99 = vsub.s32 0, %v98
  %v100 = vrot.slane %v95, %v99
  %v102 = vmul.f32 %v91, %v100
  %v103 = vmul.f32 %v92, %v100
  %v104 = vmul.f32 %v93, %v100
  %v105 = vmul.f32 %v94, %v100
  %v106 = vld [vmem:[%s2] sm:$0x1]
  %v108 = vlaneseq
  %v109 = vshrl.u32 %v108, 7
  %v110 = vsub.s32 0, %v109
  %v111 = vrot.slane %v106, %v110
  %v113 = vadd.f32 %v102, %v111
  %v114 = vadd.f32 %v103, %v111
  %v115 = vadd.f32 %v104, %v111
  %v116 = vadd.f32 %v105, %v111
  %v117 = vpack.c.bf16 %v114, %v113
  %v118 = vpack.c.bf16 %v116, %v115
  %v119 = vld [vmem:[%s3] sm:$0xff]
  %v120 = vld [vmem:[%s3 + $0x8] sm:$0xff]
  %v121 = vld [vmem:[%s3 + $0x10] sm:$0xff]
  %v122 = vld [vmem:[%s3 + $0x18] sm:$0xff]
  %v123 = vld [vmem:[%s3 + $0x20] sm:$0xff]
  %v124 = vld [vmem:[%s3 + $0x28] sm:$0xff]
  %v125 = vld [vmem:[%s3 + $0x30] sm:$0xff]
  %v126 = vld [vmem:[%s3 + $0x38] sm:$0xff]
  %v127 = vld [vmem:[%s3 + $0x40] sm:$0xff]
  %v128 = vld [vmem:[%s3 + $0x48] sm:$0xff]
  %v129 = vld [vmem:[%s3 + $0x50] sm:$0xff]
  %v130 = vld [vmem:[%s3 + $0x58] sm:$0xff]
  %v131 = vld [vmem:[%s3 + $0x60] sm:$0xff]
  %v132 = vld [vmem:[%s3 + $0x68] sm:$0xff]
  %v133 = vld [vmem:[%s3 + $0x70] sm:$0xff]
  %v134 = vld [vmem:[%s3 + $0x78] sm:$0xff]
  %v135 = vld [vmem:[%s4] sm:$0x3]
  %v137 = vlaneseq
  %v138 = vshrl.u32 %v137, 7
  %v139 = vsub.s32 0, %v138
  %v140 = vrot.slane %v135, %v139
  %v141 = vlaneseq
  %v142 = vshrl.u32 %v141, 7
  %v143 = vsub.s32 1, %v142
  %v144 = vrot.slane %v135, %v143
  %v163 = vunpack.c.l.b16 %v119
  %v164 = vunpack.c.h.b16 %v119
  %v165 = vunpack.c.l.b16 %v120
  %v166 = vunpack.c.h.b16 %v120
  %v167 = vunpack.c.l.b16 %v121
  %v168 = vunpack.c.h.b16 %v121
  %v169 = vunpack.c.l.b16 %v122
  %v170 = vunpack.c.h.b16 %v122
  %v171 = vunpack.c.l.b16 %v123
  %v172 = vunpack.c.h.b16 %v123
  %v173 = vunpack.c.l.b16 %v124
  %v174 = vunpack.c.h.b16 %v124
  %v175 = vunpack.c.l.b16 %v125
  %v176 = vunpack.c.h.b16 %v125
  %v177 = vunpack.c.l.b16 %v126
  %v178 = vunpack.c.h.b16 %v126
  %v179 = vunpack.c.l.b16 %v127
  %v180 = vunpack.c.h.b16 %v127
  %v181 = vunpack.c.l.b16 %v128
  %v182 = vunpack.c.h.b16 %v128
  %v183 = vunpack.c.l.b16 %v129
  %v184 = vunpack.c.h.b16 %v129
  %v185 = vunpack.c.l.b16 %v130
  %v186 = vunpack.c.h.b16 %v130
  %v187 = vunpack.c.l.b16 %v131
  %v188 = vunpack.c.h.b16 %v131
  %v189 = vunpack.c.l.b16 %v132
  %v190 = vunpack.c.h.b16 %v132
  %v191 = vunpack.c.l.b16 %v133
  %v192 = vunpack.c.h.b16 %v133
  %v193 = vunpack.c.l.b16 %v134
  %v194 = vunpack.c.h.b16 %v134
  %v195 = vpack.c.b16 %v165, %v163
  %v196 = vpack.c.b16 %v166, %v164
  %v197 = vpack.c.b16 %v169, %v167
  %v198 = vpack.c.b16 %v170, %v168
  %v199 = vpack.c.b16 %v173, %v171
  %v200 = vpack.c.b16 %v174, %v172
  %v201 = vpack.c.b16 %v177, %v175
  %v202 = vpack.c.b16 %v178, %v176
  %v203 = vpack.c.b16 %v181, %v179
  %v204 = vpack.c.b16 %v182, %v180
  %v205 = vpack.c.b16 %v185, %v183
  %v206 = vpack.c.b16 %v186, %v184
  %v207 = vpack.c.b16 %v189, %v187
  %v208 = vpack.c.b16 %v190, %v188
  %v209 = vpack.c.b16 %v193, %v191
  %v210 = vpack.c.b16 %v194, %v192
  %227 = vmatprep.subr.bf16.mxu0 %v196
  %228 = vmatpush1.bf16.msra.mxu0 %v195
  %229 = vmatprep.subr.bf16.mxu0 %v198
  %230 = vmatpush1.bf16.msra.mxu0 %v197
  %231 = vmatprep.subr.bf16.mxu0 %v200
  %232 = vmatpush1.bf16.msra.mxu0 %v199
  %233 = vmatprep.subr.bf16.mxu0 %v202
  %234 = vmatpush1.bf16.msra.mxu0 %v201
  %235 = vmatprep.subr.bf16.mxu0 %v204
  %236 = vmatpush1.bf16.msra.mxu0 %v203
  %237 = vmatprep.subr.bf16.mxu0 %v206
  %238 = vmatpush1.bf16.msra.mxu0 %v205
  %239 = vmatprep.subr.bf16.mxu0 %v208
  %240 = vmatpush1.bf16.msra.mxu0 %v207
  %241 = vmatprep.subr.bf16.mxu0 %v210
  %242 = vmatpush1.bf16.msra.mxu0 %v209
  %243 = vmatprep.subr.bf16.mxu0 0
  %244 = vmatpush1.bf16.msra.mxu0 0
  %245 = vmatprep.subr.bf16.mxu0 0
  %246 = vmatpush1.bf16.msra.mxu0 0
  %247 = vmatprep.subr.bf16.mxu0 0
  %248 = vmatpush1.bf16.msra.mxu0 0
  %249 = vmatprep.subr.bf16.mxu0 0
  %250 = vmatpush1.bf16.msra.mxu0 0
  %251 = vmatprep.subr.bf16.mxu0 0
  %252 = vmatpush1.bf16.msra.mxu0 0
  %253 = vmatprep.subr.bf16.mxu0 0
  %254 = vmatpush1.bf16.msra.mxu0 0
  %255 = vmatprep.subr.bf16.mxu0 0
  %256 = vmatpush1.bf16.msra.mxu0 0
  %257 = vmatprep.subr.bf16.mxu0 0
  %258 = vmatpush1.bf16.msra.mxu0 0
  %259 = vmatprep.mubr.bf16.mxu0 0
  %260 = vmatmul.mubr.bf16.gmra.mrb[0].mxu0 %v117
  %v261 = vpop.f32.mrb[0].mxu0
  %v262 = vadd.f32 %v140, %v261
  %v263 = vpop.f32.mrb[0].mxu0
  %v264 = vadd.f32 %v144, %v263
  %v265 = vpop.f32.mrb[0].mxu0
  %v266 = vadd.f32 %v140, %v265
  %v267 = vpop.f32.mrb[0].mxu0
  %v268 = vadd.f32 %v144, %v267
  %269 = vmatprep.mubr.bf16.mxu0 0
  %270 = vmatmul.mubr.bf16.gmra.mrb[0].mxu0 %v118
  %v271 = vpop.f32.mrb[0].mxu0
  %v272 = vadd.f32 %v140, %v271
  %v273 = vpop.f32.mrb[0].mxu0
  %v274 = vadd.f32 %v144, %v273
  %v275 = vpop.f32.mrb[0].mxu0
  %v276 = vadd.f32 %v140, %v275
  %v277 = vpop.f32.mrb[0].mxu0
  %v278 = vadd.f32 %v144, %v277
  %279 = vdwg.mxu0
  %v280 = vmax.f32 %v262, 0.0
  %v281 = vmax.f32 %v264, 0.0
  %v282 = vmax.f32 %v266, 0.0
  %v283 = vmax.f32 %v268, 0.0
  %v284 = vmax.f32 %v272, 0.0
  %v285 = vmax.f32 %v274, 0.0
  %v286 = vmax.f32 %v276, 0.0
  %v287 = vmax.f32 %v278, 0.0
  %v288 = vld [vmem:[#allocation2] sm:$0xff]
  %v289 = vld [vmem:[#allocation2 + $0x8] sm:$0xff]
  %v290 = vld [vmem:[#allocation2 + $0x10] sm:$0xff]
  %v291 = vld [vmem:[#allocation2 + $0x18] sm:$0xff]
  %v292 = vpack.c.bf16 %v282, %v280
  %v293 = vpack.c.bf16 %v283, %v281
  %v294 = vpack.c.bf16 %v286, %v284
  %v295 = vpack.c.bf16 %v287, %v285
  %v296 = vld [vmem:[%s5] sm:$0xf]
  %v297 = vld [vmem:[%s5 + $0x4] sm:$0xf]
  %v298 = vld [vmem:[%s5 + $0x8] sm:$0xf]
  %v299 = vld [vmem:[%s5 + $0xc] sm:$0xf]
  %v300 = vld [vmem:[%s5 + $0x10] sm:$0xf]
  %v301 = vld [vmem:[%s5 + $0x14] sm:$0xf]
  %v302 = vld [vmem:[%s5 + $0x18] sm:$0xf]
  %v303 = vld [vmem:[%s5 + $0x1c] sm:$0xf]
  %v304 = vld [vmem:[%s5 + $0x20] sm:$0xf]
  %v305 = vld [vmem:[%s5 + $0x24] sm:$0xf]
  %v306 = vld [vmem:[%s5 + $0x28] sm:$0xf]
  %v307 = vld [vmem:[%s5 + $0x2c] sm:$0xf]
  %v308 = vld [vmem:[%s5 + $0x30] sm:$0xf]
  %v309 = vld [vmem:[%s5 + $0x34] sm:$0xf]
  %v310 = vld [vmem:[%s5 + $0x38] sm:$0xf]
  %v311 = vld [vmem:[%s5 + $0x3c] sm:$0xf]
  %v312 = vld [vmem:[%s5 + $0x40] sm:$0xf]
  %v313 = vld [vmem:[%s5 + $0x44] sm:$0xf]
  %v314 = vld [vmem:[%s5 + $0x48] sm:$0xf]
  %v315 = vld [vmem:[%s5 + $0x4c] sm:$0xf]
  %v316 = vld [vmem:[%s5 + $0x50] sm:$0xf]
  %v317 = vld [vmem:[%s5 + $0x54] sm:$0xf]
  %v318 = vld [vmem:[%s5 + $0x58] sm:$0xf]
  %v319 = vld [vmem:[%s5 + $0x5c] sm:$0xf]
  %v320 = vld [vmem:[%s5 + $0x60] sm:$0xf]
  %v321 = vld [vmem:[%s5 + $0x64] sm:$0xf]
  %v322 = vld [vmem:[%s5 + $0x68] sm:$0xf]
  %v323 = vld [vmem:[%s5 + $0x6c] sm:$0xf]
  %v324 = vld [vmem:[%s5 + $0x70] sm:$0xf]
  %v325 = vld [vmem:[%s5 + $0x74] sm:$0xf]
  %v326 = vld [vmem:[%s5 + $0x78] sm:$0xf]
  %v327 = vld [vmem:[%s5 + $0x7c] sm:$0xf]
  %v360 = vunpack.c.l.b16 %v296
  %v361 = vunpack.c.l.b16 %v297
  %v362 = vunpack.c.l.b16 %v298
  %v363 = vunpack.c.l.b16 %v299
  %v364 = vunpack.c.l.b16 %v300
  %v365 = vunpack.c.l.b16 %v301
  %v366 = vunpack.c.l.b16 %v302
  %v367 = vunpack.c.l.b16 %v303
  %v368 = vunpack.c.l.b16 %v304
  %v369 = vunpack.c.l.b16 %v305
  %v370 = vunpack.c.l.b16 %v306
  %v371 = vunpack.c.l.b16 %v307
  %v372 = vunpack.c.l.b16 %v308
  %v373 = vunpack.c.l.b16 %v309
  %v374 = vunpack.c.l.b16 %v310
  %v375 = vunpack.c.l.b16 %v311
  %v376 = vunpack.c.l.b16 %v312
  %v377 = vunpack.c.l.b16 %v313
  %v378 = vunpack.c.l.b16 %v314
  %v379 = vunpack.c.l.b16 %v315
  %v380 = vunpack.c.l.b16 %v316
  %v381 = vunpack.c.l.b16 %v317
  %v382 = vunpack.c.l.b16 %v318
  %v383 = vunpack.c.l.b16 %v319
  %v384 = vunpack.c.l.b16 %v320
  %v385 = vunpack.c.l.b16 %v321
  %v386 = vunpack.c.l.b16 %v322
  %v387 = vunpack.c.l.b16 %v323
  %v388 = vunpack.c.l.b16 %v324
  %v389 = vunpack.c.l.b16 %v325
  %v390 = vunpack.c.l.b16 %v326
  %v391 = vunpack.c.l.b16 %v327
  %v392 = vpack.c.b16 %v361, %v360
  %v393 = vpack.c.b16 %v363, %v362
  %v394 = vpack.c.b16 %v365, %v364
  %v395 = vpack.c.b16 %v367, %v366
  %v396 = vpack.c.b16 %v369, %v368
  %v397 = vpack.c.b16 %v371, %v370
  %v398 = vpack.c.b16 %v373, %v372
  %v399 = vpack.c.b16 %v375, %v374
  %v400 = vpack.c.b16 %v377, %v376
  %v401 = vpack.c.b16 %v379, %v378
  %v402 = vpack.c.b16 %v381, %v380
  %v403 = vpack.c.b16 %v383, %v382
  %v404 = vpack.c.b16 %v385, %v384
  %v405 = vpack.c.b16 %v387, %v386
  %v406 = vpack.c.b16 %v389, %v388
  %v407 = vpack.c.b16 %v391, %v390
  %424 = vmatprep.subr.bf16.mxu0 0
  %425 = vmatpush1.bf16.msra.mxu0 %v392
  %426 = vmatprep.subr.bf16.mxu0 0
  %427 = vmatpush1.bf16.msra.mxu0 %v393
  %428 = vmatprep.subr.bf16.mxu0 0
  %429 = vmatpush1.bf16.msra.mxu0 %v394
  %430 = vmatprep.subr.bf16.mxu0 0
  %431 = vmatpush1.bf16.msra.mxu0 %v395
  %432 = vmatprep.subr.bf16.mxu0 0
  %433 = vmatpush1.bf16.msra.mxu0 %v396
  %434 = vmatprep.subr.bf16.mxu0 0
  %435 = vmatpush1.bf16.msra.mxu0 %v397
  %436 = vmatprep.subr.bf16.mxu0 0
  %437 = vmatpush1.bf16.msra.mxu0 %v398
  %438 = vmatprep.subr.bf16.mxu0 0
  %439 = vmatpush1.bf16.msra.mxu0 %v399
  %440 = vmatprep.subr.bf16.mxu0 0
  %441 = vmatpush1.bf16.msra.mxu0 %v400
  %442 = vmatprep.subr.bf16.mxu0 0
  %443 = vmatpush1.bf16.msra.mxu0 %v401
  %444 = vmatprep.subr.bf16.mxu0 0
  %445 = vmatpush1.bf16.msra.mxu0 %v402
  %446 = vmatprep.subr.bf16.mxu0 0
  %447 = vmatpush1.bf16.msra.mxu0 %v403
  %448 = vmatprep.subr.bf16.mxu0 0
  %449 = vmatpush1.bf16.msra.mxu0 %v404
  %450 = vmatprep.subr.bf16.mxu0 0
  %451 = vmatpush1.bf16.msra.mxu0 %v405
  %452 = vmatprep.subr.bf16.mxu0 0
  %453 = vmatpush1.bf16.msra.mxu0 %v406
  %454 = vmatprep.subr.bf16.mxu0 0
  %455 = vmatpush1.bf16.msra.mxu0 %v407
  %456 = vmatprep.mubr.bf16.mxu0 %v293
  %457 = vmatmul.mubr.bf16.gmra.mrb[0].mxu0 %v292
  %v458 = vpop.f32.mrb[0].mxu0
  %v459 = vadd.f32 0.0, %v458
  %v460 = vpop.f32.mrb[0].mxu0
  %v461 = vpop.f32.mrb[0].mxu0
  %v462 = vadd.f32 0.0, %v461
  %v463 = vpop.f32.mrb[0].mxu0
  %464 = vmatprep.mubr.bf16.mxu0 %v295
  %465 = vmatmul.mubr.bf16.gmra.mrb[0].mxu0 %v294
  %v466 = vpop.f32.mrb[0].mxu0
  %v467 = vadd.f32 0.0, %v466
  %v468 = vpop.f32.mrb[0].mxu0
  %v469 = vpop.f32.mrb[0].mxu0
  %v470 = vadd.f32 0.0, %v469
  %v471 = vpop.f32.mrb[0].mxu0
  %472 = vdwg.mxu0
  %v473 = vadd.f32 %v288, %v459
  %v474 = vadd.f32 %v289, %v462
  %v475 = vadd.f32 %v290, %v467
  %v476 = vadd.f32 %v291, %v470
  %477 = vst [vmem:[#allocation2] sm:$0xff] %v473
  %478 = vst [vmem:[#allocation2 + $0x8] sm:$0xff] %v474
  %479 = vst [vmem:[#allocation2 + $0x10] sm:$0xff] %v475
  %480 = vst [vmem:[#allocation2 + $0x18] sm:$0xff] %v476
  // Predicated region
  $region34: #{autoregressive_forward.15} parent=0 // pred_check
    %p481 = pneg %p31
  $region35: #{autoregressive_forward.15} parent=0 // pred_check_branch
    %483 = sbr.rel (%p481) target = $region37
  $region36: #{autoregressive_forward.15} parent=0 // pred_region
    %v484 = vld [vmem:[#allocation2] sm:$0xff]
    %v485 = vld [vmem:[#allocation2 + $0x8] sm:$0xff]
    %v486 = vld [vmem:[#allocation2 + $0x10] sm:$0xff]
    %v487 = vld [vmem:[#allocation2 + $0x18] sm:$0xff]
    %488 = vst [vmem:[%s7] sm:$0xff] %v484
    %489 = vst [vmem:[%s7 + $0x8] sm:$0xff] %v485
    %490 = vst [vmem:[%s7 + $0x10] sm:$0xff] %v486
    %491 = vst [vmem:[%s7 + $0x18] sm:$0xff] %v487
  $region37: #{autoregressive_forward.15} parent=0 // pred_fallthru
    _
  // Predicated region
  $region38: #{autoregressive_forward.15} parent=0 // pred_check
    _
  $region39: #{autoregressive_forward.15} parent=0 // pred_check_branch
    %493 = sbr.rel (0) target = $region41
  $region40: #{autoregressive_forward.15} parent=0 // pred_region
    _
  $region41: #{autoregressive_forward.15} parent=0 // pred_fallthru
    _
  // Predicated region
  $region42: #{autoregressive_forward.15} parent=0 // pred_check
    _
  $region43: #{autoregressive_forward.15} parent=0 // pred_check_branch
    %495 = sbr.rel (0) target = $region45
  $region44: #{autoregressive_forward.15} parent=0 // pred_region
    _
  $region45: #{autoregressive_forward.15} parent=0 // pred_fallthru
    _

// kernel: autoregressive_forward.13
$region0: #{autoregressive_forward.13}
  #allocation0 [shape = 'u32[]', space=smem, size = 0x4, offset = 0x4, fixed_abs, tag = 'smem constant byte address 0x4 - core index']
  #allocation1 [shape = 'u32[144,128]{1,0:T(1,128)}', space=vmem, size = 0x12000, scoped, tag = 'internal scratch']
  %s0 = inlined_call_operand.vmem [shape: f32[2,16,128], index: 0, kind: input, shape index: {}]
  %s1 = inlined_call_operand.vmem [shape: f32[2,40,256], index: 1, kind: input, shape index: {}]
  %s2 = inlined_call_operand.vmem [shape: f32[2,16,128], index: 2, kind: output, shape index: {}]
  %s3 = sld [smem:[#allocation0]]
  $region41: #{autoregressive_forward.13} parent=0
    _
  %s5 = ssub.s32 1, %s3
  %s6 = scalar_select 0, %s5, %s3
  loop: start=0, step=1, limit=4
  $region2: #{autoregressive_forward.13} parent=0 // loop_pre_header
    _
  $region3: #{autoregressive_forward.13} parent=0 // loop_header
    %s8 = sphi 0, %s12
    %p9 = scmp.ge.s32.totalorder %s8, 4
    %s18 = sphi 0, %s20
    %s21 = sphi 0, %s18
    %s22 = sphi 0, %s21
    %s38 = sphi 0, %s22
    %s44 = sphi 0, %s46
    %s47 = sphi 0, %s44
    %s48 = sphi 0, %s47
    %s64 = sphi 0, %s48
    %s70 = sphi 0, %s72
    %s73 = sphi 0, %s70
    %s74 = sphi 0, %s73
    %s90 = sphi 0, %s74
  $region4: #{autoregressive_forward.13} parent=0 // loop_header_branch
    %11 = sbr.rel (%p9) target = $region8
  $region5: #{autoregressive_forward.13} parent=0 // loop_body
    %s13 = ssub.s32 %s8, 1
    %s14 = ssub.s32 %s8, 2
    %s15 = sadd.s32 %s8, 1
    %s16 = ssub.s32 %s8, %s15
    %p17 = scmp.eq.s32.totalorder %s16, 0
    %s19 = sadd.s32 %s18, 1
    %s20 = scalar_select %p17, %s18, %s19
    %p23 = pneg %p17
    %p24 = scmp.eq.s32.totalorder %s8, 1
    %p25 = por %p23, %p24
    %p26 = scmp.ne.s32.totalorder %s18, %s21
    %p27 = scmp.eq.s32.totalorder %s8, 0
    %p28 = por %p26, %p27
    %p29 = scmp.ne.s32.totalorder %s18, %s21
    %p30 = scmp.eq.s32.totalorder %s13, 1
    %p31 = por %p29, %p30
    %p32 = scmp.ne.s32.totalorder %s21, %s22
    %p33 = scmp.eq.s32.totalorder %s13, 0
    %p34 = por %p32, %p33
    %p35 = scmp.ne.s32.totalorder %s21, %s22
    %p36 = scmp.eq.s32.totalorder %s14, 1
    %p37 = por %p35, %p36
    %p39 = scmp.ne.s32.totalorder %s22, %s38
    %p40 = scmp.eq.s32.totalorder %s14, 0
    %p41 = por %p39, %p40
    %s42 = ssub.s32 %s8, %s15
    %p43 = scmp.eq.s32.totalorder %s42, 0
    %s45 = sadd.s32 %s44, 1
    %s46 = scalar_select %p43, %s44, %s45
    %p49 = pneg %p43
    %p50 = scmp.eq.s32.totalorder %s8, 1
    %p51 = por %p49, %p50
    %p52 = scmp.ne.s32.totalorder %s44, %s47
    %p53 = scmp.eq.s32.totalorder %s8, 0
    %p54 = por %p52, %p53
    %p55 = scmp.ne.s32.totalorder %s44, %s47
    %p56 = scmp.eq.s32.totalorder %s13, 1
    %p57 = por %p55, %p56
    %p58 = scmp.ne.s32.totalorder %s47, %s48
    %p59 = scmp.eq.s32.totalorder %s13, 0
    %p60 = por %p58, %p59
    %p61 = scmp.ne.s32.totalorder %s47, %s48
    %p62 = scmp.eq.s32.totalorder %s14, 1
    %p63 = por %p61, %p62
    %p65 = scmp.ne.s32.totalorder %s48, %s64
    %p66 = scmp.eq.s32.totalorder %s14, 0
    %p67 = por %p65, %p66
    %s68 = ssub.s32 %s8, %s15
    %p69 = scmp.eq.s32.totalorder %s68, 0
    %s71 = sadd.s32 %s70, 1
    %s72 = scalar_select %p69, %s70, %s71
    %p75 = pneg %p69
    %p76 = scmp.eq.s32.totalorder %s8, 1
    %p77 = por %p75, %p76
    %p78 = scmp.ne.s32.totalorder %s70, %s73
    %p79 = scmp.eq.s32.totalorder %s8, 0
    %p80 = por %p78, %p79
    %p81 = scmp.ne.s32.totalorder %s70, %s73
    %p82 = scmp.eq.s32.totalorder %s13, 1
    %p83 = por %p81, %p82
    %p84 = scmp.ne.s32.totalorder %s73, %s74
    %p85 = scmp.eq.s32.totalorder %s13, 0
    %p86 = por %p84, %p85
    %p87 = scmp.ne.s32.totalorder %s73, %s74
    %p88 = scmp.eq.s32.totalorder %s14, 1
    %p89 = por %p87, %p88
    %p91 = scmp.ne.s32.totalorder %s74, %s90
    %p92 = scmp.eq.s32.totalorder %s14, 0
    %p93 = por %p91, %p92
    %p94 = scmp.le.s32.totalorder 1, %s8
    %p95 = scmp.lt.s32.totalorder %s8, 3
    %p96 = pnand %p94, %p95
    %p97 = pneg %p96
    // Predicated region
    $region9: #{autoregressive_forward.13} parent=5 // pred_check
      _
    $region10: #{autoregressive_forward.13} parent=5 // pred_check_branch
      %99 = sbr.rel (%p96) target = $region12
    $region11: #{autoregressive_forward.13} parent=5 // pred_region
      %s100 = ssub.s32 %s8, 1
    $region12: #{autoregressive_forward.13} parent=5 // pred_fallthru
      _
    %p101 = scmp.lt.s32.totalorder %s8, 2
    // Predicated region
    $region13: #{autoregressive_forward.13} parent=5 // pred_check
      %p102 = pneg %p101
    $region14: #{autoregressive_forward.13} parent=5 // pred_check_branch
      %104 = sbr.rel (%p102) target = $region16
    $region15: #{autoregressive_forward.13} parent=5 // pred_region
      // Predicated region
      $region17: #{autoregressive_forward.13} parent=15 // pred_check
        %p105 = pneg %p28
      $region18: #{autoregressive_forward.13} parent=15 // pred_check_branch
        %107 = sbr.rel (%p105) target = $region20
      $region19: #{autoregressive_forward.13} parent=15 // pred_region
        %p108 = scmp.lt.s32.totalorder %s8, 1
        %s109 = scalar_select %p108, %s8, 1
        %s110 = smul.addr %s109, 2
        %s111 = smul.addr %s110, 8
        %s112 = scalar_lea.vmem %s0, %s111
      $region20: #{autoregressive_forward.13} parent=15 // pred_fallthru
        _
      // Predicated region
      $region21: #{autoregressive_forward.13} parent=15 // pred_check
        %p113 = pneg %p54
      $region22: #{autoregressive_forward.13} parent=15 // pred_check_branch
        %115 = sbr.rel (%p113) target = $region24
      $region23: #{autoregressive_forward.13} parent=15 // pred_region
        %p116 = scmp.lt.s32.totalorder %s8, 1
        %s117 = scalar_select %p116, %s8, 1
        %s118 = smul.addr %s117, 10
        %s119 = smul.addr %s118, 8
        %s120 = scalar_lea.vmem %s1, %s119
      $region24: #{autoregressive_forward.13} parent=15 // pred_fallthru
        _
    $region16: #{autoregressive_forward.13} parent=5 // pred_fallthru
      _
    %p121 = scmp.le.s32.totalorder 1, %s8
    %p122 = scmp.lt.s32.totalorder %s8, 3
    %p123 = pnand %p121, %p122
    %p124 = pneg %p123
    // Predicated region
    $region25: #{autoregressive_forward.13} parent=5 // pred_check
      _
    $region26: #{autoregressive_forward.13} parent=5 // pred_check_branch
      %126 = sbr.rel (%p123) target = $region28
    $region27: #{autoregressive_forward.13} parent=5 // pred_region
      %s127 = ssub.s32 %s8, 1
      %p128 = scmp.lt.s32.totalorder %s13, 1
      %s129 = scalar_select %p128, %s13, 1
      %s130 = smul.addr %s129, 2
      %s131 = smul.addr %s130, 8
      %s132 = scalar_lea.vmem %s0, %s131
      %p133 = pneg %p34
      %p134 = pneg %p31
      %p135 = scmp.lt.s32.totalorder %s13, 1
      %s136 = scalar_select %p135, %s13, 1
      %s137 = smul.addr %s136, 10
      %s138 = smul.addr %s137, 8
      %s139 = scalar_lea.vmem %s1, %s138
      %p140 = pneg %p60
      %p141 = pneg %p57
      %p142 = pneg %p86
      %p143 = pneg %p83
      %p144 = scmp.lt.s32.totalorder %s13, 1
      %s145 = scalar_select %p144, %s13, 1
      %s146 = smul.addr %s145, 2
      %s147 = smul.addr %s146, 8
      %s148 = scalar_lea.vmem %s2, %s147
      %p149 = scmp.lt.s32.totalorder %s13, 1
      %s150 = scalar_select %p149, %s13, 1
      %s151 = smul.addr %s150, 2
      %s152 = smul.addr %s151, 8
      %s153 = scalar_lea.vmem %s0, %s152
      %p154 = scmp.lt.s32.totalorder %s13, 1
      %s155 = scalar_select %p154, %s13, 1
      %s156 = smul.addr %s155, 10
      %s157 = smul.addr %s156, 8
      %s158 = scalar_lea.vmem %s1, %s157
      %p159 = scmp.lt.s32.totalorder %s13, 1
      %s160 = scalar_select %p159, %s13, 1
      %s161 = smul.addr %s160, 2
      %s162 = smul.addr %s161, 8
      %s163 = scalar_lea.vmem %s2, %s162
      %v165 = vld [vmem:[%s153] sm:$0xff]
      %v166 = vld [vmem:[%s153 + $0x8] sm:$0xff]
      %169 = vrot.lane.b32.xlu0 %v165, 96
      %v170 = vpop.permute.xlu0 %169
      %171 = vrot.lane.b32.xlu0 %v166, 96
      %v172 = vpop.permute.xlu0 %171
      %175 = vrot.lane.b32.xlu0 %v165, 64
      %v176 = vpop.permute.xlu0 %175
      %177 = vrot.lane.b32.xlu0 %v166, 64
      %v178 = vpop.permute.xlu0 %177
      %181 = vrot.lane.b32.xlu0 %v165, 32
      %v182 = vpop.permute.xlu0 %181
      %183 = vrot.lane.b32.xlu0 %v166, 32
      %v184 = vpop.permute.xlu0 %183
      %v187 = vcombine.low %v165, %v176
      %v188 = vcombine.high %v165, %v176
      %v190 = vunpack.c.l.s4 1983009808
      %v191 = vunpack.c.0.s8 %v190
      %v192 = vlaneseq
      %v193 = vshrl.u32 %v192, 7
      %v194 = vsub.s32 %v191, %v193
      %v195 = vrot.slane %v187, %v194
      %v197 = vunpack.c.l.s4 1983009808
      %v198 = vunpack.c.0.s8 %v197
      %v199 = vlaneseq
      %v200 = vshrl.u32 %v199, 7
      %v201 = vsub.s32 %v198, %v200
      %v202 = vrot.slane %v188, %v201
      %v203 = vcombine.low %v170, %v182
      %v204 = vcombine.high %v170, %v182
      %v206 = vunpack.c.l.s4 1983009808
      %v207 = vunpack.c.0.s8 %v206
      %v208 = vlaneseq
      %v209 = vshrl.u32 %v208, 7
      %v210 = vsub.s32 %v207, %v209
      %v211 = vrot.slane %v203, %v210
      %v213 = vunpack.c.l.s4 1983009808
      %v214 = vunpack.c.0.s8 %v213
      %v215 = vlaneseq
      %v216 = vshrl.u32 %v215, 7
      %v217 = vsub.s32 %v214, %v216
      %v218 = vrot.slane %v204, %v217
      %v219 = vcombine.low %v195, %v211
      %v220 = vcombine.high %v195, %v211
      %v222 = vunpack.c.l.s4 1934713408
      %v223 = vunpack.c.0.s8 %v222
      %v224 = vlaneseq
      %v225 = vshrl.u32 %v224, 7
      %v226 = vsub.s32 %v223, %v225
      %v227 = vrot.slane %v219, %v226
      %v229 = vunpack.c.l.s4 1934713408
      %v230 = vunpack.c.0.s8 %v229
      %v231 = vlaneseq
      %v232 = vshrl.u32 %v231, 7
      %v233 = vsub.s32 %v230, %v232
      %v234 = vrot.slane %v220, %v233
      %v235 = vcombine.low %v202, %v218
      %v236 = vcombine.high %v202, %v218
      %v238 = vunpack.c.l.s4 1934713408
      %v239 = vunpack.c.0.s8 %v238
      %v240 = vlaneseq
      %v241 = vshrl.u32 %v240, 7
      %v242 = vsub.s32 %v239, %v241
      %v243 = vrot.slane %v235, %v242
      %v245 = vunpack.c.l.s4 1934713408
      %v246 = vunpack.c.0.s8 %v245
      %v247 = vlaneseq
      %v248 = vshrl.u32 %v247, 7
      %v249 = vsub.s32 %v246, %v248
      %v250 = vrot.slane %v236, %v249
      %v251 = vcombine.high %v227, 0.0
      %v252 = vcombine.high %v234, 0.0
      %v253 = vcombine.high %v243, 0.0
      %v254 = vcombine.high %v250, 0.0
      %v255 = vcombine.low %v166, %v178
      %v256 = vcombine.high %v166, %v178
      %v258 = vunpack.c.l.s4 1983009808
      %v259 = vunpack.c.0.s8 %v258
      %v260 = vlaneseq
      %v261 = vshrl.u32 %v260, 7
      %v262 = vsub.s32 %v259, %v261
      %v263 = vrot.slane %v255, %v262
      %v265 = vunpack.c.l.s4 1983009808
      %v266 = vunpack.c.0.s8 %v265
      %v267 = vlaneseq
      %v268 = vshrl.u32 %v267, 7
      %v269 = vsub.s32 %v266, %v268
      %v270 = vrot.slane %v256, %v269
      %v271 = vcombine.low %v172, %v184
      %v272 = vcombine.high %v172, %v184
      %v274 = vunpack.c.l.s4 1983009808
      %v275 = vunpack.c.0.s8 %v274
      %v276 = vlaneseq
      %v277 = vshrl.u32 %v276, 7
      %v278 = vsub.s32 %v275, %v277
      %v279 = vrot.slane %v271, %v278
      %v281 = vunpack.c.l.s4 1983009808
      %v282 = vunpack.c.0.s8 %v281
      %v283 = vlaneseq
      %v284 = vshrl.u32 %v283, 7
      %v285 = vsub.s32 %v282, %v284
      %v286 = vrot.slane %v272, %v285
      %v287 = vcombine.low %v263, %v279
      %v288 = vcombine.high %v263, %v279
      %v290 = vunpack.c.l.s4 1934713408
      %v291 = vunpack.c.0.s8 %v290
      %v292 = vlaneseq
      %v293 = vshrl.u32 %v292, 7
      %v294 = vsub.s32 %v291, %v293
      %v295 = vrot.slane %v287, %v294
      %v297 = vunpack.c.l.s4 1934713408
      %v298 = vunpack.c.0.s8 %v297
      %v299 = vlaneseq
      %v300 = vshrl.u32 %v299, 7
      %v301 = vsub.s32 %v298, %v300
      %v302 = vrot.slane %v288, %v301
      %v303 = vcombine.low %v270, %v286
      %v304 = vcombine.high %v270, %v286
      %v306 = vunpack.c.l.s4 1934713408
      %v307 = vunpack.c.0.s8 %v306
      %v308 = vlaneseq
      %v309 = vshrl.u32 %v308, 7
      %v310 = vsub.s32 %v307, %v309
      %v311 = vrot.slane %v303, %v310
      %v313 = vunpack.c.l.s4 1934713408
      %v314 = vunpack.c.0.s8 %v313
      %v315 = vlaneseq
      %v316 = vshrl.u32 %v315, 7
      %v317 = vsub.s32 %v314, %v316
      %v318 = vrot.slane %v304, %v317
      %v319 = vcombine.high %v295, 0.0
      %v320 = vcombine.high %v302, 0.0
      %v321 = vcombine.high %v311, 0.0
      %v322 = vcombine.high %v318, 0.0
      %v323 = vld [vmem:[%s158] sm:$0xff]
      %v324 = vld [vmem:[%s158 + $0x8] sm:$0xff]
      %v325 = vld [vmem:[%s158 + $0x10] sm:$0xff]
      %v326 = vld [vmem:[%s158 + $0x18] sm:$0xff]
      %v327 = vld [vmem:[%s158 + $0x20] sm:$0xff]
      %v328 = vld [vmem:[%s158 + $0x28] sm:$0xff]
      %v329 = vld [vmem:[%s158 + $0x30] sm:$0xff]
      %v330 = vld [vmem:[%s158 + $0x38] sm:$0xff]
      %v331 = vld [vmem:[%s158 + $0x40] sm:$0xff]
      %v332 = vld [vmem:[%s158 + $0x48] sm:$0xff]
      %338 = vrot.lane.b32.xlu0 %v323, 96
      %v339 = vpop.permute.xlu0 %338
      %340 = vrot.lane.b32.xlu0 %v325, 96
      %v341 = vpop.permute.xlu0 %340
      %342 = vrot.lane.b32.xlu0 %v327, 96
      %v343 = vpop.permute.xlu0 %342
      %344 = vrot.lane.b32.xlu0 %v329, 96
      %v345 = vpop.permute.xlu0 %344
      %346 = vrot.lane.b32.xlu0 %v331, 96
      %v347 = vpop.permute.xlu0 %346
      %353 = vrot.lane.b32.xlu0 %v323, 64
      %v354 = vpop.permute.xlu0 %353
      %355 = vrot.lane.b32.xlu0 %v325, 64
      %v356 = vpop.permute.xlu0 %355
      %357 = vrot.lane.b32.xlu0 %v327, 64
      %v358 = vpop.permute.xlu0 %357
      %359 = vrot.lane.b32.xlu0 %v329, 64
      %v360 = vpop.permute.xlu0 %359
      %361 = vrot.lane.b32.xlu0 %v331, 64
      %v362 = vpop.permute.xlu0 %361
      %368 = vrot.lane.b32.xlu0 %v323, 32
      %v369 = vpop.permute.xlu0 %368
      %370 = vrot.lane.b32.xlu0 %v325, 32
      %v371 = vpop.permute.xlu0 %370
      %372 = vrot.lane.b32.xlu0 %v327, 32
      %v373 = vpop.permute.xlu0 %372
      %374 = vrot.lane.b32.xlu0 %v329, 32
      %v375 = vpop.permute.xlu0 %374
      %376 = vrot.lane.b32.xlu0 %v331, 32
      %v377 = vpop.permute.xlu0 %376
      %v383 = vcombine.low %v323, %v354
      %v384 = vcombine.high %v323, %v354
      %v386 = vunpack.c.l.s4 1983009808
      %v387 = vunpack.c.0.s8 %v386
      %v388 = vlaneseq
      %v389 = vshrl.u32 %v388, 7
      %v390 = vsub.s32 %v387, %v389
      %v391 = vrot.slane %v383, %v390
      %v393 = vunpack.c.l.s4 1983009808
      %v394 = vunpack.c.0.s8 %v393
      %v395 = vlaneseq
      %v396 = vshrl.u32 %v395, 7
      %v397 = vsub.s32 %v394, %v396
      %v398 = vrot.slane %v384, %v397
      %v399 = vcombine.low %v339, %v369
      %v400 = vcombine.high %v339, %v369
      %v402 = vunpack.c.l.s4 1983009808
      %v403 = vunpack.c.0.s8 %v402
      %v404 = vlaneseq
      %v405 = vshrl.u32 %v404, 7
      %v406 = vsub.s32 %v403, %v405
      %v407 = vrot.slane %v399, %v406
      %v409 = vunpack.c.l.s4 1983009808
      %v410 = vunpack.c.0.s8 %v409
      %v411 = vlaneseq
      %v412 = vshrl.u32 %v411, 7
      %v413 = vsub.s32 %v410, %v412
      %v414 = vrot.slane %v400, %v413
      %v415 = vcombine.low %v391, %v407
      %v416 = vcombine.high %v391, %v407
      %v418 = vunpack.c.l.s4 1934713408
      %v419 = vunpack.c.0.s8 %v418
      %v420 = vlaneseq
      %v421 = vshrl.u32 %v420, 7
      %v422 = vsub.s32 %v419, %v421
      %v423 = vrot.slane %v415, %v422
      %v425 = vunpack.c.l.s4 1934713408
      %v426 = vunpack.c.0.s8 %v425
      %v427 = vlaneseq
      %v428 = vshrl.u32 %v427, 7
      %v429 = vsub.s32 %v426, %v428
      %v430 = vrot.slane %v416, %v429
      %v431 = vcombine.low %v398, %v414
      %v432 = vcombine.high %v398, %v414
      %v434 = vunpack.c.l.s4 1934713408
      %v435 = vunpack.c.0.s8 %v434
      %v436 = vlaneseq
      %v437 = vshrl.u32 %v436, 7
      %v438 = vsub.s32 %v435, %v437
      %v439 = vrot.slane %v431, %v438
      %v441 = vunpack.c.l.s4 1934713408
      %v442 = vunpack.c.0.s8 %v441
      %v443 = vlaneseq
      %v444 = vshrl.u32 %v443, 7
      %v445 = vsub.s32 %v442, %v444
      %v446 = vrot.slane %v432, %v445
      %v447 = vcombine.high %v423, 0.0
      %v448 = vcombine.high %v430, 0.0
      %v449 = vcombine.high %v439, 0.0
      %v450 = vcombine.high %v446, 0.0
      %v451 = vcombine.low %v325, %v356
      %v452 = vcombine.high %v325, %v356
      %v454 = vunpack.c.l.s4 1983009808
      %v455 = vunpack.c.0.s8 %v454
      %v456 = vlaneseq
      %v457 = vshrl.u32 %v456, 7
      %v458 = vsub.s32 %v455, %v457
      %v459 = vrot.slane %v451, %v458
      %v461 = vunpack.c.l.s4 1983009808
      %v462 = vunpack.c.0.s8 %v461
      %v463 = vlaneseq
      %v464 = vshrl.u32 %v463, 7
      %v465 = vsub.s32 %v462, %v464
      %v466 = vrot.slane %v452, %v465
      %v467 = vcombine.low %v341, %v371
      %v468 = vcombine.high %v341, %v371
      %v470 = vunpack.c.l.s4 1983009808
      %v471 = vunpack.c.0.s8 %v470
      %v472 = vlaneseq
      %v473 = vshrl.u32 %v472, 7
      %v474 = vsub.s32 %v471, %v473
      %v475 = vrot.slane %v467, %v474
      %v477 = vunpack.c.l.s4 1983009808
      %v478 = vunpack.c.0.s8 %v477
      %v479 = vlaneseq
      %v480 = vshrl.u32 %v479, 7
      %v481 = vsub.s32 %v478, %v480
      %v482 = vrot.slane %v468, %v481
      %v483 = vcombine.low %v459, %v475
      %v484 = vcombine.high %v459, %v475
      %v486 = vunpack.c.l.s4 1934713408
      %v487 = vunpack.c.0.s8 %v486
      %v488 = vlaneseq
      %v489 = vshrl.u32 %v488, 7
      %v490 = vsub.s32 %v487, %v489
      %v491 = vrot.slane %v483, %v490
      %v493 = vunpack.c.l.s4 1934713408
      %v494 = vunpack.c.0.s8 %v493
      %v495 = vlaneseq
      %v496 = vshrl.u32 %v495, 7
      %v497 = vsub.s32 %v494, %v496
      %v498 = vrot.slane %v484, %v497
      %v499 = vcombine.low %v466, %v482
      %v500 = vcombine.high %v466, %v482
      %v502 = vunpack.c.l.s4 1934713408
      %v503 = vunpack.c.0.s8 %v502
      %v504 = vlaneseq
      %v505 = vshrl.u32 %v504, 7
      %v506 = vsub.s32 %v503, %v505
      %v507 = vrot.slane %v499, %v506
      %v509 = vunpack.c.l.s4 1934713408
      %v510 = vunpack.c.0.s8 %v509
      %v511 = vlaneseq
      %v512 = vshrl.u32 %v511, 7
      %v513 = vsub.s32 %v510, %v512
      %v514 = vrot.slane %v500, %v513
      %v515 = vcombine.high %v491, 0.0
      %v516 = vcombine.high %v498, 0.0
      %v517 = vcombine.high %v507, 0.0
      %v518 = vcombine.high %v514, 0.0
      %v519 = vcombine.low %v327, %v358
      %v520 = vcombine.high %v327, %v358
      %v522 = vunpack.c.l.s4 1983009808
      %v523 = vunpack.c.0.s8 %v522
      %v524 = vlaneseq
      %v525 = vshrl.u32 %v524, 7
      %v526 = vsub.s32 %v523, %v525
      %v527 = vrot.slane %v519, %v526
      %v529 = vunpack.c.l.s4 1983009808
      %v530 = vunpack.c.0.s8 %v529
      %v531 = vlaneseq
      %v532 = vshrl.u32 %v531, 7
      %v533 = vsub.s32 %v530, %v532
      %v534 = vrot.slane %v520, %v533
      %v535 = vcombine.low %v343, %v373
      %v536 = vcombine.high %v343, %v373
      %v538 = vunpack.c.l.s4 1983009808
      %v539 = vunpack.c.0.s8 %v538
      %v540 = vlaneseq
      %v541 = vshrl.u32 %v540, 7
      %v542 = vsub.s32 %v539, %v541
      %v543 = vrot.slane %v535, %v542
      %v545 = vunpack.c.l.s4 1983009808
      %v546 = vunpack.c.0.s8 %v545
      %v547 = vlaneseq
      %v548 = vshrl.u32 %v547, 7
      %v549 = vsub.s32 %v546, %v548
      %v550 = vrot.slane %v536, %v549
      %v551 = vcombine.low %v527, %v543
      %v552 = vcombine.high %v527, %v543
      %v554 = vunpack.c.l.s4 1934713408
      %v555 = vunpack.c.0.s8 %v554
      %v556 = vlaneseq
      %v557 = vshrl.u32 %v556, 7
      %v558 = vsub.s32 %v555, %v557
      %v559 = vrot.slane %v551, %v558
      %v561 = vunpack.c.l.s4 1934713408
      %v562 = vunpack.c.0.s8 %v561
      %v563 = vlaneseq
      %v564 = vshrl.u32 %v563, 7
      %v565 = vsub.s32 %v562, %v564
      %v566 = vrot.slane %v552, %v565
      %v567 = vcombine.low %v534, %v550
      %v568 = vcombine.high %v534, %v550
      %v570 = vunpack.c.l.s4 1934713408
      %v571 = vunpack.c.0.s8 %v570
      %v572 = vlaneseq
      %v573 = vshrl.u32 %v572, 7
      %v574 = vsub.s32 %v571, %v573
      %v575 = vrot.slane %v567, %v574
      %v577 = vunpack.c.l.s4 1934713408
      %v578 = vunpack.c.0.s8 %v577
      %v579 = vlaneseq
      %v580 = vshrl.u32 %v579, 7
      %v581 = vsub.s32 %v578, %v580
      %v582 = vrot.slane %v568, %v581
      %v583 = vcombine.high %v559, 0.0
      %v584 = vcombine.high %v566, 0.0
      %v585 = vcombine.high %v575, 0.0
      %v586 = vcombine.high %v582, 0.0
      %v587 = vcombine.low %v329, %v360
      %v588 = vcombine.high %v329, %v360
      %v590 = vunpack.c.l.s4 1983009808
      %v591 = vunpack.c.0.s8 %v590
      %v592 = vlaneseq
      %v593 = vshrl.u32 %v592, 7
      %v594 = vsub.s32 %v591, %v593
      %v595 = vrot.slane %v587, %v594
      %v597 = vunpack.c.l.s4 1983009808
      %v598 = vunpack.c.0.s8 %v597
      %v599 = vlaneseq
      %v600 = vshrl.u32 %v599, 7
      %v601 = vsub.s32 %v598, %v600
      %v602 = vrot.slane %v588, %v601
      %v603 = vcombine.low %v345, %v375
      %v604 = vcombine.high %v345, %v375
      %v606 = vunpack.c.l.s4 1983009808
      %v607 = vunpack.c.0.s8 %v606
      %v608 = vlaneseq
      %v609 = vshrl.u32 %v608, 7
      %v610 = vsub.s32 %v607, %v609
      %v611 = vrot.slane %v603, %v610
      %v613 = vunpack.c.l.s4 1983009808
      %v614 = vunpack.c.0.s8 %v613
      %v615 = vlaneseq
      %v616 = vshrl.u32 %v615, 7
      %v617 = vsub.s32 %v614, %v616
      %v618 = vrot.slane %v604, %v617
      %v619 = vcombine.low %v595, %v611
      %v620 = vcombine.high %v595, %v611
      %v622 = vunpack.c.l.s4 1934713408
      %v623 = vunpack.c.0.s8 %v622
      %v624 = vlaneseq
      %v625 = vshrl.u32 %v624, 7
      %v626 = vsub.s32 %v623, %v625
      %v627 = vrot.slane %v619, %v626
      %v629 = vunpack.c.l.s4 1934713408
      %v630 = vunpack.c.0.s8 %v629
      %v631 = vlaneseq
      %v632 = vshrl.u32 %v631, 7
      %v633 = vsub.s32 %v630, %v632
      %v634 = vrot.slane %v620, %v633
      %v635 = vcombine.low %v602, %v618
      %v636 = vcombine.high %v602, %v618
      %v638 = vunpack.c.l.s4 1934713408
      %v639 = vunpack.c.0.s8 %v638
      %v640 = vlaneseq
      %v641 = vshrl.u32 %v640, 7
      %v642 = vsub.s32 %v639, %v641
      %v643 = vrot.slane %v635, %v642
      %v645 = vunpack.c.l.s4 1934713408
      %v646 = vunpack.c.0.s8 %v645
      %v647 = vlaneseq
      %v648 = vshrl.u32 %v647, 7
      %v649 = vsub.s32 %v646, %v648
      %v650 = vrot.slane %v636, %v649
      %v651 = vcombine.high %v627, 0.0
      %v652 = vcombine.high %v634, 0.0
      %v653 = vcombine.high %v643, 0.0
      %v654 = vcombine.high %v650, 0.0
      %v655 = vcombine.low %v331, %v362
      %v656 = vcombine.high %v331, %v362
      %v658 = vunpack.c.l.s4 1983009808
      %v659 = vunpack.c.0.s8 %v658
      %v660 = vlaneseq
      %v661 = vshrl.u32 %v660, 7
      %v662 = vsub.s32 %v659, %v661
      %v663 = vrot.slane %v655, %v662
      %v665 = vunpack.c.l.s4 1983009808
      %v666 = vunpack.c.0.s8 %v665
      %v667 = vlaneseq
      %v668 = vshrl.u32 %v667, 7
      %v669 = vsub.s32 %v666, %v668
      %v670 = vrot.slane %v656, %v669
      %v671 = vcombine.low %v347, %v377
      %v672 = vcombine.high %v347, %v377
      %v674 = vunpack.c.l.s4 1983009808
      %v675 = vunpack.c.0.s8 %v674
      %v676 = vlaneseq
      %v677 = vshrl.u32 %v676, 7
      %v678 = vsub.s32 %v675, %v677
      %v679 = vrot.slane %v671, %v678
      %v681 = vunpack.c.l.s4 1983009808
      %v682 = vunpack.c.0.s8 %v681
      %v683 = vlaneseq
      %v684 = vshrl.u32 %v683, 7
      %v685 = vsub.s32 %v682, %v684
      %v686 = vrot.slane %v672, %v685
      %v687 = vcombine.low %v663, %v679
      %v688 = vcombine.high %v663, %v679
      %v690 = vunpack.c.l.s4 1934713408
      %v691 = vunpack.c.0.s8 %v690
      %v692 = vlaneseq
      %v693 = vshrl.u32 %v692, 7
      %v694 = vsub.s32 %v691, %v693
      %v695 = vrot.slane %v687, %v694
      %v697 = vunpack.c.l.s4 1934713408
      %v698 = vunpack.c.0.s8 %v697
      %v699 = vlaneseq
      %v700 = vshrl.u32 %v699, 7
      %v701 = vsub.s32 %v698, %v700
      %v702 = vrot.slane %v688, %v701
      %v703 = vcombine.low %v670, %v686
      %v704 = vcombine.high %v670, %v686
      %v706 = vunpack.c.l.s4 1934713408
      %v707 = vunpack.c.0.s8 %v706
      %v708 = vlaneseq
      %v709 = vshrl.u32 %v708, 7
      %v710 = vsub.s32 %v707, %v709
      %v711 = vrot.slane %v703, %v710
      %v713 = vunpack.c.l.s4 1934713408
      %v714 = vunpack.c.0.s8 %v713
      %v715 = vlaneseq
      %v716 = vshrl.u32 %v715, 7
      %v717 = vsub.s32 %v714, %v716
      %v718 = vrot.slane %v704, %v717
      %v719 = vcombine.high %v695, 0.0
      %v720 = vcombine.high %v702, 0.0
      %v721 = vcombine.high %v711, 0.0
      %v722 = vcombine.high %v718, 0.0
      %728 = vrot.lane.b32.xlu0 %v324, 96
      %v729 = vpop.permute.xlu0 %728
      %730 = vrot.lane.b32.xlu0 %v326, 96
      %v731 = vpop.permute.xlu0 %730
      %732 = vrot.lane.b32.xlu0 %v328, 96
      %v733 = vpop.permute.xlu0 %732
      %734 = vrot.lane.b32.xlu0 %v330, 96
      %v735 = vpop.permute.xlu0 %734
      %736 = vrot.lane.b32.xlu0 %v332, 96
      %v737 = vpop.permute.xlu0 %736
      %743 = vrot.lane.b32.xlu0 %v324, 64
      %v744 = vpop.permute.xlu0 %743
      %745 = vrot.lane.b32.xlu0 %v326, 64
      %v746 = vpop.permute.xlu0 %745
      %747 = vrot.lane.b32.xlu0 %v328, 64
      %v748 = vpop.permute.xlu0 %747
      %749 = vrot.lane.b32.xlu0 %v330, 64
      %v750 = vpop.permute.xlu0 %749
      %751 = vrot.lane.b32.xlu0 %v332, 64
      %v752 = vpop.permute.xlu0 %751
      %758 = vrot.lane.b32.xlu0 %v324, 32
      %v759 = vpop.permute.xlu0 %758
      %760 = vrot.lane.b32.xlu0 %v326, 32
      %v761 = vpop.permute.xlu0 %760
      %762 = vrot.lane.b32.xlu0 %v328, 32
      %v763 = vpop.permute.xlu0 %762
      %764 = vrot.lane.b32.xlu0 %v330, 32
      %v765 = vpop.permute.xlu0 %764
      %766 = vrot.lane.b32.xlu0 %v332, 32
      %v767 = vpop.permute.xlu0 %766
      %v773 = vcombine.low %v324, %v744
      %v774 = vcombine.high %v324, %v744
      %v776 = vunpack.c.l.s4 1983009808
      %v777 = vunpack.c.0.s8 %v776
      %v778 = vlaneseq
      %v779 = vshrl.u32 %v778, 7
      %v780 = vsub.s32 %v777, %v779
      %v781 = vrot.slane %v773, %v780
      %v783 = vunpack.c.l.s4 1983009808
      %v784 = vunpack.c.0.s8 %v783
      %v785 = vlaneseq
      %v786 = vshrl.u32 %v785, 7
      %v787 = vsub.s32 %v784, %v786
      %v788 = vrot.slane %v774, %v787
      %v789 = vcombine.low %v729, %v759
      %v790 = vcombine.high %v729, %v759
      %v792 = vunpack.c.l.s4 1983009808
      %v793 = vunpack.c.0.s8 %v792
      %v794 = vlaneseq
      %v795 = vshrl.u32 %v794, 7
      %v796 = vsub.s32 %v793, %v795
      %v797 = vrot.slane %v789, %v796
      %v799 = vunpack.c.l.s4 1983009808
      %v800 = vunpack.c.0.s8 %v799
      %v801 = vlaneseq
      %v802 = vshrl.u32 %v801, 7
      %v803 = vsub.s32 %v800, %v802
      %v804 = vrot.slane %v790, %v803
      %v805 = vcombine.low %v781, %v797
      %v806 = vcombine.high %v781, %v797
      %v808 = vunpack.c.l.s4 1934713408
      %v809 = vunpack.c.0.s8 %v808
      %v810 = vlaneseq
      %v811 = vshrl.u32 %v810, 7
      %v812 = vsub.s32 %v809, %v811
      %v813 = vrot.slane %v805, %v812
      %v815 = vunpack.c.l.s4 1934713408
      %v816 = vunpack.c.0.s8 %v815
      %v817 = vlaneseq
      %v818 = vshrl.u32 %v817, 7
      %v819 = vsub.s32 %v816, %v818
      %v820 = vrot.slane %v806, %v819
      %v821 = vcombine.low %v788, %v804
      %v822 = vcombine.high %v788, %v804
      %v824 = vunpack.c.l.s4 1934713408
      %v825 = vunpack.c.0.s8 %v824
      %v826 = vlaneseq
      %v827 = vshrl.u32 %v826, 7
      %v828 = vsub.s32 %v825, %v827
      %v829 = vrot.slane %v821, %v828
      %v831 = vunpack.c.l.s4 1934713408
      %v832 = vunpack.c.0.s8 %v831
      %v833 = vlaneseq
      %v834 = vshrl.u32 %v833, 7
      %v835 = vsub.s32 %v832, %v834
      %v836 = vrot.slane %v822, %v835
      %v837 = vcombine.high %v813, 0.0
      %v838 = vcombine.high %v820, 0.0
      %v839 = vcombine.high %v829, 0.0
      %v840 = vcombine.high %v836, 0.0
      %v841 = vcombine.low %v326, %v746
      %v842 = vcombine.high %v326, %v746
      %v844 = vunpack.c.l.s4 1983009808
      %v845 = vunpack.c.0.s8 %v844
      %v846 = vlaneseq
      %v847 = vshrl.u32 %v846, 7
      %v848 = vsub.s32 %v845, %v847
      %v849 = vrot.slane %v841, %v848
      %v851 = vunpack.c.l.s4 1983009808
      %v852 = vunpack.c.0.s8 %v851
      %v853 = vlaneseq
      %v854 = vshrl.u32 %v853, 7
      %v855 = vsub.s32 %v852, %v854
      %v856 = vrot.slane %v842, %v855
      %v857 = vcombine.low %v731, %v761
      %v858 = vcombine.high %v731, %v761
      %v860 = vunpack.c.l.s4 1983009808
      %v861 = vunpack.c.0.s8 %v860
      %v862 = vlaneseq
      %v863 = vshrl.u32 %v862, 7
      %v864 = vsub.s32 %v861, %v863
      %v865 = vrot.slane %v857, %v864
      %v867 = vunpack.c.l.s4 1983009808
      %v868 = vunpack.c.0.s8 %v867
      %v869 = vlaneseq
      %v870 = vshrl.u32 %v869, 7
      %v871 = vsub.s32 %v868, %v870
      %v872 = vrot.slane %v858, %v871
      %v873 = vcombine.low %v849, %v865
      %v874 = vcombine.high %v849, %v865
      %v876 = vunpack.c.l.s4 1934713408
      %v877 = vunpack.c.0.s8 %v876
      %v878 = vlaneseq
      %v879 = vshrl.u32 %v878, 7
      %v880 = vsub.s32 %v877, %v879
      %v881 = vrot.slane %v873, %v880
      %v883 = vunpack.c.l.s4 1934713408
      %v884 = vunpack.c.0.s8 %v883
      %v885 = vlaneseq
      %v886 = vshrl.u32 %v885, 7
      %v887 = vsub.s32 %v884, %v886
      %v888 = vrot.slane %v874, %v887
      %v889 = vcombine.low %v856, %v872
      %v890 = vcombine.high %v856, %v872
      %v892 = vunpack.c.l.s4 1934713408
      %v893 = vunpack.c.0.s8 %v892
      %v894 = vlaneseq
      %v895 = vshrl.u32 %v894, 7
      %v896 = vsub.s32 %v893, %v895
      %v897 = vrot.slane %v889, %v896
      %v899 = vunpack.c.l.s4 1934713408
      %v900 = vunpack.c.0.s8 %v899
      %v901 = vlaneseq
      %v902 = vshrl.u32 %v901, 7
      %v903 = vsub.s32 %v900, %v902
      %v904 = vrot.slane %v890, %v903
      %v905 = vcombine.high %v881, 0.0
      %v906 = vcombine.high %v888, 0.0
      %v907 = vcombine.high %v897, 0.0
      %v908 = vcombine.high %v904, 0.0
      %v909 = vcombine.low %v328, %v748
      %v910 = vcombine.high %v328, %v748
      %v912 = vunpack.c.l.s4 1983009808
      %v913 = vunpack.c.0.s8 %v912
      %v914 = vlaneseq
      %v915 = vshrl.u32 %v914, 7
      %v916 = vsub.s32 %v913, %v915
      %v917 = vrot.slane %v909, %v916
      %v919 = vunpack.c.l.s4 1983009808
      %v920 = vunpack.c.0.s8 %v919
      %v921 = vlaneseq
      %v922 = vshrl.u32 %v921, 7
      %v923 = vsub.s32 %v920, %v922
      %v924 = vrot.slane %v910, %v923
      %v925 = vcombine.low %v733, %v763
      %v926 = vcombine.high %v733, %v763
      %v928 = vunpack.c.l.s4 1983009808
      %v929 = vunpack.c.0.s8 %v928
      %v930 = vlaneseq
      %v931 = vshrl.u32 %v930, 7
      %v932 = vsub.s32 %v929, %v931
      %v933 = vrot.slane %v925, %v932
      %v935 = vunpack.c.l.s4 1983009808
      %v936 = vunpack.c.0.s8 %v935
      %v937 = vlaneseq
      %v938 = vshrl.u32 %v937, 7
      %v939 = vsub.s32 %v936, %v938
      %v940 = vrot.slane %v926, %v939
      %v941 = vcombine.low %v917, %v933
      %v942 = vcombine.high %v917, %v933
      %v944 = vunpack.c.l.s4 1934713408
      %v945 = vunpack.c.0.s8 %v944
      %v946 = vlaneseq
      %v947 = vshrl.u32 %v946, 7
      %v948 = vsub.s32 %v945, %v947
      %v949 = vrot.slane %v941, %v948
      %v951 = vunpack.c.l.s4 1934713408
      %v952 = vunpack.c.0.s8 %v951
      %v953 = vlaneseq
      %v954 = vshrl.u32 %v953, 7
      %v955 = vsub.s32 %v952, %v954
      %v956 = vrot.slane %v942, %v955
      %v957 = vcombine.low %v924, %v940
      %v958 = vcombine.high %v924, %v940
      %v960 = vunpack.c.l.s4 1934713408
      %v961 = vunpack.c.0.s8 %v960
      %v962 = vlaneseq
      %v963 = vshrl.u32 %v962, 7
      %v964 = vsub.s32 %v961, %v963
      %v965 = vrot.slane %v957, %v964
      %v967 = vunpack.c.l.s4 1934713408
      %v968 = vunpack.c.0.s8 %v967
      %v969 = vlaneseq
      %v970 = vshrl.u32 %v969, 7
      %v971 = vsub.s32 %v968, %v970
      %v972 = vrot.slane %v958, %v971
      %v973 = vcombine.high %v949, 0.0
      %v974 = vcombine.high %v956, 0.0
      %v975 = vcombine.high %v965, 0.0
      %v976 = vcombine.high %v972, 0.0
      %v977 = vcombine.low %v330, %v750
      %v978 = vcombine.high %v330, %v750
      %v980 = vunpack.c.l.s4 1983009808
      %v981 = vunpack.c.0.s8 %v980
      %v982 = vlaneseq
      %v983 = vshrl.u32 %v982, 7
      %v984 = vsub.s32 %v981, %v983
      %v985 = vrot.slane %v977, %v984
      %v987 = vunpack.c.l.s4 1983009808
      %v988 = vunpack.c.0.s8 %v987
      %v989 = vlaneseq
      %v990 = vshrl.u32 %v989, 7
      %v991 = vsub.s32 %v988, %v990
      %v992 = vrot.slane %v978, %v991
      %v993 = vcombine.low %v735, %v765
      %v994 = vcombine.high %v735, %v765
      %v996 = vunpack.c.l.s4 1983009808
      %v997 = vunpack.c.0.s8 %v996
      %v998 = vlaneseq
      %v999 = vshrl.u32 %v998, 7
      %v1000 = vsub.s32 %v997, %v999
      %v1001 = vrot.slane %v993, %v1000
      %v1003 = vunpack.c.l.s4 1983009808
      %v1004 = vunpack.c.0.s8 %v1003
      %v1005 = vlaneseq
      %v1006 = vshrl.u32 %v1005, 7
      %v1007 = vsub.s32 %v1004, %v1006
      %v1008 = vrot.slane %v994, %v1007
      %v1009 = vcombine.low %v985, %v1001
      %v1010 = vcombine.high %v985, %v1001
      %v1012 = vunpack.c.l.s4 1934713408
      %v1013 = vunpack.c.0.s8 %v1012
      %v1014 = vlaneseq
      %v1015 = vshrl.u32 %v1014, 7
      %v1016 = vsub.s32 %v1013, %v1015
      %v1017 = vrot.slane %v1009, %v1016
      %v1019 = vunpack.c.l.s4 1934713408
      %v1020 = vunpack.c.0.s8 %v1019
      %v1021 = vlaneseq
      %v1022 = vshrl.u32 %v1021, 7
      %v1023 = vsub.s32 %v1020, %v1022
      %v1024 = vrot.slane %v1010, %v1023
      %v1025 = vcombine.low %v992, %v1008
      %v1026 = vcombine.high %v992, %v1008
      %v1028 = vunpack.c.l.s4 1934713408
      %v1029 = vunpack.c.0.s8 %v1028
      %v1030 = vlaneseq
      %v1031 = vshrl.u32 %v1030, 7
      %v1032 = vsub.s32 %v1029, %v1031
      %v1033 = vrot.slane %v1025, %v1032
      %v1035 = vunpack.c.l.s4 1934713408
      %v1036 = vunpack.c.0.s8 %v1035
      %v1037 = vlaneseq
      %v1038 = vshrl.u32 %v1037, 7
      %v1039 = vsub.s32 %v1036, %v1038
      %v1040 = vrot.slane %v1026, %v1039
      %v1041 = vcombine.high %v1017, 0.0
      %v1042 = vcombine.high %v1024, 0.0
      %v1043 = vcombine.high %v1033, 0.0
      %v1044 = vcombine.high %v1040, 0.0
      %v1045 = vcombine.low %v332, %v752
      %v1046 = vcombine.high %v332, %v752
      %v1048 = vunpack.c.l.s4 1983009808
      %v1049 = vunpack.c.0.s8 %v1048
      %v1050 = vlaneseq
      %v1051 = vshrl.u32 %v1050, 7
      %v1052 = vsub.s32 %v1049, %v1051
      %v1053 = vrot.slane %v1045, %v1052
      %v1055 = vunpack.c.l.s4 1983009808
      %v1056 = vunpack.c.0.s8 %v1055
      %v1057 = vlaneseq
      %v1058 = vshrl.u32 %v1057, 7
      %v1059 = vsub.s32 %v1056, %v1058
      %v1060 = vrot.slane %v1046, %v1059
      %v1061 = vcombine.low %v737, %v767
      %v1062 = vcombine.high %v737, %v767
      %v1064 = vunpack.c.l.s4 1983009808
      %v1065 = vunpack.c.0.s8 %v1064
      %v1066 = vlaneseq
      %v1067 = vshrl.u32 %v1066, 7
      %v1068 = vsub.s32 %v1065, %v1067
      %v1069 = vrot.slane %v1061, %v1068
      %v1071 = vunpack.c.l.s4 1983009808
      %v1072 = vunpack.c.0.s8 %v1071
      %v1073 = vlaneseq
      %v1074 = vshrl.u32 %v1073, 7
      %v1075 = vsub.s32 %v1072, %v1074
      %v1076 = vrot.slane %v1062, %v1075
      %v1077 = vcombine.low %v1053, %v1069
      %v1078 = vcombine.high %v1053, %v1069
      %v1080 = vunpack.c.l.s4 1934713408
      %v1081 = vunpack.c.0.s8 %v1080
      %v1082 = vlaneseq
      %v1083 = vshrl.u32 %v1082, 7
      %v1084 = vsub.s32 %v1081, %v1083
      %v1085 = vrot.slane %v1077, %v1084
      %v1087 = vunpack.c.l.s4 1934713408
      %v1088 = vunpack.c.0.s8 %v1087
      %v1089 = vlaneseq
      %v1090 = vshrl.u32 %v1089, 7
      %v1091 = vsub.s32 %v1088, %v1090
      %v1092 = vrot.slane %v1078, %v1091
      %v1093 = vcombine.low %v1060, %v1076
      %v1094 = vcombine.high %v1060, %v1076
      %v1096 = vunpack.c.l.s4 1934713408
      %v1097 = vunpack.c.0.s8 %v1096
      %v1098 = vlaneseq
      %v1099 = vshrl.u32 %v1098, 7
      %v1100 = vsub.s32 %v1097, %v1099
      %v1101 = vrot.slane %v1093, %v1100
      %v1103 = vunpack.c.l.s4 1934713408
      %v1104 = vunpack.c.0.s8 %v1103
      %v1105 = vlaneseq
      %v1106 = vshrl.u32 %v1105, 7
      %v1107 = vsub.s32 %v1104, %v1106
      %v1108 = vrot.slane %v1094, %v1107
      %v1109 = vcombine.high %v1085, 0.0
      %v1110 = vcombine.high %v1092, 0.0
      %v1111 = vcombine.high %v1101, 0.0
      %v1112 = vcombine.high %v1108, 0.0
      %v1113 = vpack.c.bf16 %v227, %v227
      %v1114 = vpack.c.bf16 %v251, %v251
      %v1115 = vpack.c.bf16 %v234, %v234
      %v1116 = vpack.c.bf16 %v252, %v252
      %v1117 = vpack.c.bf16 %v243, %v243
      %v1118 = vpack.c.bf16 %v253, %v253
      %v1119 = vpack.c.bf16 %v250, %v250
      %v1120 = vpack.c.bf16 %v254, %v254
      %v1121 = vpack.c.bf16 %v295, %v295
      %v1122 = vpack.c.bf16 %v319, %v319
      %v1123 = vpack.c.bf16 %v302, %v302
      %v1124 = vpack.c.bf16 %v320, %v320
      %v1125 = vpack.c.bf16 %v311, %v311
      %v1126 = vpack.c.bf16 %v321, %v321
      %v1127 = vpack.c.bf16 %v318, %v318
      %v1128 = vpack.c.bf16 %v322, %v322
      %v1129 = vpack.c.bf16 %v423, %v423
      %v1130 = vpack.c.bf16 %v447, %v447
      %v1131 = vpack.c.bf16 %v430, %v430
      %v1132 = vpack.c.bf16 %v448, %v448
      %v1133 = vpack.c.bf16 %v439, %v439
      %v1134 = vpack.c.bf16 %v449, %v449
      %v1135 = vpack.c.bf16 %v446, %v446
      %v1136 = vpack.c.bf16 %v450, %v450
      %v1137 = vpack.c.bf16 %v491, %v491
      %v1138 = vpack.c.bf16 %v515, %v515
      %v1139 = vpack.c.bf16 %v498, %v498
      %v1140 = vpack.c.bf16 %v516, %v516
      %v1141 = vpack.c.bf16 %v507, %v507
      %v1142 = vpack.c.bf16 %v517, %v517
      %v1143 = vpack.c.bf16 %v514, %v514
      %v1144 = vpack.c.bf16 %v518, %v518
      %v1145 = vpack.c.bf16 %v559, %v559
      %v1146 = vpack.c.bf16 %v583, %v583
      %v1147 = vpack.c.bf16 %v566, %v566
      %v1148 = vpack.c.bf16 %v584, %v584
      %v1149 = vpack.c.bf16 %v575, %v575
      %v1150 = vpack.c.bf16 %v585, %v585
      %v1151 = vpack.c.bf16 %v582, %v582
      %v1152 = vpack.c.bf16 %v586, %v586
      %v1153 = vpack.c.bf16 %v627, %v627
      %v1154 = vpack.c.bf16 %v651, %v651
      %v1155 = vpack.c.bf16 %v634, %v634
      %v1156 = vpack.c.bf16 %v652, %v652
      %v1157 = vpack.c.bf16 %v643, %v643
      %v1158 = vpack.c.bf16 %v653, %v653
      %v1159 = vpack.c.bf16 %v650, %v650
      %v1160 = vpack.c.bf16 %v654, %v654
      %v1161 = vpack.c.bf16 %v695, %v695
      %v1162 = vpack.c.bf16 %v719, %v719
      %v1163 = vpack.c.bf16 %v702, %v702
      %v1164 = vpack.c.bf16 %v720, %v720
      %v1165 = vpack.c.bf16 %v711, %v711
      %v1166 = vpack.c.bf16 %v721, %v721
      %v1167 = vpack.c.bf16 %v718, %v718
      %v1168 = vpack.c.bf16 %v722, %v722
      %v1169 = vcombine.low %v1113, %v1117
      %v1171 = vunpack.c.l.s4 1983009808
      %v1172 = vunpack.c.0.s8 %v1171
      %v1173 = vlaneseq
      %v1174 = vshrl.u32 %v1173, 7
      %v1175 = vsub.s32 %v1172, %v1174
      %v1176 = vrot.slane %v1169, %v1175
      %v1177 = vcombine.low %v1115, %v1119
      %v1179 = vunpack.c.l.s4 1983009808
      %v1180 = vunpack.c.0.s8 %v1179
      %v1181 = vlaneseq
      %v1182 = vshrl.u32 %v1181, 7
      %v1183 = vsub.s32 %v1180, %v1182
      %v1184 = vrot.slane %v1177, %v1183
      %v1185 = vcombine.low %v1121, %v1125
      %v1187 = vunpack.c.l.s4 1983009808
      %v1188 = vunpack.c.0.s8 %v1187
      %v1189 = vlaneseq
      %v1190 = vshrl.u32 %v1189, 7
      %v1191 = vsub.s32 %v1188, %v1190
      %v1192 = vrot.slane %v1185, %v1191
      %v1193 = vcombine.low %v1123, %v1127
      %v1195 = vunpack.c.l.s4 1983009808
      %v1196 = vunpack.c.0.s8 %v1195
      %v1197 = vlaneseq
      %v1198 = vshrl.u32 %v1197, 7
      %v1199 = vsub.s32 %v1196, %v1198
      %v1200 = vrot.slane %v1193, %v1199
      %v1201 = vcombine.low %v1176, %v1184
      %v1203 = vunpack.c.l.s4 1934713408
      %v1204 = vunpack.c.0.s8 %v1203
      %v1205 = vlaneseq
      %v1206 = vshrl.u32 %v1205, 7
      %v1207 = vsub.s32 %v1204, %v1206
      %v1208 = vrot.slane %v1201, %v1207
      %v1209 = vcombine.low %v1192, %v1200
      %v1211 = vunpack.c.l.s4 1934713408
      %v1212 = vunpack.c.0.s8 %v1211
      %v1213 = vlaneseq
      %v1214 = vshrl.u32 %v1213, 7
      %v1215 = vsub.s32 %v1212, %v1214
      %v1216 = vrot.slane %v1209, %v1215
      %v1217 = vcombine.low %v1208, %v1216
      %v1218 = vcombine.high %v1208, %v1216
      %v1219 = vcombine.low %v1114, %v1118
      %v1221 = vunpack.c.l.s4 1983009808
      %v1222 = vunpack.c.0.s8 %v1221
      %v1223 = vlaneseq
      %v1224 = vshrl.u32 %v1223, 7
      %v1225 = vsub.s32 %v1222, %v1224
      %v1226 = vrot.slane %v1219, %v1225
      %v1227 = vcombine.low %v1116, %v1120
      %v1229 = vunpack.c.l.s4 1983009808
      %v1230 = vunpack.c.0.s8 %v1229
      %v1231 = vlaneseq
      %v1232 = vshrl.u32 %v1231, 7
      %v1233 = vsub.s32 %v1230, %v1232
      %v1234 = vrot.slane %v1227, %v1233
      %v1235 = vcombine.low %v1122, %v1126
      %v1237 = vunpack.c.l.s4 1983009808
      %v1238 = vunpack.c.0.s8 %v1237
      %v1239 = vlaneseq
      %v1240 = vshrl.u32 %v1239, 7
      %v1241 = vsub.s32 %v1238, %v1240
      %v1242 = vrot.slane %v1235, %v1241
      %v1243 = vcombine.low %v1124, %v1128
      %v1245 = vunpack.c.l.s4 1983009808
      %v1246 = vunpack.c.0.s8 %v1245
      %v1247 = vlaneseq
      %v1248 = vshrl.u32 %v1247, 7
      %v1249 = vsub.s32 %v1246, %v1248
      %v1250 = vrot.slane %v1243, %v1249
      %v1251 = vcombine.low %v1226, %v1234
      %v1253 = vunpack.c.l.s4 1934713408
      %v1254 = vunpack.c.0.s8 %v1253
      %v1255 = vlaneseq
      %v1256 = vshrl.u32 %v1255, 7
      %v1257 = vsub.s32 %v1254, %v1256
      %v1258 = vrot.slane %v1251, %v1257
      %v1259 = vcombine.low %v1242, %v1250
      %v1261 = vunpack.c.l.s4 1934713408
      %v1262 = vunpack.c.0.s8 %v1261
      %v1263 = vlaneseq
      %v1264 = vshrl.u32 %v1263, 7
      %v1265 = vsub.s32 %v1262, %v1264
      %v1266 = vrot.slane %v1259, %v1265
      %v1267 = vcombine.low %v1258, %v1266
      %v1268 = vcombine.high %v1258, %v1266
      %v1271 = vpack.i.b16 %v1267, %v1217
      %v1272 = vshrl.u32 %v1217, 16
      %v1273 = vshrl.u32 %v1267, 16
      %v1274 = vpack.i.b16 %v1273, %v1272
      %v1277 = vpack.i.b16 %v1268, %v1218
      %v1278 = vshrl.u32 %v1218, 16
      %v1279 = vshrl.u32 %v1268, 16
      %v1280 = vpack.i.b16 %v1279, %v1278
      %1281 = vxpose.xlu0.c.b16.start [1/8] %v1129, 128
      %1282 = vxpose.xlu0.c.b16.cont [2/8] 0, 128
      %1283 = vxpose.xlu0.c.b16.cont [3/8] 0, 128
      %1284 = vxpose.xlu0.c.b16.cont [4/8] 0, 128
      %1285 = vxpose.xlu0.c.b16.cont [5/8] 0, 128
      %1286 = vxpose.xlu0.c.b16.cont [6/8] 0, 128
      %1287 = vxpose.xlu0.c.b16.cont [7/8] 0, 128
      %1288 = vxpose.xlu0.c.b16.end [8/8] 0, 128
      %v1289 = vpop.trf.xlu0
      %v1290 = vpop.trf.xlu0
      %v1291 = vpop.trf.xlu0
      %v1292 = vpop.trf.xlu0
      %v1293 = vpop.trf.xlu0
      %v1294 = vpop.trf.xlu0
      %v1295 = vpop.trf.xlu0
      %v1296 = vpop.trf.xlu0
      %1297 = vxpose.xlu0.c.b16.start [1/8] %v1130, 128
      %1298 = vxpose.xlu0.c.b16.cont [2/8] 0, 128
      %1299 = vxpose.xlu0.c.b16.cont [3/8] 0, 128
      %1300 = vxpose.xlu0.c.b16.cont [4/8] 0, 128
      %1301 = vxpose.xlu0.c.b16.cont [5/8] 0, 128
      %1302 = vxpose.xlu0.c.b16.cont [6/8] 0, 128
      %1303 = vxpose.xlu0.c.b16.cont [7/8] 0, 128
      %1304 = vxpose.xlu0.c.b16.end [8/8] 0, 128
      %v1305 = vpop.trf.xlu0
      %v1306 = vpop.trf.xlu0
      %v1307 = vpop.trf.xlu0
      %v1308 = vpop.trf.xlu0
      %v1309 = vpop.trf.xlu0
      %v1310 = vpop.trf.xlu0
      %v1311 = vpop.trf.xlu0
      %v1312 = vpop.trf.xlu0
      %1313 = vxpose.xlu0.c.b16.start [1/8] %v1131, 128
      %1314 = vxpose.xlu0.c.b16.cont [2/8] 0, 128
      %1315 = vxpose.xlu0.c.b16.cont [3/8] 0, 128
      %1316 = vxpose.xlu0.c.b16.cont [4/8] 0, 128
      %1317 = vxpose.xlu0.c.b16.cont [5/8] 0, 128
      %1318 = vxpose.xlu0.c.b16.cont [6/8] 0, 128
      %1319 = vxpose.xlu0.c.b16.cont [7/8] 0, 128
      %1320 = vxpose.xlu0.c.b16.end [8/8] 0, 128
      %v1321 = vpop.trf.xlu0
      %v1322 = vpop.trf.xlu0
      %v1323 = vpop.trf.xlu0
      %v1324 = vpop.trf.xlu0
      %v1325 = vpop.trf.xlu0
      %v1326 = vpop.trf.xlu0
      %v1327 = vpop.trf.xlu0
      %v1328 = vpop.trf.xlu0
      %1329 = vxpose.xlu0.c.b16.start [1/8] %v1132, 128
      %1330 = vxpose.xlu0.c.b16.cont [2/8] 0, 128
      %1331 = vxpose.xlu0.c.b16.cont [3/8] 0, 128
      %1332 = vxpose.xlu0.c.b16.cont [4/8] 0, 128
      %1333 = vxpose.xlu0.c.b16.cont [5/8] 0, 128
      %1334 = vxpose.xlu0.c.b16.cont [6/8] 0, 128
      %1335 = vxpose.xlu0.c.b16.cont [7/8] 0, 128
      %1336 = vxpose.xlu0.c.b16.end [8/8] 0, 128
      %v1337 = vpop.trf.xlu0
      %v1338 = vpop.trf.xlu0
      %v1339 = vpop.trf.xlu0
      %v1340 = vpop.trf.xlu0
      %v1341 = vpop.trf.xlu0
      %v1342 = vpop.trf.xlu0
      %v1343 = vpop.trf.xlu0
      %v1344 = vpop.trf.xlu0
      %1345 = vxpose.xlu0.c.b16.start [1/8] %v1133, 128
      %1346 = vxpose.xlu0.c.b16.cont [2/8] 0, 128
      %1347 = vxpose.xlu0.c.b16.cont [3/8] 0, 128
      %1348 = vxpose.xlu0.c.b16.cont [4/8] 0, 128
      %1349 = vxpose.xlu0.c.b16.cont [5/8] 0, 128
      %1350 = vxpose.xlu0.c.b16.cont [6/8] 0, 128
      %1351 = vxpose.xlu0.c.b16.cont [7/8] 0, 128
      %1352 = vxpose.xlu0.c.b16.end [8/8] 0, 128
      %v1353 = vpop.trf.xlu0
      %v1354 = vpop.trf.xlu0
      %v1355 = vpop.trf.xlu0
      %v1356 = vpop.trf.xlu0
      %v1357 = vpop.trf.xlu0
      %v1358 = vpop.trf.xlu0
      %v1359 = vpop.trf.xlu0
      %v1360 = vpop.trf.xlu0
      %1361 = vxpose.xlu0.c.b16.start [1/8] %v1134, 128
      %1362 = vxpose.xlu0.c.b16.cont [2/8] 0, 128
      %1363 = vxpose.xlu0.c.b16.cont [3/8] 0, 128
      %1364 = vxpose.xlu0.c.b16.cont [4/8] 0, 128
      %1365 = vxpose.xlu0.c.b16.cont [5/8] 0, 128
      %1366 = vxpose.xlu0.c.b16.cont [6/8] 0, 128
      %1367 = vxpose.xlu0.c.b16.cont [7/8] 0, 128
      %1368 = vxpose.xlu0.c.b16.end [8/8] 0, 128
      %v1369 = vpop.trf.xlu0
      %v1370 = vpop.trf.xlu0
      %v1371 = vpop.trf.xlu0
      %v1372 = vpop.trf.xlu0
      %v1373 = vpop.trf.xlu0
      %v1374 = vpop.trf.xlu0
      %v1375 = vpop.trf.xlu0
      %v1376 = vpop.trf.xlu0
      %1377 = vxpose.xlu0.c.b16.start [1/8] %v1135, 128
      %1378 = vxpose.xlu0.c.b16.cont [2/8] 0, 128
      %1379 = vxpose.xlu0.c.b16.cont [3/8] 0, 128
      %1380 = vxpose.xlu0.c.b16.cont [4/8] 0, 128
      %1381 = vxpose.xlu0.c.b16.cont [5/8] 0, 128
      %1382 = vxpose.xlu0.c.b16.cont [6/8] 0, 128
      %1383 = vxpose.xlu0.c.b16.cont [7/8] 0, 128
      %1384 = vxpose.xlu0.c.b16.end [8/8] 0, 128
      %v1385 = vpop.trf.xlu0
      %v1386 = vpop.trf.xlu0
      %v1387 = vpop.trf.xlu0
      %v1388 = vpop.trf.xlu0
      %v1389 = vpop.trf.xlu0
      %v1390 = vpop.trf.xlu0
      %v1391 = vpop.trf.xlu0
      %v1392 = vpop.trf.xlu0
      %1393 = vxpose.xlu0.c.b16.start [1/8] %v1136, 128
      %1394 = vxpose.xlu0.c.b16.cont [2/8] 0, 128
      %1395 = vxpose.xlu0.c.b16.cont [3/8] 0, 128
      %1396 = vxpose.xlu0.c.b16.cont [4/8] 0, 128
      %1397 = vxpose.xlu0.c.b16.cont [5/8] 0, 128
      %1398 = vxpose.xlu0.c.b16.cont [6/8] 0, 128
      %1399 = vxpose.xlu0.c.b16.cont [7/8] 0, 128
      %1400 = vxpose.xlu0.c.b16.end [8/8] 0, 128
      %v1401 = vpop.trf.xlu0
      %v1402 = vpop.trf.xlu0
      %v1403 = vpop.trf.xlu0
      %v1404 = vpop.trf.xlu0
      %v1405 = vpop.trf.xlu0
      %v1406 = vpop.trf.xlu0
      %v1407 = vpop.trf.xlu0
      %v1408 = vpop.trf.xlu0
      %1409 = vxpose.xlu0.c.b16.start [1/8] %v1137, 128
      %1410 = vxpose.xlu0.c.b16.cont [2/8] 0, 128
      %1411 = vxpose.xlu0.c.b16.cont [3/8] 0, 128
      %1412 = vxpose.xlu0.c.b16.cont [4/8] 0, 128
      %1413 = vxpose.xlu0.c.b16.cont [5/8] 0, 128
      %1414 = vxpose.xlu0.c.b16.cont [6/8] 0, 128
      %1415 = vxpose.xlu0.c.b16.cont [7/8] 0, 128
      %1416 = vxpose.xlu0.c.b16.end [8/8] 0, 128
      %v1417 = vpop.trf.xlu0
      %v1418 = vpop.trf.xlu0
      %v1419 = vpop.trf.xlu0
      %v1420 = vpop.trf.xlu0
      %v1421 = vpop.trf.xlu0
      %v1422 = vpop.trf.xlu0
      %v1423 = vpop.trf.xlu0
      %v1424 = vpop.trf.xlu0
      %1425 = vxpose.xlu0.c.b16.start [1/8] %v1138, 128
      %1426 = vxpose.xlu0.c.b16.cont [2/8] 0, 128
      %1427 = vxpose.xlu0.c.b16.cont [3/8] 0, 128
      %1428 = vxpose.xlu0.c.b16.cont [4/8] 0, 128
      %1429 = vxpose.xlu0.c.b16.cont [5/8] 0, 128
      %1430 = vxpose.xlu0.c.b16.cont [6/8] 0, 128
      %1431 = vxpose.xlu0.c.b16.cont [7/8] 0, 128
      %1432 = vxpose.xlu0.c.b16.end [8/8] 0, 128
      %v1433 = vpop.trf.xlu0
      %v1434 = vpop.trf.xlu0
      %v1435 = vpop.trf.xlu0
      %v1436 = vpop.trf.xlu0
      %v1437 = vpop.trf.xlu0
      %v1438 = vpop.trf.xlu0
      %v1439 = vpop.trf.xlu0
      %v1440 = vpop.trf.xlu0
      %1441 = vxpose.xlu0.c.b16.start [1/8] %v1139, 128
      %1442 = vxpose.xlu0.c.b16.cont [2/8] 0, 128
      %1443 = vxpose.xlu0.c.b16.cont [3/8] 0, 128
      %1444 = vxpose.xlu0.c.b16.cont [4/8] 0, 128
      %1445 = vxpose.xlu0.c.b16.cont [5/8] 0, 128
      %1446 = vxpose.xlu0.c.b16.cont [6/8] 0, 128
      %1447 = vxpose.xlu0.c.b16.cont [7/8] 0, 128
      %1448 = vxpose.xlu0.c.b16.end [8/8] 0, 128
      %v1449 = vpop.trf.xlu0
      %v1450 = vpop.trf.xlu0
      %v1451 = vpop.trf.xlu0
      %v1452 = vpop.trf.xlu0
      %v1453 = vpop.trf.xlu0
      %v1454 = vpop.trf.xlu0
      %v1455 = vpop.trf.xlu0
      %v1456 = vpop.trf.xlu0
      %1457 = vxpose.xlu0.c.b16.start [1/8] %v1140, 128
      %1458 = vxpose.xlu0.c.b16.cont [2/8] 0, 128
      %1459 = vxpose.xlu0.c.b16.cont [3/8] 0, 128
      %1460 = vxpose.xlu0.c.b16.cont [4/8] 0, 128
      %1461 = vxpose.xlu0.c.b16.cont [5/8] 0, 128
      %1462 = vxpose.xlu0.c.b16.cont [6/8] 0, 128
      %1463 = vxpose.xlu0.c.b16.cont [7/8] 0, 128
      %1464 = vxpose.xlu0.c.b16.end [8/8] 0, 128
      %v1465 = vpop.trf.xlu0
      %v1466 = vpop.trf.xlu0
      %v1467 = vpop.trf.xlu0
      %v1468 = vpop.trf.xlu0
      %v1469 = vpop.trf.xlu0
      %v1470 = vpop.trf.xlu0
      %v1471 = vpop.trf.xlu0
      %v1472 = vpop.trf.xlu0
      %1473 = vxpose.xlu0.c.b16.start [1/8] %v1141, 128
      %1474 = vxpose.xlu0.c.b16.cont [2/8] 0, 128
      %1475 = vxpose.xlu0.c.b16.cont [3/8] 0, 128
      %1476 = vxpose.xlu0.c.b16.cont [4/8] 0, 128
      %1477 = vxpose.xlu0.c.b16.cont [5/8] 0, 128
      %1478 = vxpose.xlu0.c.b16.cont [6/8] 0, 128
      %1479 = vxpose.xlu0.c.b16.cont [7/8] 0, 128
      %1480 = vxpose.xlu0.c.b16.end [8/8] 0, 128
      %v1481 = vpop.trf.xlu0
      %v1482 = vpop.trf.xlu0
      %v1483 = vpop.trf.xlu0
      %v1484 = vpop.trf.xlu0
      %v1485 = vpop.trf.xlu0
      %v1486 = vpop.trf.xlu0
      %v1487 = vpop.trf.xlu0
      %v1488 = vpop.trf.xlu0
      %1489 = vxpose.xlu0.c.b16.start [1/8] %v1142, 128
      %1490 = vxpose.xlu0.c.b16.cont [2/8] 0, 128
      %1491 = vxpose.xlu0.c.b16.cont [3/8] 0, 128
      %1492 = vxpose.xlu0.c.b16.cont [4/8] 0, 128
      %1493 = vxpose.xlu0.c.b16.cont [5/8] 0, 128
      %1494 = vxpose.xlu0.c.b16.cont [6/8] 0, 128
      %1495 = vxpose.xlu0.c.b16.cont [7/8] 0, 128
      %1496 = vxpose.xlu0.c.b16.end [8/8] 0, 128
      %v1497 = vpop.trf.xlu0
      %v1498 = vpop.trf.xlu0
      %v1499 = vpop.trf.xlu0
      %v1500 = vpop.trf.xlu0
      %v1501 = vpop.trf.xlu0
      %v1502 = vpop.trf.xlu0
      %v1503 = vpop.trf.xlu0
      %v1504 = vpop.trf.xlu0
      %1505 = vxpose.xlu0.c.b16.start [1/8] %v1143, 128
      %1506 = vxpose.xlu0.c.b16.cont [2/8] 0, 128
      %1507 = vxpose.xlu0.c.b16.cont [3/8] 0, 128
      %1508 = vxpose.xlu0.c.b16.cont [4/8] 0, 128
      %1509 = vxpose.xlu0.c.b16.cont [5/8] 0, 128
      %1510 = vxpose.xlu0.c.b16.cont [6/8] 0, 128
      %1511 = vxpose.xlu0.c.b16.cont [7/8] 0, 128
      %1512 = vxpose.xlu0.c.b16.end [8/8] 0, 128
      %v1513 = vpop.trf.xlu0
      %v1514 = vpop.trf.xlu0
      %v1515 = vpop.trf.xlu0
      %v1516 = vpop.trf.xlu0
      %v1517 = vpop.trf.xlu0
      %v1518 = vpop.trf.xlu0
      %v1519 = vpop.trf.xlu0
      %v1520 = vpop.trf.xlu0
      %1521 = vxpose.xlu0.c.b16.start [1/8] %v1144, 128
      %1522 = vxpose.xlu0.c.b16.cont [2/8] 0, 128
      %1523 = vxpose.xlu0.c.b16.cont [3/8] 0, 128
      %1524 = vxpose.xlu0.c.b16.cont [4/8] 0, 128
      %1525 = vxpose.xlu0.c.b16.cont [5/8] 0, 128
      %1526 = vxpose.xlu0.c.b16.cont [6/8] 0, 128
      %1527 = vxpose.xlu0.c.b16.cont [7/8] 0, 128
      %1528 = vxpose.xlu0.c.b16.end [8/8] 0, 128
      %v1529 = vpop.trf.xlu0
      %v1530 = vpop.trf.xlu0
      %v1531 = vpop.trf.xlu0
      %v1532 = vpop.trf.xlu0
      %v1533 = vpop.trf.xlu0
      %v1534 = vpop.trf.xlu0
      %v1535 = vpop.trf.xlu0
      %v1536 = vpop.trf.xlu0
      %1537 = vxpose.xlu0.c.b16.start [1/8] %v1145, 128
      %1538 = vxpose.xlu0.c.b16.cont [2/8] 0, 128
      %1539 = vxpose.xlu0.c.b16.cont [3/8] 0, 128
      %1540 = vxpose.xlu0.c.b16.cont [4/8] 0, 128
      %1541 = vxpose.xlu0.c.b16.cont [5/8] 0, 128
      %1542 = vxpose.xlu0.c.b16.cont [6/8] 0, 128
      %1543 = vxpose.xlu0.c.b16.cont [7/8] 0, 128
      %1544 = vxpose.xlu0.c.b16.end [8/8] 0, 128
      %v1545 = vpop.trf.xlu0
      %v1546 = vpop.trf.xlu0
      %v1547 = vpop.trf.xlu0
      %v1548 = vpop.trf.xlu0
      %v1549 = vpop.trf.xlu0
      %v1550 = vpop.trf.xlu0
      %v1551 = vpop.trf.xlu0
      %v1552 = vpop.trf.xlu0
      %1553 = vxpose.xlu0.c.b16.start [1/8] %v1146, 128
      %1554 = vxpose.xlu0.c.b16.cont [2/8] 0, 128
      %1555 = vxpose.xlu0.c.b16.cont [3/8] 0, 128
      %1556 = vxpose.xlu0.c.b16.cont [4/8] 0, 128
      %1557 = vxpose.xlu0.c.b16.cont [5/8] 0, 128
      %1558 = vxpose.xlu0.c.b16.cont [6/8] 0, 128
      %1559 = vxpose.xlu0.c.b16.cont [7/8] 0, 128
      %1560 = vxpose.xlu0.c.b16.end [8/8] 0, 128
      %v1561 = vpop.trf.xlu0
      %v1562 = vpop.trf.xlu0
      %v1563 = vpop.trf.xlu0
      %v1564 = vpop.trf.xlu0
      %v1565 = vpop.trf.xlu0
      %v1566 = vpop.trf.xlu0
      %v1567 = vpop.trf.xlu0
      %v1568 = vpop.trf.xlu0
      %1569 = vxpose.xlu0.c.b16.start [1/8] %v1147, 128
      %1570 = vxpose.xlu0.c.b16.cont [2/8] 0, 128
      %1571 = vxpose.xlu0.c.b16.cont [3/8] 0, 128
      %1572 = vxpose.xlu0.c.b16.cont [4/8] 0, 128
      %1573 = vxpose.xlu0.c.b16.cont [5/8] 0, 128
      %1574 = vxpose.xlu0.c.b16.cont [6/8] 0, 128
      %1575 = vxpose.xlu0.c.b16.cont [7/8] 0, 128
      %1576 = vxpose.xlu0.c.b16.end [8/8] 0, 128
      %v1577 = vpop.trf.xlu0
      %v1578 = vpop.trf.xlu0
      %v1579 = vpop.trf.xlu0
      %v1580 = vpop.trf.xlu0
      %v1581 = vpop.trf.xlu0
      %v1582 = vpop.trf.xlu0
      %v1583 = vpop.trf.xlu0
      %v1584 = vpop.trf.xlu0
      %1585 = vxpose.xlu0.c.b16.start [1/8] %v1148, 128
      %1586 = vxpose.xlu0.c.b16.cont [2/8] 0, 128
      %1587 = vxpose.xlu0.c.b16.cont [3/8] 0, 128
      %1588 = vxpose.xlu0.c.b16.cont [4/8] 0, 128
      %1589 = vxpose.xlu0.c.b16.cont [5/8] 0, 128
      %1590 = vxpose.xlu0.c.b16.cont [6/8] 0, 128
      %1591 = vxpose.xlu0.c.b16.cont [7/8] 0, 128
      %1592 = vxpose.xlu0.c.b16.end [8/8] 0, 128
      %v1593 = vpop.trf.xlu0
      %v1594 = vpop.trf.xlu0
      %v1595 = vpop.trf.xlu0
      %v1596 = vpop.trf.xlu0
      %v1597 = vpop.trf.xlu0
      %v1598 = vpop.trf.xlu0
      %v1599 = vpop.trf.xlu0
      %v1600 = vpop.trf.xlu0
      %1601 = vxpose.xlu0.c.b16.start [1/8] %v1149, 128
      %1602 = vxpose.xlu0.c.b16.cont [2/8] 0, 128
      %1603 = vxpose.xlu0.c.b16.cont [3/8] 0, 128
      %1604 = vxpose.xlu0.c.b16.cont [4/8] 0, 128
      %1605 = vxpose.xlu0.c.b16.cont [5/8] 0, 128
      %1606 = vxpose.xlu0.c.b16.cont [6/8] 0, 128
      %1607 = vxpose.xlu0.c.b16.cont [7/8] 0, 128
      %1608 = vxpose.xlu0.c.b16.end [8/8] 0, 128
      %v1609 = vpop.trf.xlu0
      %v1610 = vpop.trf.xlu0
      %v1611 = vpop.trf.xlu0
      %v1612 = vpop.trf.xlu0
      %v1613 = vpop.trf.xlu0
      %v1614 = vpop.trf.xlu0
      %v1615 = vpop.trf.xlu0
      %v1616 = vpop.trf.xlu0
      %1617 = vxpose.xlu0.c.b16.start [1/8] %v1150, 128
      %1618 = vxpose.xlu0.c.b16.cont [2/8] 0, 128
      %1619 = vxpose.xlu0.c.b16.cont [3/8] 0, 128
      %1620 = vxpose.xlu0.c.b16.cont [4/8] 0, 128
      %1621 = vxpose.xlu0.c.b16.cont [5/8] 0, 128
      %1622 = vxpose.xlu0.c.b16.cont [6/8] 0, 128
      %1623 = vxpose.xlu0.c.b16.cont [7/8] 0, 128
      %1624 = vxpose.xlu0.c.b16.end [8/8] 0, 128
      %v1625 = vpop.trf.xlu0
      %v1626 = vpop.trf.xlu0
      %v1627 = vpop.trf.xlu0
      %v1628 = vpop.trf.xlu0
      %v1629 = vpop.trf.xlu0
      %v1630 = vpop.trf.xlu0
      %v1631 = vpop.trf.xlu0
      %v1632 = vpop.trf.xlu0
      %1633 = vxpose.xlu0.c.b16.start [1/8] %v1151, 128
      %1634 = vxpose.xlu0.c.b16.cont [2/8] 0, 128
      %1635 = vxpose.xlu0.c.b16.cont [3/8] 0, 128
      %1636 = vxpose.xlu0.c.b16.cont [4/8] 0, 128
      %1637 = vxpose.xlu0.c.b16.cont [5/8] 0, 128
      %1638 = vxpose.xlu0.c.b16.cont [6/8] 0, 128
      %1639 = vxpose.xlu0.c.b16.cont [7/8] 0, 128
      %1640 = vxpose.xlu0.c.b16.end [8/8] 0, 128
      %v1641 = vpop.trf.xlu0
      %v1642 = vpop.trf.xlu0
      %v1643 = vpop.trf.xlu0
      %v1644 = vpop.trf.xlu0
      %v1645 = vpop.trf.xlu0
      %v1646 = vpop.trf.xlu0
      %v1647 = vpop.trf.xlu0
      %v1648 = vpop.trf.xlu0
      %1649 = vxpose.xlu0.c.b16.start [1/8] %v1152, 128
      %1650 = vxpose.xlu0.c.b16.cont [2/8] 0, 128
      %1651 = vxpose.xlu0.c.b16.cont [3/8] 0, 128
      %1652 = vxpose.xlu0.c.b16.cont [4/8] 0, 128
      %1653 = vxpose.xlu0.c.b16.cont [5/8] 0, 128
      %1654 = vxpose.xlu0.c.b16.cont [6/8] 0, 128
      %1655 = vxpose.xlu0.c.b16.cont [7/8] 0, 128
      %1656 = vxpose.xlu0.c.b16.end [8/8] 0, 128
      %v1657 = vpop.trf.xlu0
      %v1658 = vpop.trf.xlu0
      %v1659 = vpop.trf.xlu0
      %v1660 = vpop.trf.xlu0
      %v1661 = vpop.trf.xlu0
      %v1662 = vpop.trf.xlu0
      %v1663 = vpop.trf.xlu0
      %v1664 = vpop.trf.xlu0
      %1665 = vxpose.xlu0.c.b16.start [1/8] %v1153, 128
      %1666 = vxpose.xlu0.c.b16.cont [2/8] 0, 128
      %1667 = vxpose.xlu0.c.b16.cont [3/8] 0, 128
      %1668 = vxpose.xlu0.c.b16.cont [4/8] 0, 128
      %1669 = vxpose.xlu0.c.b16.cont [5/8] 0, 128
      %1670 = vxpose.xlu0.c.b16.cont [6/8] 0, 128
      %1671 = vxpose.xlu0.c.b16.cont [7/8] 0, 128
      %1672 = vxpose.xlu0.c.b16.end [8/8] 0, 128
      %v1673 = vpop.trf.xlu0
      %v1674 = vpop.trf.xlu0
      %v1675 = vpop.trf.xlu0
      %v1676 = vpop.trf.xlu0
      %v1677 = vpop.trf.xlu0
      %v1678 = vpop.trf.xlu0
      %v1679 = vpop.trf.xlu0
      %v1680 = vpop.trf.xlu0
      %1681 = vxpose.xlu0.c.b16.start [1/8] %v1154, 128
      %1682 = vxpose.xlu0.c.b16.cont [2/8] 0, 128
      %1683 = vxpose.xlu0.c.b16.cont [3/8] 0, 128
      %1684 = vxpose.xlu0.c.b16.cont [4/8] 0, 128
      %1685 = vxpose.xlu0.c.b16.cont [5/8] 0, 128
      %1686 = vxpose.xlu0.c.b16.cont [6/8] 0, 128
      %1687 = vxpose.xlu0.c.b16.cont [7/8] 0, 128
      %1688 = vxpose.xlu0.c.b16.end [8/8] 0, 128
      %v1689 = vpop.trf.xlu0
      %v1690 = vpop.trf.xlu0
      %v1691 = vpop.trf.xlu0
      %v1692 = vpop.trf.xlu0
      %v1693 = vpop.trf.xlu0
      %v1694 = vpop.trf.xlu0
      %v1695 = vpop.trf.xlu0
      %v1696 = vpop.trf.xlu0
      %1697 = vxpose.xlu0.c.b16.start [1/8] %v1155, 128
      %1698 = vxpose.xlu0.c.b16.cont [2/8] 0, 128
      %1699 = vxpose.xlu0.c.b16.cont [3/8] 0, 128
      %1700 = vxpose.xlu0.c.b16.cont [4/8] 0, 128
      %1701 = vxpose.xlu0.c.b16.cont [5/8] 0, 128
      %1702 = vxpose.xlu0.c.b16.cont [6/8] 0, 128
      %1703 = vxpose.xlu0.c.b16.cont [7/8] 0, 128
      %1704 = vxpose.xlu0.c.b16.end [8/8] 0, 128
      %v1705 = vpop.trf.xlu0
      %v1706 = vpop.trf.xlu0
      %v1707 = vpop.trf.xlu0
      %v1708 = vpop.trf.xlu0
      %v1709 = vpop.trf.xlu0
      %v1710 = vpop.trf.xlu0
      %v1711 = vpop.trf.xlu0
      %v1712 = vpop.trf.xlu0
      %1713 = vxpose.xlu0.c.b16.start [1/8] %v1156, 128
      %1714 = vxpose.xlu0.c.b16.cont [2/8] 0, 128
      %1715 = vxpose.xlu0.c.b16.cont [3/8] 0, 128
      %1716 = vxpose.xlu0.c.b16.cont [4/8] 0, 128
      %1717 = vxpose.xlu0.c.b16.cont [5/8] 0, 128
      %1718 = vxpose.xlu0.c.b16.cont [6/8] 0, 128
      %1719 = vxpose.xlu0.c.b16.cont [7/8] 0, 128
      %1720 = vxpose.xlu0.c.b16.end [8/8] 0, 128
      %v1721 = vpop.trf.xlu0
      %v1722 = vpop.trf.xlu0
      %v1723 = vpop.trf.xlu0
      %v1724 = vpop.trf.xlu0
      %v1725 = vpop.trf.xlu0
      %v1726 = vpop.trf.xlu0
      %v1727 = vpop.trf.xlu0
      %v1728 = vpop.trf.xlu0
      %1729 = vxpose.xlu0.c.b16.start [1/8] %v1157, 128
      %1730 = vxpose.xlu0.c.b16.cont [2/8] 0, 128
      %1731 = vxpose.xlu0.c.b16.cont [3/8] 0, 128
      %1732 = vxpose.xlu0.c.b16.cont [4/8] 0, 128
      %1733 = vxpose.xlu0.c.b16.cont [5/8] 0, 128
      %1734 = vxpose.xlu0.c.b16.cont [6/8] 0, 128
      %1735 = vxpose.xlu0.c.b16.cont [7/8] 0, 128
      %1736 = vxpose.xlu0.c.b16.end [8/8] 0, 128
      %v1737 = vpop.trf.xlu0
      %v1738 = vpop.trf.xlu0
      %v1739 = vpop.trf.xlu0
      %v1740 = vpop.trf.xlu0
      %v1741 = vpop.trf.xlu0
      %v1742 = vpop.trf.xlu0
      %v1743 = vpop.trf.xlu0
      %v1744 = vpop.trf.xlu0
      %1745 = vxpose.xlu0.c.b16.start [1/8] %v1158, 128
      %1746 = vxpose.xlu0.c.b16.cont [2/8] 0, 128
      %1747 = vxpose.xlu0.c.b16.cont [3/8] 0, 128
      %1748 = vxpose.xlu0.c.b16.cont [4/8] 0, 128
      %1749 = vxpose.xlu0.c.b16.cont [5/8] 0, 128
      %1750 = vxpose.xlu0.c.b16.cont [6/8] 0, 128
      %1751 = vxpose.xlu0.c.b16.cont [7/8] 0, 128
      %1752 = vxpose.xlu0.c.b16.end [8/8] 0, 128
      %v1753 = vpop.trf.xlu0
      %v1754 = vpop.trf.xlu0
      %v1755 = vpop.trf.xlu0
      %v1756 = vpop.trf.xlu0
      %v1757 = vpop.trf.xlu0
      %v1758 = vpop.trf.xlu0
      %v1759 = vpop.trf.xlu0
      %v1760 = vpop.trf.xlu0
      %1761 = vxpose.xlu0.c.b16.start [1/8] %v1159, 128
      %1762 = vxpose.xlu0.c.b16.cont [2/8] 0, 128
      %1763 = vxpose.xlu0.c.b16.cont [3/8] 0, 128
      %1764 = vxpose.xlu0.c.b16.cont [4/8] 0, 128
      %1765 = vxpose.xlu0.c.b16.cont [5/8] 0, 128
      %1766 = vxpose.xlu0.c.b16.cont [6/8] 0, 128
      %1767 = vxpose.xlu0.c.b16.cont [7/8] 0, 128
      %1768 = vxpose.xlu0.c.b16.end [8/8] 0, 128
      %v1769 = vpop.trf.xlu0
      %v1770 = vpop.trf.xlu0
      %v1771 = vpop.trf.xlu0
      %v1772 = vpop.trf.xlu0
      %v1773 = vpop.trf.xlu0
      %v1774 = vpop.trf.xlu0
      %v1775 = vpop.trf.xlu0
      %v1776 = vpop.trf.xlu0
      %1777 = vxpose.xlu0.c.b16.start [1/8] %v1160, 128
      %1778 = vxpose.xlu0.c.b16.cont [2/8] 0, 128
      %1779 = vxpose.xlu0.c.b16.cont [3/8] 0, 128
      %1780 = vxpose.xlu0.c.b16.cont [4/8] 0, 128
      %1781 = vxpose.xlu0.c.b16.cont [5/8] 0, 128
      %1782 = vxpose.xlu0.c.b16.cont [6/8] 0, 128
      %1783 = vxpose.xlu0.c.b16.cont [7/8] 0, 128
      %1784 = vxpose.xlu0.c.b16.end [8/8] 0, 128
      %v1785 = vpop.trf.xlu0
      %v1786 = vpop.trf.xlu0
      %v1787 = vpop.trf.xlu0
      %v1788 = vpop.trf.xlu0
      %v1789 = vpop.trf.xlu0
      %v1790 = vpop.trf.xlu0
      %v1791 = vpop.trf.xlu0
      %v1792 = vpop.trf.xlu0
      %1793 = vxpose.xlu0.c.b16.start [1/8] %v1161, 128
      %1794 = vxpose.xlu0.c.b16.cont [2/8] 0, 128
      %1795 = vxpose.xlu0.c.b16.cont [3/8] 0, 128
      %1796 = vxpose.xlu0.c.b16.cont [4/8] 0, 128
      %1797 = vxpose.xlu0.c.b16.cont [5/8] 0, 128
      %1798 = vxpose.xlu0.c.b16.cont [6/8] 0, 128
      %1799 = vxpose.xlu0.c.b16.cont [7/8] 0, 128
      %1800 = vxpose.xlu0.c.b16.end [8/8] 0, 128
      %v1801 = vpop.trf.xlu0
      %v1802 = vpop.trf.xlu0
      %v1803 = vpop.trf.xlu0
      %v1804 = vpop.trf.xlu0
      %v1805 = vpop.trf.xlu0
      %v1806 = vpop.trf.xlu0
      %v1807 = vpop.trf.xlu0
      %v1808 = vpop.trf.xlu0
      %1809 = vxpose.xlu0.c.b16.start [1/8] %v1162, 128
      %1810 = vxpose.xlu0.c.b16.cont [2/8] 0, 128
      %1811 = vxpose.xlu0.c.b16.cont [3/8] 0, 128
      %1812 = vxpose.xlu0.c.b16.cont [4/8] 0, 128
      %1813 = vxpose.xlu0.c.b16.cont [5/8] 0, 128
      %1814 = vxpose.xlu0.c.b16.cont [6/8] 0, 128
      %1815 = vxpose.xlu0.c.b16.cont [7/8] 0, 128
      %1816 = vxpose.xlu0.c.b16.end [8/8] 0, 128
      %v1817 = vpop.trf.xlu0
      %v1818 = vpop.trf.xlu0
      %v1819 = vpop.trf.xlu0
      %v1820 = vpop.trf.xlu0
      %v1821 = vpop.trf.xlu0
      %v1822 = vpop.trf.xlu0
      %v1823 = vpop.trf.xlu0
      %v1824 = vpop.trf.xlu0
      %1825 = vxpose.xlu0.c.b16.start [1/8] %v1163, 128
      %1826 = vxpose.xlu0.c.b16.cont [2/8] 0, 128
      %1827 = vxpose.xlu0.c.b16.cont [3/8] 0, 128
      %1828 = vxpose.xlu0.c.b16.cont [4/8] 0, 128
      %1829 = vxpose.xlu0.c.b16.cont [5/8] 0, 128
      %1830 = vxpose.xlu0.c.b16.cont [6/8] 0, 128
      %1831 = vxpose.xlu0.c.b16.cont [7/8] 0, 128
      %1832 = vxpose.xlu0.c.b16.end [8/8] 0, 128
      %v1833 = vpop.trf.xlu0
      %v1834 = vpop.trf.xlu0
      %v1835 = vpop.trf.xlu0
      %v1836 = vpop.trf.xlu0
      %v1837 = vpop.trf.xlu0
      %v1838 = vpop.trf.xlu0
      %v1839 = vpop.trf.xlu0
      %v1840 = vpop.trf.xlu0
      %1841 = vxpose.xlu0.c.b16.start [1/8] %v1164, 128
      %1842 = vxpose.xlu0.c.b16.cont [2/8] 0, 128
      %1843 = vxpose.xlu0.c.b16.cont [3/8] 0, 128
      %1844 = vxpose.xlu0.c.b16.cont [4/8] 0, 128
      %1845 = vxpose.xlu0.c.b16.cont [5/8] 0, 128
      %1846 = vxpose.xlu0.c.b16.cont [6/8] 0, 128
      %1847 = vxpose.xlu0.c.b16.cont [7/8] 0, 128
      %1848 = vxpose.xlu0.c.b16.end [8/8] 0, 128
      %v1849 = vpop.trf.xlu0
      %v1850 = vpop.trf.xlu0
      %v1851 = vpop.trf.xlu0
      %v1852 = vpop.trf.xlu0
      %v1853 = vpop.trf.xlu0
      %v1854 = vpop.trf.xlu0
      %v1855 = vpop.trf.xlu0
      %v1856 = vpop.trf.xlu0
      %1857 = vxpose.xlu0.c.b16.start [1/8] %v1165, 128
      %1858 = vxpose.xlu0.c.b16.cont [2/8] 0, 128
      %1859 = vxpose.xlu0.c.b16.cont [3/8] 0, 128
      %1860 = vxpose.xlu0.c.b16.cont [4/8] 0, 128
      %1861 = vxpose.xlu0.c.b16.cont [5/8] 0, 128
      %1862 = vxpose.xlu0.c.b16.cont [6/8] 0, 128
      %1863 = vxpose.xlu0.c.b16.cont [7/8] 0, 128
      %1864 = vxpose.xlu0.c.b16.end [8/8] 0, 128
      %v1865 = vpop.trf.xlu0
      %v1866 = vpop.trf.xlu0
      %v1867 = vpop.trf.xlu0
      %v1868 = vpop.trf.xlu0
      %v1869 = vpop.trf.xlu0
      %v1870 = vpop.trf.xlu0
      %v1871 = vpop.trf.xlu0
      %v1872 = vpop.trf.xlu0
      %1873 = vxpose.xlu0.c.b16.start [1/8] %v1166, 128
      %1874 = vxpose.xlu0.c.b16.cont [2/8] 0, 128
      %1875 = vxpose.xlu0.c.b16.cont [3/8] 0, 128
      %1876 = vxpose.xlu0.c.b16.cont [4/8] 0, 128
      %1877 = vxpose.xlu0.c.b16.cont [5/8] 0, 128
      %1878 = vxpose.xlu0.c.b16.cont [6/8] 0, 128
      %1879 = vxpose.xlu0.c.b16.cont [7/8] 0, 128
      %1880 = vxpose.xlu0.c.b16.end [8/8] 0, 128
      %v1881 = vpop.trf.xlu0
      %v1882 = vpop.trf.xlu0
      %v1883 = vpop.trf.xlu0
      %v1884 = vpop.trf.xlu0
      %v1885 = vpop.trf.xlu0
      %v1886 = vpop.trf.xlu0
      %v1887 = vpop.trf.xlu0
      %v1888 = vpop.trf.xlu0
      %1889 = vxpose.xlu0.c.b16.start [1/8] %v1167, 128
      %1890 = vxpose.xlu0.c.b16.cont [2/8] 0, 128
      %1891 = vxpose.xlu0.c.b16.cont [3/8] 0, 128
      %1892 = vxpose.xlu0.c.b16.cont [4/8] 0, 128
      %1893 = vxpose.xlu0.c.b16.cont [5/8] 0, 128
      %1894 = vxpose.xlu0.c.b16.cont [6/8] 0, 128
      %1895 = vxpose.xlu0.c.b16.cont [7/8] 0, 128
      %1896 = vxpose.xlu0.c.b16.end [8/8] 0, 128
      %v1897 = vpop.trf.xlu0
      %v1898 = vpop.trf.xlu0
      %v1899 = vpop.trf.xlu0
      %v1900 = vpop.trf.xlu0
      %v1901 = vpop.trf.xlu0
      %v1902 = vpop.trf.xlu0
      %v1903 = vpop.trf.xlu0
      %v1904 = vpop.trf.xlu0
      %1905 = vxpose.xlu0.c.b16.start [1/8] %v1168, 128
      %1906 = vxpose.xlu0.c.b16.cont [2/8] 0, 128
      %1907 = vxpose.xlu0.c.b16.cont [3/8] 0, 128
      %1908 = vxpose.xlu0.c.b16.cont [4/8] 0, 128
      %1909 = vxpose.xlu0.c.b16.cont [5/8] 0, 128
      %1910 = vxpose.xlu0.c.b16.cont [6/8] 0, 128
      %1911 = vxpose.xlu0.c.b16.cont [7/8] 0, 128
      %1912 = vxpose.xlu0.c.b16.end [8/8] 0, 128
      %v1913 = vpop.trf.xlu0
      %v1914 = vpop.trf.xlu0
      %v1915 = vpop.trf.xlu0
      %v1916 = vpop.trf.xlu0
      %v1917 = vpop.trf.xlu0
      %v1918 = vpop.trf.xlu0
      %v1919 = vpop.trf.xlu0
      %v1920 = vpop.trf.xlu0
      %v1923 = vpack.i.b16 %v1305, %v1289
      %v1925 = vshrl.u32 %v1289, 16
      %v1926 = vshrl.u32 %v1305, 16
      %v1927 = vpack.i.b16 %v1926, %v1925
      %v1931 = vpack.i.b16 %v1337, %v1321
      %v1933 = vshrl.u32 %v1321, 16
      %v1934 = vshrl.u32 %v1337, 16
      %v1935 = vpack.i.b16 %v1934, %v1933
      %v1939 = vpack.i.b16 %v1369, %v1353
      %v1941 = vshrl.u32 %v1353, 16
      %v1942 = vshrl.u32 %v1369, 16
      %v1943 = vpack.i.b16 %v1942, %v1941
      %v1947 = vpack.i.b16 %v1401, %v1385
      %v1949 = vshrl.u32 %v1385, 16
      %v1950 = vshrl.u32 %v1401, 16
      %v1951 = vpack.i.b16 %v1950, %v1949
      %v1955 = vpack.i.b16 %v1433, %v1417
      %v1957 = vshrl.u32 %v1417, 16
      %v1958 = vshrl.u32 %v1433, 16
      %v1959 = vpack.i.b16 %v1958, %v1957
      %v1963 = vpack.i.b16 %v1465, %v1449
      %v1965 = vshrl.u32 %v1449, 16
      %v1966 = vshrl.u32 %v1465, 16
      %v1967 = vpack.i.b16 %v1966, %v1965
      %v1971 = vpack.i.b16 %v1497, %v1481
      %v1973 = vshrl.u32 %v1481, 16
      %v1974 = vshrl.u32 %v1497, 16
      %v1975 = vpack.i.b16 %v1974, %v1973
      %v1979 = vpack.i.b16 %v1529, %v1513
      %v1981 = vshrl.u32 %v1513, 16
      %v1982 = vshrl.u32 %v1529, 16
      %v1983 = vpack.i.b16 %v1982, %v1981
      %v1987 = vpack.i.b16 %v1561, %v1545
      %v1989 = vshrl.u32 %v1545, 16
      %v1990 = vshrl.u32 %v1561, 16
      %v1991 = vpack.i.b16 %v1990, %v1989
      %v1995 = vpack.i.b16 %v1593, %v1577
      %v1997 = vshrl.u32 %v1577, 16
      %v1998 = vshrl.u32 %v1593, 16
      %v1999 = vpack.i.b16 %v1998, %v1997
      %v2003 = vpack.i.b16 %v1625, %v1609
      %v2005 = vshrl.u32 %v1609, 16
      %v2006 = vshrl.u32 %v1625, 16
      %v2007 = vpack.i.b16 %v2006, %v2005
      %v2011 = vpack.i.b16 %v1657, %v1641
      %v2013 = vshrl.u32 %v1641, 16
      %v2014 = vshrl.u32 %v1657, 16
      %v2015 = vpack.i.b16 %v2014, %v2013
      %v2019 = vpack.i.b16 %v1689, %v1673
      %v2021 = vshrl.u32 %v1673, 16
      %v2022 = vshrl.u32 %v1689, 16
      %v2023 = vpack.i.b16 %v2022, %v2021
      %v2027 = vpack.i.b16 %v1721, %v1705
      %v2029 = vshrl.u32 %v1705, 16
      %v2030 = vshrl.u32 %v1721, 16
      %v2031 = vpack.i.b16 %v2030, %v2029
      %v2035 = vpack.i.b16 %v1753, %v1737
      %v2037 = vshrl.u32 %v1737, 16
      %v2038 = vshrl.u32 %v1753, 16
      %v2039 = vpack.i.b16 %v2038, %v2037
      %v2043 = vpack.i.b16 %v1785, %v1769
      %v2045 = vshrl.u32 %v1769, 16
      %v2046 = vshrl.u32 %v1785, 16
      %v2047 = vpack.i.b16 %v2046, %v2045
      %v2051 = vpack.i.b16 %v1817, %v1801
      %v2053 = vshrl.u32 %v1801, 16
      %v2054 = vshrl.u32 %v1817, 16
      %v2055 = vpack.i.b16 %v2054, %v2053
      %v2059 = vpack.i.b16 %v1849, %v1833
      %v2061 = vshrl.u32 %v1833, 16
      %v2062 = vshrl.u32 %v1849, 16
      %v2063 = vpack.i.b16 %v2062, %v2061
      %v2067 = vpack.i.b16 %v1881, %v1865
      %v2069 = vshrl.u32 %v1865, 16
      %v2070 = vshrl.u32 %v1881, 16
      %v2071 = vpack.i.b16 %v2070, %v2069
      %v2075 = vpack.i.b16 %v1913, %v1897
      %v2077 = vshrl.u32 %v1897, 16
      %v2078 = vshrl.u32 %v1913, 16
      %v2079 = vpack.i.b16 %v2078, %v2077
      %v2083 = vpack.i.b16 %v1306, %v1290
      %v2085 = vshrl.u32 %v1290, 16
      %v2086 = vshrl.u32 %v1306, 16
      %v2087 = vpack.i.b16 %v2086, %v2085
      %v2091 = vpack.i.b16 %v1338, %v1322
      %v2093 = vshrl.u32 %v1322, 16
      %v2094 = vshrl.u32 %v1338, 16
      %v2095 = vpack.i.b16 %v2094, %v2093
      %v2099 = vpack.i.b16 %v1370, %v1354
      %v2101 = vshrl.u32 %v1354, 16
      %v2102 = vshrl.u32 %v1370, 16
      %v2103 = vpack.i.b16 %v2102, %v2101
      %v2107 = vpack.i.b16 %v1402, %v1386
      %v2109 = vshrl.u32 %v1386, 16
      %v2110 = vshrl.u32 %v1402, 16
      %v2111 = vpack.i.b16 %v2110, %v2109
      %v2115 = vpack.i.b16 %v1434, %v1418
      %v2117 = vshrl.u32 %v1418, 16
      %v2118 = vshrl.u32 %v1434, 16
      %v2119 = vpack.i.b16 %v2118, %v2117
      %v2123 = vpack.i.b16 %v1466, %v1450
      %v2125 = vshrl.u32 %v1450, 16
      %v2126 = vshrl.u32 %v1466, 16
      %v2127 = vpack.i.b16 %v2126, %v2125
      %v2131 = vpack.i.b16 %v1498, %v1482
      %v2133 = vshrl.u32 %v1482, 16
      %v2134 = vshrl.u32 %v1498, 16
      %v2135 = vpack.i.b16 %v2134, %v2133
      %v2139 = vpack.i.b16 %v1530, %v1514
      %v2141 = vshrl.u32 %v1514, 16
      %v2142 = vshrl.u32 %v1530, 16
      %v2143 = vpack.i.b16 %v2142, %v2141
      %v2147 = vpack.i.b16 %v1562, %v1546
      %v2149 = vshrl.u32 %v1546, 16
      %v2150 = vshrl.u32 %v1562, 16
      %v2151 = vpack.i.b16 %v2150, %v2149
      %v2155 = vpack.i.b16 %v1594, %v1578
      %v2157 = vshrl.u32 %v1578, 16
      %v2158 = vshrl.u32 %v1594, 16
      %v2159 = vpack.i.b16 %v2158, %v2157
      %v2163 = vpack.i.b16 %v1626, %v1610
      %v2165 = vshrl.u32 %v1610, 16
      %v2166 = vshrl.u32 %v1626, 16
      %v2167 = vpack.i.b16 %v2166, %v2165
      %v2171 = vpack.i.b16 %v1658, %v1642
      %v2173 = vshrl.u32 %v1642, 16
      %v2174 = vshrl.u32 %v1658, 16
      %v2175 = vpack.i.b16 %v2174, %v2173
      %v2179 = vpack.i.b16 %v1690, %v1674
      %v2181 = vshrl.u32 %v1674, 16
      %v2182 = vshrl.u32 %v1690, 16
      %v2183 = vpack.i.b16 %v2182, %v2181
      %v2187 = vpack.i.b16 %v1722, %v1706
      %v2189 = vshrl.u32 %v1706, 16
      %v2190 = vshrl.u32 %v1722, 16
      %v2191 = vpack.i.b16 %v2190, %v2189
      %v2195 = vpack.i.b16 %v1754, %v1738
      %v2197 = vshrl.u32 %v1738, 16
      %v2198 = vshrl.u32 %v1754, 16
      %v2199 = vpack.i.b16 %v2198, %v2197
      %v2203 = vpack.i.b16 %v1786, %v1770
      %v2205 = vshrl.u32 %v1770, 16
      %v2206 = vshrl.u32 %v1786, 16
      %v2207 = vpack.i.b16 %v2206, %v2205
      %v2211 = vpack.i.b16 %v1818, %v1802
      %v2213 = vshrl.u32 %v1802, 16
      %v2214 = vshrl.u32 %v1818, 16
      %v2215 = vpack.i.b16 %v2214, %v2213
      %v2219 = vpack.i.b16 %v1850, %v1834
      %v2221 = vshrl.u32 %v1834, 16
      %v2222 = vshrl.u32 %v1850, 16
      %v2223 = vpack.i.b16 %v2222, %v2221
      %v2227 = vpack.i.b16 %v1882, %v1866
      %v2229 = vshrl.u32 %v1866, 16
      %v2230 = vshrl.u32 %v1882, 16
      %v2231 = vpack.i.b16 %v2230, %v2229
      %v2235 = vpack.i.b16 %v1914, %v1898
      %v2237 = vshrl.u32 %v1898, 16
      %v2238 = vshrl.u32 %v1914, 16
      %v2239 = vpack.i.b16 %v2238, %v2237
      %v2241 = vcombine.low %v1923, %v1939
      %v2242 = vcombine.high %v1923, %v1939
      %v2244 = vunpack.c.l.s4 1983009808
      %v2245 = vunpack.c.0.s8 %v2244
      %v2246 = vlaneseq
      %v2247 = vshrl.u32 %v2246, 7
      %v2248 = vsub.s32 %v2245, %v2247
      %v2249 = vrot.slane %v2241, %v2248
      %v2251 = vunpack.c.l.s4 1983009808
      %v2252 = vunpack.c.0.s8 %v2251
      %v2253 = vlaneseq
      %v2254 = vshrl.u32 %v2253, 7
      %v2255 = vsub.s32 %v2252, %v2254
      %v2256 = vrot.slane %v2242, %v2255
      %v2257 = vcombine.low %v1931, %v1947
      %v2258 = vcombine.high %v1931, %v1947
      %v2260 = vunpack.c.l.s4 1983009808
      %v2261 = vunpack.c.0.s8 %v2260
      %v2262 = vlaneseq
      %v2263 = vshrl.u32 %v2262, 7
      %v2264 = vsub.s32 %v2261, %v2263
      %v2265 = vrot.slane %v2257, %v2264
      %v2267 = vunpack.c.l.s4 1983009808
      %v2268 = vunpack.c.0.s8 %v2267
      %v2269 = vlaneseq
      %v2270 = vshrl.u32 %v2269, 7
      %v2271 = vsub.s32 %v2268, %v2270
      %v2272 = vrot.slane %v2258, %v2271
      %v2273 = vcombine.low %v1955, %v1971
      %v2274 = vcombine.high %v1955, %v1971
      %v2276 = vunpack.c.l.s4 1983009808
      %v2277 = vunpack.c.0.s8 %v2276
      %v2278 = vlaneseq
      %v2279 = vshrl.u32 %v2278, 7
      %v2280 = vsub.s32 %v2277, %v2279
      %v2281 = vrot.slane %v2273, %v2280
      %v2283 = vunpack.c.l.s4 1983009808
      %v2284 = vunpack.c.0.s8 %v2283
      %v2285 = vlaneseq
      %v2286 = vshrl.u32 %v2285, 7
      %v2287 = vsub.s32 %v2284, %v2286
      %v2288 = vrot.slane %v2274, %v2287
      %v2289 = vcombine.low %v1963, %v1979
      %v2290 = vcombine.high %v1963, %v1979
      %v2292 = vunpack.c.l.s4 1983009808
      %v2293 = vunpack.c.0.s8 %v2292
      %v2294 = vlaneseq
      %v2295 = vshrl.u32 %v2294, 7
      %v2296 = vsub.s32 %v2293, %v2295
      %v2297 = vrot.slane %v2289, %v2296
      %v2299 = vunpack.c.l.s4 1983009808
      %v2300 = vunpack.c.0.s8 %v2299
      %v2301 = vlaneseq
      %v2302 = vshrl.u32 %v2301, 7
      %v2303 = vsub.s32 %v2300, %v2302
      %v2304 = vrot.slane %v2290, %v2303
      %v2305 = vcombine.low %v2249, %v2265
      %v2306 = vcombine.high %v2249, %v2265
      %v2308 = vunpack.c.l.s4 1934713408
      %v2309 = vunpack.c.0.s8 %v2308
      %v2310 = vlaneseq
      %v2311 = vshrl.u32 %v2310, 7
      %v2312 = vsub.s32 %v2309, %v2311
      %v2313 = vrot.slane %v2305, %v2312
      %v2315 = vunpack.c.l.s4 1934713408
      %v2316 = vunpack.c.0.s8 %v2315
      %v2317 = vlaneseq
      %v2318 = vshrl.u32 %v2317, 7
      %v2319 = vsub.s32 %v2316, %v2318
      %v2320 = vrot.slane %v2306, %v2319
      %v2321 = vcombine.low %v2256, %v2272
      %v2322 = vcombine.high %v2256, %v2272
      %v2324 = vunpack.c.l.s4 1934713408
      %v2325 = vunpack.c.0.s8 %v2324
      %v2326 = vlaneseq
      %v2327 = vshrl.u32 %v2326, 7
      %v2328 = vsub.s32 %v2325, %v2327
      %v2329 = vrot.slane %v2321, %v2328
      %v2331 = vunpack.c.l.s4 1934713408
      %v2332 = vunpack.c.0.s8 %v2331
      %v2333 = vlaneseq
      %v2334 = vshrl.u32 %v2333, 7
      %v2335 = vsub.s32 %v2332, %v2334
      %v2336 = vrot.slane %v2322, %v2335
      %v2337 = vcombine.low %v2281, %v2297
      %v2338 = vcombine.high %v2281, %v2297
      %v2340 = vunpack.c.l.s4 1934713408
      %v2341 = vunpack.c.0.s8 %v2340
      %v2342 = vlaneseq
      %v2343 = vshrl.u32 %v2342, 7
      %v2344 = vsub.s32 %v2341, %v2343
      %v2345 = vrot.slane %v2337, %v2344
      %v2347 = vunpack.c.l.s4 1934713408
      %v2348 = vunpack.c.0.s8 %v2347
      %v2349 = vlaneseq
      %v2350 = vshrl.u32 %v2349, 7
      %v2351 = vsub.s32 %v2348, %v2350
      %v2352 = vrot.slane %v2338, %v2351
      %v2353 = vcombine.low %v2288, %v2304
      %v2354 = vcombine.high %v2288, %v2304
      %v2356 = vunpack.c.l.s4 1934713408
      %v2357 = vunpack.c.0.s8 %v2356
      %v2358 = vlaneseq
      %v2359 = vshrl.u32 %v2358, 7
      %v2360 = vsub.s32 %v2357, %v2359
      %v2361 = vrot.slane %v2353, %v2360
      %v2363 = vunpack.c.l.s4 1934713408
      %v2364 = vunpack.c.0.s8 %v2363
      %v2365 = vlaneseq
      %v2366 = vshrl.u32 %v2365, 7
      %v2367 = vsub.s32 %v2364, %v2366
      %v2368 = vrot.slane %v2354, %v2367
      %v2369 = vcombine.low %v2313, %v2345
      %v2370 = vcombine.high %v2313, %v2345
      %v2371 = vcombine.low %v2320, %v2352
      %v2372 = vcombine.high %v2320, %v2352
      %v2373 = vcombine.low %v2329, %v2361
      %v2374 = vcombine.high %v2329, %v2361
      %v2375 = vcombine.low %v2336, %v2368
      %v2376 = vcombine.high %v2336, %v2368
      %v2377 = vcombine.low %v1927, %v1943
      %v2378 = vcombine.high %v1927, %v1943
      %v2380 = vunpack.c.l.s4 1983009808
      %v2381 = vunpack.c.0.s8 %v2380
      %v2382 = vlaneseq
      %v2383 = vshrl.u32 %v2382, 7
      %v2384 = vsub.s32 %v2381, %v2383
      %v2385 = vrot.slane %v2377, %v2384
      %v2387 = vunpack.c.l.s4 1983009808
      %v2388 = vunpack.c.0.s8 %v2387
      %v2389 = vlaneseq
      %v2390 = vshrl.u32 %v2389, 7
      %v2391 = vsub.s32 %v2388, %v2390
      %v2392 = vrot.slane %v2378, %v2391
      %v2393 = vcombine.low %v1935, %v1951
      %v2394 = vcombine.high %v1935, %v1951
      %v2396 = vunpack.c.l.s4 1983009808
      %v2397 = vunpack.c.0.s8 %v2396
      %v2398 = vlaneseq
      %v2399 = vshrl.u32 %v2398, 7
      %v2400 = vsub.s32 %v2397, %v2399
      %v2401 = vrot.slane %v2393, %v2400
      %v2403 = vunpack.c.l.s4 1983009808
      %v2404 = vunpack.c.0.s8 %v2403
      %v2405 = vlaneseq
      %v2406 = vshrl.u32 %v2405, 7
      %v2407 = vsub.s32 %v2404, %v2406
      %v2408 = vrot.slane %v2394, %v2407
      %v2409 = vcombine.low %v1959, %v1975
      %v2410 = vcombine.high %v1959, %v1975
      %v2412 = vunpack.c.l.s4 1983009808
      %v2413 = vunpack.c.0.s8 %v2412
      %v2414 = vlaneseq
      %v2415 = vshrl.u32 %v2414, 7
      %v2416 = vsub.s32 %v2413, %v2415
      %v2417 = vrot.slane %v2409, %v2416
      %v2419 = vunpack.c.l.s4 1983009808
      %v2420 = vunpack.c.0.s8 %v2419
      %v2421 = vlaneseq
      %v2422 = vshrl.u32 %v2421, 7
      %v2423 = vsub.s32 %v2420, %v2422
      %v2424 = vrot.slane %v2410, %v2423
      %v2425 = vcombine.low %v1967, %v1983
      %v2426 = vcombine.high %v1967, %v1983
      %v2428 = vunpack.c.l.s4 1983009808
      %v2429 = vunpack.c.0.s8 %v2428
      %v2430 = vlaneseq
      %v2431 = vshrl.u32 %v2430, 7
      %v2432 = vsub.s32 %v2429, %v2431
      %v2433 = vrot.slane %v2425, %v2432
      %v2435 = vunpack.c.l.s4 1983009808
      %v2436 = vunpack.c.0.s8 %v2435
      %v2437 = vlaneseq
      %v2438 = vshrl.u32 %v2437, 7
      %v2439 = vsub.s32 %v2436, %v2438
      %v2440 = vrot.slane %v2426, %v2439
      %v2441 = vcombine.low %v2385, %v2401
      %v2442 = vcombine.high %v2385, %v2401
      %v2444 = vunpack.c.l.s4 1934713408
      %v2445 = vunpack.c.0.s8 %v2444
      %v2446 = vlaneseq
      %v2447 = vshrl.u32 %v2446, 7
      %v2448 = vsub.s32 %v2445, %v2447
      %v2449 = vrot.slane %v2441, %v2448
      %v2451 = vunpack.c.l.s4 1934713408
      %v2452 = vunpack.c.0.s8 %v2451
      %v2453 = vlaneseq
      %v2454 = vshrl.u32 %v2453, 7
      %v2455 = vsub.s32 %v2452, %v2454
      %v2456 = vrot.slane %v2442, %v2455
      %v2457 = vcombine.low %v2392, %v2408
      %v2458 = vcombine.high %v2392, %v2408
      %v2460 = vunpack.c.l.s4 1934713408
      %v2461 = vunpack.c.0.s8 %v2460
      %v2462 = vlaneseq
      %v2463 = vshrl.u32 %v2462, 7
      %v2464 = vsub.s32 %v2461, %v2463
      %v2465 = vrot.slane %v2457, %v2464
      %v2467 = vunpack.c.l.s4 1934713408
      %v2468 = vunpack.c.0.s8 %v2467
      %v2469 = vlaneseq
      %v2470 = vshrl.u32 %v2469, 7
      %v2471 = vsub.s32 %v2468, %v2470
      %v2472 = vrot.slane %v2458, %v2471
      %v2473 = vcombine.low %v2417, %v2433
      %v2474 = vcombine.high %v2417, %v2433
      %v2476 = vunpack.c.l.s4 1934713408
      %v2477 = vunpack.c.0.s8 %v2476
      %v2478 = vlaneseq
      %v2479 = vshrl.u32 %v2478, 7
      %v2480 = vsub.s32 %v2477, %v2479
      %v2481 = vrot.slane %v2473, %v2480
      %v2483 = vunpack.c.l.s4 1934713408
      %v2484 = vunpack.c.0.s8 %v2483
      %v2485 = vlaneseq
      %v2486 = vshrl.u32 %v2485, 7
      %v2487 = vsub.s32 %v2484, %v2486
      %v2488 = vrot.slane %v2474, %v2487
      %v2489 = vcombine.low %v2424, %v2440
      %v2490 = vcombine.high %v2424, %v2440
      %v2492 = vunpack.c.l.s4 1934713408
      %v2493 = vunpack.c.0.s8 %v2492
      %v2494 = vlaneseq
      %v2495 = vshrl.u32 %v2494, 7
      %v2496 = vsub.s32 %v2493, %v2495
      %v2497 = vrot.slane %v2489, %v2496
      %v2499 = vunpack.c.l.s4 1934713408
      %v2500 = vunpack.c.0.s8 %v2499
      %v2501 = vlaneseq
      %v2502 = vshrl.u32 %v2501, 7
      %v2503 = vsub.s32 %v2500, %v2502
      %v2504 = vrot.slane %v2490, %v2503
      %v2505 = vcombine.low %v2449, %v2481
      %v2506 = vcombine.high %v2449, %v2481
      %v2507 = vcombine.low %v2456, %v2488
      %v2508 = vcombine.high %v2456, %v2488
      %v2509 = vcombine.low %v2465, %v2497
      %v2510 = vcombine.high %v2465, %v2497
      %v2511 = vcombine.low %v2472, %v2504
      %v2512 = vcombine.high %v2472, %v2504
      %v2513 = vcombine.low %v1987, %v2003
      %v2514 = vcombine.high %v1987, %v2003
      %v2516 = vunpack.c.l.s4 1983009808
      %v2517 = vunpack.c.0.s8 %v2516
      %v2518 = vlaneseq
      %v2519 = vshrl.u32 %v2518, 7
      %v2520 = vsub.s32 %v2517, %v2519
      %v2521 = vrot.slane %v2513, %v2520
      %v2523 = vunpack.c.l.s4 1983009808
      %v2524 = vunpack.c.0.s8 %v2523
      %v2525 = vlaneseq
      %v2526 = vshrl.u32 %v2525, 7
      %v2527 = vsub.s32 %v2524, %v2526
      %v2528 = vrot.slane %v2514, %v2527
      %v2529 = vcombine.low %v1995, %v2011
      %v2530 = vcombine.high %v1995, %v2011
      %v2532 = vunpack.c.l.s4 1983009808
      %v2533 = vunpack.c.0.s8 %v2532
      %v2534 = vlaneseq
      %v2535 = vshrl.u32 %v2534, 7
      %v2536 = vsub.s32 %v2533, %v2535
      %v2537 = vrot.slane %v2529, %v2536
      %v2539 = vunpack.c.l.s4 1983009808
      %v2540 = vunpack.c.0.s8 %v2539
      %v2541 = vlaneseq
      %v2542 = vshrl.u32 %v2541, 7
      %v2543 = vsub.s32 %v2540, %v2542
      %v2544 = vrot.slane %v2530, %v2543
      %v2545 = vcombine.low %v2019, %v2035
      %v2546 = vcombine.high %v2019, %v2035
      %v2548 = vunpack.c.l.s4 1983009808
      %v2549 = vunpack.c.0.s8 %v2548
      %v2550 = vlaneseq
      %v2551 = vshrl.u32 %v2550, 7
      %v2552 = vsub.s32 %v2549, %v2551
      %v2553 = vrot.slane %v2545, %v2552
      %v2555 = vunpack.c.l.s4 1983009808
      %v2556 = vunpack.c.0.s8 %v2555
      %v2557 = vlaneseq
      %v2558 = vshrl.u32 %v2557, 7
      %v2559 = vsub.s32 %v2556, %v2558
      %v2560 = vrot.slane %v2546, %v2559
      %v2561 = vcombine.low %v2027, %v2043
      %v2562 = vcombine.high %v2027, %v2043
      %v2564 = vunpack.c.l.s4 1983009808
      %v2565 = vunpack.c.0.s8 %v2564
      %v2566 = vlaneseq
      %v2567 = vshrl.u32 %v2566, 7
      %v2568 = vsub.s32 %v2565, %v2567
      %v2569 = vrot.slane %v2561, %v2568
      %v2571 = vunpack.c.l.s4 1983009808
      %v2572 = vunpack.c.0.s8 %v2571
      %v2573 = vlaneseq
      %v2574 = vshrl.u32 %v2573, 7
      %v2575 = vsub.s32 %v2572, %v2574
      %v2576 = vrot.slane %v2562, %v2575
      %v2577 = vcombine.low %v2521, %v2537
      %v2578 = vcombine.high %v2521, %v2537
      %v2580 = vunpack.c.l.s4 1934713408
      %v2581 = vunpack.c.0.s8 %v2580
      %v2582 = vlaneseq
      %v2583 = vshrl.u32 %v2582, 7
      %v2584 = vsub.s32 %v2581, %v2583
      %v2585 = vrot.slane %v2577, %v2584
      %v2587 = vunpack.c.l.s4 1934713408
      %v2588 = vunpack.c.0.s8 %v2587
      %v2589 = vlaneseq
      %v2590 = vshrl.u32 %v2589, 7
      %v2591 = vsub.s32 %v2588, %v2590
      %v2592 = vrot.slane %v2578, %v2591
      %v2593 = vcombine.low %v2528, %v2544
      %v2594 = vcombine.high %v2528, %v2544
      %v2596 = vunpack.c.l.s4 1934713408
      %v2597 = vunpack.c.0.s8 %v2596
      %v2598 = vlaneseq
      %v2599 = vshrl.u32 %v2598, 7
      %v2600 = vsub.s32 %v2597, %v2599
      %v2601 = vrot.slane %v2593, %v2600
      %v2603 = vunpack.c.l.s4 1934713408
      %v2604 = vunpack.c.0.s8 %v2603
      %v2605 = vlaneseq
      %v2606 = vshrl.u32 %v2605, 7
      %v2607 = vsub.s32 %v2604, %v2606
      %v2608 = vrot.slane %v2594, %v2607
      %v2609 = vcombine.low %v2553, %v2569
      %v2610 = vcombine.high %v2553, %v2569
      %v2612 = vunpack.c.l.s4 1934713408
      %v2613 = vunpack.c.0.s8 %v2612
      %v2614 = vlaneseq
      %v2615 = vshrl.u32 %v2614, 7
      %v2616 = vsub.s32 %v2613, %v2615
      %v2617 = vrot.slane %v2609, %v2616
      %v2619 = vunpack.c.l.s4 1934713408
      %v2620 = vunpack.c.0.s8 %v2619
      %v2621 = vlaneseq
      %v2622 = vshrl.u32 %v2621, 7
      %v2623 = vsub.s32 %v2620, %v2622
      %v2624 = vrot.slane %v2610, %v2623
      %v2625 = vcombine.low %v2560, %v2576
      %v2626 = vcombine.high %v2560, %v2576
      %v2628 = vunpack.c.l.s4 1934713408
      %v2629 = vunpack.c.0.s8 %v2628
      %v2630 = vlaneseq
      %v2631 = vshrl.u32 %v2630, 7
      %v2632 = vsub.s32 %v2629, %v2631
      %v2633 = vrot.slane %v2625, %v2632
      %v2635 = vunpack.c.l.s4 1934713408
      %v2636 = vunpack.c.0.s8 %v2635
      %v2637 = vlaneseq
      %v2638 = vshrl.u32 %v2637, 7
      %v2639 = vsub.s32 %v2636, %v2638
      %v2640 = vrot.slane %v2626, %v2639
      %v2641 = vcombine.low %v2585, %v2617
      %v2642 = vcombine.high %v2585, %v2617
      %v2643 = vcombine.low %v2592, %v2624
      %v2644 = vcombine.high %v2592, %v2624
      %v2645 = vcombine.low %v2601, %v2633
      %v2646 = vcombine.high %v2601, %v2633
      %v2647 = vcombine.low %v2608, %v2640
      %v2648 = vcombine.high %v2608, %v2640
      %v2649 = vcombine.low %v1991, %v2007
      %v2650 = vcombine.high %v1991, %v2007
      %v2652 = vunpack.c.l.s4 1983009808
      %v2653 = vunpack.c.0.s8 %v2652
      %v2654 = vlaneseq
      %v2655 = vshrl.u32 %v2654, 7
      %v2656 = vsub.s32 %v2653, %v2655
      %v2657 = vrot.slane %v2649, %v2656
      %v2659 = vunpack.c.l.s4 1983009808
      %v2660 = vunpack.c.0.s8 %v2659
      %v2661 = vlaneseq
      %v2662 = vshrl.u32 %v2661, 7
      %v2663 = vsub.s32 %v2660, %v2662
      %v2664 = vrot.slane %v2650, %v2663
      %v2665 = vcombine.low %v1999, %v2015
      %v2666 = vcombine.high %v1999, %v2015
      %v2668 = vunpack.c.l.s4 1983009808
      %v2669 = vunpack.c.0.s8 %v2668
      %v2670 = vlaneseq
      %v2671 = vshrl.u32 %v2670, 7
      %v2672 = vsub.s32 %v2669, %v2671
      %v2673 = vrot.slane %v2665, %v2672
      %v2675 = vunpack.c.l.s4 1983009808
      %v2676 = vunpack.c.0.s8 %v2675
      %v2677 = vlaneseq
      %v2678 = vshrl.u32 %v2677, 7
      %v2679 = vsub.s32 %v2676, %v2678
      %v2680 = vrot.slane %v2666, %v2679
      %v2681 = vcombine.low %v2023, %v2039
      %v2682 = vcombine.high %v2023, %v2039
      %v2684 = vunpack.c.l.s4 1983009808
      %v2685 = vunpack.c.0.s8 %v2684
      %v2686 = vlaneseq
      %v2687 = vshrl.u32 %v2686, 7
      %v2688 = vsub.s32 %v2685, %v2687
      %v2689 = vrot.slane %v2681, %v2688
      %v2691 = vunpack.c.l.s4 1983009808
      %v2692 = vunpack.c.0.s8 %v2691
      %v2693 = vlaneseq
      %v2694 = vshrl.u32 %v2693, 7
      %v2695 = vsub.s32 %v2692, %v2694
      %v2696 = vrot.slane %v2682, %v2695
      %v2697 = vcombine.low %v2031, %v2047
      %v2698 = vcombine.high %v2031, %v2047
      %v2700 = vunpack.c.l.s4 1983009808
      %v2701 = vunpack.c.0.s8 %v2700
      %v2702 = vlaneseq
      %v2703 = vshrl.u32 %v2702, 7
      %v2704 = vsub.s32 %v2701, %v2703
      %v2705 = vrot.slane %v2697, %v2704
      %v2707 = vunpack.c.l.s4 1983009808
      %v2708 = vunpack.c.0.s8 %v2707
      %v2709 = vlaneseq
      %v2710 = vshrl.u32 %v2709, 7
      %v2711 = vsub.s32 %v2708, %v2710
      %v2712 = vrot.slane %v2698, %v2711
      %v2713 = vcombine.low %v2657, %v2673
      %v2714 = vcombine.high %v2657, %v2673
      %v2716 = vunpack.c.l.s4 1934713408
      %v2717 = vunpack.c.0.s8 %v2716
      %v2718 = vlaneseq
      %v2719 = vshrl.u32 %v2718, 7
      %v2720 = vsub.s32 %v2717, %v2719
      %v2721 = vrot.slane %v2713, %v2720
      %v2723 = vunpack.c.l.s4 1934713408
      %v2724 = vunpack.c.0.s8 %v2723
      %v2725 = vlaneseq
      %v2726 = vshrl.u32 %v2725, 7
      %v2727 = vsub.s32 %v2724, %v2726
      %v2728 = vrot.slane %v2714, %v2727
      %v2729 = vcombine.low %v2664, %v2680
      %v2730 = vcombine.high %v2664, %v2680
      %v2732 = vunpack.c.l.s4 1934713408
      %v2733 = vunpack.c.0.s8 %v2732
      %v2734 = vlaneseq
      %v2735 = vshrl.u32 %v2734, 7
      %v2736 = vsub.s32 %v2733, %v2735
      %v2737 = vrot.slane %v2729, %v2736
      %v2739 = vunpack.c.l.s4 1934713408
      %v2740 = vunpack.c.0.s8 %v2739
      %v2741 = vlaneseq
      %v2742 = vshrl.u32 %v2741, 7
      %v2743 = vsub.s32 %v2740, %v2742
      %v2744 = vrot.slane %v2730, %v2743
      %v2745 = vcombine.low %v2689, %v2705
      %v2746 = vcombine.high %v2689, %v2705
      %v2748 = vunpack.c.l.s4 1934713408
      %v2749 = vunpack.c.0.s8 %v2748
      %v2750 = vlaneseq
      %v2751 = vshrl.u32 %v2750, 7
      %v2752 = vsub.s32 %v2749, %v2751
      %v2753 = vrot.slane %v2745, %v2752
      %v2755 = vunpack.c.l.s4 1934713408
      %v2756 = vunpack.c.0.s8 %v2755
      %v2757 = vlaneseq
      %v2758 = vshrl.u32 %v2757, 7
      %v2759 = vsub.s32 %v2756, %v2758
      %v2760 = vrot.slane %v2746, %v2759
      %v2761 = vcombine.low %v2696, %v2712
      %v2762 = vcombine.high %v2696, %v2712
      %v2764 = vunpack.c.l.s4 1934713408
      %v2765 = vunpack.c.0.s8 %v2764
      %v2766 = vlaneseq
      %v2767 = vshrl.u32 %v2766, 7
      %v2768 = vsub.s32 %v2765, %v2767
      %v2769 = vrot.slane %v2761, %v2768
      %v2771 = vunpack.c.l.s4 1934713408
      %v2772 = vunpack.c.0.s8 %v2771
      %v2773 = vlaneseq
      %v2774 = vshrl.u32 %v2773, 7
      %v2775 = vsub.s32 %v2772, %v2774
      %v2776 = vrot.slane %v2762, %v2775
      %v2777 = vcombine.low %v2721, %v2753
      %v2778 = vcombine.high %v2721, %v2753
      %v2779 = vcombine.low %v2728, %v2760
      %v2780 = vcombine.high %v2728, %v2760
      %v2781 = vcombine.low %v2737, %v2769
      %v2782 = vcombine.high %v2737, %v2769
      %v2783 = vcombine.low %v2744, %v2776
      %v2784 = vcombine.high %v2744, %v2776
      %v2785 = vcombine.low %v2051, %v2067
      %v2786 = vcombine.high %v2051, %v2067
      %v2788 = vunpack.c.l.s4 1983009808
      %v2789 = vunpack.c.0.s8 %v2788
      %v2790 = vlaneseq
      %v2791 = vshrl.u32 %v2790, 7
      %v2792 = vsub.s32 %v2789, %v2791
      %v2793 = vrot.slane %v2785, %v2792
      %v2795 = vunpack.c.l.s4 1983009808
      %v2796 = vunpack.c.0.s8 %v2795
      %v2797 = vlaneseq
      %v2798 = vshrl.u32 %v2797, 7
      %v2799 = vsub.s32 %v2796, %v2798
      %v2800 = vrot.slane %v2786, %v2799
      %v2801 = vcombine.low %v2059, %v2075
      %v2802 = vcombine.high %v2059, %v2075
      %v2804 = vunpack.c.l.s4 1983009808
      %v2805 = vunpack.c.0.s8 %v2804
      %v2806 = vlaneseq
      %v2807 = vshrl.u32 %v2806, 7
      %v2808 = vsub.s32 %v2805, %v2807
      %v2809 = vrot.slane %v2801, %v2808
      %v2811 = vunpack.c.l.s4 1983009808
      %v2812 = vunpack.c.0.s8 %v2811
      %v2813 = vlaneseq
      %v2814 = vshrl.u32 %v2813, 7
      %v2815 = vsub.s32 %v2812, %v2814
      %v2816 = vrot.slane %v2802, %v2815
      %v2817 = vcombine.low %v2793, %v2809
      %v2818 = vcombine.high %v2793, %v2809
      %v2820 = vunpack.c.l.s4 1934713408
      %v2821 = vunpack.c.0.s8 %v2820
      %v2822 = vlaneseq
      %v2823 = vshrl.u32 %v2822, 7
      %v2824 = vsub.s32 %v2821, %v2823
      %v2825 = vrot.slane %v2817, %v2824
      %v2827 = vunpack.c.l.s4 1934713408
      %v2828 = vunpack.c.0.s8 %v2827
      %v2829 = vlaneseq
      %v2830 = vshrl.u32 %v2829, 7
      %v2831 = vsub.s32 %v2828, %v2830
      %v2832 = vrot.slane %v2818, %v2831
      %v2833 = vcombine.low %v2800, %v2816
      %v2834 = vcombine.high %v2800, %v2816
      %v2836 = vunpack.c.l.s4 1934713408
      %v2837 = vunpack.c.0.s8 %v2836
      %v2838 = vlaneseq
      %v2839 = vshrl.u32 %v2838, 7
      %v2840 = vsub.s32 %v2837, %v2839
      %v2841 = vrot.slane %v2833, %v2840
      %v2843 = vunpack.c.l.s4 1934713408
      %v2844 = vunpack.c.0.s8 %v2843
      %v2845 = vlaneseq
      %v2846 = vshrl.u32 %v2845, 7
      %v2847 = vsub.s32 %v2844, %v2846
      %v2848 = vrot.slane %v2834, %v2847
      %v2849 = vcombine.high %v2825, 0
      %v2850 = vcombine.high %v2832, 0
      %v2851 = vcombine.high %v2841, 0
      %v2852 = vcombine.high %v2848, 0
      %v2853 = vcombine.low %v2055, %v2071
      %v2854 = vcombine.high %v2055, %v2071
      %v2856 = vunpack.c.l.s4 1983009808
      %v2857 = vunpack.c.0.s8 %v2856
      %v2858 = vlaneseq
      %v2859 = vshrl.u32 %v2858, 7
      %v2860 = vsub.s32 %v2857, %v2859
      %v2861 = vrot.slane %v2853, %v2860
      %v2863 = vunpack.c.l.s4 1983009808
      %v2864 = vunpack.c.0.s8 %v2863
      %v2865 = vlaneseq
      %v2866 = vshrl.u32 %v2865, 7
      %v2867 = vsub.s32 %v2864, %v2866
      %v2868 = vrot.slane %v2854, %v2867
      %v2869 = vcombine.low %v2063, %v2079
      %v2870 = vcombine.high %v2063, %v2079
      %v2872 = vunpack.c.l.s4 1983009808
      %v2873 = vunpack.c.0.s8 %v2872
      %v2874 = vlaneseq
      %v2875 = vshrl.u32 %v2874, 7
      %v2876 = vsub.s32 %v2873, %v2875
      %v2877 = vrot.slane %v2869, %v2876
      %v2879 = vunpack.c.l.s4 1983009808
      %v2880 = vunpack.c.0.s8 %v2879
      %v2881 = vlaneseq
      %v2882 = vshrl.u32 %v2881, 7
      %v2883 = vsub.s32 %v2880, %v2882
      %v2884 = vrot.slane %v2870, %v2883
      %v2885 = vcombine.low %v2861, %v2877
      %v2886 = vcombine.high %v2861, %v2877
      %v2888 = vunpack.c.l.s4 1934713408
      %v2889 = vunpack.c.0.s8 %v2888
      %v2890 = vlaneseq
      %v2891 = vshrl.u32 %v2890, 7
      %v2892 = vsub.s32 %v2889, %v2891
      %v2893 = vrot.slane %v2885, %v2892
      %v2895 = vunpack.c.l.s4 1934713408
      %v2896 = vunpack.c.0.s8 %v2895
      %v2897 = vlaneseq
      %v2898 = vshrl.u32 %v2897, 7
      %v2899 = vsub.s32 %v2896, %v2898
      %v2900 = vrot.slane %v2886, %v2899
      %v2901 = vcombine.low %v2868, %v2884
      %v2902 = vcombine.high %v2868, %v2884
      %v2904 = vunpack.c.l.s4 1934713408
      %v2905 = vunpack.c.0.s8 %v2904
      %v2906 = vlaneseq
      %v2907 = vshrl.u32 %v2906, 7
      %v2908 = vsub.s32 %v2905, %v2907
      %v2909 = vrot.slane %v2901, %v2908
      %v2911 = vunpack.c.l.s4 1934713408
      %v2912 = vunpack.c.0.s8 %v2911
      %v2913 = vlaneseq
      %v2914 = vshrl.u32 %v2913, 7
      %v2915 = vsub.s32 %v2912, %v2914
      %v2916 = vrot.slane %v2902, %v2915
      %v2917 = vcombine.high %v2893, 0
      %v2918 = vcombine.high %v2900, 0
      %v2919 = vcombine.high %v2909, 0
      %v2920 = vcombine.high %v2916, 0
      %v2921 = vcombine.low %v2083, %v2099
      %v2922 = vcombine.high %v2083, %v2099
      %v2924 = vunpack.c.l.s4 1983009808
      %v2925 = vunpack.c.0.s8 %v2924
      %v2926 = vlaneseq
      %v2927 = vshrl.u32 %v2926, 7
      %v2928 = vsub.s32 %v2925, %v2927
      %v2929 = vrot.slane %v2921, %v2928
      %v2931 = vunpack.c.l.s4 1983009808
      %v2932 = vunpack.c.0.s8 %v2931
      %v2933 = vlaneseq
      %v2934 = vshrl.u32 %v2933, 7
      %v2935 = vsub.s32 %v2932, %v2934
      %v2936 = vrot.slane %v2922, %v2935
      %v2937 = vcombine.low %v2091, %v2107
      %v2938 = vcombine.high %v2091, %v2107
      %v2940 = vunpack.c.l.s4 1983009808
      %v2941 = vunpack.c.0.s8 %v2940
      %v2942 = vlaneseq
      %v2943 = vshrl.u32 %v2942, 7
      %v2944 = vsub.s32 %v2941, %v2943
      %v2945 = vrot.slane %v2937, %v2944
      %v2947 = vunpack.c.l.s4 1983009808
      %v2948 = vunpack.c.0.s8 %v2947
      %v2949 = vlaneseq
      %v2950 = vshrl.u32 %v2949, 7
      %v2951 = vsub.s32 %v2948, %v2950
      %v2952 = vrot.slane %v2938, %v2951
      %v2953 = vcombine.low %v2115, %v2131
      %v2954 = vcombine.high %v2115, %v2131
      %v2956 = vunpack.c.l.s4 1983009808
      %v2957 = vunpack.c.0.s8 %v2956
      %v2958 = vlaneseq
      %v2959 = vshrl.u32 %v2958, 7
      %v2960 = vsub.s32 %v2957, %v2959
      %v2961 = vrot.slane %v2953, %v2960
      %v2963 = vunpack.c.l.s4 1983009808
      %v2964 = vunpack.c.0.s8 %v2963
      %v2965 = vlaneseq
      %v2966 = vshrl.u32 %v2965, 7
      %v2967 = vsub.s32 %v2964, %v2966
      %v2968 = vrot.slane %v2954, %v2967
      %v2969 = vcombine.low %v2123, %v2139
      %v2970 = vcombine.high %v2123, %v2139
      %v2972 = vunpack.c.l.s4 1983009808
      %v2973 = vunpack.c.0.s8 %v2972
      %v2974 = vlaneseq
      %v2975 = vshrl.u32 %v2974, 7
      %v2976 = vsub.s32 %v2973, %v2975
      %v2977 = vrot.slane %v2969, %v2976
      %v2979 = vunpack.c.l.s4 1983009808
      %v2980 = vunpack.c.0.s8 %v2979
      %v2981 = vlaneseq
      %v2982 = vshrl.u32 %v2981, 7
      %v2983 = vsub.s32 %v2980, %v2982
      %v2984 = vrot.slane %v2970, %v2983
      %v2985 = vcombine.low %v2929, %v2945
      %v2986 = vcombine.high %v2929, %v2945
      %v2988 = vunpack.c.l.s4 1934713408
      %v2989 = vunpack.c.0.s8 %v2988
      %v2990 = vlaneseq
      %v2991 = vshrl.u32 %v2990, 7
      %v2992 = vsub.s32 %v2989, %v2991
      %v2993 = vrot.slane %v2985, %v2992
      %v2995 = vunpack.c.l.s4 1934713408
      %v2996 = vunpack.c.0.s8 %v2995
      %v2997 = vlaneseq
      %v2998 = vshrl.u32 %v2997, 7
      %v2999 = vsub.s32 %v2996, %v2998
      %v3000 = vrot.slane %v2986, %v2999
      %v3001 = vcombine.low %v2936, %v2952
      %v3002 = vcombine.high %v2936, %v2952
      %v3004 = vunpack.c.l.s4 1934713408
      %v3005 = vunpack.c.0.s8 %v3004
      %v3006 = vlaneseq
      %v3007 = vshrl.u32 %v3006, 7
      %v3008 = vsub.s32 %v3005, %v3007
      %v3009 = vrot.slane %v3001, %v3008
      %v3011 = vunpack.c.l.s4 1934713408
      %v3012 = vunpack.c.0.s8 %v3011
      %v3013 = vlaneseq
      %v3014 = vshrl.u32 %v3013, 7
      %v3015 = vsub.s32 %v3012, %v3014
      %v3016 = vrot.slane %v3002, %v3015
      %v3017 = vcombine.low %v2961, %v2977
      %v3018 = vcombine.high %v2961, %v2977
      %v3020 = vunpack.c.l.s4 1934713408
      %v3021 = vunpack.c.0.s8 %v3020
      %v3022 = vlaneseq
      %v3023 = vshrl.u32 %v3022, 7
      %v3024 = vsub.s32 %v3021, %v3023
      %v3025 = vrot.slane %v3017, %v3024
      %v3027 = vunpack.c.l.s4 1934713408
      %v3028 = vunpack.c.0.s8 %v3027
      %v3029 = vlaneseq
      %v3030 = vshrl.u32 %v3029, 7
      %v3031 = vsub.s32 %v3028, %v3030
      %v3032 = vrot.slane %v3018, %v3031
      %v3033 = vcombine.low %v2968, %v2984
      %v3034 = vcombine.high %v2968, %v2984
      %v3036 = vunpack.c.l.s4 1934713408
      %v3037 = vunpack.c.0.s8 %v3036
      %v3038 = vlaneseq
      %v3039 = vshrl.u32 %v3038, 7
      %v3040 = vsub.s32 %v3037, %v3039
      %v3041 = vrot.slane %v3033, %v3040
      %v3043 = vunpack.c.l.s4 1934713408
      %v3044 = vunpack.c.0.s8 %v3043
      %v3045 = vlaneseq
      %v3046 = vshrl.u32 %v3045, 7
      %v3047 = vsub.s32 %v3044, %v3046
      %v3048 = vrot.slane %v3034, %v3047
      %v3049 = vcombine.low %v2993, %v3025
      %v3050 = vcombine.high %v2993, %v3025
      %v3051 = vcombine.low %v3000, %v3032
      %v3052 = vcombine.high %v3000, %v3032
      %v3053 = vcombine.low %v3009, %v3041
      %v3054 = vcombine.high %v3009, %v3041
      %v3055 = vcombine.low %v3016, %v3048
      %v3056 = vcombine.high %v3016, %v3048
      %v3057 = vcombine.low %v2087, %v2103
      %v3058 = vcombine.high %v2087, %v2103
      %v3060 = vunpack.c.l.s4 1983009808
      %v3061 = vunpack.c.0.s8 %v3060
      %v3062 = vlaneseq
      %v3063 = vshrl.u32 %v3062, 7
      %v3064 = vsub.s32 %v3061, %v3063
      %v3065 = vrot.slane %v3057, %v3064
      %v3067 = vunpack.c.l.s4 1983009808
      %v3068 = vunpack.c.0.s8 %v3067
      %v3069 = vlaneseq
      %v3070 = vshrl.u32 %v3069, 7
      %v3071 = vsub.s32 %v3068, %v3070
      %v3072 = vrot.slane %v3058, %v3071
      %v3073 = vcombine.low %v2095, %v2111
      %v3074 = vcombine.high %v2095, %v2111
      %v3076 = vunpack.c.l.s4 1983009808
      %v3077 = vunpack.c.0.s8 %v3076
      %v3078 = vlaneseq
      %v3079 = vshrl.u32 %v3078, 7
      %v3080 = vsub.s32 %v3077, %v3079
      %v3081 = vrot.slane %v3073, %v3080
      %v3083 = vunpack.c.l.s4 1983009808
      %v3084 = vunpack.c.0.s8 %v3083
      %v3085 = vlaneseq
      %v3086 = vshrl.u32 %v3085, 7
      %v3087 = vsub.s32 %v3084, %v3086
      %v3088 = vrot.slane %v3074, %v3087
      %v3089 = vcombine.low %v2119, %v2135
      %v3090 = vcombine.high %v2119, %v2135
      %v3092 = vunpack.c.l.s4 1983009808
      %v3093 = vunpack.c.0.s8 %v3092
      %v3094 = vlaneseq
      %v3095 = vshrl.u32 %v3094, 7
      %v3096 = vsub.s32 %v3093, %v3095
      %v3097 = vrot.slane %v3089, %v3096
      %v3099 = vunpack.c.l.s4 1983009808
      %v3100 = vunpack.c.0.s8 %v3099
      %v3101 = vlaneseq
      %v3102 = vshrl.u32 %v3101, 7
      %v3103 = vsub.s32 %v3100, %v3102
      %v3104 = vrot.slane %v3090, %v3103
      %v3105 = vcombine.low %v2127, %v2143
      %v3106 = vcombine.high %v2127, %v2143
      %v3108 = vunpack.c.l.s4 1983009808
      %v3109 = vunpack.c.0.s8 %v3108
      %v3110 = vlaneseq
      %v3111 = vshrl.u32 %v3110, 7
      %v3112 = vsub.s32 %v3109, %v3111
      %v3113 = vrot.slane %v3105, %v3112
      %v3115 = vunpack.c.l.s4 1983009808
      %v3116 = vunpack.c.0.s8 %v3115
      %v3117 = vlaneseq
      %v3118 = vshrl.u32 %v3117, 7
      %v3119 = vsub.s32 %v3116, %v3118
      %v3120 = vrot.slane %v3106, %v3119
      %v3121 = vcombine.low %v3065, %v3081
      %v3122 = vcombine.high %v3065, %v3081
      %v3124 = vunpack.c.l.s4 1934713408
      %v3125 = vunpack.c.0.s8 %v3124
      %v3126 = vlaneseq
      %v3127 = vshrl.u32 %v3126, 7
      %v3128 = vsub.s32 %v3125, %v3127
      %v3129 = vrot.slane %v3121, %v3128
      %v3131 = vunpack.c.l.s4 1934713408
      %v3132 = vunpack.c.0.s8 %v3131
      %v3133 = vlaneseq
      %v3134 = vshrl.u32 %v3133, 7
      %v3135 = vsub.s32 %v3132, %v3134
      %v3136 = vrot.slane %v3122, %v3135
      %v3137 = vcombine.low %v3072, %v3088
      %v3138 = vcombine.high %v3072, %v3088
      %v3140 = vunpack.c.l.s4 1934713408
      %v3141 = vunpack.c.0.s8 %v3140
      %v3142 = vlaneseq
      %v3143 = vshrl.u32 %v3142, 7
      %v3144 = vsub.s32 %v3141, %v3143
      %v3145 = vrot.slane %v3137, %v3144
      %v3147 = vunpack.c.l.s4 1934713408
      %v3148 = vunpack.c.0.s8 %v3147
      %v3149 = vlaneseq
      %v3150 = vshrl.u32 %v3149, 7
      %v3151 = vsub.s32 %v3148, %v3150
      %v3152 = vrot.slane %v3138, %v3151
      %v3153 = vcombine.low %v3097, %v3113
      %v3154 = vcombine.high %v3097, %v3113
      %v3156 = vunpack.c.l.s4 1934713408
      %v3157 = vunpack.c.0.s8 %v3156
      %v3158 = vlaneseq
      %v3159 = vshrl.u32 %v3158, 7
      %v3160 = vsub.s32 %v3157, %v3159
      %v3161 = vrot.slane %v3153, %v3160
      %v3163 = vunpack.c.l.s4 1934713408
      %v3164 = vunpack.c.0.s8 %v3163
      %v3165 = vlaneseq
      %v3166 = vshrl.u32 %v3165, 7
      %v3167 = vsub.s32 %v3164, %v3166
      %v3168 = vrot.slane %v3154, %v3167
      %v3169 = vcombine.low %v3104, %v3120
      %v3170 = vcombine.high %v3104, %v3120
      %v3172 = vunpack.c.l.s4 1934713408
      %v3173 = vunpack.c.0.s8 %v3172
      %v3174 = vlaneseq
      %v3175 = vshrl.u32 %v3174, 7
      %v3176 = vsub.s32 %v3173, %v3175
      %v3177 = vrot.slane %v3169, %v3176
      %v3179 = vunpack.c.l.s4 1934713408
      %v3180 = vunpack.c.0.s8 %v3179
      %v3181 = vlaneseq
      %v3182 = vshrl.u32 %v3181, 7
      %v3183 = vsub.s32 %v3180, %v3182
      %v3184 = vrot.slane %v3170, %v3183
      %v3185 = vcombine.low %v3129, %v3161
      %v3186 = vcombine.high %v3129, %v3161
      %v3187 = vcombine.low %v3136, %v3168
      %v3188 = vcombine.high %v3136, %v3168
      %v3189 = vcombine.low %v3145, %v3177
      %v3190 = vcombine.high %v3145, %v3177
      %v3191 = vcombine.low %v3152, %v3184
      %v3192 = vcombine.high %v3152, %v3184
      %v3193 = vcombine.low %v2147, %v2163
      %v3194 = vcombine.high %v2147, %v2163
      %v3196 = vunpack.c.l.s4 1983009808
      %v3197 = vunpack.c.0.s8 %v3196
      %v3198 = vlaneseq
      %v3199 = vshrl.u32 %v3198, 7
      %v3200 = vsub.s32 %v3197, %v3199
      %v3201 = vrot.slane %v3193, %v3200
      %v3203 = vunpack.c.l.s4 1983009808
      %v3204 = vunpack.c.0.s8 %v3203
      %v3205 = vlaneseq
      %v3206 = vshrl.u32 %v3205, 7
      %v3207 = vsub.s32 %v3204, %v3206
      %v3208 = vrot.slane %v3194, %v3207
      %v3209 = vcombine.low %v2155, %v2171
      %v3210 = vcombine.high %v2155, %v2171
      %v3212 = vunpack.c.l.s4 1983009808
      %v3213 = vunpack.c.0.s8 %v3212
      %v3214 = vlaneseq
      %v3215 = vshrl.u32 %v3214, 7
      %v3216 = vsub.s32 %v3213, %v3215
      %v3217 = vrot.slane %v3209, %v3216
      %v3219 = vunpack.c.l.s4 1983009808
      %v3220 = vunpack.c.0.s8 %v3219
      %v3221 = vlaneseq
      %v3222 = vshrl.u32 %v3221, 7
      %v3223 = vsub.s32 %v3220, %v3222
      %v3224 = vrot.slane %v3210, %v3223
      %v3225 = vcombine.low %v2179, %v2195
      %v3226 = vcombine.high %v2179, %v2195
      %v3228 = vunpack.c.l.s4 1983009808
      %v3229 = vunpack.c.0.s8 %v3228
      %v3230 = vlaneseq
      %v3231 = vshrl.u32 %v3230, 7
      %v3232 = vsub.s32 %v3229, %v3231
      %v3233 = vrot.slane %v3225, %v3232
      %v3235 = vunpack.c.l.s4 1983009808
      %v3236 = vunpack.c.0.s8 %v3235
      %v3237 = vlaneseq
      %v3238 = vshrl.u32 %v3237, 7
      %v3239 = vsub.s32 %v3236, %v3238
      %v3240 = vrot.slane %v3226, %v3239
      %v3241 = vcombine.low %v2187, %v2203
      %v3242 = vcombine.high %v2187, %v2203
      %v3244 = vunpack.c.l.s4 1983009808
      %v3245 = vunpack.c.0.s8 %v3244
      %v3246 = vlaneseq
      %v3247 = vshrl.u32 %v3246, 7
      %v3248 = vsub.s32 %v3245, %v3247
      %v3249 = vrot.slane %v3241, %v3248
      %v3251 = vunpack.c.l.s4 1983009808
      %v3252 = vunpack.c.0.s8 %v3251
      %v3253 = vlaneseq
      %v3254 = vshrl.u32 %v3253, 7
      %v3255 = vsub.s32 %v3252, %v3254
      %v3256 = vrot.slane %v3242, %v3255
      %v3257 = vcombine.low %v3201, %v3217
      %v3258 = vcombine.high %v3201, %v3217
      %v3260 = vunpack.c.l.s4 1934713408
      %v3261 = vunpack.c.0.s8 %v3260
      %v3262 = vlaneseq
      %v3263 = vshrl.u32 %v3262, 7
      %v3264 = vsub.s32 %v3261, %v3263
      %v3265 = vrot.slane %v3257, %v3264
      %v3267 = vunpack.c.l.s4 1934713408
      %v3268 = vunpack.c.0.s8 %v3267
      %v3269 = vlaneseq
      %v3270 = vshrl.u32 %v3269, 7
      %v3271 = vsub.s32 %v3268, %v3270
      %v3272 = vrot.slane %v3258, %v3271
      %v3273 = vcombine.low %v3208, %v3224
      %v3274 = vcombine.high %v3208, %v3224
      %v3276 = vunpack.c.l.s4 1934713408
      %v3277 = vunpack.c.0.s8 %v3276
      %v3278 = vlaneseq
      %v3279 = vshrl.u32 %v3278, 7
      %v3280 = vsub.s32 %v3277, %v3279
      %v3281 = vrot.slane %v3273, %v3280
      %v3283 = vunpack.c.l.s4 1934713408
      %v3284 = vunpack.c.0.s8 %v3283
      %v3285 = vlaneseq
      %v3286 = vshrl.u32 %v3285, 7
      %v3287 = vsub.s32 %v3284, %v3286
      %v3288 = vrot.slane %v3274, %v3287
      %v3289 = vcombine.low %v3233, %v3249
      %v3290 = vcombine.high %v3233, %v3249
      %v3292 = vunpack.c.l.s4 1934713408
      %v3293 = vunpack.c.0.s8 %v3292
      %v3294 = vlaneseq
      %v3295 = vshrl.u32 %v3294, 7
      %v3296 = vsub.s32 %v3293, %v3295
      %v3297 = vrot.slane %v3289, %v3296
      %v3299 = vunpack.c.l.s4 1934713408
      %v3300 = vunpack.c.0.s8 %v3299
      %v3301 = vlaneseq
      %v3302 = vshrl.u32 %v3301, 7
      %v3303 = vsub.s32 %v3300, %v3302
      %v3304 = vrot.slane %v3290, %v3303
      %v3305 = vcombine.low %v3240, %v3256
      %v3306 = vcombine.high %v3240, %v3256
      %v3308 = vunpack.c.l.s4 1934713408
      %v3309 = vunpack.c.0.s8 %v3308
      %v3310 = vlaneseq
      %v3311 = vshrl.u32 %v3310, 7
      %v3312 = vsub.s32 %v3309, %v3311
      %v3313 = vrot.slane %v3305, %v3312
      %v3315 = vunpack.c.l.s4 1934713408
      %v3316 = vunpack.c.0.s8 %v3315
      %v3317 = vlaneseq
      %v3318 = vshrl.u32 %v3317, 7
      %v3319 = vsub.s32 %v3316, %v3318
      %v3320 = vrot.slane %v3306, %v3319
      %v3321 = vcombine.low %v3265, %v3297
      %v3322 = vcombine.high %v3265, %v3297
      %v3323 = vcombine.low %v3272, %v3304
      %v3324 = vcombine.high %v3272, %v3304
      %v3325 = vcombine.low %v3281, %v3313
      %v3326 = vcombine.high %v3281, %v3313
      %v3327 = vcombine.low %v3288, %v3320
      %v3328 = vcombine.high %v3288, %v3320
      %v3329 = vcombine.low %v2151, %v2167
      %v3330 = vcombine.high %v2151, %v2167
      %v3332 = vunpack.c.l.s4 1983009808
      %v3333 = vunpack.c.0.s8 %v3332
      %v3334 = vlaneseq
      %v3335 = vshrl.u32 %v3334, 7
      %v3336 = vsub.s32 %v3333, %v3335
      %v3337 = vrot.slane %v3329, %v3336
      %v3339 = vunpack.c.l.s4 1983009808
      %v3340 = vunpack.c.0.s8 %v3339
      %v3341 = vlaneseq
      %v3342 = vshrl.u32 %v3341, 7
      %v3343 = vsub.s32 %v3340, %v3342
      %v3344 = vrot.slane %v3330, %v3343
      %v3345 = vcombine.low %v2159, %v2175
      %v3346 = vcombine.high %v2159, %v2175
      %v3348 = vunpack.c.l.s4 1983009808
      %v3349 = vunpack.c.0.s8 %v3348
      %v3350 = vlaneseq
      %v3351 = vshrl.u32 %v3350, 7
      %v3352 = vsub.s32 %v3349, %v3351
      %v3353 = vrot.slane %v3345, %v3352
      %v3355 = vunpack.c.l.s4 1983009808
      %v3356 = vunpack.c.0.s8 %v3355
      %v3357 = vlaneseq
      %v3358 = vshrl.u32 %v3357, 7
      %v3359 = vsub.s32 %v3356, %v3358
      %v3360 = vrot.slane %v3346, %v3359
      %v3361 = vcombine.low %v2183, %v2199
      %v3362 = vcombine.high %v2183, %v2199
      %v3364 = vunpack.c.l.s4 1983009808
      %v3365 = vunpack.c.0.s8 %v3364
      %v3366 = vlaneseq
      %v3367 = vshrl.u32 %v3366, 7
      %v3368 = vsub.s32 %v3365, %v3367
      %v3369 = vrot.slane %v3361, %v3368
      %v3371 = vunpack.c.l.s4 1983009808
      %v3372 = vunpack.c.0.s8 %v3371
      %v3373 = vlaneseq
      %v3374 = vshrl.u32 %v3373, 7
      %v3375 = vsub.s32 %v3372, %v3374
      %v3376 = vrot.slane %v3362, %v3375
      %v3377 = vcombine.low %v2191, %v2207
      %v3378 = vcombine.high %v2191, %v2207
      %v3380 = vunpack.c.l.s4 1983009808
      %v3381 = vunpack.c.0.s8 %v3380
      %v3382 = vlaneseq
      %v3383 = vshrl.u32 %v3382, 7
      %v3384 = vsub.s32 %v3381, %v3383
      %v3385 = vrot.slane %v3377, %v3384
      %v3387 = vunpack.c.l.s4 1983009808
      %v3388 = vunpack.c.0.s8 %v3387
      %v3389 = vlaneseq
      %v3390 = vshrl.u32 %v3389, 7
      %v3391 = vsub.s32 %v3388, %v3390
      %v3392 = vrot.slane %v3378, %v3391
      %v3393 = vcombine.low %v3337, %v3353
      %v3394 = vcombine.high %v3337, %v3353
      %v3396 = vunpack.c.l.s4 1934713408
      %v3397 = vunpack.c.0.s8 %v3396
      %v3398 = vlaneseq
      %v3399 = vshrl.u32 %v3398, 7
      %v3400 = vsub.s32 %v3397, %v3399
      %v3401 = vrot.slane %v3393, %v3400
      %v3403 = vunpack.c.l.s4 1934713408
      %v3404 = vunpack.c.0.s8 %v3403
      %v3405 = vlaneseq
      %v3406 = vshrl.u32 %v3405, 7
      %v3407 = vsub.s32 %v3404, %v3406
      %v3408 = vrot.slane %v3394, %v3407
      %v3409 = vcombine.low %v3344, %v3360
      %v3410 = vcombine.high %v3344, %v3360
      %v3412 = vunpack.c.l.s4 1934713408
      %v3413 = vunpack.c.0.s8 %v3412
      %v3414 = vlaneseq
      %v3415 = vshrl.u32 %v3414, 7
      %v3416 = vsub.s32 %v3413, %v3415
      %v3417 = vrot.slane %v3409, %v3416
      %v3419 = vunpack.c.l.s4 1934713408
      %v3420 = vunpack.c.0.s8 %v3419
      %v3421 = vlaneseq
      %v3422 = vshrl.u32 %v3421, 7
      %v3423 = vsub.s32 %v3420, %v3422
      %v3424 = vrot.slane %v3410, %v3423
      %v3425 = vcombine.low %v3369, %v3385
      %v3426 = vcombine.high %v3369, %v3385
      %v3428 = vunpack.c.l.s4 1934713408
      %v3429 = vunpack.c.0.s8 %v3428
      %v3430 = vlaneseq
      %v3431 = vshrl.u32 %v3430, 7
      %v3432 = vsub.s32 %v3429, %v3431
      %v3433 = vrot.slane %v3425, %v3432
      %v3435 = vunpack.c.l.s4 1934713408
      %v3436 = vunpack.c.0.s8 %v3435
      %v3437 = vlaneseq
      %v3438 = vshrl.u32 %v3437, 7
      %v3439 = vsub.s32 %v3436, %v3438
      %v3440 = vrot.slane %v3426, %v3439
      %v3441 = vcombine.low %v3376, %v3392
      %v3442 = vcombine.high %v3376, %v3392
      %v3444 = vunpack.c.l.s4 1934713408
      %v3445 = vunpack.c.0.s8 %v3444
      %v3446 = vlaneseq
      %v3447 = vshrl.u32 %v3446, 7
      %v3448 = vsub.s32 %v3445, %v3447
      %v3449 = vrot.slane %v3441, %v3448
      %v3451 = vunpack.c.l.s4 1934713408
      %v3452 = vunpack.c.0.s8 %v3451
      %v3453 = vlaneseq
      %v3454 = vshrl.u32 %v3453, 7
      %v3455 = vsub.s32 %v3452, %v3454
      %v3456 = vrot.slane %v3442, %v3455
      %v3457 = vcombine.low %v3401, %v3433
      %v3458 = vcombine.high %v3401, %v3433
      %v3459 = vcombine.low %v3408, %v3440
      %v3460 = vcombine.high %v3408, %v3440
      %v3461 = vcombine.low %v3417, %v3449
      %v3462 = vcombine.high %v3417, %v3449
      %v3463 = vcombine.low %v3424, %v3456
      %v3464 = vcombine.high %v3424, %v3456
      %v3465 = vcombine.low %v2211, %v2227
      %v3466 = vcombine.high %v2211, %v2227
      %v3468 = vunpack.c.l.s4 1983009808
      %v3469 = vunpack.c.0.s8 %v3468
      %v3470 = vlaneseq
      %v3471 = vshrl.u32 %v3470, 7
      %v3472 = vsub.s32 %v3469, %v3471
      %v3473 = vrot.slane %v3465, %v3472
      %v3475 = vunpack.c.l.s4 1983009808
      %v3476 = vunpack.c.0.s8 %v3475
      %v3477 = vlaneseq
      %v3478 = vshrl.u32 %v3477, 7
      %v3479 = vsub.s32 %v3476, %v3478
      %v3480 = vrot.slane %v3466, %v3479
      %v3481 = vcombine.low %v2219, %v2235
      %v3482 = vcombine.high %v2219, %v2235
      %v3484 = vunpack.c.l.s4 1983009808
      %v3485 = vunpack.c.0.s8 %v3484
      %v3486 = vlaneseq
      %v3487 = vshrl.u32 %v3486, 7
      %v3488 = vsub.s32 %v3485, %v3487
      %v3489 = vrot.slane %v3481, %v3488
      %v3491 = vunpack.c.l.s4 1983009808
      %v3492 = vunpack.c.0.s8 %v3491
      %v3493 = vlaneseq
      %v3494 = vshrl.u32 %v3493, 7
      %v3495 = vsub.s32 %v3492, %v3494
      %v3496 = vrot.slane %v3482, %v3495
      %v3497 = vcombine.low %v3473, %v3489
      %v3498 = vcombine.high %v3473, %v3489
      %v3500 = vunpack.c.l.s4 1934713408
      %v3501 = vunpack.c.0.s8 %v3500
      %v3502 = vlaneseq
      %v3503 = vshrl.u32 %v3502, 7
      %v3504 = vsub.s32 %v3501, %v3503
      %v3505 = vrot.slane %v3497, %v3504
      %v3507 = vunpack.c.l.s4 1934713408
      %v3508 = vunpack.c.0.s8 %v3507
      %v3509 = vlaneseq
      %v3510 = vshrl.u32 %v3509, 7
      %v3511 = vsub.s32 %v3508, %v3510
      %v3512 = vrot.slane %v3498, %v3511
      %v3513 = vcombine.low %v3480, %v3496
      %v3514 = vcombine.high %v3480, %v3496
      %v3516 = vunpack.c.l.s4 1934713408
      %v3517 = vunpack.c.0.s8 %v3516
      %v3518 = vlaneseq
      %v3519 = vshrl.u32 %v3518, 7
      %v3520 = vsub.s32 %v3517, %v3519
      %v3521 = vrot.slane %v3513, %v3520
      %v3523 = vunpack.c.l.s4 1934713408
      %v3524 = vunpack.c.0.s8 %v3523
      %v3525 = vlaneseq
      %v3526 = vshrl.u32 %v3525, 7
      %v3527 = vsub.s32 %v3524, %v3526
      %v3528 = vrot.slane %v3514, %v3527
      %v3529 = vcombine.high %v3505, 0
      %v3530 = vcombine.high %v3512, 0
      %v3531 = vcombine.high %v3521, 0
      %v3532 = vcombine.high %v3528, 0
      %v3533 = vcombine.low %v2215, %v2231
      %v3534 = vcombine.high %v2215, %v2231
      %v3536 = vunpack.c.l.s4 1983009808
      %v3537 = vunpack.c.0.s8 %v3536
      %v3538 = vlaneseq
      %v3539 = vshrl.u32 %v3538, 7
      %v3540 = vsub.s32 %v3537, %v3539
      %v3541 = vrot.slane %v3533, %v3540
      %v3543 = vunpack.c.l.s4 1983009808
      %v3544 = vunpack.c.0.s8 %v3543
      %v3545 = vlaneseq
      %v3546 = vshrl.u32 %v3545, 7
      %v3547 = vsub.s32 %v3544, %v3546
      %v3548 = vrot.slane %v3534, %v3547
      %v3549 = vcombine.low %v2223, %v2239
      %v3550 = vcombine.high %v2223, %v2239
      %v3552 = vunpack.c.l.s4 1983009808
      %v3553 = vunpack.c.0.s8 %v3552
      %v3554 = vlaneseq
      %v3555 = vshrl.u32 %v3554, 7
      %v3556 = vsub.s32 %v3553, %v3555
      %v3557 = vrot.slane %v3549, %v3556
      %v3559 = vunpack.c.l.s4 1983009808
      %v3560 = vunpack.c.0.s8 %v3559
      %v3561 = vlaneseq
      %v3562 = vshrl.u32 %v3561, 7
      %v3563 = vsub.s32 %v3560, %v3562
      %v3564 = vrot.slane %v3550, %v3563
      %v3565 = vcombine.low %v3541, %v3557
      %v3566 = vcombine.high %v3541, %v3557
      %v3568 = vunpack.c.l.s4 1934713408
      %v3569 = vunpack.c.0.s8 %v3568
      %v3570 = vlaneseq
      %v3571 = vshrl.u32 %v3570, 7
      %v3572 = vsub.s32 %v3569, %v3571
      %v3573 = vrot.slane %v3565, %v3572
      %v3575 = vunpack.c.l.s4 1934713408
      %v3576 = vunpack.c.0.s8 %v3575
      %v3577 = vlaneseq
      %v3578 = vshrl.u32 %v3577, 7
      %v3579 = vsub.s32 %v3576, %v3578
      %v3580 = vrot.slane %v3566, %v3579
      %v3581 = vcombine.low %v3548, %v3564
      %v3582 = vcombine.high %v3548, %v3564
      %v3584 = vunpack.c.l.s4 1934713408
      %v3585 = vunpack.c.0.s8 %v3584
      %v3586 = vlaneseq
      %v3587 = vshrl.u32 %v3586, 7
      %v3588 = vsub.s32 %v3585, %v3587
      %v3589 = vrot.slane %v3581, %v3588
      %v3591 = vunpack.c.l.s4 1934713408
      %v3592 = vunpack.c.0.s8 %v3591
      %v3593 = vlaneseq
      %v3594 = vshrl.u32 %v3593, 7
      %v3595 = vsub.s32 %v3592, %v3594
      %v3596 = vrot.slane %v3582, %v3595
      %v3597 = vcombine.high %v3573, 0
      %v3598 = vcombine.high %v3580, 0
      %v3599 = vcombine.high %v3589, 0
      %v3600 = vcombine.high %v3596, 0
      %3601 = vxpose.xlu0.c.b16.start [1/8] %v2369, 128
      %3602 = vxpose.xlu0.c.b16.cont [2/8] %v2641, 128
      %3603 = vxpose.xlu0.c.b16.cont [3/8] %v2825, 128
      %3604 = vxpose.xlu0.c.b16.cont [4/8] 0, 128
      %3605 = vxpose.xlu0.c.b16.cont [5/8] 0, 128
      %3606 = vxpose.xlu0.c.b16.cont [6/8] 0, 128
      %3607 = vxpose.xlu0.c.b16.cont [7/8] 0, 128
      %3608 = vxpose.xlu0.c.b16.end [8/8] 0, 128
      %v3609 = vpop.trf.xlu0
      %v3610 = vpop.trf.xlu0
      %v3611 = vpop.trf.xlu0
      %v3612 = vpop.trf.xlu0
      %v3613 = vpop.trf.xlu0
      %v3614 = vpop.trf.xlu0
      %v3615 = vpop.trf.xlu0
      %v3616 = vpop.trf.xlu0
      %3617 = vxpose.xlu0.c.b16.start [1/8] %v2505, 128
      %3618 = vxpose.xlu0.c.b16.cont [2/8] %v2777, 128
      %3619 = vxpose.xlu0.c.b16.cont [3/8] %v2893, 128
      %3620 = vxpose.xlu0.c.b16.cont [4/8] 0, 128
      %3621 = vxpose.xlu0.c.b16.cont [5/8] 0, 128
      %3622 = vxpose.xlu0.c.b16.cont [6/8] 0, 128
      %3623 = vxpose.xlu0.c.b16.cont [7/8] 0, 128
      %3624 = vxpose.xlu0.c.b16.end [8/8] 0, 128
      %v3625 = vpop.trf.xlu0
      %v3626 = vpop.trf.xlu0
      %v3627 = vpop.trf.xlu0
      %v3628 = vpop.trf.xlu0
      %v3629 = vpop.trf.xlu0
      %v3630 = vpop.trf.xlu0
      %v3631 = vpop.trf.xlu0
      %v3632 = vpop.trf.xlu0
      %3633 = vxpose.xlu0.c.b16.start [1/8] %v2370, 128
      %3634 = vxpose.xlu0.c.b16.cont [2/8] %v2642, 128
      %3635 = vxpose.xlu0.c.b16.cont [3/8] %v2849, 128
      %3636 = vxpose.xlu0.c.b16.cont [4/8] 0, 128
      %3637 = vxpose.xlu0.c.b16.cont [5/8] 0, 128
      %3638 = vxpose.xlu0.c.b16.cont [6/8] 0, 128
      %3639 = vxpose.xlu0.c.b16.cont [7/8] 0, 128
      %3640 = vxpose.xlu0.c.b16.end [8/8] 0, 128
      %v3641 = vpop.trf.xlu0
      %v3642 = vpop.trf.xlu0
      %v3643 = vpop.trf.xlu0
      %v3644 = vpop.trf.xlu0
      %v3645 = vpop.trf.xlu0
      %v3646 = vpop.trf.xlu0
      %v3647 = vpop.trf.xlu0
      %v3648 = vpop.trf.xlu0
      %3649 = vxpose.xlu0.c.b16.start [1/8] %v2506, 128
      %3650 = vxpose.xlu0.c.b16.cont [2/8] %v2778, 128
      %3651 = vxpose.xlu0.c.b16.cont [3/8] %v2917, 128
      %3652 = vxpose.xlu0.c.b16.cont [4/8] 0, 128
      %3653 = vxpose.xlu0.c.b16.cont [5/8] 0, 128
      %3654 = vxpose.xlu0.c.b16.cont [6/8] 0, 128
      %3655 = vxpose.xlu0.c.b16.cont [7/8] 0, 128
      %3656 = vxpose.xlu0.c.b16.end [8/8] 0, 128
      %v3657 = vpop.trf.xlu0
      %v3658 = vpop.trf.xlu0
      %v3659 = vpop.trf.xlu0
      %v3660 = vpop.trf.xlu0
      %v3661 = vpop.trf.xlu0
      %v3662 = vpop.trf.xlu0
      %v3663 = vpop.trf.xlu0
      %v3664 = vpop.trf.xlu0
      %3665 = vxpose.xlu0.c.b16.start [1/8] %v2371, 128
      %3666 = vxpose.xlu0.c.b16.cont [2/8] %v2643, 128
      %3667 = vxpose.xlu0.c.b16.cont [3/8] %v2832, 128
      %3668 = vxpose.xlu0.c.b16.cont [4/8] 0, 128
      %3669 = vxpose.xlu0.c.b16.cont [5/8] 0, 128
      %3670 = vxpose.xlu0.c.b16.cont [6/8] 0, 128
      %3671 = vxpose.xlu0.c.b16.cont [7/8] 0, 128
      %3672 = vxpose.xlu0.c.b16.end [8/8] 0, 128
      %v3673 = vpop.trf.xlu0
      %v3674 = vpop.trf.xlu0
      %v3675 = vpop.trf.xlu0
      %v3676 = vpop.trf.xlu0
      %v3677 = vpop.trf.xlu0
      %v3678 = vpop.trf.xlu0
      %v3679 = vpop.trf.xlu0
      %v3680 = vpop.trf.xlu0
      %3681 = vxpose.xlu0.c.b16.start [1/8] %v2507, 128
      %3682 = vxpose.xlu0.c.b16.cont [2/8] %v2779, 128
      %3683 = vxpose.xlu0.c.b16.cont [3/8] %v2900, 128
      %3684 = vxpose.xlu0.c.b16.cont [4/8] 0, 128
      %3685 = vxpose.xlu0.c.b16.cont [5/8] 0, 128
      %3686 = vxpose.xlu0.c.b16.cont [6/8] 0, 128
      %3687 = vxpose.xlu0.c.b16.cont [7/8] 0, 128
      %3688 = vxpose.xlu0.c.b16.end [8/8] 0, 128
      %v3689 = vpop.trf.xlu0
      %v3690 = vpop.trf.xlu0
      %v3691 = vpop.trf.xlu0
      %v3692 = vpop.trf.xlu0
      %v3693 = vpop.trf.xlu0
      %v3694 = vpop.trf.xlu0
      %v3695 = vpop.trf.xlu0
      %v3696 = vpop.trf.xlu0
      %3697 = vxpose.xlu0.c.b16.start [1/8] %v2372, 128
      %3698 = vxpose.xlu0.c.b16.cont [2/8] %v2644, 128
      %3699 = vxpose.xlu0.c.b16.cont [3/8] %v2850, 128
      %3700 = vxpose.xlu0.c.b16.cont [4/8] 0, 128
      %3701 = vxpose.xlu0.c.b16.cont [5/8] 0, 128
      %3702 = vxpose.xlu0.c.b16.cont [6/8] 0, 128
      %3703 = vxpose.xlu0.c.b16.cont [7/8] 0, 128
      %3704 = vxpose.xlu0.c.b16.end [8/8] 0, 128
      %v3705 = vpop.trf.xlu0
      %v3706 = vpop.trf.xlu0
      %v3707 = vpop.trf.xlu0
      %v3708 = vpop.trf.xlu0
      %v3709 = vpop.trf.xlu0
      %v3710 = vpop.trf.xlu0
      %v3711 = vpop.trf.xlu0
      %v3712 = vpop.trf.xlu0
      %3713 = vxpose.xlu0.c.b16.start [1/8] %v2508, 128
      %3714 = vxpose.xlu0.c.b16.cont [2/8] %v2780, 128
      %3715 = vxpose.xlu0.c.b16.cont [3/8] %v2918, 128
      %3716 = vxpose.xlu0.c.b16.cont [4/8] 0, 128
      %3717 = vxpose.xlu0.c.b16.cont [5/8] 0, 128
      %3718 = vxpose.xlu0.c.b16.cont [6/8] 0, 128
      %3719 = vxpose.xlu0.c.b16.cont [7/8] 0, 128
      %3720 = vxpose.xlu0.c.b16.end [8/8] 0, 128
      %v3721 = vpop.trf.xlu0
      %v3722 = vpop.trf.xlu0
      %v3723 = vpop.trf.xlu0
      %v3724 = vpop.trf.xlu0
      %v3725 = vpop.trf.xlu0
      %v3726 = vpop.trf.xlu0
      %v3727 = vpop.trf.xlu0
      %v3728 = vpop.trf.xlu0
      %3729 = vxpose.xlu0.c.b16.start [1/8] %v2373, 128
      %3730 = vxpose.xlu0.c.b16.cont [2/8] %v2645, 128
      %3731 = vxpose.xlu0.c.b16.cont [3/8] %v2841, 128
      %3732 = vxpose.xlu0.c.b16.cont [4/8] 0, 128
      %3733 = vxpose.xlu0.c.b16.cont [5/8] 0, 128
      %3734 = vxpose.xlu0.c.b16.cont [6/8] 0, 128
      %3735 = vxpose.xlu0.c.b16.cont [7/8] 0, 128
      %3736 = vxpose.xlu0.c.b16.end [8/8] 0, 128
      %v3737 = vpop.trf.xlu0
      %v3738 = vpop.trf.xlu0
      %v3739 = vpop.trf.xlu0
      %v3740 = vpop.trf.xlu0
      %v3741 = vpop.trf.xlu0
      %v3742 = vpop.trf.xlu0
      %v3743 = vpop.trf.xlu0
      %v3744 = vpop.trf.xlu0
      %3745 = vxpose.xlu0.c.b16.start [1/8] %v2509, 128
      %3746 = vxpose.xlu0.c.b16.cont [2/8] %v2781, 128
      %3747 = vxpose.xlu0.c.b16.cont [3/8] %v2909, 128
      %3748 = vxpose.xlu0.c.b16.cont [4/8] 0, 128
      %3749 = vxpose.xlu0.c.b16.cont [5/8] 0, 128
      %3750 = vxpose.xlu0.c.b16.cont [6/8] 0, 128
      %3751 = vxpose.xlu0.c.b16.cont [7/8] 0, 128
      %3752 = vxpose.xlu0.c.b16.end [8/8] 0, 128
      %v3753 = vpop.trf.xlu0
      %v3754 = vpop.trf.xlu0
      %v3755 = vpop.trf.xlu0
      %v3756 = vpop.trf.xlu0
      %v3757 = vpop.trf.xlu0
      %v3758 = vpop.trf.xlu0
      %v3759 = vpop.trf.xlu0
      %v3760 = vpop.trf.xlu0
      %3761 = vxpose.xlu0.c.b16.start [1/8] %v2374, 128
      %3762 = vxpose.xlu0.c.b16.cont [2/8] %v2646, 128
      %3763 = vxpose.xlu0.c.b16.cont [3/8] %v2851, 128
      %3764 = vxpose.xlu0.c.b16.cont [4/8] 0, 128
      %3765 = vxpose.xlu0.c.b16.cont [5/8] 0, 128
      %3766 = vxpose.xlu0.c.b16.cont [6/8] 0, 128
      %3767 = vxpose.xlu0.c.b16.cont [7/8] 0, 128
      %3768 = vxpose.xlu0.c.b16.end [8/8] 0, 128
      %v3769 = vpop.trf.xlu0
      %v3770 = vpop.trf.xlu0
      %v3771 = vpop.trf.xlu0
      %v3772 = vpop.trf.xlu0
      %v3773 = vpop.trf.xlu0
      %v3774 = vpop.trf.xlu0
      %v3775 = vpop.trf.xlu0
      %v3776 = vpop.trf.xlu0
      %3777 = vxpose.xlu0.c.b16.start [1/8] %v2510, 128
      %3778 = vxpose.xlu0.c.b16.cont [2/8] %v2782, 128
      %3779 = vxpose.xlu0.c.b16.cont [3/8] %v2919, 128
      %3780 = vxpose.xlu0.c.b16.cont [4/8] 0, 128
      %3781 = vxpose.xlu0.c.b16.cont [5/8] 0, 128
      %3782 = vxpose.xlu0.c.b16.cont [6/8] 0, 128
      %3783 = vxpose.xlu0.c.b16.cont [7/8] 0, 128
      %3784 = vxpose.xlu0.c.b16.end [8/8] 0, 128
      %v3785 = vpop.trf.xlu0
      %v3786 = vpop.trf.xlu0
      %v3787 = vpop.trf.xlu0
      %v3788 = vpop.trf.xlu0
      %v3789 = vpop.trf.xlu0
      %v3790 = vpop.trf.xlu0
      %v3791 = vpop.trf.xlu0
      %v3792 = vpop.trf.xlu0
      %3793 = vxpose.xlu0.c.b16.start [1/8] %v2375, 128
      %3794 = vxpose.xlu0.c.b16.cont [2/8] %v2647, 128
      %3795 = vxpose.xlu0.c.b16.cont [3/8] %v2848, 128
      %3796 = vxpose.xlu0.c.b16.cont [4/8] 0, 128
      %3797 = vxpose.xlu0.c.b16.cont [5/8] 0, 128
      %3798 = vxpose.xlu0.c.b16.cont [6/8] 0, 128
      %3799 = vxpose.xlu0.c.b16.cont [7/8] 0, 128
      %3800 = vxpose.xlu0.c.b16.end [8/8] 0, 128
      %v3801 = vpop.trf.xlu0
      %v3802 = vpop.trf.xlu0
      %v3803 = vpop.trf.xlu0
      %v3804 = vpop.trf.xlu0
      %v3805 = vpop.trf.xlu0
      %v3806 = vpop.trf.xlu0
      %v3807 = vpop.trf.xlu0
      %v3808 = vpop.trf.xlu0
      %3809 = vxpose.xlu0.c.b16.start [1/8] %v2511, 128
      %3810 = vxpose.xlu0.c.b16.cont [2/8] %v2783, 128
      %3811 = vxpose.xlu0.c.b16.cont [3/8] %v2916, 128
      %3812 = vxpose.xlu0.c.b16.cont [4/8] 0, 128
      %3813 = vxpose.xlu0.c.b16.cont [5/8] 0, 128
      %3814 = vxpose.xlu0.c.b16.cont [6/8] 0, 128
      %3815 = vxpose.xlu0.c.b16.cont [7/8] 0, 128
      %3816 = vxpose.xlu0.c.b16.end [8/8] 0, 128
      %v3817 = vpop.trf.xlu0
      %v3818 = vpop.trf.xlu0
      %v3819 = vpop.trf.xlu0
      %v3820 = vpop.trf.xlu0
      %v3821 = vpop.trf.xlu0
      %v3822 = vpop.trf.xlu0
      %v3823 = vpop.trf.xlu0
      %v3824 = vpop.trf.xlu0
      %3825 = vxpose.xlu0.c.b16.start [1/8] %v2376, 128
      %3826 = vxpose.xlu0.c.b16.cont [2/8] %v2648, 128
      %3827 = vxpose.xlu0.c.b16.cont [3/8] %v2852, 128
      %3828 = vxpose.xlu0.c.b16.cont [4/8] 0, 128
      %3829 = vxpose.xlu0.c.b16.cont [5/8] 0, 128
      %3830 = vxpose.xlu0.c.b16.cont [6/8] 0, 128
      %3831 = vxpose.xlu0.c.b16.cont [7/8] 0, 128
      %3832 = vxpose.xlu0.c.b16.end [8/8] 0, 128
      %v3833 = vpop.trf.xlu0
      %v3834 = vpop.trf.xlu0
      %v3835 = vpop.trf.xlu0
      %v3836 = vpop.trf.xlu0
      %v3837 = vpop.trf.xlu0
      %v3838 = vpop.trf.xlu0
      %v3839 = vpop.trf.xlu0
      %v3840 = vpop.trf.xlu0
      %3841 = vxpose.xlu0.c.b16.start [1/8] %v2512, 128
      %3842 = vxpose.xlu0.c.b16.cont [2/8] %v2784, 128
      %3843 = vxpose.xlu0.c.b16.cont [3/8] %v2920, 128
      %3844 = vxpose.xlu0.c.b16.cont [4/8] 0, 128
      %3845 = vxpose.xlu0.c.b16.cont [5/8] 0, 128
      %3846 = vxpose.xlu0.c.b16.cont [6/8] 0, 128
      %3847 = vxpose.xlu0.c.b16.cont [7/8] 0, 128
      %3848 = vxpose.xlu0.c.b16.end [8/8] 0, 128
      %v3849 = vpop.trf.xlu0
      %v3850 = vpop.trf.xlu0
      %v3851 = vpop.trf.xlu0
      %v3852 = vpop.trf.xlu0
      %v3853 = vpop.trf.xlu0
      %v3854 = vpop.trf.xlu0
      %v3855 = vpop.trf.xlu0
      %v3856 = vpop.trf.xlu0
      %3857 = vxpose.xlu0.c.b16.start [1/8] %v3049, 128
      %3858 = vxpose.xlu0.c.b16.cont [2/8] %v3321, 128
      %3859 = vxpose.xlu0.c.b16.cont [3/8] %v3505, 128
      %3860 = vxpose.xlu0.c.b16.cont [4/8] 0, 128
      %3861 = vxpose.xlu0.c.b16.cont [5/8] 0, 128
      %3862 = vxpose.xlu0.c.b16.cont [6/8] 0, 128
      %3863 = vxpose.xlu0.c.b16.cont [7/8] 0, 128
      %3864 = vxpose.xlu0.c.b16.end [8/8] 0, 128
      %v3865 = vpop.trf.xlu0
      %v3866 = vpop.trf.xlu0
      %v3867 = vpop.trf.xlu0
      %v3868 = vpop.trf.xlu0
      %v3869 = vpop.trf.xlu0
      %v3870 = vpop.trf.xlu0
      %v3871 = vpop.trf.xlu0
      %v3872 = vpop.trf.xlu0
      %3873 = vxpose.xlu0.c.b16.start [1/8] %v3185, 128
      %3874 = vxpose.xlu0.c.b16.cont [2/8] %v3457, 128
      %3875 = vxpose.xlu0.c.b16.cont [3/8] %v3573, 128
      %3876 = vxpose.xlu0.c.b16.cont [4/8] 0, 128
      %3877 = vxpose.xlu0.c.b16.cont [5/8] 0, 128
      %3878 = vxpose.xlu0.c.b16.cont [6/8] 0, 128
      %3879 = vxpose.xlu0.c.b16.cont [7/8] 0, 128
      %3880 = vxpose.xlu0.c.b16.end [8/8] 0, 128
      %v3881 = vpop.trf.xlu0
      %v3882 = vpop.trf.xlu0
      %v3883 = vpop.trf.xlu0
      %v3884 = vpop.trf.xlu0
      %v3885 = vpop.trf.xlu0
      %v3886 = vpop.trf.xlu0
      %v3887 = vpop.trf.xlu0
      %v3888 = vpop.trf.xlu0
      %3889 = vxpose.xlu0.c.b16.start [1/8] %v3050, 128
      %3890 = vxpose.xlu0.c.b16.cont [2/8] %v3322, 128
      %3891 = vxpose.xlu0.c.b16.cont [3/8] %v3529, 128
      %3892 = vxpose.xlu0.c.b16.cont [4/8] 0, 128
      %3893 = vxpose.xlu0.c.b16.cont [5/8] 0, 128
      %3894 = vxpose.xlu0.c.b16.cont [6/8] 0, 128
      %3895 = vxpose.xlu0.c.b16.cont [7/8] 0, 128
      %3896 = vxpose.xlu0.c.b16.end [8/8] 0, 128
      %v3897 = vpop.trf.xlu0
      %v3898 = vpop.trf.xlu0
      %v3899 = vpop.trf.xlu0
      %v3900 = vpop.trf.xlu0
      %v3901 = vpop.trf.xlu0
      %v3902 = vpop.trf.xlu0
      %v3903 = vpop.trf.xlu0
      %v3904 = vpop.trf.xlu0
      %3905 = vxpose.xlu0.c.b16.start [1/8] %v3186, 128
      %3906 = vxpose.xlu0.c.b16.cont [2/8] %v3458, 128
      %3907 = vxpose.xlu0.c.b16.cont [3/8] %v3597, 128
      %3908 = vxpose.xlu0.c.b16.cont [4/8] 0, 128
      %3909 = vxpose.xlu0.c.b16.cont [5/8] 0, 128
      %3910 = vxpose.xlu0.c.b16.cont [6/8] 0, 128
      %3911 = vxpose.xlu0.c.b16.cont [7/8] 0, 128
      %3912 = vxpose.xlu0.c.b16.end [8/8] 0, 128
      %v3913 = vpop.trf.xlu0
      %v3914 = vpop.trf.xlu0
      %v3915 = vpop.trf.xlu0
      %v3916 = vpop.trf.xlu0
      %v3917 = vpop.trf.xlu0
      %v3918 = vpop.trf.xlu0
      %v3919 = vpop.trf.xlu0
      %v3920 = vpop.trf.xlu0
      %3921 = vxpose.xlu0.c.b16.start [1/8] %v3051, 128
      %3922 = vxpose.xlu0.c.b16.cont [2/8] %v3323, 128
      %3923 = vxpose.xlu0.c.b16.cont [3/8] %v3512, 128
      %3924 = vxpose.xlu0.c.b16.cont [4/8] 0, 128
      %3925 = vxpose.xlu0.c.b16.cont [5/8] 0, 128
      %3926 = vxpose.xlu0.c.b16.cont [6/8] 0, 128
      %3927 = vxpose.xlu0.c.b16.cont [7/8] 0, 128
      %3928 = vxpose.xlu0.c.b16.end [8/8] 0, 128
      %v3929 = vpop.trf.xlu0
      %v3930 = vpop.trf.xlu0
      %v3931 = vpop.trf.xlu0
      %v3932 = vpop.trf.xlu0
      %v3933 = vpop.trf.xlu0
      %v3934 = vpop.trf.xlu0
      %v3935 = vpop.trf.xlu0
      %v3936 = vpop.trf.xlu0
      %3937 = vxpose.xlu0.c.b16.start [1/8] %v3187, 128
      %3938 = vxpose.xlu0.c.b16.cont [2/8] %v3459, 128
      %3939 = vxpose.xlu0.c.b16.cont [3/8] %v3580, 128
      %3940 = vxpose.xlu0.c.b16.cont [4/8] 0, 128
      %3941 = vxpose.xlu0.c.b16.cont [5/8] 0, 128
      %3942 = vxpose.xlu0.c.b16.cont [6/8] 0, 128
      %3943 = vxpose.xlu0.c.b16.cont [7/8] 0, 128
      %3944 = vxpose.xlu0.c.b16.end [8/8] 0, 128
      %v3945 = vpop.trf.xlu0
      %v3946 = vpop.trf.xlu0
      %v3947 = vpop.trf.xlu0
      %v3948 = vpop.trf.xlu0
      %v3949 = vpop.trf.xlu0
      %v3950 = vpop.trf.xlu0
      %v3951 = vpop.trf.xlu0
      %v3952 = vpop.trf.xlu0
      %3953 = vxpose.xlu0.c.b16.start [1/8] %v3052, 128
      %3954 = vxpose.xlu0.c.b16.cont [2/8] %v3324, 128
      %3955 = vxpose.xlu0.c.b16.cont [3/8] %v3530, 128
      %3956 = vxpose.xlu0.c.b16.cont [4/8] 0, 128
      %3957 = vxpose.xlu0.c.b16.cont [5/8] 0, 128
      %3958 = vxpose.xlu0.c.b16.cont [6/8] 0, 128
      %3959 = vxpose.xlu0.c.b16.cont [7/8] 0, 128
      %3960 = vxpose.xlu0.c.b16.end [8/8] 0, 128
      %v3961 = vpop.trf.xlu0
      %v3962 = vpop.trf.xlu0
      %v3963 = vpop.trf.xlu0
      %v3964 = vpop.trf.xlu0
      %v3965 = vpop.trf.xlu0
      %v3966 = vpop.trf.xlu0
      %v3967 = vpop.trf.xlu0
      %v3968 = vpop.trf.xlu0
      %3969 = vxpose.xlu0.c.b16.start [1/8] %v3188, 128
      %3970 = vxpose.xlu0.c.b16.cont [2/8] %v3460, 128
      %3971 = vxpose.xlu0.c.b16.cont [3/8] %v3598, 128
      %3972 = vxpose.xlu0.c.b16.cont [4/8] 0, 128
      %3973 = vxpose.xlu0.c.b16.cont [5/8] 0, 128
      %3974 = vxpose.xlu0.c.b16.cont [6/8] 0, 128
      %3975 = vxpose.xlu0.c.b16.cont [7/8] 0, 128
      %3976 = vxpose.xlu0.c.b16.end [8/8] 0, 128
      %v3977 = vpop.trf.xlu0
      %v3978 = vpop.trf.xlu0
      %v3979 = vpop.trf.xlu0
      %v3980 = vpop.trf.xlu0
      %v3981 = vpop.trf.xlu0
      %v3982 = vpop.trf.xlu0
      %v3983 = vpop.trf.xlu0
      %v3984 = vpop.trf.xlu0
      %3985 = vxpose.xlu0.c.b16.start [1/8] %v3053, 128
      %3986 = vxpose.xlu0.c.b16.cont [2/8] %v3325, 128
      %3987 = vxpose.xlu0.c.b16.cont [3/8] %v3521, 128
      %3988 = vxpose.xlu0.c.b16.cont [4/8] 0, 128
      %3989 = vxpose.xlu0.c.b16.cont [5/8] 0, 128
      %3990 = vxpose.xlu0.c.b16.cont [6/8] 0, 128
      %3991 = vxpose.xlu0.c.b16.cont [7/8] 0, 128
      %3992 = vxpose.xlu0.c.b16.end [8/8] 0, 128
      %v3993 = vpop.trf.xlu0
      %v3994 = vpop.trf.xlu0
      %v3995 = vpop.trf.xlu0
      %v3996 = vpop.trf.xlu0
      %v3997 = vpop.trf.xlu0
      %v3998 = vpop.trf.xlu0
      %v3999 = vpop.trf.xlu0
      %v4000 = vpop.trf.xlu0
      %4001 = vxpose.xlu0.c.b16.start [1/8] %v3189, 128
      %4002 = vxpose.xlu0.c.b16.cont [2/8] %v3461, 128
      %4003 = vxpose.xlu0.c.b16.cont [3/8] %v3589, 128
      %4004 = vxpose.xlu0.c.b16.cont [4/8] 0, 128
      %4005 = vxpose.xlu0.c.b16.cont [5/8] 0, 128
      %4006 = vxpose.xlu0.c.b16.cont [6/8] 0, 128
      %4007 = vxpose.xlu0.c.b16.cont [7/8] 0, 128
      %4008 = vxpose.xlu0.c.b16.end [8/8] 0, 128
      %v4009 = vpop.trf.xlu0
      %v4010 = vpop.trf.xlu0
      %v4011 = vpop.trf.xlu0
      %v4012 = vpop.trf.xlu0
      %v4013 = vpop.trf.xlu0
      %v4014 = vpop.trf.xlu0
      %v4015 = vpop.trf.xlu0
      %v4016 = vpop.trf.xlu0
      %4017 = vxpose.xlu0.c.b16.start [1/8] %v3054, 128
      %4018 = vxpose.xlu0.c.b16.cont [2/8] %v3326, 128
      %4019 = vxpose.xlu0.c.b16.cont [3/8] %v3531, 128
      %4020 = vxpose.xlu0.c.b16.cont [4/8] 0, 128
      %4021 = vxpose.xlu0.c.b16.cont [5/8] 0, 128
      %4022 = vxpose.xlu0.c.b16.cont [6/8] 0, 128
      %4023 = vxpose.xlu0.c.b16.cont [7/8] 0, 128
      %4024 = vxpose.xlu0.c.b16.end [8/8] 0, 128
      %v4025 = vpop.trf.xlu0
      %v4026 = vpop.trf.xlu0
      %v4027 = vpop.trf.xlu0
      %v4028 = vpop.trf.xlu0
      %v4029 = vpop.trf.xlu0
      %v4030 = vpop.trf.xlu0
      %v4031 = vpop.trf.xlu0
      %v4032 = vpop.trf.xlu0
      %4033 = vxpose.xlu0.c.b16.start [1/8] %v3190, 128
      %4034 = vxpose.xlu0.c.b16.cont [2/8] %v3462, 128
      %4035 = vxpose.xlu0.c.b16.cont [3/8] %v3599, 128
      %4036 = vxpose.xlu0.c.b16.cont [4/8] 0, 128
      %4037 = vxpose.xlu0.c.b16.cont [5/8] 0, 128
      %4038 = vxpose.xlu0.c.b16.cont [6/8] 0, 128
      %4039 = vxpose.xlu0.c.b16.cont [7/8] 0, 128
      %4040 = vxpose.xlu0.c.b16.end [8/8] 0, 128
      %v4041 = vpop.trf.xlu0
      %v4042 = vpop.trf.xlu0
      %v4043 = vpop.trf.xlu0
      %v4044 = vpop.trf.xlu0
      %v4045 = vpop.trf.xlu0
      %v4046 = vpop.trf.xlu0
      %v4047 = vpop.trf.xlu0
      %v4048 = vpop.trf.xlu0
      %4049 = vxpose.xlu0.c.b16.start [1/8] %v3055, 128
      %4050 = vxpose.xlu0.c.b16.cont [2/8] %v3327, 128
      %4051 = vxpose.xlu0.c.b16.cont [3/8] %v3528, 128
      %4052 = vxpose.xlu0.c.b16.cont [4/8] 0, 128
      %4053 = vxpose.xlu0.c.b16.cont [5/8] 0, 128
      %4054 = vxpose.xlu0.c.b16.cont [6/8] 0, 128
      %4055 = vxpose.xlu0.c.b16.cont [7/8] 0, 128
      %4056 = vxpose.xlu0.c.b16.end [8/8] 0, 128
      %v4057 = vpop.trf.xlu0
      %v4058 = vpop.trf.xlu0
      %v4059 = vpop.trf.xlu0
      %v4060 = vpop.trf.xlu0
      %v4061 = vpop.trf.xlu0
      %v4062 = vpop.trf.xlu0
      %v4063 = vpop.trf.xlu0
      %v4064 = vpop.trf.xlu0
      %4065 = vxpose.xlu0.c.b16.start [1/8] %v3191, 128
      %4066 = vxpose.xlu0.c.b16.cont [2/8] %v3463, 128
      %4067 = vxpose.xlu0.c.b16.cont [3/8] %v3596, 128
      %4068 = vxpose.xlu0.c.b16.cont [4/8] 0, 128
      %4069 = vxpose.xlu0.c.b16.cont [5/8] 0, 128
      %4070 = vxpose.xlu0.c.b16.cont [6/8] 0, 128
      %4071 = vxpose.xlu0.c.b16.cont [7/8] 0, 128
      %4072 = vxpose.xlu0.c.b16.end [8/8] 0, 128
      %v4073 = vpop.trf.xlu0
      %v4074 = vpop.trf.xlu0
      %v4075 = vpop.trf.xlu0
      %v4076 = vpop.trf.xlu0
      %v4077 = vpop.trf.xlu0
      %v4078 = vpop.trf.xlu0
      %v4079 = vpop.trf.xlu0
      %v4080 = vpop.trf.xlu0
      %4081 = vxpose.xlu0.c.b16.start [1/8] %v3056, 128
      %4082 = vxpose.xlu0.c.b16.cont [2/8] %v3328, 128
      %4083 = vxpose.xlu0.c.b16.cont [3/8] %v3532, 128
      %4084 = vxpose.xlu0.c.b16.cont [4/8] 0, 128
      %4085 = vxpose.xlu0.c.b16.cont [5/8] 0, 128
      %4086 = vxpose.xlu0.c.b16.cont [6/8] 0, 128
      %4087 = vxpose.xlu0.c.b16.cont [7/8] 0, 128
      %4088 = vxpose.xlu0.c.b16.end [8/8] 0, 128
      %v4089 = vpop.trf.xlu0
      %v4090 = vpop.trf.xlu0
      %v4091 = vpop.trf.xlu0
      %v4092 = vpop.trf.xlu0
      %v4093 = vpop.trf.xlu0
      %v4094 = vpop.trf.xlu0
      %v4095 = vpop.trf.xlu0
      %v4096 = vpop.trf.xlu0
      %4097 = vxpose.xlu0.c.b16.start [1/8] %v3192, 128
      %4098 = vxpose.xlu0.c.b16.cont [2/8] %v3464, 128
      %4099 = vxpose.xlu0.c.b16.cont [3/8] %v3600, 128
      %4100 = vxpose.xlu0.c.b16.cont [4/8] 0, 128
      %4101 = vxpose.xlu0.c.b16.cont [5/8] 0, 128
      %4102 = vxpose.xlu0.c.b16.cont [6/8] 0, 128
      %4103 = vxpose.xlu0.c.b16.cont [7/8] 0, 128
      %4104 = vxpose.xlu0.c.b16.end [8/8] 0, 128
      %v4105 = vpop.trf.xlu0
      %v4106 = vpop.trf.xlu0
      %v4107 = vpop.trf.xlu0
      %v4108 = vpop.trf.xlu0
      %v4109 = vpop.trf.xlu0
      %v4110 = vpop.trf.xlu0
      %v4111 = vpop.trf.xlu0
      %v4112 = vpop.trf.xlu0
      %v4113 = vcombine.low %v3609, %v3673
      %v4115 = vunpack.c.l.s4 1983009808
      %v4116 = vunpack.c.0.s8 %v4115
      %v4117 = vlaneseq
      %v4118 = vshrl.u32 %v4117, 7
      %v4119 = vsub.s32 %v4116, %v4118
      %v4120 = vrot.slane %v4113, %v4119
      %v4121 = vcombine.low %v3641, %v3705
      %v4123 = vunpack.c.l.s4 1983009808
      %v4124 = vunpack.c.0.s8 %v4123
      %v4125 = vlaneseq
      %v4126 = vshrl.u32 %v4125, 7
      %v4127 = vsub.s32 %v4124, %v4126
      %v4128 = vrot.slane %v4121, %v4127
      %v4129 = vcombine.low %v3737, %v3801
      %v4131 = vunpack.c.l.s4 1983009808
      %v4132 = vunpack.c.0.s8 %v4131
      %v4133 = vlaneseq
      %v4134 = vshrl.u32 %v4133, 7
      %v4135 = vsub.s32 %v4132, %v4134
      %v4136 = vrot.slane %v4129, %v4135
      %v4137 = vcombine.low %v3769, %v3833
      %v4139 = vunpack.c.l.s4 1983009808
      %v4140 = vunpack.c.0.s8 %v4139
      %v4141 = vlaneseq
      %v4142 = vshrl.u32 %v4141, 7
      %v4143 = vsub.s32 %v4140, %v4142
      %v4144 = vrot.slane %v4137, %v4143
      %v4145 = vcombine.low %v4120, %v4128
      %v4147 = vunpack.c.l.s4 1934713408
      %v4148 = vunpack.c.0.s8 %v4147
      %v4149 = vlaneseq
      %v4150 = vshrl.u32 %v4149, 7
      %v4151 = vsub.s32 %v4148, %v4150
      %v4152 = vrot.slane %v4145, %v4151
      %v4153 = vcombine.low %v4136, %v4144
      %v4155 = vunpack.c.l.s4 1934713408
      %v4156 = vunpack.c.0.s8 %v4155
      %v4157 = vlaneseq
      %v4158 = vshrl.u32 %v4157, 7
      %v4159 = vsub.s32 %v4156, %v4158
      %v4160 = vrot.slane %v4153, %v4159
      %v4161 = vcombine.low %v4152, %v4160
      %v4162 = vcombine.high %v4152, %v4160
      %v4163 = vcombine.low %v3625, %v3689
      %v4165 = vunpack.c.l.s4 1983009808
      %v4166 = vunpack.c.0.s8 %v4165
      %v4167 = vlaneseq
      %v4168 = vshrl.u32 %v4167, 7
      %v4169 = vsub.s32 %v4166, %v4168
      %v4170 = vrot.slane %v4163, %v4169
      %v4171 = vcombine.low %v3657, %v3721
      %v4173 = vunpack.c.l.s4 1983009808
      %v4174 = vunpack.c.0.s8 %v4173
      %v4175 = vlaneseq
      %v4176 = vshrl.u32 %v4175, 7
      %v4177 = vsub.s32 %v4174, %v4176
      %v4178 = vrot.slane %v4171, %v4177
      %v4179 = vcombine.low %v3753, %v3817
      %v4181 = vunpack.c.l.s4 1983009808
      %v4182 = vunpack.c.0.s8 %v4181
      %v4183 = vlaneseq
      %v4184 = vshrl.u32 %v4183, 7
      %v4185 = vsub.s32 %v4182, %v4184
      %v4186 = vrot.slane %v4179, %v4185
      %v4187 = vcombine.low %v3785, %v3849
      %v4189 = vunpack.c.l.s4 1983009808
      %v4190 = vunpack.c.0.s8 %v4189
      %v4191 = vlaneseq
      %v4192 = vshrl.u32 %v4191, 7
      %v4193 = vsub.s32 %v4190, %v4192
      %v4194 = vrot.slane %v4187, %v4193
      %v4195 = vcombine.low %v4170, %v4178
      %v4197 = vunpack.c.l.s4 1934713408
      %v4198 = vunpack.c.0.s8 %v4197
      %v4199 = vlaneseq
      %v4200 = vshrl.u32 %v4199, 7
      %v4201 = vsub.s32 %v4198, %v4200
      %v4202 = vrot.slane %v4195, %v4201
      %v4203 = vcombine.low %v4186, %v4194
      %v4205 = vunpack.c.l.s4 1934713408
      %v4206 = vunpack.c.0.s8 %v4205
      %v4207 = vlaneseq
      %v4208 = vshrl.u32 %v4207, 7
      %v4209 = vsub.s32 %v4206, %v4208
      %v4210 = vrot.slane %v4203, %v4209
      %v4211 = vcombine.low %v4202, %v4210
      %v4212 = vcombine.high %v4202, %v4210
      %v4213 = vcombine.low %v3865, %v3929
      %v4215 = vunpack.c.l.s4 1983009808
      %v4216 = vunpack.c.0.s8 %v4215
      %v4217 = vlaneseq
      %v4218 = vshrl.u32 %v4217, 7
      %v4219 = vsub.s32 %v4216, %v4218
      %v4220 = vrot.slane %v4213, %v4219
      %v4221 = vcombine.low %v3897, %v3961
      %v4223 = vunpack.c.l.s4 1983009808
      %v4224 = vunpack.c.0.s8 %v4223
      %v4225 = vlaneseq
      %v4226 = vshrl.u32 %v4225, 7
      %v4227 = vsub.s32 %v4224, %v4226
      %v4228 = vrot.slane %v4221, %v4227
      %v4229 = vcombine.low %v3993, %v4057
      %v4231 = vunpack.c.l.s4 1983009808
      %v4232 = vunpack.c.0.s8 %v4231
      %v4233 = vlaneseq
      %v4234 = vshrl.u32 %v4233, 7
      %v4235 = vsub.s32 %v4232, %v4234
      %v4236 = vrot.slane %v4229, %v4235
      %v4237 = vcombine.low %v4025, %v4089
      %v4239 = vunpack.c.l.s4 1983009808
      %v4240 = vunpack.c.0.s8 %v4239
      %v4241 = vlaneseq
      %v4242 = vshrl.u32 %v4241, 7
      %v4243 = vsub.s32 %v4240, %v4242
      %v4244 = vrot.slane %v4237, %v4243
      %v4245 = vcombine.low %v4220, %v4228
      %v4247 = vunpack.c.l.s4 1934713408
      %v4248 = vunpack.c.0.s8 %v4247
      %v4249 = vlaneseq
      %v4250 = vshrl.u32 %v4249, 7
      %v4251 = vsub.s32 %v4248, %v4250
      %v4252 = vrot.slane %v4245, %v4251
      %v4253 = vcombine.low %v4236, %v4244
      %v4255 = vunpack.c.l.s4 1934713408
      %v4256 = vunpack.c.0.s8 %v4255
      %v4257 = vlaneseq
      %v4258 = vshrl.u32 %v4257, 7
      %v4259 = vsub.s32 %v4256, %v4258
      %v4260 = vrot.slane %v4253, %v4259
      %v4261 = vcombine.low %v4252, %v4260
      %v4262 = vcombine.high %v4252, %v4260
      %v4263 = vcombine.low %v3881, %v3945
      %v4265 = vunpack.c.l.s4 1983009808
      %v4266 = vunpack.c.0.s8 %v4265
      %v4267 = vlaneseq
      %v4268 = vshrl.u32 %v4267, 7
      %v4269 = vsub.s32 %v4266, %v4268
      %v4270 = vrot.slane %v4263, %v4269
      %v4271 = vcombine.low %v3913, %v3977
      %v4273 = vunpack.c.l.s4 1983009808
      %v4274 = vunpack.c.0.s8 %v4273
      %v4275 = vlaneseq
      %v4276 = vshrl.u32 %v4275, 7
      %v4277 = vsub.s32 %v4274, %v4276
      %v4278 = vrot.slane %v4271, %v4277
      %v4279 = vcombine.low %v4009, %v4073
      %v4281 = vunpack.c.l.s4 1983009808
      %v4282 = vunpack.c.0.s8 %v4281
      %v4283 = vlaneseq
      %v4284 = vshrl.u32 %v4283, 7
      %v4285 = vsub.s32 %v4282, %v4284
      %v4286 = vrot.slane %v4279, %v4285
      %v4287 = vcombine.low %v4041, %v4105
      %v4289 = vunpack.c.l.s4 1983009808
      %v4290 = vunpack.c.0.s8 %v4289
      %v4291 = vlaneseq
      %v4292 = vshrl.u32 %v4291, 7
      %v4293 = vsub.s32 %v4290, %v4292
      %v4294 = vrot.slane %v4287, %v4293
      %v4295 = vcombine.low %v4270, %v4278
      %v4297 = vunpack.c.l.s4 1934713408
      %v4298 = vunpack.c.0.s8 %v4297
      %v4299 = vlaneseq
      %v4300 = vshrl.u32 %v4299, 7
      %v4301 = vsub.s32 %v4298, %v4300
      %v4302 = vrot.slane %v4295, %v4301
      %v4303 = vcombine.low %v4286, %v4294
      %v4305 = vunpack.c.l.s4 1934713408
      %v4306 = vunpack.c.0.s8 %v4305
      %v4307 = vlaneseq
      %v4308 = vshrl.u32 %v4307, 7
      %v4309 = vsub.s32 %v4306, %v4308
      %v4310 = vrot.slane %v4303, %v4309
      %v4311 = vcombine.low %v4302, %v4310
      %v4312 = vcombine.high %v4302, %v4310
      %v4315 = vpack.i.b16 %v4211, %v4161
      %v4317 = vshrl.u32 %v4161, 16
      %v4318 = vshrl.u32 %v4211, 16
      %v4319 = vpack.i.b16 %v4318, %v4317
      %v4323 = vpack.i.b16 %v4212, %v4162
      %v4325 = vshrl.u32 %v4162, 16
      %v4326 = vshrl.u32 %v4212, 16
      %v4327 = vpack.i.b16 %v4326, %v4325
      %v4331 = vpack.i.b16 %v4311, %v4261
      %v4333 = vshrl.u32 %v4261, 16
      %v4334 = vshrl.u32 %v4311, 16
      %v4335 = vpack.i.b16 %v4334, %v4333
      %v4339 = vpack.i.b16 %v4312, %v4262
      %v4341 = vshrl.u32 %v4262, 16
      %v4342 = vshrl.u32 %v4312, 16
      %v4343 = vpack.i.b16 %v4342, %v4341
      %vm4345 = vcmask 261120
      %v4347 = vsel %vm4345, %v1271, 0
      %4349 = vmatprep.subr.bf16.mxu0 0
      %4350 = vmatpush1.bf16.msra.mxu0 %v4315
      %4351 = vmatprep.subr.bf16.mxu0 0
      %4352 = vmatpush1.bf16.msra.mxu0 %v4331
      %4353 = vmatprep.subr.bf16.mxu0 0
      %4354 = vmatpush1.bf16.msra.mxu0 0
      %4355 = vmatprep.subr.bf16.mxu0 0
      %4356 = vmatpush1.bf16.msra.mxu0 0
      %4357 = vmatprep.subr.bf16.mxu0 0
      %4358 = vmatpush1.bf16.msra.mxu0 0
      %4359 = vmatprep.subr.bf16.mxu0 0
      %4360 = vmatpush1.bf16.msra.mxu0 0
      %4361 = vmatprep.subr.bf16.mxu0 0
      %4362 = vmatpush1.bf16.msra.mxu0 0
      %4363 = vmatprep.subr.bf16.mxu0 0
      %4364 = vmatpush1.bf16.msra.mxu0 0
      %4365 = vmatprep.subr.bf16.mxu0 0
      %4366 = vmatpush1.bf16.msra.mxu0 0
      %4367 = vmatprep.subr.bf16.mxu0 0
      %4368 = vmatpush1.bf16.msra.mxu0 0
      %4369 = vmatprep.subr.bf16.mxu0 0
      %4370 = vmatpush1.bf16.msra.mxu0 0
      %4371 = vmatprep.subr.bf16.mxu0 0
      %4372 = vmatpush1.bf16.msra.mxu0 0
      %4373 = vmatprep.subr.bf16.mxu0 0
      %4374 = vmatpush1.bf16.msra.mxu0 0
      %4375 = vmatprep.subr.bf16.mxu0 0
      %4376 = vmatpush1.bf16.msra.mxu0 0
      %4377 = vmatprep.subr.bf16.mxu0 0
      %4378 = vmatpush1.bf16.msra.mxu0 0
      %4379 = vmatprep.subr.bf16.mxu0 0
      %4380 = vmatpush1.bf16.msra.mxu0 0
      %4381 = vmatprep.mubr.bf16.mxu0 0
      %4382 = vmatmul.mubr.bf16.gmra.mrb[0].mxu0 %v4347
      %v4383 = vpop.f32.mrb[0].mxu0
      %v4384 = vadd.f32 0.0, %v4383
      %v4385 = vpop.f32.mrb[0].mxu0
      %v4386 = vpop.f32.mrb[0].mxu0
      %v4387 = vadd.f32 0.0, %v4386
      %v4388 = vpop.f32.mrb[0].mxu0
      %4389 = vdwg.mxu0
      %v4391 = vsel %vm4345, %v1274, 0
      %4393 = vmatprep.subr.bf16.mxu0 0
      %4394 = vmatpush1.bf16.msra.mxu0 %v4319
      %4395 = vmatprep.subr.bf16.mxu0 0
      %4396 = vmatpush1.bf16.msra.mxu0 %v4335
      %4397 = vmatprep.subr.bf16.mxu0 0
      %4398 = vmatpush1.bf16.msra.mxu0 0
      %4399 = vmatprep.subr.bf16.mxu0 0
      %4400 = vmatpush1.bf16.msra.mxu0 0
      %4401 = vmatprep.subr.bf16.mxu0 0
      %4402 = vmatpush1.bf16.msra.mxu0 0
      %4403 = vmatprep.subr.bf16.mxu0 0
      %4404 = vmatpush1.bf16.msra.mxu0 0
      %4405 = vmatprep.subr.bf16.mxu0 0
      %4406 = vmatpush1.bf16.msra.mxu0 0
      %4407 = vmatprep.subr.bf16.mxu0 0
      %4408 = vmatpush1.bf16.msra.mxu0 0
      %4409 = vmatprep.subr.bf16.mxu0 0
      %4410 = vmatpush1.bf16.msra.mxu0 0
      %4411 = vmatprep.subr.bf16.mxu0 0
      %4412 = vmatpush1.bf16.msra.mxu0 0
      %4413 = vmatprep.subr.bf16.mxu0 0
      %4414 = vmatpush1.bf16.msra.mxu0 0
      %4415 = vmatprep.subr.bf16.mxu0 0
      %4416 = vmatpush1.bf16.msra.mxu0 0
      %4417 = vmatprep.subr.bf16.mxu0 0
      %4418 = vmatpush1.bf16.msra.mxu0 0
      %4419 = vmatprep.subr.bf16.mxu0 0
      %4420 = vmatpush1.bf16.msra.mxu0 0
      %4421 = vmatprep.subr.bf16.mxu0 0
      %4422 = vmatpush1.bf16.msra.mxu0 0
      %4423 = vmatprep.subr.bf16.mxu0 0
      %4424 = vmatpush1.bf16.msra.mxu0 0
      %4425 = vmatprep.mubr.bf16.mxu0 0
      %4426 = vmatmul.mubr.bf16.gmra.mrb[0].mxu0 %v4391
      %v4427 = vpop.f32.mrb[0].mxu0
      %v4428 = vadd.f32 0.0, %v4427
      %v4429 = vpop.f32.mrb[0].mxu0
      %v4430 = vpop.f32.mrb[0].mxu0
      %v4431 = vadd.f32 0.0, %v4430
      %v4432 = vpop.f32.mrb[0].mxu0
      %4433 = vdwg.mxu0
      %v4435 = vsel %vm4345, %v1277, 0
      %4437 = vmatprep.subr.bf16.mxu0 0
      %4438 = vmatpush1.bf16.msra.mxu0 %v4323
      %4439 = vmatprep.subr.bf16.mxu0 0
      %4440 = vmatpush1.bf16.msra.mxu0 %v4339
      %4441 = vmatprep.subr.bf16.mxu0 0
      %4442 = vmatpush1.bf16.msra.mxu0 0
      %4443 = vmatprep.subr.bf16.mxu0 0
      %4444 = vmatpush1.bf16.msra.mxu0 0
      %4445 = vmatprep.subr.bf16.mxu0 0
      %4446 = vmatpush1.bf16.msra.mxu0 0
      %4447 = vmatprep.subr.bf16.mxu0 0
      %4448 = vmatpush1.bf16.msra.mxu0 0
      %4449 = vmatprep.subr.bf16.mxu0 0
      %4450 = vmatpush1.bf16.msra.mxu0 0
      %4451 = vmatprep.subr.bf16.mxu0 0
      %4452 = vmatpush1.bf16.msra.mxu0 0
      %4453 = vmatprep.subr.bf16.mxu0 0
      %4454 = vmatpush1.bf16.msra.mxu0 0
      %4455 = vmatprep.subr.bf16.mxu0 0
      %4456 = vmatpush1.bf16.msra.mxu0 0
      %4457 = vmatprep.subr.bf16.mxu0 0
      %4458 = vmatpush1.bf16.msra.mxu0 0
      %4459 = vmatprep.subr.bf16.mxu0 0
      %4460 = vmatpush1.bf16.msra.mxu0 0
      %4461 = vmatprep.subr.bf16.mxu0 0
      %4462 = vmatpush1.bf16.msra.mxu0 0
      %4463 = vmatprep.subr.bf16.mxu0 0
      %4464 = vmatpush1.bf16.msra.mxu0 0
      %4465 = vmatprep.subr.bf16.mxu0 0
      %4466 = vmatpush1.bf16.msra.mxu0 0
      %4467 = vmatprep.subr.bf16.mxu0 0
      %4468 = vmatpush1.bf16.msra.mxu0 0
      %4469 = vmatprep.mubr.bf16.mxu0 0
      %4470 = vmatmul.mubr.bf16.gmra.mrb[0].mxu0 %v4435
      %v4471 = vpop.f32.mrb[0].mxu0
      %v4472 = vadd.f32 0.0, %v4471
      %v4473 = vpop.f32.mrb[0].mxu0
      %v4474 = vpop.f32.mrb[0].mxu0
      %v4475 = vadd.f32 0.0, %v4474
      %v4476 = vpop.f32.mrb[0].mxu0
      %4477 = vdwg.mxu0
      %v4479 = vsel %vm4345, %v1280, 0
      %4481 = vmatprep.subr.bf16.mxu0 0
      %4482 = vmatpush1.bf16.msra.mxu0 %v4327
      %4483 = vmatprep.subr.bf16.mxu0 0
      %4484 = vmatpush1.bf16.msra.mxu0 %v4343
      %4485 = vmatprep.subr.bf16.mxu0 0
      %4486 = vmatpush1.bf16.msra.mxu0 0
      %4487 = vmatprep.subr.bf16.mxu0 0
      %4488 = vmatpush1.bf16.msra.mxu0 0
      %4489 = vmatprep.subr.bf16.mxu0 0
      %4490 = vmatpush1.bf16.msra.mxu0 0
      %4491 = vmatprep.subr.bf16.mxu0 0
      %4492 = vmatpush1.bf16.msra.mxu0 0
      %4493 = vmatprep.subr.bf16.mxu0 0
      %4494 = vmatpush1.bf16.msra.mxu0 0
      %4495 = vmatprep.subr.bf16.mxu0 0
      %4496 = vmatpush1.bf16.msra.mxu0 0
      %4497 = vmatprep.subr.bf16.mxu0 0
      %4498 = vmatpush1.bf16.msra.mxu0 0
      %4499 = vmatprep.subr.bf16.mxu0 0
      %4500 = vmatpush1.bf16.msra.mxu0 0
      %4501 = vmatprep.subr.bf16.mxu0 0
      %4502 = vmatpush1.bf16.msra.mxu0 0
      %4503 = vmatprep.subr.bf16.mxu0 0
      %4504 = vmatpush1.bf16.msra.mxu0 0
      %4505 = vmatprep.subr.bf16.mxu0 0
      %4506 = vmatpush1.bf16.msra.mxu0 0
      %4507 = vmatprep.subr.bf16.mxu0 0
      %4508 = vmatpush1.bf16.msra.mxu0 0
      %4509 = vmatprep.subr.bf16.mxu0 0
      %4510 = vmatpush1.bf16.msra.mxu0 0
      %4511 = vmatprep.subr.bf16.mxu0 0
      %4512 = vmatpush1.bf16.msra.mxu0 0
      %4513 = vmatprep.mubr.bf16.mxu0 0
      %4514 = vmatmul.mubr.bf16.gmra.mrb[0].mxu0 %v4479
      %v4515 = vpop.f32.mrb[0].mxu0
      %v4516 = vadd.f32 0.0, %v4515
      %v4517 = vpop.f32.mrb[0].mxu0
      %v4518 = vpop.f32.mrb[0].mxu0
      %v4519 = vadd.f32 0.0, %v4518
      %v4520 = vpop.f32.mrb[0].mxu0
      %4521 = vdwg.mxu0
      %v4522 = vmul.f32 %v4384, 0.17677669
      %v4523 = vmul.f32 %v4387, 0.17677669
      %v4524 = vmul.f32 %v4428, 0.17677669
      %v4525 = vmul.f32 %v4431, 0.17677669
      %v4526 = vmul.f32 %v4472, 0.17677669
      %v4527 = vmul.f32 %v4475, 0.17677669
      %v4528 = vmul.f32 %v4516, 0.17677669
      %v4529 = vmul.f32 %v4519, 0.17677669
      %v4530 = vlaneseq
      %v4531 = vshrl.u32 %v4530, 7
      %v4532 = vadd.s32 %v4531, 8
      %v4533 = vlaneseq
      %v4534 = vand.u32 %v4533, 127
      %v4535 = vadd.s32 %v4531, 24
      %v4536 = vadd.s32 %v4532, 24
      %vm4537 = vcmp.le.s32.totalorder %v4534, %v4535
      %vm4538 = vcmp.le.s32.totalorder %v4534, %v4536
      %v4539 = vsel %vm4537, 1, 0
      %v4540 = vsel %vm4538, 1, 0
      %vm4541 = vcmp.eq.s32.totalorder %v4539, 1
      %vm4542 = vcmp.eq.s32.totalorder %v4540, 1
      %v4543 = vsel %vm4541, %v4522, -1e+30
      %v4544 = vsel %vm4542, %v4523, -1e+30
      %v4545 = vsel %vm4541, %v4524, -1e+30
      %v4546 = vsel %vm4542, %v4525, -1e+30
      %v4547 = vsel %vm4541, %v4526, -1e+30
      %v4548 = vsel %vm4542, %v4527, -1e+30
      %v4549 = vsel %vm4541, %v4528, -1e+30
      %v4550 = vsel %vm4542, %v4529, -1e+30
      %vm4551 = vcmask 326656
      %v4552 = vsel %vm4551, %v4543, -inf
      %4553 = vmax.xlane.f32.xlu0 %v4552
      %v4554 = vpop.xlane.xlu0 %4553
      %v4555 = vsel %vm4551, %v4544, -inf
      %4556 = vmax.xlane.f32.xlu0 %v4555
      %v4557 = vpop.xlane.xlu0 %4556
      %v4558 = vsel %vm4551, %v4545, -inf
      %4559 = vmax.xlane.f32.xlu0 %v4558
      %v4560 = vpop.xlane.xlu0 %4559
      %v4561 = vsel %vm4551, %v4546, -inf
      %4562 = vmax.xlane.f32.xlu0 %v4561
      %v4563 = vpop.xlane.xlu0 %4562
      %v4564 = vsel %vm4551, %v4547, -inf
      %4565 = vmax.xlane.f32.xlu0 %v4564
      %v4566 = vpop.xlane.xlu0 %4565
      %v4567 = vsel %vm4551, %v4548, -inf
      %4568 = vmax.xlane.f32.xlu0 %v4567
      %v4569 = vpop.xlane.xlu0 %4568
      %v4570 = vsel %vm4551, %v4549, -inf
      %4571 = vmax.xlane.f32.xlu0 %v4570
      %v4572 = vpop.xlane.xlu0 %4571
      %v4573 = vsel %vm4551, %v4550, -inf
      %4574 = vmax.xlane.f32.xlu0 %v4573
      %v4575 = vpop.xlane.xlu0 %4574
      %v4576 = vsub.f32 %v4543, %v4554
      %v4577 = vsub.f32 %v4544, %v4557
      %v4578 = vsub.f32 %v4545, %v4560
      %v4579 = vsub.f32 %v4546, %v4563
      %v4580 = vsub.f32 %v4547, %v4566
      %v4581 = vsub.f32 %v4548, %v4569
      %v4582 = vsub.f32 %v4549, %v4572
      %v4583 = vsub.f32 %v4550, %v4575
      %v4584 = vmul.f32 %v4576, 1.442695
      %v4585 = vpow.pop %v4584
      %v4586 = vmul.f32 %v4577, 1.442695
      %v4587 = vpow.pop %v4586
      %v4588 = vmul.f32 %v4578, 1.442695
      %v4589 = vpow.pop %v4588
      %v4590 = vmul.f32 %v4579, 1.442695
      %v4591 = vpow.pop %v4590
      %v4592 = vmul.f32 %v4580, 1.442695
      %v4593 = vpow.pop %v4592
      %v4594 = vmul.f32 %v4581, 1.442695
      %v4595 = vpow.pop %v4594
      %v4596 = vmul.f32 %v4582, 1.442695
      %v4597 = vpow.pop %v4596
      %v4598 = vmul.f32 %v4583, 1.442695
      %v4599 = vpow.pop %v4598
      %v4600 = vsel %vm4551, %v4585, 0.0
      %4601 = vadd.xlane.f32.xlu0 %v4600
      %v4602 = vpop.xlane.xlu0 %4601
      %v4603 = vsel %vm4551, %v4587, 0.0
      %4604 = vadd.xlane.f32.xlu0 %v4603
      %v4605 = vpop.xlane.xlu0 %4604
      %v4606 = vsel %vm4551, %v4589, 0.0
      %4607 = vadd.xlane.f32.xlu0 %v4606
      %v4608 = vpop.xlane.xlu0 %4607
      %v4609 = vsel %vm4551, %v4591, 0.0
      %4610 = vadd.xlane.f32.xlu0 %v4609
      %v4611 = vpop.xlane.xlu0 %4610
      %v4612 = vsel %vm4551, %v4593, 0.0
      %4613 = vadd.xlane.f32.xlu0 %v4612
      %v4614 = vpop.xlane.xlu0 %4613
      %v4615 = vsel %vm4551, %v4595, 0.0
      %4616 = vadd.xlane.f32.xlu0 %v4615
      %v4617 = vpop.xlane.xlu0 %4616
      %v4618 = vsel %vm4551, %v4597, 0.0
      %4619 = vadd.xlane.f32.xlu0 %v4618
      %v4620 = vpop.xlane.xlu0 %4619
      %v4621 = vsel %vm4551, %v4599, 0.0
      %4622 = vadd.xlane.f32.xlu0 %v4621
      %v4623 = vpop.xlane.xlu0 %4622
      %v4624 = vrcp.pop %v4602
      %v4625 = vrcp.pop %v4605
      %v4626 = vrcp.pop %v4608
      %v4627 = vrcp.pop %v4611
      %v4628 = vrcp.pop %v4614
      %v4629 = vrcp.pop %v4617
      %v4630 = vrcp.pop %v4620
      %v4631 = vrcp.pop %v4623
      %v4632 = vmul.f32 %v4585, %v4624
      %v4633 = vmul.f32 %v4587, %v4625
      %v4634 = vmul.f32 %v4589, %v4626
      %v4635 = vmul.f32 %v4591, %v4627
      %v4636 = vmul.f32 %v4593, %v4628
      %v4637 = vmul.f32 %v4595, %v4629
      %v4638 = vmul.f32 %v4597, %v4630
      %v4639 = vmul.f32 %v4599, %v4631
      %v4640 = vpack.c.bf16 %v4633, %v4632
      %v4641 = vpack.c.bf16 %v4635, %v4634
      %v4642 = vpack.c.bf16 %v4637, %v4636
      %v4643 = vpack.c.bf16 %v4639, %v4638
      %v4644 = vpack.c.bf16 %v813, %v813
      %v4645 = vpack.c.bf16 %v837, %v837
      %v4646 = vpack.c.bf16 %v820, %v820
      %v4647 = vpack.c.bf16 %v838, %v838
      %v4648 = vpack.c.bf16 %v829, %v829
      %v4649 = vpack.c.bf16 %v839, %v839
      %v4650 = vpack.c.bf16 %v836, %v836
      %v4651 = vpack.c.bf16 %v840, %v840
      %v4652 = vpack.c.bf16 %v881, %v881
      %v4653 = vpack.c.bf16 %v905, %v905
      %v4654 = vpack.c.bf16 %v888, %v888
      %v4655 = vpack.c.bf16 %v906, %v906
      %v4656 = vpack.c.bf16 %v897, %v897
      %v4657 = vpack.c.bf16 %v907, %v907
      %v4658 = vpack.c.bf16 %v904, %v904
      %v4659 = vpack.c.bf16 %v908, %v908
      %v4660 = vpack.c.bf16 %v949, %v949
      %v4661 = vpack.c.bf16 %v973, %v973
      %v4662 = vpack.c.bf16 %v956, %v956
      %v4663 = vpack.c.bf16 %v974, %v974
      %v4664 = vpack.c.bf16 %v965, %v965
      %v4665 = vpack.c.bf16 %v975, %v975
      %v4666 = vpack.c.bf16 %v972, %v972
      %v4667 = vpack.c.bf16 %v976, %v976
      %v4668 = vpack.c.bf16 %v1017, %v1017
      %v4669 = vpack.c.bf16 %v1041, %v1041
      %v4670 = vpack.c.bf16 %v1024, %v1024
      %v4671 = vpack.c.bf16 %v1042, %v1042
      %v4672 = vpack.c.bf16 %v1033, %v1033
      %v4673 = vpack.c.bf16 %v1043, %v1043
      %v4674 = vpack.c.bf16 %v1040, %v1040
      %v4675 = vpack.c.bf16 %v1044, %v1044
      %v4676 = vpack.c.bf16 %v1085, %v1085
      %v4677 = vpack.c.bf16 %v1109, %v1109
      %v4678 = vpack.c.bf16 %v1092, %v1092
      %v4679 = vpack.c.bf16 %v1110, %v1110
      %v4680 = vpack.c.bf16 %v1101, %v1101
      %v4681 = vpack.c.bf16 %v1111, %v1111
      %v4682 = vpack.c.bf16 %v1108, %v1108
      %v4683 = vpack.c.bf16 %v1112, %v1112
      %4684 = vxpose.xlu0.c.b16.start [1/8] %v4644, 128
      %4685 = vxpose.xlu0.c.b16.cont [2/8] 0, 128
      %4686 = vxpose.xlu0.c.b16.cont [3/8] 0, 128
      %4687 = vxpose.xlu0.c.b16.cont [4/8] 0, 128
      %4688 = vxpose.xlu0.c.b16.cont [5/8] 0, 128
      %4689 = vxpose.xlu0.c.b16.cont [6/8] 0, 128
      %4690 = vxpose.xlu0.c.b16.cont [7/8] 0, 128
      %4691 = vxpose.xlu0.c.b16.end [8/8] 0, 128
      %v4692 = vpop.trf.xlu0
      %v4693 = vpop.trf.xlu0
      %v4694 = vpop.trf.xlu0
      %v4695 = vpop.trf.xlu0
      %v4696 = vpop.trf.xlu0
      %v4697 = vpop.trf.xlu0
      %v4698 = vpop.trf.xlu0
      %v4699 = vpop.trf.xlu0
      %4700 = vxpose.xlu0.c.b16.start [1/8] %v4645, 128
      %4701 = vxpose.xlu0.c.b16.cont [2/8] 0, 128
      %4702 = vxpose.xlu0.c.b16.cont [3/8] 0, 128
      %4703 = vxpose.xlu0.c.b16.cont [4/8] 0, 128
      %4704 = vxpose.xlu0.c.b16.cont [5/8] 0, 128
      %4705 = vxpose.xlu0.c.b16.cont [6/8] 0, 128
      %4706 = vxpose.xlu0.c.b16.cont [7/8] 0, 128
      %4707 = vxpose.xlu0.c.b16.end [8/8] 0, 128
      %v4708 = vpop.trf.xlu0
      %v4709 = vpop.trf.xlu0
      %v4710 = vpop.trf.xlu0
      %v4711 = vpop.trf.xlu0
      %v4712 = vpop.trf.xlu0
      %v4713 = vpop.trf.xlu0
      %v4714 = vpop.trf.xlu0
      %v4715 = vpop.trf.xlu0
      %4716 = vxpose.xlu0.c.b16.start [1/8] %v4646, 128
      %4717 = vxpose.xlu0.c.b16.cont [2/8] 0, 128
      %4718 = vxpose.xlu0.c.b16.cont [3/8] 0, 128
      %4719 = vxpose.xlu0.c.b16.cont [4/8] 0, 128
      %4720 = vxpose.xlu0.c.b16.cont [5/8] 0, 128
      %4721 = vxpose.xlu0.c.b16.cont [6/8] 0, 128
      %4722 = vxpose.xlu0.c.b16.cont [7/8] 0, 128
      %4723 = vxpose.xlu0.c.b16.end [8/8] 0, 128
      %v4724 = vpop.trf.xlu0
      %v4725 = vpop.trf.xlu0
      %v4726 = vpop.trf.xlu0
      %v4727 = vpop.trf.xlu0
      %v4728 = vpop.trf.xlu0
      %v4729 = vpop.trf.xlu0
      %v4730 = vpop.trf.xlu0
      %v4731 = vpop.trf.xlu0
      %4732 = vxpose.xlu0.c.b16.start [1/8] %v4647, 128
      %4733 = vxpose.xlu0.c.b16.cont [2/8] 0, 128
      %4734 = vxpose.xlu0.c.b16.cont [3/8] 0, 128
      %4735 = vxpose.xlu0.c.b16.cont [4/8] 0, 128
      %4736 = vxpose.xlu0.c.b16.cont [5/8] 0, 128
      %4737 = vxpose.xlu0.c.b16.cont [6/8] 0, 128
      %4738 = vxpose.xlu0.c.b16.cont [7/8] 0, 128
      %4739 = vxpose.xlu0.c.b16.end [8/8] 0, 128
      %v4740 = vpop.trf.xlu0
      %v4741 = vpop.trf.xlu0
      %v4742 = vpop.trf.xlu0
      %v4743 = vpop.trf.xlu0
      %v4744 = vpop.trf.xlu0
      %v4745 = vpop.trf.xlu0
      %v4746 = vpop.trf.xlu0
      %v4747 = vpop.trf.xlu0
      %4748 = vxpose.xlu0.c.b16.start [1/8] %v4648, 128
      %4749 = vxpose.xlu0.c.b16.cont [2/8] 0, 128
      %4750 = vxpose.xlu0.c.b16.cont [3/8] 0, 128
      %4751 = vxpose.xlu0.c.b16.cont [4/8] 0, 128
      %4752 = vxpose.xlu0.c.b16.cont [5/8] 0, 128
      %4753 = vxpose.xlu0.c.b16.cont [6/8] 0, 128
      %4754 = vxpose.xlu0.c.b16.cont [7/8] 0, 128
      %4755 = vxpose.xlu0.c.b16.end [8/8] 0, 128
      %v4756 = vpop.trf.xlu0
      %v4757 = vpop.trf.xlu0
      %v4758 = vpop.trf.xlu0
      %v4759 = vpop.trf.xlu0
      %v4760 = vpop.trf.xlu0
      %v4761 = vpop.trf.xlu0
      %v4762 = vpop.trf.xlu0
      %v4763 = vpop.trf.xlu0
      %4764 = vxpose.xlu0.c.b16.start [1/8] %v4649, 128
      %4765 = vxpose.xlu0.c.b16.cont [2/8] 0, 128
      %4766 = vxpose.xlu0.c.b16.cont [3/8] 0, 128
      %4767 = vxpose.xlu0.c.b16.cont [4/8] 0, 128
      %4768 = vxpose.xlu0.c.b16.cont [5/8] 0, 128
      %4769 = vxpose.xlu0.c.b16.cont [6/8] 0, 128
      %4770 = vxpose.xlu0.c.b16.cont [7/8] 0, 128
      %4771 = vxpose.xlu0.c.b16.end [8/8] 0, 128
      %v4772 = vpop.trf.xlu0
      %v4773 = vpop.trf.xlu0
      %v4774 = vpop.trf.xlu0
      %v4775 = vpop.trf.xlu0
      %v4776 = vpop.trf.xlu0
      %v4777 = vpop.trf.xlu0
      %v4778 = vpop.trf.xlu0
      %v4779 = vpop.trf.xlu0
      %4780 = vxpose.xlu0.c.b16.start [1/8] %v4650, 128
      %4781 = vxpose.xlu0.c.b16.cont [2/8] 0, 128
      %4782 = vxpose.xlu0.c.b16.cont [3/8] 0, 128
      %4783 = vxpose.xlu0.c.b16.cont [4/8] 0, 128
      %4784 = vxpose.xlu0.c.b16.cont [5/8] 0, 128
      %4785 = vxpose.xlu0.c.b16.cont [6/8] 0, 128
      %4786 = vxpose.xlu0.c.b16.cont [7/8] 0, 128
      %4787 = vxpose.xlu0.c.b16.end [8/8] 0, 128
      %v4788 = vpop.trf.xlu0
      %v4789 = vpop.trf.xlu0
      %v4790 = vpop.trf.xlu0
      %v4791 = vpop.trf.xlu0
      %v4792 = vpop.trf.xlu0
      %v4793 = vpop.trf.xlu0
      %v4794 = vpop.trf.xlu0
      %v4795 = vpop.trf.xlu0
      %4796 = vxpose.xlu0.c.b16.start [1/8] %v4651, 128
      %4797 = vxpose.xlu0.c.b16.cont [2/8] 0, 128
      %4798 = vxpose.xlu0.c.b16.cont [3/8] 0, 128
      %4799 = vxpose.xlu0.c.b16.cont [4/8] 0, 128
      %4800 = vxpose.xlu0.c.b16.cont [5/8] 0, 128
      %4801 = vxpose.xlu0.c.b16.cont [6/8] 0, 128
      %4802 = vxpose.xlu0.c.b16.cont [7/8] 0, 128
      %4803 = vxpose.xlu0.c.b16.end [8/8] 0, 128
      %v4804 = vpop.trf.xlu0
      %v4805 = vpop.trf.xlu0
      %v4806 = vpop.trf.xlu0
      %v4807 = vpop.trf.xlu0
      %v4808 = vpop.trf.xlu0
      %v4809 = vpop.trf.xlu0
      %v4810 = vpop.trf.xlu0
      %v4811 = vpop.trf.xlu0
      %4812 = vxpose.xlu0.c.b16.start [1/8] %v4652, 128
      %4813 = vxpose.xlu0.c.b16.cont [2/8] 0, 128
      %4814 = vxpose.xlu0.c.b16.cont [3/8] 0, 128
      %4815 = vxpose.xlu0.c.b16.cont [4/8] 0, 128
      %4816 = vxpose.xlu0.c.b16.cont [5/8] 0, 128
      %4817 = vxpose.xlu0.c.b16.cont [6/8] 0, 128
      %4818 = vxpose.xlu0.c.b16.cont [7/8] 0, 128
      %4819 = vxpose.xlu0.c.b16.end [8/8] 0, 128
      %v4820 = vpop.trf.xlu0
      %v4821 = vpop.trf.xlu0
      %v4822 = vpop.trf.xlu0
      %v4823 = vpop.trf.xlu0
      %v4824 = vpop.trf.xlu0
      %v4825 = vpop.trf.xlu0
      %v4826 = vpop.trf.xlu0
      %v4827 = vpop.trf.xlu0
      %4828 = vxpose.xlu0.c.b16.start [1/8] %v4653, 128
      %4829 = vxpose.xlu0.c.b16.cont [2/8] 0, 128
      %4830 = vxpose.xlu0.c.b16.cont [3/8] 0, 128
      %4831 = vxpose.xlu0.c.b16.cont [4/8] 0, 128
      %4832 = vxpose.xlu0.c.b16.cont [5/8] 0, 128
      %4833 = vxpose.xlu0.c.b16.cont [6/8] 0, 128
      %4834 = vxpose.xlu0.c.b16.cont [7/8] 0, 128
      %4835 = vxpose.xlu0.c.b16.end [8/8] 0, 128
      %v4836 = vpop.trf.xlu0
      %v4837 = vpop.trf.xlu0
      %v4838 = vpop.trf.xlu0
      %v4839 = vpop.trf.xlu0
      %v4840 = vpop.trf.xlu0
      %v4841 = vpop.trf.xlu0
      %v4842 = vpop.trf.xlu0
      %v4843 = vpop.trf.xlu0
      %4844 = vxpose.xlu0.c.b16.start [1/8] %v4654, 128
      %4845 = vxpose.xlu0.c.b16.cont [2/8] 0, 128
      %4846 = vxpose.xlu0.c.b16.cont [3/8] 0, 128
      %4847 = vxpose.xlu0.c.b16.cont [4/8] 0, 128
      %4848 = vxpose.xlu0.c.b16.cont [5/8] 0, 128
      %4849 = vxpose.xlu0.c.b16.cont [6/8] 0, 128
      %4850 = vxpose.xlu0.c.b16.cont [7/8] 0, 128
      %4851 = vxpose.xlu0.c.b16.end [8/8] 0, 128
      %v4852 = vpop.trf.xlu0
      %v4853 = vpop.trf.xlu0
      %v4854 = vpop.trf.xlu0
      %v4855 = vpop.trf.xlu0
      %v4856 = vpop.trf.xlu0
      %v4857 = vpop.trf.xlu0
      %v4858 = vpop.trf.xlu0
      %v4859 = vpop.trf.xlu0
      %4860 = vxpose.xlu0.c.b16.start [1/8] %v4655, 128
      %4861 = vxpose.xlu0.c.b16.cont [2/8] 0, 128
      %4862 = vxpose.xlu0.c.b16.cont [3/8] 0, 128
      %4863 = vxpose.xlu0.c.b16.cont [4/8] 0, 128
      %4864 = vxpose.xlu0.c.b16.cont [5/8] 0, 128
      %4865 = vxpose.xlu0.c.b16.cont [6/8] 0, 128
      %4866 = vxpose.xlu0.c.b16.cont [7/8] 0, 128
      %4867 = vxpose.xlu0.c.b16.end [8/8] 0, 128
      %v4868 = vpop.trf.xlu0
      %v4869 = vpop.trf.xlu0
      %v4870 = vpop.trf.xlu0
      %v4871 = vpop.trf.xlu0
      %v4872 = vpop.trf.xlu0
      %v4873 = vpop.trf.xlu0
      %v4874 = vpop.trf.xlu0
      %v4875 = vpop.trf.xlu0
      %4876 = vxpose.xlu0.c.b16.start [1/8] %v4656, 128
      %4877 = vxpose.xlu0.c.b16.cont [2/8] 0, 128
      %4878 = vxpose.xlu0.c.b16.cont [3/8] 0, 128
      %4879 = vxpose.xlu0.c.b16.cont [4/8] 0, 128
      %4880 = vxpose.xlu0.c.b16.cont [5/8] 0, 128
      %4881 = vxpose.xlu0.c.b16.cont [6/8] 0, 128
      %4882 = vxpose.xlu0.c.b16.cont [7/8] 0, 128
      %4883 = vxpose.xlu0.c.b16.end [8/8] 0, 128
      %v4884 = vpop.trf.xlu0
      %v4885 = vpop.trf.xlu0
      %v4886 = vpop.trf.xlu0
      %v4887 = vpop.trf.xlu0
      %v4888 = vpop.trf.xlu0
      %v4889 = vpop.trf.xlu0
      %v4890 = vpop.trf.xlu0
      %v4891 = vpop.trf.xlu0
      %4892 = vxpose.xlu0.c.b16.start [1/8] %v4657, 128
      %4893 = vxpose.xlu0.c.b16.cont [2/8] 0, 128
      %4894 = vxpose.xlu0.c.b16.cont [3/8] 0, 128
      %4895 = vxpose.xlu0.c.b16.cont [4/8] 0, 128
      %4896 = vxpose.xlu0.c.b16.cont [5/8] 0, 128
      %4897 = vxpose.xlu0.c.b16.cont [6/8] 0, 128
      %4898 = vxpose.xlu0.c.b16.cont [7/8] 0, 128
      %4899 = vxpose.xlu0.c.b16.end [8/8] 0, 128
      %v4900 = vpop.trf.xlu0
      %v4901 = vpop.trf.xlu0
      %v4902 = vpop.trf.xlu0
      %v4903 = vpop.trf.xlu0
      %v4904 = vpop.trf.xlu0
      %v4905 = vpop.trf.xlu0
      %v4906 = vpop.trf.xlu0
      %v4907 = vpop.trf.xlu0
      %4908 = vxpose.xlu0.c.b16.start [1/8] %v4658, 128
      %4909 = vxpose.xlu0.c.b16.cont [2/8] 0, 128
      %4910 = vxpose.xlu0.c.b16.cont [3/8] 0, 128
      %4911 = vxpose.xlu0.c.b16.cont [4/8] 0, 128
      %4912 = vxpose.xlu0.c.b16.cont [5/8] 0, 128
      %4913 = vxpose.xlu0.c.b16.cont [6/8] 0, 128
      %4914 = vxpose.xlu0.c.b16.cont [7/8] 0, 128
      %4915 = vxpose.xlu0.c.b16.end [8/8] 0, 128
      %v4916 = vpop.trf.xlu0
      %v4917 = vpop.trf.xlu0
      %v4918 = vpop.trf.xlu0
      %v4919 = vpop.trf.xlu0
      %v4920 = vpop.trf.xlu0
      %v4921 = vpop.trf.xlu0
      %v4922 = vpop.trf.xlu0
      %v4923 = vpop.trf.xlu0
      %4924 = vxpose.xlu0.c.b16.start [1/8] %v4659, 128
      %4925 = vxpose.xlu0.c.b16.cont [2/8] 0, 128
      %4926 = vxpose.xlu0.c.b16.cont [3/8] 0, 128
      %4927 = vxpose.xlu0.c.b16.cont [4/8] 0, 128
      %4928 = vxpose.xlu0.c.b16.cont [5/8] 0, 128
      %4929 = vxpose.xlu0.c.b16.cont [6/8] 0, 128
      %4930 = vxpose.xlu0.c.b16.cont [7/8] 0, 128
      %4931 = vxpose.xlu0.c.b16.end [8/8] 0, 128
      %v4932 = vpop.trf.xlu0
      %v4933 = vpop.trf.xlu0
      %v4934 = vpop.trf.xlu0
      %v4935 = vpop.trf.xlu0
      %v4936 = vpop.trf.xlu0
      %v4937 = vpop.trf.xlu0
      %v4938 = vpop.trf.xlu0
      %v4939 = vpop.trf.xlu0
      %4940 = vxpose.xlu0.c.b16.start [1/8] %v4660, 128
      %4941 = vxpose.xlu0.c.b16.cont [2/8] 0, 128
      %4942 = vxpose.xlu0.c.b16.cont [3/8] 0, 128
      %4943 = vxpose.xlu0.c.b16.cont [4/8] 0, 128
      %4944 = vxpose.xlu0.c.b16.cont [5/8] 0, 128
      %4945 = vxpose.xlu0.c.b16.cont [6/8] 0, 128
      %4946 = vxpose.xlu0.c.b16.cont [7/8] 0, 128
      %4947 = vxpose.xlu0.c.b16.end [8/8] 0, 128
      %v4948 = vpop.trf.xlu0
      %v4949 = vpop.trf.xlu0
      %v4950 = vpop.trf.xlu0
      %v4951 = vpop.trf.xlu0
      %v4952 = vpop.trf.xlu0
      %v4953 = vpop.trf.xlu0
      %v4954 = vpop.trf.xlu0
      %v4955 = vpop.trf.xlu0
      %4956 = vxpose.xlu0.c.b16.start [1/8] %v4661, 128
      %4957 = vxpose.xlu0.c.b16.cont [2/8] 0, 128
      %4958 = vxpose.xlu0.c.b16.cont [3/8] 0, 128
      %4959 = vxpose.xlu0.c.b16.cont [4/8] 0, 128
      %4960 = vxpose.xlu0.c.b16.cont [5/8] 0, 128
      %4961 = vxpose.xlu0.c.b16.cont [6/8] 0, 128
      %4962 = vxpose.xlu0.c.b16.cont [7/8] 0, 128
      %4963 = vxpose.xlu0.c.b16.end [8/8] 0, 128
      %v4964 = vpop.trf.xlu0
      %v4965 = vpop.trf.xlu0
      %v4966 = vpop.trf.xlu0
      %v4967 = vpop.trf.xlu0
      %v4968 = vpop.trf.xlu0
      %v4969 = vpop.trf.xlu0
      %v4970 = vpop.trf.xlu0
      %v4971 = vpop.trf.xlu0
      %4972 = vxpose.xlu0.c.b16.start [1/8] %v4662, 128
      %4973 = vxpose.xlu0.c.b16.cont [2/8] 0, 128
      %4974 = vxpose.xlu0.c.b16.cont [3/8] 0, 128
      %4975 = vxpose.xlu0.c.b16.cont [4/8] 0, 128
      %4976 = vxpose.xlu0.c.b16.cont [5/8] 0, 128
      %4977 = vxpose.xlu0.c.b16.cont [6/8] 0, 128
      %4978 = vxpose.xlu0.c.b16.cont [7/8] 0, 128
      %4979 = vxpose.xlu0.c.b16.end [8/8] 0, 128
      %v4980 = vpop.trf.xlu0
      %v4981 = vpop.trf.xlu0
      %v4982 = vpop.trf.xlu0
      %v4983 = vpop.trf.xlu0
      %v4984 = vpop.trf.xlu0
      %v4985 = vpop.trf.xlu0
      %v4986 = vpop.trf.xlu0
      %v4987 = vpop.trf.xlu0
      %4988 = vxpose.xlu0.c.b16.start [1/8] %v4663, 128
      %4989 = vxpose.xlu0.c.b16.cont [2/8] 0, 128
      %4990 = vxpose.xlu0.c.b16.cont [3/8] 0, 128
      %4991 = vxpose.xlu0.c.b16.cont [4/8] 0, 128
      %4992 = vxpose.xlu0.c.b16.cont [5/8] 0, 128
      %4993 = vxpose.xlu0.c.b16.cont [6/8] 0, 128
      %4994 = vxpose.xlu0.c.b16.cont [7/8] 0, 128
      %4995 = vxpose.xlu0.c.b16.end [8/8] 0, 128
      %v4996 = vpop.trf.xlu0
      %v4997 = vpop.trf.xlu0
      %v4998 = vpop.trf.xlu0
      %v4999 = vpop.trf.xlu0
      %v5000 = vpop.trf.xlu0
      %v5001 = vpop.trf.xlu0
      %v5002 = vpop.trf.xlu0
      %v5003 = vpop.trf.xlu0
      %5004 = vxpose.xlu0.c.b16.start [1/8] %v4664, 128
      %5005 = vxpose.xlu0.c.b16.cont [2/8] 0, 128
      %5006 = vxpose.xlu0.c.b16.cont [3/8] 0, 128
      %5007 = vxpose.xlu0.c.b16.cont [4/8] 0, 128
      %5008 = vxpose.xlu0.c.b16.cont [5/8] 0, 128
      %5009 = vxpose.xlu0.c.b16.cont [6/8] 0, 128
      %5010 = vxpose.xlu0.c.b16.cont [7/8] 0, 128
      %5011 = vxpose.xlu0.c.b16.end [8/8] 0, 128
      %v5012 = vpop.trf.xlu0
      %v5013 = vpop.trf.xlu0
      %v5014 = vpop.trf.xlu0
      %v5015 = vpop.trf.xlu0
      %v5016 = vpop.trf.xlu0
      %v5017 = vpop.trf.xlu0
      %v5018 = vpop.trf.xlu0
      %v5019 = vpop.trf.xlu0
      %5020 = vxpose.xlu0.c.b16.start [1/8] %v4665, 128
      %5021 = vxpose.xlu0.c.b16.cont [2/8] 0, 128
      %5022 = vxpose.xlu0.c.b16.cont [3/8] 0, 128
      %5023 = vxpose.xlu0.c.b16.cont [4/8] 0, 128
      %5024 = vxpose.xlu0.c.b16.cont [5/8] 0, 128
      %5025 = vxpose.xlu0.c.b16.cont [6/8] 0, 128
      %5026 = vxpose.xlu0.c.b16.cont [7/8] 0, 128
      %5027 = vxpose.xlu0.c.b16.end [8/8] 0, 128
      %v5028 = vpop.trf.xlu0
      %v5029 = vpop.trf.xlu0
      %v5030 = vpop.trf.xlu0
      %v5031 = vpop.trf.xlu0
      %v5032 = vpop.trf.xlu0
      %v5033 = vpop.trf.xlu0
      %v5034 = vpop.trf.xlu0
      %v5035 = vpop.trf.xlu0
      %5036 = vxpose.xlu0.c.b16.start [1/8] %v4666, 128
      %5037 = vxpose.xlu0.c.b16.cont [2/8] 0, 128
      %5038 = vxpose.xlu0.c.b16.cont [3/8] 0, 128
      %5039 = vxpose.xlu0.c.b16.cont [4/8] 0, 128
      %5040 = vxpose.xlu0.c.b16.cont [5/8] 0, 128
      %5041 = vxpose.xlu0.c.b16.cont [6/8] 0, 128
      %5042 = vxpose.xlu0.c.b16.cont [7/8] 0, 128
      %5043 = vxpose.xlu0.c.b16.end [8/8] 0, 128
      %v5044 = vpop.trf.xlu0
      %v5045 = vpop.trf.xlu0
      %v5046 = vpop.trf.xlu0
      %v5047 = vpop.trf.xlu0
      %v5048 = vpop.trf.xlu0
      %v5049 = vpop.trf.xlu0
      %v5050 = vpop.trf.xlu0
      %v5051 = vpop.trf.xlu0
      %5052 = vxpose.xlu0.c.b16.start [1/8] %v4667, 128
      %5053 = vxpose.xlu0.c.b16.cont [2/8] 0, 128
      %5054 = vxpose.xlu0.c.b16.cont [3/8] 0, 128
      %5055 = vxpose.xlu0.c.b16.cont [4/8] 0, 128
      %5056 = vxpose.xlu0.c.b16.cont [5/8] 0, 128
      %5057 = vxpose.xlu0.c.b16.cont [6/8] 0, 128
      %5058 = vxpose.xlu0.c.b16.cont [7/8] 0, 128
      %5059 = vxpose.xlu0.c.b16.end [8/8] 0, 128
      %v5060 = vpop.trf.xlu0
      %v5061 = vpop.trf.xlu0
      %v5062 = vpop.trf.xlu0
      %v5063 = vpop.trf.xlu0
      %v5064 = vpop.trf.xlu0
      %v5065 = vpop.trf.xlu0
      %v5066 = vpop.trf.xlu0
      %v5067 = vpop.trf.xlu0
      %5068 = vxpose.xlu0.c.b16.start [1/8] %v4668, 128
      %5069 = vxpose.xlu0.c.b16.cont [2/8] 0, 128
      %5070 = vxpose.xlu0.c.b16.cont [3/8] 0, 128
      %5071 = vxpose.xlu0.c.b16.cont [4/8] 0, 128
      %5072 = vxpose.xlu0.c.b16.cont [5/8] 0, 128
      %5073 = vxpose.xlu0.c.b16.cont [6/8] 0, 128
      %5074 = vxpose.xlu0.c.b16.cont [7/8] 0, 128
      %5075 = vxpose.xlu0.c.b16.end [8/8] 0, 128
      %v5076 = vpop.trf.xlu0
      %v5077 = vpop.trf.xlu0
      %v5078 = vpop.trf.xlu0
      %v5079 = vpop.trf.xlu0
      %v5080 = vpop.trf.xlu0
      %v5081 = vpop.trf.xlu0
      %v5082 = vpop.trf.xlu0
      %v5083 = vpop.trf.xlu0
      %5084 = vxpose.xlu0.c.b16.start [1/8] %v4669, 128
      %5085 = vxpose.xlu0.c.b16.cont [2/8] 0, 128
      %5086 = vxpose.xlu0.c.b16.cont [3/8] 0, 128
      %5087 = vxpose.xlu0.c.b16.cont [4/8] 0, 128
      %5088 = vxpose.xlu0.c.b16.cont [5/8] 0, 128
      %5089 = vxpose.xlu0.c.b16.cont [6/8] 0, 128
      %5090 = vxpose.xlu0.c.b16.cont [7/8] 0, 128
      %5091 = vxpose.xlu0.c.b16.end [8/8] 0, 128
      %v5092 = vpop.trf.xlu0
      %v5093 = vpop.trf.xlu0
      %v5094 = vpop.trf.xlu0
      %v5095 = vpop.trf.xlu0
      %v5096 = vpop.trf.xlu0
      %v5097 = vpop.trf.xlu0
      %v5098 = vpop.trf.xlu0
      %v5099 = vpop.trf.xlu0
      %5100 = vxpose.xlu0.c.b16.start [1/8] %v4670, 128
      %5101 = vxpose.xlu0.c.b16.cont [2/8] 0, 128
      %5102 = vxpose.xlu0.c.b16.cont [3/8] 0, 128
      %5103 = vxpose.xlu0.c.b16.cont [4/8] 0, 128
      %5104 = vxpose.xlu0.c.b16.cont [5/8] 0, 128
      %5105 = vxpose.xlu0.c.b16.cont [6/8] 0, 128
      %5106 = vxpose.xlu0.c.b16.cont [7/8] 0, 128
      %5107 = vxpose.xlu0.c.b16.end [8/8] 0, 128
      %v5108 = vpop.trf.xlu0
      %v5109 = vpop.trf.xlu0
      %v5110 = vpop.trf.xlu0
      %v5111 = vpop.trf.xlu0
      %v5112 = vpop.trf.xlu0
      %v5113 = vpop.trf.xlu0
      %v5114 = vpop.trf.xlu0
      %v5115 = vpop.trf.xlu0
      %5116 = vxpose.xlu0.c.b16.start [1/8] %v4671, 128
      %5117 = vxpose.xlu0.c.b16.cont [2/8] 0, 128
      %5118 = vxpose.xlu0.c.b16.cont [3/8] 0, 128
      %5119 = vxpose.xlu0.c.b16.cont [4/8] 0, 128
      %5120 = vxpose.xlu0.c.b16.cont [5/8] 0, 128
      %5121 = vxpose.xlu0.c.b16.cont [6/8] 0, 128
      %5122 = vxpose.xlu0.c.b16.cont [7/8] 0, 128
      %5123 = vxpose.xlu0.c.b16.end [8/8] 0, 128
      %v5124 = vpop.trf.xlu0
      %v5125 = vpop.trf.xlu0
      %v5126 = vpop.trf.xlu0
      %v5127 = vpop.trf.xlu0
      %v5128 = vpop.trf.xlu0
      %v5129 = vpop.trf.xlu0
      %v5130 = vpop.trf.xlu0
      %v5131 = vpop.trf.xlu0
      %5132 = vxpose.xlu0.c.b16.start [1/8] %v4672, 128
      %5133 = vxpose.xlu0.c.b16.cont [2/8] 0, 128
      %5134 = vxpose.xlu0.c.b16.cont [3/8] 0, 128
      %5135 = vxpose.xlu0.c.b16.cont [4/8] 0, 128
      %5136 = vxpose.xlu0.c.b16.cont [5/8] 0, 128
      %5137 = vxpose.xlu0.c.b16.cont [6/8] 0, 128
      %5138 = vxpose.xlu0.c.b16.cont [7/8] 0, 128
      %5139 = vxpose.xlu0.c.b16.end [8/8] 0, 128
      %v5140 = vpop.trf.xlu0
      %v5141 = vpop.trf.xlu0
      %v5142 = vpop.trf.xlu0
      %v5143 = vpop.trf.xlu0
      %v5144 = vpop.trf.xlu0
      %v5145 = vpop.trf.xlu0
      %v5146 = vpop.trf.xlu0
      %v5147 = vpop.trf.xlu0
      %5148 = vxpose.xlu0.c.b16.start [1/8] %v4673, 128
      %5149 = vxpose.xlu0.c.b16.cont [2/8] 0, 128
      %5150 = vxpose.xlu0.c.b16.cont [3/8] 0, 128
      %5151 = vxpose.xlu0.c.b16.cont [4/8] 0, 128
      %5152 = vxpose.xlu0.c.b16.cont [5/8] 0, 128
      %5153 = vxpose.xlu0.c.b16.cont [6/8] 0, 128
      %5154 = vxpose.xlu0.c.b16.cont [7/8] 0, 128
      %5155 = vxpose.xlu0.c.b16.end [8/8] 0, 128
      %v5156 = vpop.trf.xlu0
      %v5157 = vpop.trf.xlu0
      %v5158 = vpop.trf.xlu0
      %v5159 = vpop.trf.xlu0
      %v5160 = vpop.trf.xlu0
      %v5161 = vpop.trf.xlu0
      %v5162 = vpop.trf.xlu0
      %v5163 = vpop.trf.xlu0
      %5164 = vxpose.xlu0.c.b16.start [1/8] %v4674, 128
      %5165 = vxpose.xlu0.c.b16.cont [2/8] 0, 128
      %5166 = vxpose.xlu0.c.b16.cont [3/8] 0, 128
      %5167 = vxpose.xlu0.c.b16.cont [4/8] 0, 128
      %5168 = vxpose.xlu0.c.b16.cont [5/8] 0, 128
      %5169 = vxpose.xlu0.c.b16.cont [6/8] 0, 128
      %5170 = vxpose.xlu0.c.b16.cont [7/8] 0, 128
      %5171 = vxpose.xlu0.c.b16.end [8/8] 0, 128
      %v5172 = vpop.trf.xlu0
      %v5173 = vpop.trf.xlu0
      %v5174 = vpop.trf.xlu0
      %v5175 = vpop.trf.xlu0
      %v5176 = vpop.trf.xlu0
      %v5177 = vpop.trf.xlu0
      %v5178 = vpop.trf.xlu0
      %v5179 = vpop.trf.xlu0
      %5180 = vxpose.xlu0.c.b16.start [1/8] %v4675, 128
      %5181 = vxpose.xlu0.c.b16.cont [2/8] 0, 128
      %5182 = vxpose.xlu0.c.b16.cont [3/8] 0, 128
      %5183 = vxpose.xlu0.c.b16.cont [4/8] 0, 128
      %5184 = vxpose.xlu0.c.b16.cont [5/8] 0, 128
      %5185 = vxpose.xlu0.c.b16.cont [6/8] 0, 128
      %5186 = vxpose.xlu0.c.b16.cont [7/8] 0, 128
      %5187 = vxpose.xlu0.c.b16.end [8/8] 0, 128
      %v5188 = vpop.trf.xlu0
      %v5189 = vpop.trf.xlu0
      %v5190 = vpop.trf.xlu0
      %v5191 = vpop.trf.xlu0
      %v5192 = vpop.trf.xlu0
      %v5193 = vpop.trf.xlu0
      %v5194 = vpop.trf.xlu0
      %v5195 = vpop.trf.xlu0
      %5196 = vxpose.xlu0.c.b16.start [1/8] %v4676, 128
      %5197 = vxpose.xlu0.c.b16.cont [2/8] 0, 128
      %5198 = vxpose.xlu0.c.b16.cont [3/8] 0, 128
      %5199 = vxpose.xlu0.c.b16.cont [4/8] 0, 128
      %5200 = vxpose.xlu0.c.b16.cont [5/8] 0, 128
      %5201 = vxpose.xlu0.c.b16.cont [6/8] 0, 128
      %5202 = vxpose.xlu0.c.b16.cont [7/8] 0, 128
      %5203 = vxpose.xlu0.c.b16.end [8/8] 0, 128
      %v5204 = vpop.trf.xlu0
      %v5205 = vpop.trf.xlu0
      %v5206 = vpop.trf.xlu0
      %v5207 = vpop.trf.xlu0
      %v5208 = vpop.trf.xlu0
      %v5209 = vpop.trf.xlu0
      %v5210 = vpop.trf.xlu0
      %v5211 = vpop.trf.xlu0
      %5212 = vxpose.xlu0.c.b16.start [1/8] %v4677, 128
      %5213 = vxpose.xlu0.c.b16.cont [2/8] 0, 128
      %5214 = vxpose.xlu0.c.b16.cont [3/8] 0, 128
      %5215 = vxpose.xlu0.c.b16.cont [4/8] 0, 128
      %5216 = vxpose.xlu0.c.b16.cont [5/8] 0, 128
      %5217 = vxpose.xlu0.c.b16.cont [6/8] 0, 128
      %5218 = vxpose.xlu0.c.b16.cont [7/8] 0, 128
      %5219 = vxpose.xlu0.c.b16.end [8/8] 0, 128
      %v5220 = vpop.trf.xlu0
      %v5221 = vpop.trf.xlu0
      %v5222 = vpop.trf.xlu0
      %v5223 = vpop.trf.xlu0
      %v5224 = vpop.trf.xlu0
      %v5225 = vpop.trf.xlu0
      %v5226 = vpop.trf.xlu0
      %v5227 = vpop.trf.xlu0
      %5228 = vxpose.xlu0.c.b16.start [1/8] %v4678, 128
      %5229 = vxpose.xlu0.c.b16.cont [2/8] 0, 128
      %5230 = vxpose.xlu0.c.b16.cont [3/8] 0, 128
      %5231 = vxpose.xlu0.c.b16.cont [4/8] 0, 128
      %5232 = vxpose.xlu0.c.b16.cont [5/8] 0, 128
      %5233 = vxpose.xlu0.c.b16.cont [6/8] 0, 128
      %5234 = vxpose.xlu0.c.b16.cont [7/8] 0, 128
      %5235 = vxpose.xlu0.c.b16.end [8/8] 0, 128
      %v5236 = vpop.trf.xlu0
      %v5237 = vpop.trf.xlu0
      %v5238 = vpop.trf.xlu0
      %v5239 = vpop.trf.xlu0
      %v5240 = vpop.trf.xlu0
      %v5241 = vpop.trf.xlu0
      %v5242 = vpop.trf.xlu0
      %v5243 = vpop.trf.xlu0
      %5244 = vxpose.xlu0.c.b16.start [1/8] %v4679, 128
      %5245 = vxpose.xlu0.c.b16.cont [2/8] 0, 128
      %5246 = vxpose.xlu0.c.b16.cont [3/8] 0, 128
      %5247 = vxpose.xlu0.c.b16.cont [4/8] 0, 128
      %5248 = vxpose.xlu0.c.b16.cont [5/8] 0, 128
      %5249 = vxpose.xlu0.c.b16.cont [6/8] 0, 128
      %5250 = vxpose.xlu0.c.b16.cont [7/8] 0, 128
      %5251 = vxpose.xlu0.c.b16.end [8/8] 0, 128
      %v5252 = vpop.trf.xlu0
      %v5253 = vpop.trf.xlu0
      %v5254 = vpop.trf.xlu0
      %v5255 = vpop.trf.xlu0
      %v5256 = vpop.trf.xlu0
      %v5257 = vpop.trf.xlu0
      %v5258 = vpop.trf.xlu0
      %v5259 = vpop.trf.xlu0
      %5260 = vxpose.xlu0.c.b16.start [1/8] %v4680, 128
      %5261 = vxpose.xlu0.c.b16.cont [2/8] 0, 128
      %5262 = vxpose.xlu0.c.b16.cont [3/8] 0, 128
      %5263 = vxpose.xlu0.c.b16.cont [4/8] 0, 128
      %5264 = vxpose.xlu0.c.b16.cont [5/8] 0, 128
      %5265 = vxpose.xlu0.c.b16.cont [6/8] 0, 128
      %5266 = vxpose.xlu0.c.b16.cont [7/8] 0, 128
      %5267 = vxpose.xlu0.c.b16.end [8/8] 0, 128
      %v5268 = vpop.trf.xlu0
      %v5269 = vpop.trf.xlu0
      %v5270 = vpop.trf.xlu0
      %v5271 = vpop.trf.xlu0
      %v5272 = vpop.trf.xlu0
      %v5273 = vpop.trf.xlu0
      %v5274 = vpop.trf.xlu0
      %v5275 = vpop.trf.xlu0
      %5276 = vxpose.xlu0.c.b16.start [1/8] %v4681, 128
      %5277 = vxpose.xlu0.c.b16.cont [2/8] 0, 128
      %5278 = vxpose.xlu0.c.b16.cont [3/8] 0, 128
      %5279 = vxpose.xlu0.c.b16.cont [4/8] 0, 128
      %5280 = vxpose.xlu0.c.b16.cont [5/8] 0, 128
      %5281 = vxpose.xlu0.c.b16.cont [6/8] 0, 128
      %5282 = vxpose.xlu0.c.b16.cont [7/8] 0, 128
      %5283 = vxpose.xlu0.c.b16.end [8/8] 0, 128
      %v5284 = vpop.trf.xlu0
      %v5285 = vpop.trf.xlu0
      %v5286 = vpop.trf.xlu0
      %v5287 = vpop.trf.xlu0
      %v5288 = vpop.trf.xlu0
      %v5289 = vpop.trf.xlu0
      %v5290 = vpop.trf.xlu0
      %v5291 = vpop.trf.xlu0
      %5292 = vxpose.xlu0.c.b16.start [1/8] %v4682, 128
      %5293 = vxpose.xlu0.c.b16.cont [2/8] 0, 128
      %5294 = vxpose.xlu0.c.b16.cont [3/8] 0, 128
      %5295 = vxpose.xlu0.c.b16.cont [4/8] 0, 128
      %5296 = vxpose.xlu0.c.b16.cont [5/8] 0, 128
      %5297 = vxpose.xlu0.c.b16.cont [6/8] 0, 128
      %5298 = vxpose.xlu0.c.b16.cont [7/8] 0, 128
      %5299 = vxpose.xlu0.c.b16.end [8/8] 0, 128
      %v5300 = vpop.trf.xlu0
      %v5301 = vpop.trf.xlu0
      %v5302 = vpop.trf.xlu0
      %v5303 = vpop.trf.xlu0
      %v5304 = vpop.trf.xlu0
      %v5305 = vpop.trf.xlu0
      %v5306 = vpop.trf.xlu0
      %v5307 = vpop.trf.xlu0
      %5308 = vxpose.xlu0.c.b16.start [1/8] %v4683, 128
      %5309 = vxpose.xlu0.c.b16.cont [2/8] 0, 128
      %5310 = vxpose.xlu0.c.b16.cont [3/8] 0, 128
      %5311 = vxpose.xlu0.c.b16.cont [4/8] 0, 128
      %5312 = vxpose.xlu0.c.b16.cont [5/8] 0, 128
      %5313 = vxpose.xlu0.c.b16.cont [6/8] 0, 128
      %5314 = vxpose.xlu0.c.b16.cont [7/8] 0, 128
      %5315 = vxpose.xlu0.c.b16.end [8/8] 0, 128
      %v5316 = vpop.trf.xlu0
      %v5317 = vpop.trf.xlu0
      %v5318 = vpop.trf.xlu0
      %v5319 = vpop.trf.xlu0
      %v5320 = vpop.trf.xlu0
      %v5321 = vpop.trf.xlu0
      %v5322 = vpop.trf.xlu0
      %v5323 = vpop.trf.xlu0
      %v5326 = vpack.i.b16 %v4708, %v4692
      %v5328 = vshrl.u32 %v4692, 16
      %v5329 = vshrl.u32 %v4708, 16
      %v5330 = vpack.i.b16 %v5329, %v5328
      %v5334 = vpack.i.b16 %v4740, %v4724
      %v5336 = vshrl.u32 %v4724, 16
      %v5337 = vshrl.u32 %v4740, 16
      %v5338 = vpack.i.b16 %v5337, %v5336
      %v5342 = vpack.i.b16 %v4772, %v4756
      %v5344 = vshrl.u32 %v4756, 16
      %v5345 = vshrl.u32 %v4772, 16
      %v5346 = vpack.i.b16 %v5345, %v5344
      %v5350 = vpack.i.b16 %v4804, %v4788
      %v5352 = vshrl.u32 %v4788, 16
      %v5353 = vshrl.u32 %v4804, 16
      %v5354 = vpack.i.b16 %v5353, %v5352
      %v5358 = vpack.i.b16 %v4836, %v4820
      %v5360 = vshrl.u32 %v4820, 16
      %v5361 = vshrl.u32 %v4836, 16
      %v5362 = vpack.i.b16 %v5361, %v5360
      %v5366 = vpack.i.b16 %v4868, %v4852
      %v5368 = vshrl.u32 %v4852, 16
      %v5369 = vshrl.u32 %v4868, 16
      %v5370 = vpack.i.b16 %v5369, %v5368
      %v5374 = vpack.i.b16 %v4900, %v4884
      %v5376 = vshrl.u32 %v4884, 16
      %v5377 = vshrl.u32 %v4900, 16
      %v5378 = vpack.i.b16 %v5377, %v5376
      %v5382 = vpack.i.b16 %v4932, %v4916
      %v5384 = vshrl.u32 %v4916, 16
      %v5385 = vshrl.u32 %v4932, 16
      %v5386 = vpack.i.b16 %v5385, %v5384
      %v5390 = vpack.i.b16 %v4964, %v4948
      %v5392 = vshrl.u32 %v4948, 16
      %v5393 = vshrl.u32 %v4964, 16
      %v5394 = vpack.i.b16 %v5393, %v5392
      %v5398 = vpack.i.b16 %v4996, %v4980
      %v5400 = vshrl.u32 %v4980, 16
      %v5401 = vshrl.u32 %v4996, 16
      %v5402 = vpack.i.b16 %v5401, %v5400
      %v5406 = vpack.i.b16 %v5028, %v5012
      %v5408 = vshrl.u32 %v5012, 16
      %v5409 = vshrl.u32 %v5028, 16
      %v5410 = vpack.i.b16 %v5409, %v5408
      %v5414 = vpack.i.b16 %v5060, %v5044
      %v5416 = vshrl.u32 %v5044, 16
      %v5417 = vshrl.u32 %v5060, 16
      %v5418 = vpack.i.b16 %v5417, %v5416
      %v5422 = vpack.i.b16 %v5092, %v5076
      %v5424 = vshrl.u32 %v5076, 16
      %v5425 = vshrl.u32 %v5092, 16
      %v5426 = vpack.i.b16 %v5425, %v5424
      %v5430 = vpack.i.b16 %v5124, %v5108
      %v5432 = vshrl.u32 %v5108, 16
      %v5433 = vshrl.u32 %v5124, 16
      %v5434 = vpack.i.b16 %v5433, %v5432
      %v5438 = vpack.i.b16 %v5156, %v5140
      %v5440 = vshrl.u32 %v5140, 16
      %v5441 = vshrl.u32 %v5156, 16
      %v5442 = vpack.i.b16 %v5441, %v5440
      %v5446 = vpack.i.b16 %v5188, %v5172
      %v5448 = vshrl.u32 %v5172, 16
      %v5449 = vshrl.u32 %v5188, 16
      %v5450 = vpack.i.b16 %v5449, %v5448
      %v5454 = vpack.i.b16 %v5220, %v5204
      %v5456 = vshrl.u32 %v5204, 16
      %v5457 = vshrl.u32 %v5220, 16
      %v5458 = vpack.i.b16 %v5457, %v5456
      %v5462 = vpack.i.b16 %v5252, %v5236
      %v5464 = vshrl.u32 %v5236, 16
      %v5465 = vshrl.u32 %v5252, 16
      %v5466 = vpack.i.b16 %v5465, %v5464
      %v5470 = vpack.i.b16 %v5284, %v5268
      %v5472 = vshrl.u32 %v5268, 16
      %v5473 = vshrl.u32 %v5284, 16
      %v5474 = vpack.i.b16 %v5473, %v5472
      %v5478 = vpack.i.b16 %v5316, %v5300
      %v5480 = vshrl.u32 %v5300, 16
      %v5481 = vshrl.u32 %v5316, 16
      %v5482 = vpack.i.b16 %v5481, %v5480
      %v5486 = vpack.i.b16 %v4709, %v4693
      %v5488 = vshrl.u32 %v4693, 16
      %v5489 = vshrl.u32 %v4709, 16
      %v5490 = vpack.i.b16 %v5489, %v5488
      %v5494 = vpack.i.b16 %v4741, %v4725
      %v5496 = vshrl.u32 %v4725, 16
      %v5497 = vshrl.u32 %v4741, 16
      %v5498 = vpack.i.b16 %v5497, %v5496
      %v5502 = vpack.i.b16 %v4773, %v4757
      %v5504 = vshrl.u32 %v4757, 16
      %v5505 = vshrl.u32 %v4773, 16
      %v5506 = vpack.i.b16 %v5505, %v5504
      %v5510 = vpack.i.b16 %v4805, %v4789
      %v5512 = vshrl.u32 %v4789, 16
      %v5513 = vshrl.u32 %v4805, 16
      %v5514 = vpack.i.b16 %v5513, %v5512
      %v5518 = vpack.i.b16 %v4837, %v4821
      %v5520 = vshrl.u32 %v4821, 16
      %v5521 = vshrl.u32 %v4837, 16
      %v5522 = vpack.i.b16 %v5521, %v5520
      %v5526 = vpack.i.b16 %v4869, %v4853
      %v5528 = vshrl.u32 %v4853, 16
      %v5529 = vshrl.u32 %v4869, 16
      %v5530 = vpack.i.b16 %v5529, %v5528
      %v5534 = vpack.i.b16 %v4901, %v4885
      %v5536 = vshrl.u32 %v4885, 16
      %v5537 = vshrl.u32 %v4901, 16
      %v5538 = vpack.i.b16 %v5537, %v5536
      %v5542 = vpack.i.b16 %v4933, %v4917
      %v5544 = vshrl.u32 %v4917, 16
      %v5545 = vshrl.u32 %v4933, 16
      %v5546 = vpack.i.b16 %v5545, %v5544
      %v5550 = vpack.i.b16 %v4965, %v4949
      %v5552 = vshrl.u32 %v4949, 16
      %v5553 = vshrl.u32 %v4965, 16
      %v5554 = vpack.i.b16 %v5553, %v5552
      %v5558 = vpack.i.b16 %v4997, %v4981
      %v5560 = vshrl.u32 %v4981, 16
      %v5561 = vshrl.u32 %v4997, 16
      %v5562 = vpack.i.b16 %v5561, %v5560
      %v5566 = vpack.i.b16 %v5029, %v5013
      %v5568 = vshrl.u32 %v5013, 16
      %v5569 = vshrl.u32 %v5029, 16
      %v5570 = vpack.i.b16 %v5569, %v5568
      %v5574 = vpack.i.b16 %v5061, %v5045
      %v5576 = vshrl.u32 %v5045, 16
      %v5577 = vshrl.u32 %v5061, 16
      %v5578 = vpack.i.b16 %v5577, %v5576
      %v5582 = vpack.i.b16 %v5093, %v5077
      %v5584 = vshrl.u32 %v5077, 16
      %v5585 = vshrl.u32 %v5093, 16
      %v5586 = vpack.i.b16 %v5585, %v5584
      %v5590 = vpack.i.b16 %v5125, %v5109
      %v5592 = vshrl.u32 %v5109, 16
      %v5593 = vshrl.u32 %v5125, 16
      %v5594 = vpack.i.b16 %v5593, %v5592
      %v5598 = vpack.i.b16 %v5157, %v5141
      %v5600 = vshrl.u32 %v5141, 16
      %v5601 = vshrl.u32 %v5157, 16
      %v5602 = vpack.i.b16 %v5601, %v5600
      %v5606 = vpack.i.b16 %v5189, %v5173
      %v5608 = vshrl.u32 %v5173, 16
      %v5609 = vshrl.u32 %v5189, 16
      %v5610 = vpack.i.b16 %v5609, %v5608
      %v5614 = vpack.i.b16 %v5221, %v5205
      %v5616 = vshrl.u32 %v5205, 16
      %v5617 = vshrl.u32 %v5221, 16
      %v5618 = vpack.i.b16 %v5617, %v5616
      %v5622 = vpack.i.b16 %v5253, %v5237
      %v5624 = vshrl.u32 %v5237, 16
      %v5625 = vshrl.u32 %v5253, 16
      %v5626 = vpack.i.b16 %v5625, %v5624
      %v5630 = vpack.i.b16 %v5285, %v5269
      %v5632 = vshrl.u32 %v5269, 16
      %v5633 = vshrl.u32 %v5285, 16
      %v5634 = vpack.i.b16 %v5633, %v5632
      %v5638 = vpack.i.b16 %v5317, %v5301
      %v5640 = vshrl.u32 %v5301, 16
      %v5641 = vshrl.u32 %v5317, 16
      %v5642 = vpack.i.b16 %v5641, %v5640
      %v5644 = vcombine.low %v5326, %v5342
      %v5645 = vcombine.high %v5326, %v5342
      %v5647 = vunpack.c.l.s4 1983009808
      %v5648 = vunpack.c.0.s8 %v5647
      %v5649 = vlaneseq
      %v5650 = vshrl.u32 %v5649, 7
      %v5651 = vsub.s32 %v5648, %v5650
      %v5652 = vrot.slane %v5644, %v5651
      %v5654 = vunpack.c.l.s4 1983009808
      %v5655 = vunpack.c.0.s8 %v5654
      %v5656 = vlaneseq
      %v5657 = vshrl.u32 %v5656, 7
      %v5658 = vsub.s32 %v5655, %v5657
      %v5659 = vrot.slane %v5645, %v5658
      %v5660 = vcombine.low %v5334, %v5350
      %v5661 = vcombine.high %v5334, %v5350
      %v5663 = vunpack.c.l.s4 1983009808
      %v5664 = vunpack.c.0.s8 %v5663
      %v5665 = vlaneseq
      %v5666 = vshrl.u32 %v5665, 7
      %v5667 = vsub.s32 %v5664, %v5666
      %v5668 = vrot.slane %v5660, %v5667
      %v5670 = vunpack.c.l.s4 1983009808
      %v5671 = vunpack.c.0.s8 %v5670
      %v5672 = vlaneseq
      %v5673 = vshrl.u32 %v5672, 7
      %v5674 = vsub.s32 %v5671, %v5673
      %v5675 = vrot.slane %v5661, %v5674
      %v5676 = vcombine.low %v5358, %v5374
      %v5677 = vcombine.high %v5358, %v5374
      %v5679 = vunpack.c.l.s4 1983009808
      %v5680 = vunpack.c.0.s8 %v5679
      %v5681 = vlaneseq
      %v5682 = vshrl.u32 %v5681, 7
      %v5683 = vsub.s32 %v5680, %v5682
      %v5684 = vrot.slane %v5676, %v5683
      %v5686 = vunpack.c.l.s4 1983009808
      %v5687 = vunpack.c.0.s8 %v5686
      %v5688 = vlaneseq
      %v5689 = vshrl.u32 %v5688, 7
      %v5690 = vsub.s32 %v5687, %v5689
      %v5691 = vrot.slane %v5677, %v5690
      %v5692 = vcombine.low %v5366, %v5382
      %v5693 = vcombine.high %v5366, %v5382
      %v5695 = vunpack.c.l.s4 1983009808
      %v5696 = vunpack.c.0.s8 %v5695
      %v5697 = vlaneseq
      %v5698 = vshrl.u32 %v5697, 7
      %v5699 = vsub.s32 %v5696, %v5698
      %v5700 = vrot.slane %v5692, %v5699
      %v5702 = vunpack.c.l.s4 1983009808
      %v5703 = vunpack.c.0.s8 %v5702
      %v5704 = vlaneseq
      %v5705 = vshrl.u32 %v5704, 7
      %v5706 = vsub.s32 %v5703, %v5705
      %v5707 = vrot.slane %v5693, %v5706
      %v5708 = vcombine.low %v5652, %v5668
      %v5709 = vcombine.high %v5652, %v5668
      %v5711 = vunpack.c.l.s4 1934713408
      %v5712 = vunpack.c.0.s8 %v5711
      %v5713 = vlaneseq
      %v5714 = vshrl.u32 %v5713, 7
      %v5715 = vsub.s32 %v5712, %v5714
      %v5716 = vrot.slane %v5708, %v5715
      %v5718 = vunpack.c.l.s4 1934713408
      %v5719 = vunpack.c.0.s8 %v5718
      %v5720 = vlaneseq
      %v5721 = vshrl.u32 %v5720, 7
      %v5722 = vsub.s32 %v5719, %v5721
      %v5723 = vrot.slane %v5709, %v5722
      %v5724 = vcombine.low %v5659, %v5675
      %v5725 = vcombine.high %v5659, %v5675
      %v5727 = vunpack.c.l.s4 1934713408
      %v5728 = vunpack.c.0.s8 %v5727
      %v5729 = vlaneseq
      %v5730 = vshrl.u32 %v5729, 7
      %v5731 = vsub.s32 %v5728, %v5730
      %v5732 = vrot.slane %v5724, %v5731
      %v5734 = vunpack.c.l.s4 1934713408
      %v5735 = vunpack.c.0.s8 %v5734
      %v5736 = vlaneseq
      %v5737 = vshrl.u32 %v5736, 7
      %v5738 = vsub.s32 %v5735, %v5737
      %v5739 = vrot.slane %v5725, %v5738
      %v5740 = vcombine.low %v5684, %v5700
      %v5741 = vcombine.high %v5684, %v5700
      %v5743 = vunpack.c.l.s4 1934713408
      %v5744 = vunpack.c.0.s8 %v5743
      %v5745 = vlaneseq
      %v5746 = vshrl.u32 %v5745, 7
      %v5747 = vsub.s32 %v5744, %v5746
      %v5748 = vrot.slane %v5740, %v5747
      %v5750 = vunpack.c.l.s4 1934713408
      %v5751 = vunpack.c.0.s8 %v5750
      %v5752 = vlaneseq
      %v5753 = vshrl.u32 %v5752, 7
      %v5754 = vsub.s32 %v5751, %v5753
      %v5755 = vrot.slane %v5741, %v5754
      %v5756 = vcombine.low %v5691, %v5707
      %v5757 = vcombine.high %v5691, %v5707
      %v5759 = vunpack.c.l.s4 1934713408
      %v5760 = vunpack.c.0.s8 %v5759
      %v5761 = vlaneseq
      %v5762 = vshrl.u32 %v5761, 7
      %v5763 = vsub.s32 %v5760, %v5762
      %v5764 = vrot.slane %v5756, %v5763
      %v5766 = vunpack.c.l.s4 1934713408
      %v5767 = vunpack.c.0.s8 %v5766
      %v5768 = vlaneseq
      %v5769 = vshrl.u32 %v5768, 7
      %v5770 = vsub.s32 %v5767, %v5769
      %v5771 = vrot.slane %v5757, %v5770
      %v5772 = vcombine.low %v5716, %v5748
      %v5773 = vcombine.high %v5716, %v5748
      %v5774 = vcombine.low %v5723, %v5755
      %v5775 = vcombine.high %v5723, %v5755
      %v5776 = vcombine.low %v5732, %v5764
      %v5777 = vcombine.high %v5732, %v5764
      %v5778 = vcombine.low %v5739, %v5771
      %v5779 = vcombine.high %v5739, %v5771
      %v5780 = vcombine.low %v5330, %v5346
      %v5781 = vcombine.high %v5330, %v5346
      %v5783 = vunpack.c.l.s4 1983009808
      %v5784 = vunpack.c.0.s8 %v5783
      %v5785 = vlaneseq
      %v5786 = vshrl.u32 %v5785, 7
      %v5787 = vsub.s32 %v5784, %v5786
      %v5788 = vrot.slane %v5780, %v5787
      %v5790 = vunpack.c.l.s4 1983009808
      %v5791 = vunpack.c.0.s8 %v5790
      %v5792 = vlaneseq
      %v5793 = vshrl.u32 %v5792, 7
      %v5794 = vsub.s32 %v5791, %v5793
      %v5795 = vrot.slane %v5781, %v5794
      %v5796 = vcombine.low %v5338, %v5354
      %v5797 = vcombine.high %v5338, %v5354
      %v5799 = vunpack.c.l.s4 1983009808
      %v5800 = vunpack.c.0.s8 %v5799
      %v5801 = vlaneseq
      %v5802 = vshrl.u32 %v5801, 7
      %v5803 = vsub.s32 %v5800, %v5802
      %v5804 = vrot.slane %v5796, %v5803
      %v5806 = vunpack.c.l.s4 1983009808
      %v5807 = vunpack.c.0.s8 %v5806
      %v5808 = vlaneseq
      %v5809 = vshrl.u32 %v5808, 7
      %v5810 = vsub.s32 %v5807, %v5809
      %v5811 = vrot.slane %v5797, %v5810
      %v5812 = vcombine.low %v5362, %v5378
      %v5813 = vcombine.high %v5362, %v5378
      %v5815 = vunpack.c.l.s4 1983009808
      %v5816 = vunpack.c.0.s8 %v5815
      %v5817 = vlaneseq
      %v5818 = vshrl.u32 %v5817, 7
      %v5819 = vsub.s32 %v5816, %v5818
      %v5820 = vrot.slane %v5812, %v5819
      %v5822 = vunpack.c.l.s4 1983009808
      %v5823 = vunpack.c.0.s8 %v5822
      %v5824 = vlaneseq
      %v5825 = vshrl.u32 %v5824, 7
      %v5826 = vsub.s32 %v5823, %v5825
      %v5827 = vrot.slane %v5813, %v5826
      %v5828 = vcombine.low %v5370, %v5386
      %v5829 = vcombine.high %v5370, %v5386
      %v5831 = vunpack.c.l.s4 1983009808
      %v5832 = vunpack.c.0.s8 %v5831
      %v5833 = vlaneseq
      %v5834 = vshrl.u32 %v5833, 7
      %v5835 = vsub.s32 %v5832, %v5834
      %v5836 = vrot.slane %v5828, %v5835
      %v5838 = vunpack.c.l.s4 1983009808
      %v5839 = vunpack.c.0.s8 %v5838
      %v5840 = vlaneseq
      %v5841 = vshrl.u32 %v5840, 7
      %v5842 = vsub.s32 %v5839, %v5841
      %v5843 = vrot.slane %v5829, %v5842
      %v5844 = vcombine.low %v5788, %v5804
      %v5845 = vcombine.high %v5788, %v5804
      %v5847 = vunpack.c.l.s4 1934713408
      %v5848 = vunpack.c.0.s8 %v5847
      %v5849 = vlaneseq
      %v5850 = vshrl.u32 %v5849, 7
      %v5851 = vsub.s32 %v5848, %v5850
      %v5852 = vrot.slane %v5844, %v5851
      %v5854 = vunpack.c.l.s4 1934713408
      %v5855 = vunpack.c.0.s8 %v5854
      %v5856 = vlaneseq
      %v5857 = vshrl.u32 %v5856, 7
      %v5858 = vsub.s32 %v5855, %v5857
      %v5859 = vrot.slane %v5845, %v5858
      %v5860 = vcombine.low %v5795, %v5811
      %v5861 = vcombine.high %v5795, %v5811
      %v5863 = vunpack.c.l.s4 1934713408
      %v5864 = vunpack.c.0.s8 %v5863
      %v5865 = vlaneseq
      %v5866 = vshrl.u32 %v5865, 7
      %v5867 = vsub.s32 %v5864, %v5866
      %v5868 = vrot.slane %v5860, %v5867
      %v5870 = vunpack.c.l.s4 1934713408
      %v5871 = vunpack.c.0.s8 %v5870
      %v5872 = vlaneseq
      %v5873 = vshrl.u32 %v5872, 7
      %v5874 = vsub.s32 %v5871, %v5873
      %v5875 = vrot.slane %v5861, %v5874
      %v5876 = vcombine.low %v5820, %v5836
      %v5877 = vcombine.high %v5820, %v5836
      %v5879 = vunpack.c.l.s4 1934713408
      %v5880 = vunpack.c.0.s8 %v5879
      %v5881 = vlaneseq
      %v5882 = vshrl.u32 %v5881, 7
      %v5883 = vsub.s32 %v5880, %v5882
      %v5884 = vrot.slane %v5876, %v5883
      %v5886 = vunpack.c.l.s4 1934713408
      %v5887 = vunpack.c.0.s8 %v5886
      %v5888 = vlaneseq
      %v5889 = vshrl.u32 %v5888, 7
      %v5890 = vsub.s32 %v5887, %v5889
      %v5891 = vrot.slane %v5877, %v5890
      %v5892 = vcombine.low %v5827, %v5843
      %v5893 = vcombine.high %v5827, %v5843
      %v5895 = vunpack.c.l.s4 1934713408
      %v5896 = vunpack.c.0.s8 %v5895
      %v5897 = vlaneseq
      %v5898 = vshrl.u32 %v5897, 7
      %v5899 = vsub.s32 %v5896, %v5898
      %v5900 = vrot.slane %v5892, %v5899
      %v5902 = vunpack.c.l.s4 1934713408
      %v5903 = vunpack.c.0.s8 %v5902
      %v5904 = vlaneseq
      %v5905 = vshrl.u32 %v5904, 7
      %v5906 = vsub.s32 %v5903, %v5905
      %v5907 = vrot.slane %v5893, %v5906
      %v5908 = vcombine.low %v5852, %v5884
      %v5909 = vcombine.high %v5852, %v5884
      %v5910 = vcombine.low %v5859, %v5891
      %v5911 = vcombine.high %v5859, %v5891
      %v5912 = vcombine.low %v5868, %v5900
      %v5913 = vcombine.high %v5868, %v5900
      %v5914 = vcombine.low %v5875, %v5907
      %v5915 = vcombine.high %v5875, %v5907
      %v5916 = vcombine.low %v5390, %v5406
      %v5917 = vcombine.high %v5390, %v5406
      %v5919 = vunpack.c.l.s4 1983009808
      %v5920 = vunpack.c.0.s8 %v5919
      %v5921 = vlaneseq
      %v5922 = vshrl.u32 %v5921, 7
      %v5923 = vsub.s32 %v5920, %v5922
      %v5924 = vrot.slane %v5916, %v5923
      %v5926 = vunpack.c.l.s4 1983009808
      %v5927 = vunpack.c.0.s8 %v5926
      %v5928 = vlaneseq
      %v5929 = vshrl.u32 %v5928, 7
      %v5930 = vsub.s32 %v5927, %v5929
      %v5931 = vrot.slane %v5917, %v5930
      %v5932 = vcombine.low %v5398, %v5414
      %v5933 = vcombine.high %v5398, %v5414
      %v5935 = vunpack.c.l.s4 1983009808
      %v5936 = vunpack.c.0.s8 %v5935
      %v5937 = vlaneseq
      %v5938 = vshrl.u32 %v5937, 7
      %v5939 = vsub.s32 %v5936, %v5938
      %v5940 = vrot.slane %v5932, %v5939
      %v5942 = vunpack.c.l.s4 1983009808
      %v5943 = vunpack.c.0.s8 %v5942
      %v5944 = vlaneseq
      %v5945 = vshrl.u32 %v5944, 7
      %v5946 = vsub.s32 %v5943, %v5945
      %v5947 = vrot.slane %v5933, %v5946
      %v5948 = vcombine.low %v5422, %v5438
      %v5949 = vcombine.high %v5422, %v5438
      %v5951 = vunpack.c.l.s4 1983009808
      %v5952 = vunpack.c.0.s8 %v5951
      %v5953 = vlaneseq
      %v5954 = vshrl.u32 %v5953, 7
      %v5955 = vsub.s32 %v5952, %v5954
      %v5956 = vrot.slane %v5948, %v5955
      %v5958 = vunpack.c.l.s4 1983009808
      %v5959 = vunpack.c.0.s8 %v5958
      %v5960 = vlaneseq
      %v5961 = vshrl.u32 %v5960, 7
      %v5962 = vsub.s32 %v5959, %v5961
      %v5963 = vrot.slane %v5949, %v5962
      %v5964 = vcombine.low %v5430, %v5446
      %v5965 = vcombine.high %v5430, %v5446
      %v5967 = vunpack.c.l.s4 1983009808
      %v5968 = vunpack.c.0.s8 %v5967
      %v5969 = vlaneseq
      %v5970 = vshrl.u32 %v5969, 7
      %v5971 = vsub.s32 %v5968, %v5970
      %v5972 = vrot.slane %v5964, %v5971
      %v5974 = vunpack.c.l.s4 1983009808
      %v5975 = vunpack.c.0.s8 %v5974
      %v5976 = vlaneseq
      %v5977 = vshrl.u32 %v5976, 7
      %v5978 = vsub.s32 %v5975, %v5977
      %v5979 = vrot.slane %v5965, %v5978
      %v5980 = vcombine.low %v5924, %v5940
      %v5981 = vcombine.high %v5924, %v5940
      %v5983 = vunpack.c.l.s4 1934713408
      %v5984 = vunpack.c.0.s8 %v5983
      %v5985 = vlaneseq
      %v5986 = vshrl.u32 %v5985, 7
      %v5987 = vsub.s32 %v5984, %v5986
      %v5988 = vrot.slane %v5980, %v5987
      %v5990 = vunpack.c.l.s4 1934713408
      %v5991 = vunpack.c.0.s8 %v5990
      %v5992 = vlaneseq
      %v5993 = vshrl.u32 %v5992, 7
      %v5994 = vsub.s32 %v5991, %v5993
      %v5995 = vrot.slane %v5981, %v5994
      %v5996 = vcombine.low %v5931, %v5947
      %v5997 = vcombine.high %v5931, %v5947
      %v5999 = vunpack.c.l.s4 1934713408
      %v6000 = vunpack.c.0.s8 %v5999
      %v6001 = vlaneseq
      %v6002 = vshrl.u32 %v6001, 7
      %v6003 = vsub.s32 %v6000, %v6002
      %v6004 = vrot.slane %v5996, %v6003
      %v6006 = vunpack.c.l.s4 1934713408
      %v6007 = vunpack.c.0.s8 %v6006
      %v6008 = vlaneseq
      %v6009 = vshrl.u32 %v6008, 7
      %v6010 = vsub.s32 %v6007, %v6009
      %v6011 = vrot.slane %v5997, %v6010
      %v6012 = vcombine.low %v5956, %v5972
      %v6013 = vcombine.high %v5956, %v5972
      %v6015 = vunpack.c.l.s4 1934713408
      %v6016 = vunpack.c.0.s8 %v6015
      %v6017 = vlaneseq
      %v6018 = vshrl.u32 %v6017, 7
      %v6019 = vsub.s32 %v6016, %v6018
      %v6020 = vrot.slane %v6012, %v6019
      %v6022 = vunpack.c.l.s4 1934713408
      %v6023 = vunpack.c.0.s8 %v6022
      %v6024 = vlaneseq
      %v6025 = vshrl.u32 %v6024, 7
      %v6026 = vsub.s32 %v6023, %v6025
      %v6027 = vrot.slane %v6013, %v6026
      %v6028 = vcombine.low %v5963, %v5979
      %v6029 = vcombine.high %v5963, %v5979
      %v6031 = vunpack.c.l.s4 1934713408
      %v6032 = vunpack.c.0.s8 %v6031
      %v6033 = vlaneseq
      %v6034 = vshrl.u32 %v6033, 7
      %v6035 = vsub.s32 %v6032, %v6034
      %v6036 = vrot.slane %v6028, %v6035
      %v6038 = vunpack.c.l.s4 1934713408
      %v6039 = vunpack.c.0.s8 %v6038
      %v6040 = vlaneseq
      %v6041 = vshrl.u32 %v6040, 7
      %v6042 = vsub.s32 %v6039, %v6041
      %v6043 = vrot.slane %v6029, %v6042
      %v6044 = vcombine.low %v5988, %v6020
      %v6045 = vcombine.high %v5988, %v6020
      %v6046 = vcombine.low %v5995, %v6027
      %v6047 = vcombine.high %v5995, %v6027
      %v6048 = vcombine.low %v6004, %v6036
      %v6049 = vcombine.high %v6004, %v6036
      %v6050 = vcombine.low %v6011, %v6043
      %v6051 = vcombine.high %v6011, %v6043
      %v6052 = vcombine.low %v5394, %v5410
      %v6053 = vcombine.high %v5394, %v5410
      %v6055 = vunpack.c.l.s4 1983009808
      %v6056 = vunpack.c.0.s8 %v6055
      %v6057 = vlaneseq
      %v6058 = vshrl.u32 %v6057, 7
      %v6059 = vsub.s32 %v6056, %v6058
      %v6060 = vrot.slane %v6052, %v6059
      %v6062 = vunpack.c.l.s4 1983009808
      %v6063 = vunpack.c.0.s8 %v6062
      %v6064 = vlaneseq
      %v6065 = vshrl.u32 %v6064, 7
      %v6066 = vsub.s32 %v6063, %v6065
      %v6067 = vrot.slane %v6053, %v6066
      %v6068 = vcombine.low %v5402, %v5418
      %v6069 = vcombine.high %v5402, %v5418
      %v6071 = vunpack.c.l.s4 1983009808
      %v6072 = vunpack.c.0.s8 %v6071
      %v6073 = vlaneseq
      %v6074 = vshrl.u32 %v6073, 7
      %v6075 = vsub.s32 %v6072, %v6074
      %v6076 = vrot.slane %v6068, %v6075
      %v6078 = vunpack.c.l.s4 1983009808
      %v6079 = vunpack.c.0.s8 %v6078
      %v6080 = vlaneseq
      %v6081 = vshrl.u32 %v6080, 7
      %v6082 = vsub.s32 %v6079, %v6081
      %v6083 = vrot.slane %v6069, %v6082
      %v6084 = vcombine.low %v5426, %v5442
      %v6085 = vcombine.high %v5426, %v5442
      %v6087 = vunpack.c.l.s4 1983009808
      %v6088 = vunpack.c.0.s8 %v6087
      %v6089 = vlaneseq
      %v6090 = vshrl.u32 %v6089, 7
      %v6091 = vsub.s32 %v6088, %v6090
      %v6092 = vrot.slane %v6084, %v6091
      %v6094 = vunpack.c.l.s4 1983009808
      %v6095 = vunpack.c.0.s8 %v6094
      %v6096 = vlaneseq
      %v6097 = vshrl.u32 %v6096, 7
      %v6098 = vsub.s32 %v6095, %v6097
      %v6099 = vrot.slane %v6085, %v6098
      %v6100 = vcombine.low %v5434, %v5450
      %v6101 = vcombine.high %v5434, %v5450
      %v6103 = vunpack.c.l.s4 1983009808
      %v6104 = vunpack.c.0.s8 %v6103
      %v6105 = vlaneseq
      %v6106 = vshrl.u32 %v6105, 7
      %v6107 = vsub.s32 %v6104, %v6106
      %v6108 = vrot.slane %v6100, %v6107
      %v6110 = vunpack.c.l.s4 1983009808
      %v6111 = vunpack.c.0.s8 %v6110
      %v6112 = vlaneseq
      %v6113 = vshrl.u32 %v6112, 7
      %v6114 = vsub.s32 %v6111, %v6113
      %v6115 = vrot.slane %v6101, %v6114
      %v6116 = vcombine.low %v6060, %v6076
      %v6117 = vcombine.high %v6060, %v6076
      %v6119 = vunpack.c.l.s4 1934713408
      %v6120 = vunpack.c.0.s8 %v6119
      %v6121 = vlaneseq
      %v6122 = vshrl.u32 %v6121, 7
      %v6123 = vsub.s32 %v6120, %v6122
      %v6124 = vrot.slane %v6116, %v6123
      %v6126 = vunpack.c.l.s4 1934713408
      %v6127 = vunpack.c.0.s8 %v6126
      %v6128 = vlaneseq
      %v6129 = vshrl.u32 %v6128, 7
      %v6130 = vsub.s32 %v6127, %v6129
      %v6131 = vrot.slane %v6117, %v6130
      %v6132 = vcombine.low %v6067, %v6083
      %v6133 = vcombine.high %v6067, %v6083
      %v6135 = vunpack.c.l.s4 1934713408
      %v6136 = vunpack.c.0.s8 %v6135
      %v6137 = vlaneseq
      %v6138 = vshrl.u32 %v6137, 7
      %v6139 = vsub.s32 %v6136, %v6138
      %v6140 = vrot.slane %v6132, %v6139
      %v6142 = vunpack.c.l.s4 1934713408
      %v6143 = vunpack.c.0.s8 %v6142
      %v6144 = vlaneseq
      %v6145 = vshrl.u32 %v6144, 7
      %v6146 = vsub.s32 %v6143, %v6145
      %v6147 = vrot.slane %v6133, %v6146
      %v6148 = vcombine.low %v6092, %v6108
      %v6149 = vcombine.high %v6092, %v6108
      %v6151 = vunpack.c.l.s4 1934713408
      %v6152 = vunpack.c.0.s8 %v6151
      %v6153 = vlaneseq
      %v6154 = vshrl.u32 %v6153, 7
      %v6155 = vsub.s32 %v6152, %v6154
      %v6156 = vrot.slane %v6148, %v6155
      %v6158 = vunpack.c.l.s4 1934713408
      %v6159 = vunpack.c.0.s8 %v6158
      %v6160 = vlaneseq
      %v6161 = vshrl.u32 %v6160, 7
      %v6162 = vsub.s32 %v6159, %v6161
      %v6163 = vrot.slane %v6149, %v6162
      %v6164 = vcombine.low %v6099, %v6115
      %v6165 = vcombine.high %v6099, %v6115
      %v6167 = vunpack.c.l.s4 1934713408
      %v6168 = vunpack.c.0.s8 %v6167
      %v6169 = vlaneseq
      %v6170 = vshrl.u32 %v6169, 7
      %v6171 = vsub.s32 %v6168, %v6170
      %v6172 = vrot.slane %v6164, %v6171
      %v6174 = vunpack.c.l.s4 1934713408
      %v6175 = vunpack.c.0.s8 %v6174
      %v6176 = vlaneseq
      %v6177 = vshrl.u32 %v6176, 7
      %v6178 = vsub.s32 %v6175, %v6177
      %v6179 = vrot.slane %v6165, %v6178
      %v6180 = vcombine.low %v6124, %v6156
      %v6181 = vcombine.high %v6124, %v6156
      %v6182 = vcombine.low %v6131, %v6163
      %v6183 = vcombine.high %v6131, %v6163
      %v6184 = vcombine.low %v6140, %v6172
      %v6185 = vcombine.high %v6140, %v6172
      %v6186 = vcombine.low %v6147, %v6179
      %v6187 = vcombine.high %v6147, %v6179
      %v6188 = vcombine.low %v5454, %v5470
      %v6189 = vcombine.high %v5454, %v5470
      %v6191 = vunpack.c.l.s4 1983009808
      %v6192 = vunpack.c.0.s8 %v6191
      %v6193 = vlaneseq
      %v6194 = vshrl.u32 %v6193, 7
      %v6195 = vsub.s32 %v6192, %v6194
      %v6196 = vrot.slane %v6188, %v6195
      %v6198 = vunpack.c.l.s4 1983009808
      %v6199 = vunpack.c.0.s8 %v6198
      %v6200 = vlaneseq
      %v6201 = vshrl.u32 %v6200, 7
      %v6202 = vsub.s32 %v6199, %v6201
      %v6203 = vrot.slane %v6189, %v6202
      %v6204 = vcombine.low %v5462, %v5478
      %v6205 = vcombine.high %v5462, %v5478
      %v6207 = vunpack.c.l.s4 1983009808
      %v6208 = vunpack.c.0.s8 %v6207
      %v6209 = vlaneseq
      %v6210 = vshrl.u32 %v6209, 7
      %v6211 = vsub.s32 %v6208, %v6210
      %v6212 = vrot.slane %v6204, %v6211
      %v6214 = vunpack.c.l.s4 1983009808
      %v6215 = vunpack.c.0.s8 %v6214
      %v6216 = vlaneseq
      %v6217 = vshrl.u32 %v6216, 7
      %v6218 = vsub.s32 %v6215, %v6217
      %v6219 = vrot.slane %v6205, %v6218
      %v6220 = vcombine.low %v6196, %v6212
      %v6221 = vcombine.high %v6196, %v6212
      %v6223 = vunpack.c.l.s4 1934713408
      %v6224 = vunpack.c.0.s8 %v6223
      %v6225 = vlaneseq
      %v6226 = vshrl.u32 %v6225, 7
      %v6227 = vsub.s32 %v6224, %v6226
      %v6228 = vrot.slane %v6220, %v6227
      %v6230 = vunpack.c.l.s4 1934713408
      %v6231 = vunpack.c.0.s8 %v6230
      %v6232 = vlaneseq
      %v6233 = vshrl.u32 %v6232, 7
      %v6234 = vsub.s32 %v6231, %v6233
      %v6235 = vrot.slane %v6221, %v6234
      %v6236 = vcombine.low %v6203, %v6219
      %v6237 = vcombine.high %v6203, %v6219
      %v6239 = vunpack.c.l.s4 1934713408
      %v6240 = vunpack.c.0.s8 %v6239
      %v6241 = vlaneseq
      %v6242 = vshrl.u32 %v6241, 7
      %v6243 = vsub.s32 %v6240, %v6242
      %v6244 = vrot.slane %v6236, %v6243
      %v6246 = vunpack.c.l.s4 1934713408
      %v6247 = vunpack.c.0.s8 %v6246
      %v6248 = vlaneseq
      %v6249 = vshrl.u32 %v6248, 7
      %v6250 = vsub.s32 %v6247, %v6249
      %v6251 = vrot.slane %v6237, %v6250
      %v6252 = vcombine.high %v6228, 0
      %v6253 = vcombine.high %v6235, 0
      %v6254 = vcombine.high %v6244, 0
      %v6255 = vcombine.high %v6251, 0
      %v6256 = vcombine.low %v5458, %v5474
      %v6257 = vcombine.high %v5458, %v5474
      %v6259 = vunpack.c.l.s4 1983009808
      %v6260 = vunpack.c.0.s8 %v6259
      %v6261 = vlaneseq
      %v6262 = vshrl.u32 %v6261, 7
      %v6263 = vsub.s32 %v6260, %v6262
      %v6264 = vrot.slane %v6256, %v6263
      %v6266 = vunpack.c.l.s4 1983009808
      %v6267 = vunpack.c.0.s8 %v6266
      %v6268 = vlaneseq
      %v6269 = vshrl.u32 %v6268, 7
      %v6270 = vsub.s32 %v6267, %v6269
      %v6271 = vrot.slane %v6257, %v6270
      %v6272 = vcombine.low %v5466, %v5482
      %v6273 = vcombine.high %v5466, %v5482
      %v6275 = vunpack.c.l.s4 1983009808
      %v6276 = vunpack.c.0.s8 %v6275
      %v6277 = vlaneseq
      %v6278 = vshrl.u32 %v6277, 7
      %v6279 = vsub.s32 %v6276, %v6278
      %v6280 = vrot.slane %v6272, %v6279
      %v6282 = vunpack.c.l.s4 1983009808
      %v6283 = vunpack.c.0.s8 %v6282
      %v6284 = vlaneseq
      %v6285 = vshrl.u32 %v6284, 7
      %v6286 = vsub.s32 %v6283, %v6285
      %v6287 = vrot.slane %v6273, %v6286
      %v6288 = vcombine.low %v6264, %v6280
      %v6289 = vcombine.high %v6264, %v6280
      %v6291 = vunpack.c.l.s4 1934713408
      %v6292 = vunpack.c.0.s8 %v6291
      %v6293 = vlaneseq
      %v6294 = vshrl.u32 %v6293, 7
      %v6295 = vsub.s32 %v6292, %v6294
      %v6296 = vrot.slane %v6288, %v6295
      %v6298 = vunpack.c.l.s4 1934713408
      %v6299 = vunpack.c.0.s8 %v6298
      %v6300 = vlaneseq
      %v6301 = vshrl.u32 %v6300, 7
      %v6302 = vsub.s32 %v6299, %v6301
      %v6303 = vrot.slane %v6289, %v6302
      %v6304 = vcombine.low %v6271, %v6287
      %v6305 = vcombine.high %v6271, %v6287
      %v6307 = vunpack.c.l.s4 1934713408
      %v6308 = vunpack.c.0.s8 %v6307
      %v6309 = vlaneseq
      %v6310 = vshrl.u32 %v6309, 7
      %v6311 = vsub.s32 %v6308, %v6310
      %v6312 = vrot.slane %v6304, %v6311
      %v6314 = vunpack.c.l.s4 1934713408
      %v6315 = vunpack.c.0.s8 %v6314
      %v6316 = vlaneseq
      %v6317 = vshrl.u32 %v6316, 7
      %v6318 = vsub.s32 %v6315, %v6317
      %v6319 = vrot.slane %v6305, %v6318
      %v6320 = vcombine.high %v6296, 0
      %v6321 = vcombine.high %v6303, 0
      %v6322 = vcombine.high %v6312, 0
      %v6323 = vcombine.high %v6319, 0
      %v6324 = vcombine.low %v5486, %v5502
      %v6325 = vcombine.high %v5486, %v5502
      %v6327 = vunpack.c.l.s4 1983009808
      %v6328 = vunpack.c.0.s8 %v6327
      %v6329 = vlaneseq
      %v6330 = vshrl.u32 %v6329, 7
      %v6331 = vsub.s32 %v6328, %v6330
      %v6332 = vrot.slane %v6324, %v6331
      %v6334 = vunpack.c.l.s4 1983009808
      %v6335 = vunpack.c.0.s8 %v6334
      %v6336 = vlaneseq
      %v6337 = vshrl.u32 %v6336, 7
      %v6338 = vsub.s32 %v6335, %v6337
      %v6339 = vrot.slane %v6325, %v6338
      %v6340 = vcombine.low %v5494, %v5510
      %v6341 = vcombine.high %v5494, %v5510
      %v6343 = vunpack.c.l.s4 1983009808
      %v6344 = vunpack.c.0.s8 %v6343
      %v6345 = vlaneseq
      %v6346 = vshrl.u32 %v6345, 7
      %v6347 = vsub.s32 %v6344, %v6346
      %v6348 = vrot.slane %v6340, %v6347
      %v6350 = vunpack.c.l.s4 1983009808
      %v6351 = vunpack.c.0.s8 %v6350
      %v6352 = vlaneseq
      %v6353 = vshrl.u32 %v6352, 7
      %v6354 = vsub.s32 %v6351, %v6353
      %v6355 = vrot.slane %v6341, %v6354
      %v6356 = vcombine.low %v5518, %v5534
      %v6357 = vcombine.high %v5518, %v5534
      %v6359 = vunpack.c.l.s4 1983009808
      %v6360 = vunpack.c.0.s8 %v6359
      %v6361 = vlaneseq
      %v6362 = vshrl.u32 %v6361, 7
      %v6363 = vsub.s32 %v6360, %v6362
      %v6364 = vrot.slane %v6356, %v6363
      %v6366 = vunpack.c.l.s4 1983009808
      %v6367 = vunpack.c.0.s8 %v6366
      %v6368 = vlaneseq
      %v6369 = vshrl.u32 %v6368, 7
      %v6370 = vsub.s32 %v6367, %v6369
      %v6371 = vrot.slane %v6357, %v6370
      %v6372 = vcombine.low %v5526, %v5542
      %v6373 = vcombine.high %v5526, %v5542
      %v6375 = vunpack.c.l.s4 1983009808
      %v6376 = vunpack.c.0.s8 %v6375
      %v6377 = vlaneseq
      %v6378 = vshrl.u32 %v6377, 7
      %v6379 = vsub.s32 %v6376, %v6378
      %v6380 = vrot.slane %v6372, %v6379
      %v6382 = vunpack.c.l.s4 1983009808
      %v6383 = vunpack.c.0.s8 %v6382
      %v6384 = vlaneseq
      %v6385 = vshrl.u32 %v6384, 7
      %v6386 = vsub.s32 %v6383, %v6385
      %v6387 = vrot.slane %v6373, %v6386
      %v6388 = vcombine.low %v6332, %v6348
      %v6389 = vcombine.high %v6332, %v6348
      %v6391 = vunpack.c.l.s4 1934713408
      %v6392 = vunpack.c.0.s8 %v6391
      %v6393 = vlaneseq
      %v6394 = vshrl.u32 %v6393, 7
      %v6395 = vsub.s32 %v6392, %v6394
      %v6396 = vrot.slane %v6388, %v6395
      %v6398 = vunpack.c.l.s4 1934713408
      %v6399 = vunpack.c.0.s8 %v6398
      %v6400 = vlaneseq
      %v6401 = vshrl.u32 %v6400, 7
      %v6402 = vsub.s32 %v6399, %v6401
      %v6403 = vrot.slane %v6389, %v6402
      %v6404 = vcombine.low %v6339, %v6355
      %v6405 = vcombine.high %v6339, %v6355
      %v6407 = vunpack.c.l.s4 1934713408
      %v6408 = vunpack.c.0.s8 %v6407
      %v6409 = vlaneseq
      %v6410 = vshrl.u32 %v6409, 7
      %v6411 = vsub.s32 %v6408, %v6410
      %v6412 = vrot.slane %v6404, %v6411
      %v6414 = vunpack.c.l.s4 1934713408
      %v6415 = vunpack.c.0.s8 %v6414
      %v6416 = vlaneseq
      %v6417 = vshrl.u32 %v6416, 7
      %v6418 = vsub.s32 %v6415, %v6417
      %v6419 = vrot.slane %v6405, %v6418
      %v6420 = vcombine.low %v6364, %v6380
      %v6421 = vcombine.high %v6364, %v6380
      %v6423 = vunpack.c.l.s4 1934713408
      %v6424 = vunpack.c.0.s8 %v6423
      %v6425 = vlaneseq
      %v6426 = vshrl.u32 %v6425, 7
      %v6427 = vsub.s32 %v6424, %v6426
      %v6428 = vrot.slane %v6420, %v6427
      %v6430 = vunpack.c.l.s4 1934713408
      %v6431 = vunpack.c.0.s8 %v6430
      %v6432 = vlaneseq
      %v6433 = vshrl.u32 %v6432, 7
      %v6434 = vsub.s32 %v6431, %v6433
      %v6435 = vrot.slane %v6421, %v6434
      %v6436 = vcombine.low %v6371, %v6387
      %v6437 = vcombine.high %v6371, %v6387
      %v6439 = vunpack.c.l.s4 1934713408
      %v6440 = vunpack.c.0.s8 %v6439
      %v6441 = vlaneseq
      %v6442 = vshrl.u32 %v6441, 7
      %v6443 = vsub.s32 %v6440, %v6442
      %v6444 = vrot.slane %v6436, %v6443
      %v6446 = vunpack.c.l.s4 1934713408
      %v6447 = vunpack.c.0.s8 %v6446
      %v6448 = vlaneseq
      %v6449 = vshrl.u32 %v6448, 7
      %v6450 = vsub.s32 %v6447, %v6449
      %v6451 = vrot.slane %v6437, %v6450
      %v6452 = vcombine.low %v6396, %v6428
      %v6453 = vcombine.high %v6396, %v6428
      %v6454 = vcombine.low %v6403, %v6435
      %v6455 = vcombine.high %v6403, %v6435
      %v6456 = vcombine.low %v6412, %v6444
      %v6457 = vcombine.high %v6412, %v6444
      %v6458 = vcombine.low %v6419, %v6451
      %v6459 = vcombine.high %v6419, %v6451
      %v6460 = vcombine.low %v5490, %v5506
      %v6461 = vcombine.high %v5490, %v5506
      %v6463 = vunpack.c.l.s4 1983009808
      %v6464 = vunpack.c.0.s8 %v6463
      %v6465 = vlaneseq
      %v6466 = vshrl.u32 %v6465, 7
      %v6467 = vsub.s32 %v6464, %v6466
      %v6468 = vrot.slane %v6460, %v6467
      %v6470 = vunpack.c.l.s4 1983009808
      %v6471 = vunpack.c.0.s8 %v6470
      %v6472 = vlaneseq
      %v6473 = vshrl.u32 %v6472, 7
      %v6474 = vsub.s32 %v6471, %v6473
      %v6475 = vrot.slane %v6461, %v6474
      %v6476 = vcombine.low %v5498, %v5514
      %v6477 = vcombine.high %v5498, %v5514
      %v6479 = vunpack.c.l.s4 1983009808
      %v6480 = vunpack.c.0.s8 %v6479
      %v6481 = vlaneseq
      %v6482 = vshrl.u32 %v6481, 7
      %v6483 = vsub.s32 %v6480, %v6482
      %v6484 = vrot.slane %v6476, %v6483
      %v6486 = vunpack.c.l.s4 1983009808
      %v6487 = vunpack.c.0.s8 %v6486
      %v6488 = vlaneseq
      %v6489 = vshrl.u32 %v6488, 7
      %v6490 = vsub.s32 %v6487, %v6489
      %v6491 = vrot.slane %v6477, %v6490
      %v6492 = vcombine.low %v5522, %v5538
      %v6493 = vcombine.high %v5522, %v5538
      %v6495 = vunpack.c.l.s4 1983009808
      %v6496 = vunpack.c.0.s8 %v6495
      %v6497 = vlaneseq
      %v6498 = vshrl.u32 %v6497, 7
      %v6499 = vsub.s32 %v6496, %v6498
      %v6500 = vrot.slane %v6492, %v6499
      %v6502 = vunpack.c.l.s4 1983009808
      %v6503 = vunpack.c.0.s8 %v6502
      %v6504 = vlaneseq
      %v6505 = vshrl.u32 %v6504, 7
      %v6506 = vsub.s32 %v6503, %v6505
      %v6507 = vrot.slane %v6493, %v6506
      %v6508 = vcombine.low %v5530, %v5546
      %v6509 = vcombine.high %v5530, %v5546
      %v6511 = vunpack.c.l.s4 1983009808
      %v6512 = vunpack.c.0.s8 %v6511
      %v6513 = vlaneseq
      %v6514 = vshrl.u32 %v6513, 7
      %v6515 = vsub.s32 %v6512, %v6514
      %v6516 = vrot.slane %v6508, %v6515
      %v6518 = vunpack.c.l.s4 1983009808
      %v6519 = vunpack.c.0.s8 %v6518
      %v6520 = vlaneseq
      %v6521 = vshrl.u32 %v6520, 7
      %v6522 = vsub.s32 %v6519, %v6521
      %v6523 = vrot.slane %v6509, %v6522
      %v6524 = vcombine.low %v6468, %v6484
      %v6525 = vcombine.high %v6468, %v6484
      %v6527 = vunpack.c.l.s4 1934713408
      %v6528 = vunpack.c.0.s8 %v6527
      %v6529 = vlaneseq
      %v6530 = vshrl.u32 %v6529, 7
      %v6531 = vsub.s32 %v6528, %v6530
      %v6532 = vrot.slane %v6524, %v6531
      %v6534 = vunpack.c.l.s4 1934713408
      %v6535 = vunpack.c.0.s8 %v6534
      %v6536 = vlaneseq
      %v6537 = vshrl.u32 %v6536, 7
      %v6538 = vsub.s32 %v6535, %v6537
      %v6539 = vrot.slane %v6525, %v6538
      %v6540 = vcombine.low %v6475, %v6491
      %v6541 = vcombine.high %v6475, %v6491
      %v6543 = vunpack.c.l.s4 1934713408
      %v6544 = vunpack.c.0.s8 %v6543
      %v6545 = vlaneseq
      %v6546 = vshrl.u32 %v6545, 7
      %v6547 = vsub.s32 %v6544, %v6546
      %v6548 = vrot.slane %v6540, %v6547
      %v6550 = vunpack.c.l.s4 1934713408
      %v6551 = vunpack.c.0.s8 %v6550
      %v6552 = vlaneseq
      %v6553 = vshrl.u32 %v6552, 7
      %v6554 = vsub.s32 %v6551, %v6553
      %v6555 = vrot.slane %v6541, %v6554
      %v6556 = vcombine.low %v6500, %v6516
      %v6557 = vcombine.high %v6500, %v6516
      %v6559 = vunpack.c.l.s4 1934713408
      %v6560 = vunpack.c.0.s8 %v6559
      %v6561 = vlaneseq
      %v6562 = vshrl.u32 %v6561, 7
      %v6563 = vsub.s32 %v6560, %v6562
      %v6564 = vrot.slane %v6556, %v6563
      %v6566 = vunpack.c.l.s4 1934713408
      %v6567 = vunpack.c.0.s8 %v6566
      %v6568 = vlaneseq
      %v6569 = vshrl.u32 %v6568, 7
      %v6570 = vsub.s32 %v6567, %v6569
      %v6571 = vrot.slane %v6557, %v6570
      %v6572 = vcombine.low %v6507, %v6523
      %v6573 = vcombine.high %v6507, %v6523
      %v6575 = vunpack.c.l.s4 1934713408
      %v6576 = vunpack.c.0.s8 %v6575
      %v6577 = vlaneseq
      %v6578 = vshrl.u32 %v6577, 7
      %v6579 = vsub.s32 %v6576, %v6578
      %v6580 = vrot.slane %v6572, %v6579
      %v6582 = vunpack.c.l.s4 1934713408
      %v6583 = vunpack.c.0.s8 %v6582
      %v6584 = vlaneseq
      %v6585 = vshrl.u32 %v6584, 7
      %v6586 = vsub.s32 %v6583, %v6585
      %v6587 = vrot.slane %v6573, %v6586
      %v6588 = vcombine.low %v6532, %v6564
      %v6589 = vcombine.high %v6532, %v6564
      %v6590 = vcombine.low %v6539, %v6571
      %v6591 = vcombine.high %v6539, %v6571
      %v6592 = vcombine.low %v6548, %v6580
      %v6593 = vcombine.high %v6548, %v6580
      %v6594 = vcombine.low %v6555, %v6587
      %v6595 = vcombine.high %v6555, %v6587
      %v6596 = vcombine.low %v5550, %v5566
      %v6597 = vcombine.high %v5550, %v5566
      %v6599 = vunpack.c.l.s4 1983009808
      %v6600 = vunpack.c.0.s8 %v6599
      %v6601 = vlaneseq
      %v6602 = vshrl.u32 %v6601, 7
      %v6603 = vsub.s32 %v6600, %v6602
      %v6604 = vrot.slane %v6596, %v6603
      %v6606 = vunpack.c.l.s4 1983009808
      %v6607 = vunpack.c.0.s8 %v6606
      %v6608 = vlaneseq
      %v6609 = vshrl.u32 %v6608, 7
      %v6610 = vsub.s32 %v6607, %v6609
      %v6611 = vrot.slane %v6597, %v6610
      %v6612 = vcombine.low %v5558, %v5574
      %v6613 = vcombine.high %v5558, %v5574
      %v6615 = vunpack.c.l.s4 1983009808
      %v6616 = vunpack.c.0.s8 %v6615
      %v6617 = vlaneseq
      %v6618 = vshrl.u32 %v6617, 7
      %v6619 = vsub.s32 %v6616, %v6618
      %v6620 = vrot.slane %v6612, %v6619
      %v6622 = vunpack.c.l.s4 1983009808
      %v6623 = vunpack.c.0.s8 %v6622
      %v6624 = vlaneseq
      %v6625 = vshrl.u32 %v6624, 7
      %v6626 = vsub.s32 %v6623, %v6625
      %v6627 = vrot.slane %v6613, %v6626
      %v6628 = vcombine.low %v5582, %v5598
      %v6629 = vcombine.high %v5582, %v5598
      %v6631 = vunpack.c.l.s4 1983009808
      %v6632 = vunpack.c.0.s8 %v6631
      %v6633 = vlaneseq
      %v6634 = vshrl.u32 %v6633, 7
      %v6635 = vsub.s32 %v6632, %v6634
      %v6636 = vrot.slane %v6628, %v6635
      %v6638 = vunpack.c.l.s4 1983009808
      %v6639 = vunpack.c.0.s8 %v6638
      %v6640 = vlaneseq
      %v6641 = vshrl.u32 %v6640, 7
      %v6642 = vsub.s32 %v6639, %v6641
      %v6643 = vrot.slane %v6629, %v6642
      %v6644 = vcombine.low %v5590, %v5606
      %v6645 = vcombine.high %v5590, %v5606
      %v6647 = vunpack.c.l.s4 1983009808
      %v6648 = vunpack.c.0.s8 %v6647
      %v6649 = vlaneseq
      %v6650 = vshrl.u32 %v6649, 7
      %v6651 = vsub.s32 %v6648, %v6650
      %v6652 = vrot.slane %v6644, %v6651
      %v6654 = vunpack.c.l.s4 1983009808
      %v6655 = vunpack.c.0.s8 %v6654
      %v6656 = vlaneseq
      %v6657 = vshrl.u32 %v6656, 7
      %v6658 = vsub.s32 %v6655, %v6657
      %v6659 = vrot.slane %v6645, %v6658
      %v6660 = vcombine.low %v6604, %v6620
      %v6661 = vcombine.high %v6604, %v6620
      %v6663 = vunpack.c.l.s4 1934713408
      %v6664 = vunpack.c.0.s8 %v6663
      %v6665 = vlaneseq
      %v6666 = vshrl.u32 %v6665, 7
      %v6667 = vsub.s32 %v6664, %v6666
      %v6668 = vrot.slane %v6660, %v6667
      %v6670 = vunpack.c.l.s4 1934713408
      %v6671 = vunpack.c.0.s8 %v6670
      %v6672 = vlaneseq
      %v6673 = vshrl.u32 %v6672, 7
      %v6674 = vsub.s32 %v6671, %v6673
      %v6675 = vrot.slane %v6661, %v6674
      %v6676 = vcombine.low %v6611, %v6627
      %v6677 = vcombine.high %v6611, %v6627
      %v6679 = vunpack.c.l.s4 1934713408
      %v6680 = vunpack.c.0.s8 %v6679
      %v6681 = vlaneseq
      %v6682 = vshrl.u32 %v6681, 7
      %v6683 = vsub.s32 %v6680, %v6682
      %v6684 = vrot.slane %v6676, %v6683
      %v6686 = vunpack.c.l.s4 1934713408
      %v6687 = vunpack.c.0.s8 %v6686
      %v6688 = vlaneseq
      %v6689 = vshrl.u32 %v6688, 7
      %v6690 = vsub.s32 %v6687, %v6689
      %v6691 = vrot.slane %v6677, %v6690
      %v6692 = vcombine.low %v6636, %v6652
      %v6693 = vcombine.high %v6636, %v6652
      %v6695 = vunpack.c.l.s4 1934713408
      %v6696 = vunpack.c.0.s8 %v6695
      %v6697 = vlaneseq
      %v6698 = vshrl.u32 %v6697, 7
      %v6699 = vsub.s32 %v6696, %v6698
      %v6700 = vrot.slane %v6692, %v6699
      %v6702 = vunpack.c.l.s4 1934713408
      %v6703 = vunpack.c.0.s8 %v6702
      %v6704 = vlaneseq
      %v6705 = vshrl.u32 %v6704, 7
      %v6706 = vsub.s32 %v6703, %v6705
      %v6707 = vrot.slane %v6693, %v6706
      %v6708 = vcombine.low %v6643, %v6659
      %v6709 = vcombine.high %v6643, %v6659
      %v6711 = vunpack.c.l.s4 1934713408
      %v6712 = vunpack.c.0.s8 %v6711
      %v6713 = vlaneseq
      %v6714 = vshrl.u32 %v6713, 7
      %v6715 = vsub.s32 %v6712, %v6714
      %v6716 = vrot.slane %v6708, %v6715
      %v6718 = vunpack.c.l.s4 1934713408
      %v6719 = vunpack.c.0.s8 %v6718
      %v6720 = vlaneseq
      %v6721 = vshrl.u32 %v6720, 7
      %v6722 = vsub.s32 %v6719, %v6721
      %v6723 = vrot.slane %v6709, %v6722
      %v6724 = vcombine.low %v6668, %v6700
      %v6725 = vcombine.high %v6668, %v6700
      %v6726 = vcombine.low %v6675, %v6707
      %v6727 = vcombine.high %v6675, %v6707
      %v6728 = vcombine.low %v6684, %v6716
      %v6729 = vcombine.high %v6684, %v6716
      %v6730 = vcombine.low %v6691, %v6723
      %v6731 = vcombine.high %v6691, %v6723
      %v6732 = vcombine.low %v5554, %v5570
      %v6733 = vcombine.high %v5554, %v5570
      %v6735 = vunpack.c.l.s4 1983009808
      %v6736 = vunpack.c.0.s8 %v6735
      %v6737 = vlaneseq
      %v6738 = vshrl.u32 %v6737, 7
      %v6739 = vsub.s32 %v6736, %v6738
      %v6740 = vrot.slane %v6732, %v6739
      %v6742 = vunpack.c.l.s4 1983009808
      %v6743 = vunpack.c.0.s8 %v6742
      %v6744 = vlaneseq
      %v6745 = vshrl.u32 %v6744, 7
      %v6746 = vsub.s32 %v6743, %v6745
      %v6747 = vrot.slane %v6733, %v6746
      %v6748 = vcombine.low %v5562, %v5578
      %v6749 = vcombine.high %v5562, %v5578
      %v6751 = vunpack.c.l.s4 1983009808
      %v6752 = vunpack.c.0.s8 %v6751
      %v6753 = vlaneseq
      %v6754 = vshrl.u32 %v6753, 7
      %v6755 = vsub.s32 %v6752, %v6754
      %v6756 = vrot.slane %v6748, %v6755
      %v6758 = vunpack.c.l.s4 1983009808
      %v6759 = vunpack.c.0.s8 %v6758
      %v6760 = vlaneseq
      %v6761 = vshrl.u32 %v6760, 7
      %v6762 = vsub.s32 %v6759, %v6761
      %v6763 = vrot.slane %v6749, %v6762
      %v6764 = vcombine.low %v5586, %v5602
      %v6765 = vcombine.high %v5586, %v5602
      %v6767 = vunpack.c.l.s4 1983009808
      %v6768 = vunpack.c.0.s8 %v6767
      %v6769 = vlaneseq
      %v6770 = vshrl.u32 %v6769, 7
      %v6771 = vsub.s32 %v6768, %v6770
      %v6772 = vrot.slane %v6764, %v6771
      %v6774 = vunpack.c.l.s4 1983009808
      %v6775 = vunpack.c.0.s8 %v6774
      %v6776 = vlaneseq
      %v6777 = vshrl.u32 %v6776, 7
      %v6778 = vsub.s32 %v6775, %v6777
      %v6779 = vrot.slane %v6765, %v6778
      %v6780 = vcombine.low %v5594, %v5610
      %v6781 = vcombine.high %v5594, %v5610
      %v6783 = vunpack.c.l.s4 1983009808
      %v6784 = vunpack.c.0.s8 %v6783
      %v6785 = vlaneseq
      %v6786 = vshrl.u32 %v6785, 7
      %v6787 = vsub.s32 %v6784, %v6786
      %v6788 = vrot.slane %v6780, %v6787
      %v6790 = vunpack.c.l.s4 1983009808
      %v6791 = vunpack.c.0.s8 %v6790
      %v6792 = vlaneseq
      %v6793 = vshrl.u32 %v6792, 7
      %v6794 = vsub.s32 %v6791, %v6793
      %v6795 = vrot.slane %v6781, %v6794
      %v6796 = vcombine.low %v6740, %v6756
      %v6797 = vcombine.high %v6740, %v6756
      %v6799 = vunpack.c.l.s4 1934713408
      %v6800 = vunpack.c.0.s8 %v6799
      %v6801 = vlaneseq
      %v6802 = vshrl.u32 %v6801, 7
      %v6803 = vsub.s32 %v6800, %v6802
      %v6804 = vrot.slane %v6796, %v6803
      %v6806 = vunpack.c.l.s4 1934713408
      %v6807 = vunpack.c.0.s8 %v6806
      %v6808 = vlaneseq
      %v6809 = vshrl.u32 %v6808, 7
      %v6810 = vsub.s32 %v6807, %v6809
      %v6811 = vrot.slane %v6797, %v6810
      %v6812 = vcombine.low %v6747, %v6763
      %v6813 = vcombine.high %v6747, %v6763
      %v6815 = vunpack.c.l.s4 1934713408
      %v6816 = vunpack.c.0.s8 %v6815
      %v6817 = vlaneseq
      %v6818 = vshrl.u32 %v6817, 7
      %v6819 = vsub.s32 %v6816, %v6818
      %v6820 = vrot.slane %v6812, %v6819
      %v6822 = vunpack.c.l.s4 1934713408
      %v6823 = vunpack.c.0.s8 %v6822
      %v6824 = vlaneseq
      %v6825 = vshrl.u32 %v6824, 7
      %v6826 = vsub.s32 %v6823, %v6825
      %v6827 = vrot.slane %v6813, %v6826
      %v6828 = vcombine.low %v6772, %v6788
      %v6829 = vcombine.high %v6772, %v6788
      %v6831 = vunpack.c.l.s4 1934713408
      %v6832 = vunpack.c.0.s8 %v6831
      %v6833 = vlaneseq
      %v6834 = vshrl.u32 %v6833, 7
      %v6835 = vsub.s32 %v6832, %v6834
      %v6836 = vrot.slane %v6828, %v6835
      %v6838 = vunpack.c.l.s4 1934713408
      %v6839 = vunpack.c.0.s8 %v6838
      %v6840 = vlaneseq
      %v6841 = vshrl.u32 %v6840, 7
      %v6842 = vsub.s32 %v6839, %v6841
      %v6843 = vrot.slane %v6829, %v6842
      %v6844 = vcombine.low %v6779, %v6795
      %v6845 = vcombine.high %v6779, %v6795
      %v6847 = vunpack.c.l.s4 1934713408
      %v6848 = vunpack.c.0.s8 %v6847
      %v6849 = vlaneseq
      %v6850 = vshrl.u32 %v6849, 7
      %v6851 = vsub.s32 %v6848, %v6850
      %v6852 = vrot.slane %v6844, %v6851
      %v6854 = vunpack.c.l.s4 1934713408
      %v6855 = vunpack.c.0.s8 %v6854
      %v6856 = vlaneseq
      %v6857 = vshrl.u32 %v6856, 7
      %v6858 = vsub.s32 %v6855, %v6857
      %v6859 = vrot.slane %v6845, %v6858
      %v6860 = vcombine.low %v6804, %v6836
      %v6861 = vcombine.high %v6804, %v6836
      %v6862 = vcombine.low %v6811, %v6843
      %v6863 = vcombine.high %v6811, %v6843
      %v6864 = vcombine.low %v6820, %v6852
      %v6865 = vcombine.high %v6820, %v6852
      %v6866 = vcombine.low %v6827, %v6859
      %v6867 = vcombine.high %v6827, %v6859
      %v6868 = vcombine.low %v5614, %v5630
      %v6869 = vcombine.high %v5614, %v5630
      %v6871 = vunpack.c.l.s4 1983009808
      %v6872 = vunpack.c.0.s8 %v6871
      %v6873 = vlaneseq
      %v6874 = vshrl.u32 %v6873, 7
      %v6875 = vsub.s32 %v6872, %v6874
      %v6876 = vrot.slane %v6868, %v6875
      %v6878 = vunpack.c.l.s4 1983009808
      %v6879 = vunpack.c.0.s8 %v6878
      %v6880 = vlaneseq
      %v6881 = vshrl.u32 %v6880, 7
      %v6882 = vsub.s32 %v6879, %v6881
      %v6883 = vrot.slane %v6869, %v6882
      %v6884 = vcombine.low %v5622, %v5638
      %v6885 = vcombine.high %v5622, %v5638
      %v6887 = vunpack.c.l.s4 1983009808
      %v6888 = vunpack.c.0.s8 %v6887
      %v6889 = vlaneseq
      %v6890 = vshrl.u32 %v6889, 7
      %v6891 = vsub.s32 %v6888, %v6890
      %v6892 = vrot.slane %v6884, %v6891
      %v6894 = vunpack.c.l.s4 1983009808
      %v6895 = vunpack.c.0.s8 %v6894
      %v6896 = vlaneseq
      %v6897 = vshrl.u32 %v6896, 7
      %v6898 = vsub.s32 %v6895, %v6897
      %v6899 = vrot.slane %v6885, %v6898
      %v6900 = vcombine.low %v6876, %v6892
      %v6901 = vcombine.high %v6876, %v6892
      %v6903 = vunpack.c.l.s4 1934713408
      %v6904 = vunpack.c.0.s8 %v6903
      %v6905 = vlaneseq
      %v6906 = vshrl.u32 %v6905, 7
      %v6907 = vsub.s32 %v6904, %v6906
      %v6908 = vrot.slane %v6900, %v6907
      %v6910 = vunpack.c.l.s4 1934713408
      %v6911 = vunpack.c.0.s8 %v6910
      %v6912 = vlaneseq
      %v6913 = vshrl.u32 %v6912, 7
      %v6914 = vsub.s32 %v6911, %v6913
      %v6915 = vrot.slane %v6901, %v6914
      %v6916 = vcombine.low %v6883, %v6899
      %v6917 = vcombine.high %v6883, %v6899
      %v6919 = vunpack.c.l.s4 1934713408
      %v6920 = vunpack.c.0.s8 %v6919
      %v6921 = vlaneseq
      %v6922 = vshrl.u32 %v6921, 7
      %v6923 = vsub.s32 %v6920, %v6922
      %v6924 = vrot.slane %v6916, %v6923
      %v6926 = vunpack.c.l.s4 1934713408
      %v6927 = vunpack.c.0.s8 %v6926
      %v6928 = vlaneseq
      %v6929 = vshrl.u32 %v6928, 7
      %v6930 = vsub.s32 %v6927, %v6929
      %v6931 = vrot.slane %v6917, %v6930
      %v6932 = vcombine.high %v6908, 0
      %v6933 = vcombine.high %v6915, 0
      %v6934 = vcombine.high %v6924, 0
      %v6935 = vcombine.high %v6931, 0
      %v6936 = vcombine.low %v5618, %v5634
      %v6937 = vcombine.high %v5618, %v5634
      %v6939 = vunpack.c.l.s4 1983009808
      %v6940 = vunpack.c.0.s8 %v6939
      %v6941 = vlaneseq
      %v6942 = vshrl.u32 %v6941, 7
      %v6943 = vsub.s32 %v6940, %v6942
      %v6944 = vrot.slane %v6936, %v6943
      %v6946 = vunpack.c.l.s4 1983009808
      %v6947 = vunpack.c.0.s8 %v6946
      %v6948 = vlaneseq
      %v6949 = vshrl.u32 %v6948, 7
      %v6950 = vsub.s32 %v6947, %v6949
      %v6951 = vrot.slane %v6937, %v6950
      %v6952 = vcombine.low %v5626, %v5642
      %v6953 = vcombine.high %v5626, %v5642
      %v6955 = vunpack.c.l.s4 1983009808
      %v6956 = vunpack.c.0.s8 %v6955
      %v6957 = vlaneseq
      %v6958 = vshrl.u32 %v6957, 7
      %v6959 = vsub.s32 %v6956, %v6958
      %v6960 = vrot.slane %v6952, %v6959
      %v6962 = vunpack.c.l.s4 1983009808
      %v6963 = vunpack.c.0.s8 %v6962
      %v6964 = vlaneseq
      %v6965 = vshrl.u32 %v6964, 7
      %v6966 = vsub.s32 %v6963, %v6965
      %v6967 = vrot.slane %v6953, %v6966
      %v6968 = vcombine.low %v6944, %v6960
      %v6969 = vcombine.high %v6944, %v6960
      %v6971 = vunpack.c.l.s4 1934713408
      %v6972 = vunpack.c.0.s8 %v6971
      %v6973 = vlaneseq
      %v6974 = vshrl.u32 %v6973, 7
      %v6975 = vsub.s32 %v6972, %v6974
      %v6976 = vrot.slane %v6968, %v6975
      %v6978 = vunpack.c.l.s4 1934713408
      %v6979 = vunpack.c.0.s8 %v6978
      %v6980 = vlaneseq
      %v6981 = vshrl.u32 %v6980, 7
      %v6982 = vsub.s32 %v6979, %v6981
      %v6983 = vrot.slane %v6969, %v6982
      %v6984 = vcombine.low %v6951, %v6967
      %v6985 = vcombine.high %v6951, %v6967
      %v6987 = vunpack.c.l.s4 1934713408
      %v6988 = vunpack.c.0.s8 %v6987
      %v6989 = vlaneseq
      %v6990 = vshrl.u32 %v6989, 7
      %v6991 = vsub.s32 %v6988, %v6990
      %v6992 = vrot.slane %v6984, %v6991
      %v6994 = vunpack.c.l.s4 1934713408
      %v6995 = vunpack.c.0.s8 %v6994
      %v6996 = vlaneseq
      %v6997 = vshrl.u32 %v6996, 7
      %v6998 = vsub.s32 %v6995, %v6997
      %v6999 = vrot.slane %v6985, %v6998
      %v7000 = vcombine.high %v6976, 0
      %v7001 = vcombine.high %v6983, 0
      %v7002 = vcombine.high %v6992, 0
      %v7003 = vcombine.high %v6999, 0
      %7004 = vxpose.xlu0.c.b16.start [1/8] %v5772, 128
      %7005 = vxpose.xlu0.c.b16.cont [2/8] %v6044, 128
      %7006 = vxpose.xlu0.c.b16.cont [3/8] %v6228, 128
      %7007 = vxpose.xlu0.c.b16.cont [4/8] 0, 128
      %7008 = vxpose.xlu0.c.b16.cont [5/8] 0, 128
      %7009 = vxpose.xlu0.c.b16.cont [6/8] 0, 128
      %7010 = vxpose.xlu0.c.b16.cont [7/8] 0, 128
      %7011 = vxpose.xlu0.c.b16.end [8/8] 0, 128
      %v7012 = vpop.trf.xlu0
      %v7013 = vpop.trf.xlu0
      %v7014 = vpop.trf.xlu0
      %v7015 = vpop.trf.xlu0
      %v7016 = vpop.trf.xlu0
      %v7017 = vpop.trf.xlu0
      %v7018 = vpop.trf.xlu0
      %v7019 = vpop.trf.xlu0
      %7020 = vxpose.xlu0.c.b16.start [1/8] %v5908, 128
      %7021 = vxpose.xlu0.c.b16.cont [2/8] %v6180, 128
      %7022 = vxpose.xlu0.c.b16.cont [3/8] %v6296, 128
      %7023 = vxpose.xlu0.c.b16.cont [4/8] 0, 128
      %7024 = vxpose.xlu0.c.b16.cont [5/8] 0, 128
      %7025 = vxpose.xlu0.c.b16.cont [6/8] 0, 128
      %7026 = vxpose.xlu0.c.b16.cont [7/8] 0, 128
      %7027 = vxpose.xlu0.c.b16.end [8/8] 0, 128
      %v7028 = vpop.trf.xlu0
      %v7029 = vpop.trf.xlu0
      %v7030 = vpop.trf.xlu0
      %v7031 = vpop.trf.xlu0
      %v7032 = vpop.trf.xlu0
      %v7033 = vpop.trf.xlu0
      %v7034 = vpop.trf.xlu0
      %v7035 = vpop.trf.xlu0
      %7036 = vxpose.xlu0.c.b16.start [1/8] %v5773, 128
      %7037 = vxpose.xlu0.c.b16.cont [2/8] %v6045, 128
      %7038 = vxpose.xlu0.c.b16.cont [3/8] %v6252, 128
      %7039 = vxpose.xlu0.c.b16.cont [4/8] 0, 128
      %7040 = vxpose.xlu0.c.b16.cont [5/8] 0, 128
      %7041 = vxpose.xlu0.c.b16.cont [6/8] 0, 128
      %7042 = vxpose.xlu0.c.b16.cont [7/8] 0, 128
      %7043 = vxpose.xlu0.c.b16.end [8/8] 0, 128
      %v7044 = vpop.trf.xlu0
      %v7045 = vpop.trf.xlu0
      %v7046 = vpop.trf.xlu0
      %v7047 = vpop.trf.xlu0
      %v7048 = vpop.trf.xlu0
      %v7049 = vpop.trf.xlu0
      %v7050 = vpop.trf.xlu0
      %v7051 = vpop.trf.xlu0
      %7052 = vxpose.xlu0.c.b16.start [1/8] %v5909, 128
      %7053 = vxpose.xlu0.c.b16.cont [2/8] %v6181, 128
      %7054 = vxpose.xlu0.c.b16.cont [3/8] %v6320, 128
      %7055 = vxpose.xlu0.c.b16.cont [4/8] 0, 128
      %7056 = vxpose.xlu0.c.b16.cont [5/8] 0, 128
      %7057 = vxpose.xlu0.c.b16.cont [6/8] 0, 128
      %7058 = vxpose.xlu0.c.b16.cont [7/8] 0, 128
      %7059 = vxpose.xlu0.c.b16.end [8/8] 0, 128
      %v7060 = vpop.trf.xlu0
      %v7061 = vpop.trf.xlu0
      %v7062 = vpop.trf.xlu0
      %v7063 = vpop.trf.xlu0
      %v7064 = vpop.trf.xlu0
      %v7065 = vpop.trf.xlu0
      %v7066 = vpop.trf.xlu0
      %v7067 = vpop.trf.xlu0
      %7068 = vxpose.xlu0.c.b16.start [1/8] %v5774, 128
      %7069 = vxpose.xlu0.c.b16.cont [2/8] %v6046, 128
      %7070 = vxpose.xlu0.c.b16.cont [3/8] %v6235, 128
      %7071 = vxpose.xlu0.c.b16.cont [4/8] 0, 128
      %7072 = vxpose.xlu0.c.b16.cont [5/8] 0, 128
      %7073 = vxpose.xlu0.c.b16.cont [6/8] 0, 128
      %7074 = vxpose.xlu0.c.b16.cont [7/8] 0, 128
      %7075 = vxpose.xlu0.c.b16.end [8/8] 0, 128
      %v7076 = vpop.trf.xlu0
      %v7077 = vpop.trf.xlu0
      %v7078 = vpop.trf.xlu0
      %v7079 = vpop.trf.xlu0
      %v7080 = vpop.trf.xlu0
      %v7081 = vpop.trf.xlu0
      %v7082 = vpop.trf.xlu0
      %v7083 = vpop.trf.xlu0
      %7084 = vxpose.xlu0.c.b16.start [1/8] %v5910, 128
      %7085 = vxpose.xlu0.c.b16.cont [2/8] %v6182, 128
      %7086 = vxpose.xlu0.c.b16.cont [3/8] %v6303, 128
      %7087 = vxpose.xlu0.c.b16.cont [4/8] 0, 128
      %7088 = vxpose.xlu0.c.b16.cont [5/8] 0, 128
      %7089 = vxpose.xlu0.c.b16.cont [6/8] 0, 128
      %7090 = vxpose.xlu0.c.b16.cont [7/8] 0, 128
      %7091 = vxpose.xlu0.c.b16.end [8/8] 0, 128
      %v7092 = vpop.trf.xlu0
      %v7093 = vpop.trf.xlu0
      %v7094 = vpop.trf.xlu0
      %v7095 = vpop.trf.xlu0
      %v7096 = vpop.trf.xlu0
      %v7097 = vpop.trf.xlu0
      %v7098 = vpop.trf.xlu0
      %v7099 = vpop.trf.xlu0
      %7100 = vxpose.xlu0.c.b16.start [1/8] %v5775, 128
      %7101 = vxpose.xlu0.c.b16.cont [2/8] %v6047, 128
      %7102 = vxpose.xlu0.c.b16.cont [3/8] %v6253, 128
      %7103 = vxpose.xlu0.c.b16.cont [4/8] 0, 128
      %7104 = vxpose.xlu0.c.b16.cont [5/8] 0, 128
      %7105 = vxpose.xlu0.c.b16.cont [6/8] 0, 128
      %7106 = vxpose.xlu0.c.b16.cont [7/8] 0, 128
      %7107 = vxpose.xlu0.c.b16.end [8/8] 0, 128
      %v7108 = vpop.trf.xlu0
      %v7109 = vpop.trf.xlu0
      %v7110 = vpop.trf.xlu0
      %v7111 = vpop.trf.xlu0
      %v7112 = vpop.trf.xlu0
      %v7113 = vpop.trf.xlu0
      %v7114 = vpop.trf.xlu0
      %v7115 = vpop.trf.xlu0
      %7116 = vxpose.xlu0.c.b16.start [1/8] %v5911, 128
      %7117 = vxpose.xlu0.c.b16.cont [2/8] %v6183, 128
      %7118 = vxpose.xlu0.c.b16.cont [3/8] %v6321, 128
      %7119 = vxpose.xlu0.c.b16.cont [4/8] 0, 128
      %7120 = vxpose.xlu0.c.b16.cont [5/8] 0, 128
      %7121 = vxpose.xlu0.c.b16.cont [6/8] 0, 128
      %7122 = vxpose.xlu0.c.b16.cont [7/8] 0, 128
      %7123 = vxpose.xlu0.c.b16.end [8/8] 0, 128
      %v7124 = vpop.trf.xlu0
      %v7125 = vpop.trf.xlu0
      %v7126 = vpop.trf.xlu0
      %v7127 = vpop.trf.xlu0
      %v7128 = vpop.trf.xlu0
      %v7129 = vpop.trf.xlu0
      %v7130 = vpop.trf.xlu0
      %v7131 = vpop.trf.xlu0
      %7132 = vxpose.xlu0.c.b16.start [1/8] %v5776, 128
      %7133 = vxpose.xlu0.c.b16.cont [2/8] %v6048, 128
      %7134 = vxpose.xlu0.c.b16.cont [3/8] %v6244, 128
      %7135 = vxpose.xlu0.c.b16.cont [4/8] 0, 128
      %7136 = vxpose.xlu0.c.b16.cont [5/8] 0, 128
      %7137 = vxpose.xlu0.c.b16.cont [6/8] 0, 128
      %7138 = vxpose.xlu0.c.b16.cont [7/8] 0, 128
      %7139 = vxpose.xlu0.c.b16.end [8/8] 0, 128
      %v7140 = vpop.trf.xlu0
      %v7141 = vpop.trf.xlu0
      %v7142 = vpop.trf.xlu0
      %v7143 = vpop.trf.xlu0
      %v7144 = vpop.trf.xlu0
      %v7145 = vpop.trf.xlu0
      %v7146 = vpop.trf.xlu0
      %v7147 = vpop.trf.xlu0
      %7148 = vxpose.xlu0.c.b16.start [1/8] %v5912, 128
      %7149 = vxpose.xlu0.c.b16.cont [2/8] %v6184, 128
      %7150 = vxpose.xlu0.c.b16.cont [3/8] %v6312, 128
      %7151 = vxpose.xlu0.c.b16.cont [4/8] 0, 128
      %7152 = vxpose.xlu0.c.b16.cont [5/8] 0, 128
      %7153 = vxpose.xlu0.c.b16.cont [6/8] 0, 128
      %7154 = vxpose.xlu0.c.b16.cont [7/8] 0, 128
      %7155 = vxpose.xlu0.c.b16.end [8/8] 0, 128
      %v7156 = vpop.trf.xlu0
      %v7157 = vpop.trf.xlu0
      %v7158 = vpop.trf.xlu0
      %v7159 = vpop.trf.xlu0
      %v7160 = vpop.trf.xlu0
      %v7161 = vpop.trf.xlu0
      %v7162 = vpop.trf.xlu0
      %v7163 = vpop.trf.xlu0
      %7164 = vxpose.xlu0.c.b16.start [1/8] %v5777, 128
      %7165 = vxpose.xlu0.c.b16.cont [2/8] %v6049, 128
      %7166 = vxpose.xlu0.c.b16.cont [3/8] %v6254, 128
      %7167 = vxpose.xlu0.c.b16.cont [4/8] 0, 128
      %7168 = vxpose.xlu0.c.b16.cont [5/8] 0, 128
      %7169 = vxpose.xlu0.c.b16.cont [6/8] 0, 128
      %7170 = vxpose.xlu0.c.b16.cont [7/8] 0, 128
      %7171 = vxpose.xlu0.c.b16.end [8/8] 0, 128
      %v7172 = vpop.trf.xlu0
      %v7173 = vpop.trf.xlu0
      %v7174 = vpop.trf.xlu0
      %v7175 = vpop.trf.xlu0
      %v7176 = vpop.trf.xlu0
      %v7177 = vpop.trf.xlu0
      %v7178 = vpop.trf.xlu0
      %v7179 = vpop.trf.xlu0
      %7180 = vxpose.xlu0.c.b16.start [1/8] %v5913, 128
      %7181 = vxpose.xlu0.c.b16.cont [2/8] %v6185, 128
      %7182 = vxpose.xlu0.c.b16.cont [3/8] %v6322, 128
      %7183 = vxpose.xlu0.c.b16.cont [4/8] 0, 128
      %7184 = vxpose.xlu0.c.b16.cont [5/8] 0, 128
      %7185 = vxpose.xlu0.c.b16.cont [6/8] 0, 128
      %7186 = vxpose.xlu0.c.b16.cont [7/8] 0, 128
      %7187 = vxpose.xlu0.c.b16.end [8/8] 0, 128
      %v7188 = vpop.trf.xlu0
      %v7189 = vpop.trf.xlu0
      %v7190 = vpop.trf.xlu0
      %v7191 = vpop.trf.xlu0
      %v7192 = vpop.trf.xlu0
      %v7193 = vpop.trf.xlu0
      %v7194 = vpop.trf.xlu0
      %v7195 = vpop.trf.xlu0
      %7196 = vxpose.xlu0.c.b16.start [1/8] %v5778, 128
      %7197 = vxpose.xlu0.c.b16.cont [2/8] %v6050, 128
      %7198 = vxpose.xlu0.c.b16.cont [3/8] %v6251, 128
      %7199 = vxpose.xlu0.c.b16.cont [4/8] 0, 128
      %7200 = vxpose.xlu0.c.b16.cont [5/8] 0, 128
      %7201 = vxpose.xlu0.c.b16.cont [6/8] 0, 128
      %7202 = vxpose.xlu0.c.b16.cont [7/8] 0, 128
      %7203 = vxpose.xlu0.c.b16.end [8/8] 0, 128
      %v7204 = vpop.trf.xlu0
      %v7205 = vpop.trf.xlu0
      %v7206 = vpop.trf.xlu0
      %v7207 = vpop.trf.xlu0
      %v7208 = vpop.trf.xlu0
      %v7209 = vpop.trf.xlu0
      %v7210 = vpop.trf.xlu0
      %v7211 = vpop.trf.xlu0
      %7212 = vxpose.xlu0.c.b16.start [1/8] %v5914, 128
      %7213 = vxpose.xlu0.c.b16.cont [2/8] %v6186, 128
      %7214 = vxpose.xlu0.c.b16.cont [3/8] %v6319, 128
      %7215 = vxpose.xlu0.c.b16.cont [4/8] 0, 128
      %7216 = vxpose.xlu0.c.b16.cont [5/8] 0, 128
      %7217 = vxpose.xlu0.c.b16.cont [6/8] 0, 128
      %7218 = vxpose.xlu0.c.b16.cont [7/8] 0, 128
      %7219 = vxpose.xlu0.c.b16.end [8/8] 0, 128
      %v7220 = vpop.trf.xlu0
      %v7221 = vpop.trf.xlu0
      %v7222 = vpop.trf.xlu0
      %v7223 = vpop.trf.xlu0
      %v7224 = vpop.trf.xlu0
      %v7225 = vpop.trf.xlu0
      %v7226 = vpop.trf.xlu0
      %v7227 = vpop.trf.xlu0
      %7228 = vxpose.xlu0.c.b16.start [1/8] %v5779, 128
      %7229 = vxpose.xlu0.c.b16.cont [2/8] %v6051, 128
      %7230 = vxpose.xlu0.c.b16.cont [3/8] %v6255, 128
      %7231 = vxpose.xlu0.c.b16.cont [4/8] 0, 128
      %7232 = vxpose.xlu0.c.b16.cont [5/8] 0, 128
      %7233 = vxpose.xlu0.c.b16.cont [6/8] 0, 128
      %7234 = vxpose.xlu0.c.b16.cont [7/8] 0, 128
      %7235 = vxpose.xlu0.c.b16.end [8/8] 0, 128
      %v7236 = vpop.trf.xlu0
      %v7237 = vpop.trf.xlu0
      %v7238 = vpop.trf.xlu0
      %v7239 = vpop.trf.xlu0
      %v7240 = vpop.trf.xlu0
      %v7241 = vpop.trf.xlu0
      %v7242 = vpop.trf.xlu0
      %v7243 = vpop.trf.xlu0
      %7244 = vxpose.xlu0.c.b16.start [1/8] %v5915, 128
      %7245 = vxpose.xlu0.c.b16.cont [2/8] %v6187, 128
      %7246 = vxpose.xlu0.c.b16.cont [3/8] %v6323, 128
      %7247 = vxpose.xlu0.c.b16.cont [4/8] 0, 128
      %7248 = vxpose.xlu0.c.b16.cont [5/8] 0, 128
      %7249 = vxpose.xlu0.c.b16.cont [6/8] 0, 128
      %7250 = vxpose.xlu0.c.b16.cont [7/8] 0, 128
      %7251 = vxpose.xlu0.c.b16.end [8/8] 0, 128
      %v7252 = vpop.trf.xlu0
      %v7253 = vpop.trf.xlu0
      %v7254 = vpop.trf.xlu0
      %v7255 = vpop.trf.xlu0
      %v7256 = vpop.trf.xlu0
      %v7257 = vpop.trf.xlu0
      %v7258 = vpop.trf.xlu0
      %v7259 = vpop.trf.xlu0
      %7260 = vxpose.xlu0.c.b16.start [1/8] %v6452, 128
      %7261 = vxpose.xlu0.c.b16.cont [2/8] %v6724, 128
      %7262 = vxpose.xlu0.c.b16.cont [3/8] %v6908, 128
      %7263 = vxpose.xlu0.c.b16.cont [4/8] 0, 128
      %7264 = vxpose.xlu0.c.b16.cont [5/8] 0, 128
      %7265 = vxpose.xlu0.c.b16.cont [6/8] 0, 128
      %7266 = vxpose.xlu0.c.b16.cont [7/8] 0, 128
      %7267 = vxpose.xlu0.c.b16.end [8/8] 0, 128
      %v7268 = vpop.trf.xlu0
      %v7269 = vpop.trf.xlu0
      %v7270 = vpop.trf.xlu0
      %v7271 = vpop.trf.xlu0
      %v7272 = vpop.trf.xlu0
      %v7273 = vpop.trf.xlu0
      %v7274 = vpop.trf.xlu0
      %v7275 = vpop.trf.xlu0
      %7276 = vxpose.xlu0.c.b16.start [1/8] %v6588, 128
      %7277 = vxpose.xlu0.c.b16.cont [2/8] %v6860, 128
      %7278 = vxpose.xlu0.c.b16.cont [3/8] %v6976, 128
      %7279 = vxpose.xlu0.c.b16.cont [4/8] 0, 128
      %7280 = vxpose.xlu0.c.b16.cont [5/8] 0, 128
      %7281 = vxpose.xlu0.c.b16.cont [6/8] 0, 128
      %7282 = vxpose.xlu0.c.b16.cont [7/8] 0, 128
      %7283 = vxpose.xlu0.c.b16.end [8/8] 0, 128
      %v7284 = vpop.trf.xlu0
      %v7285 = vpop.trf.xlu0
      %v7286 = vpop.trf.xlu0
      %v7287 = vpop.trf.xlu0
      %v7288 = vpop.trf.xlu0
      %v7289 = vpop.trf.xlu0
      %v7290 = vpop.trf.xlu0
      %v7291 = vpop.trf.xlu0
      %7292 = vxpose.xlu0.c.b16.start [1/8] %v6453, 128
      %7293 = vxpose.xlu0.c.b16.cont [2/8] %v6725, 128
      %7294 = vxpose.xlu0.c.b16.cont [3/8] %v6932, 128
      %7295 = vxpose.xlu0.c.b16.cont [4/8] 0, 128
      %7296 = vxpose.xlu0.c.b16.cont [5/8] 0, 128
      %7297 = vxpose.xlu0.c.b16.cont [6/8] 0, 128
      %7298 = vxpose.xlu0.c.b16.cont [7/8] 0, 128
      %7299 = vxpose.xlu0.c.b16.end [8/8] 0, 128
      %v7300 = vpop.trf.xlu0
      %v7301 = vpop.trf.xlu0
      %v7302 = vpop.trf.xlu0
      %v7303 = vpop.trf.xlu0
      %v7304 = vpop.trf.xlu0
      %v7305 = vpop.trf.xlu0
      %v7306 = vpop.trf.xlu0
      %v7307 = vpop.trf.xlu0
      %7308 = vxpose.xlu0.c.b16.start [1/8] %v6589, 128
      %7309 = vxpose.xlu0.c.b16.cont [2/8] %v6861, 128
      %7310 = vxpose.xlu0.c.b16.cont [3/8] %v7000, 128
      %7311 = vxpose.xlu0.c.b16.cont [4/8] 0, 128
      %7312 = vxpose.xlu0.c.b16.cont [5/8] 0, 128
      %7313 = vxpose.xlu0.c.b16.cont [6/8] 0, 128
      %7314 = vxpose.xlu0.c.b16.cont [7/8] 0, 128
      %7315 = vxpose.xlu0.c.b16.end [8/8] 0, 128
      %v7316 = vpop.trf.xlu0
      %v7317 = vpop.trf.xlu0
      %v7318 = vpop.trf.xlu0
      %v7319 = vpop.trf.xlu0
      %v7320 = vpop.trf.xlu0
      %v7321 = vpop.trf.xlu0
      %v7322 = vpop.trf.xlu0
      %v7323 = vpop.trf.xlu0
      %7324 = vxpose.xlu0.c.b16.start [1/8] %v6454, 128
      %7325 = vxpose.xlu0.c.b16.cont [2/8] %v6726, 128
      %7326 = vxpose.xlu0.c.b16.cont [3/8] %v6915, 128
      %7327 = vxpose.xlu0.c.b16.cont [4/8] 0, 128
      %7328 = vxpose.xlu0.c.b16.cont [5/8] 0, 128
      %7329 = vxpose.xlu0.c.b16.cont [6/8] 0, 128
      %7330 = vxpose.xlu0.c.b16.cont [7/8] 0, 128
      %7331 = vxpose.xlu0.c.b16.end [8/8] 0, 128
      %v7332 = vpop.trf.xlu0
      %v7333 = vpop.trf.xlu0
      %v7334 = vpop.trf.xlu0
      %v7335 = vpop.trf.xlu0
      %v7336 = vpop.trf.xlu0
      %v7337 = vpop.trf.xlu0
      %v7338 = vpop.trf.xlu0
      %v7339 = vpop.trf.xlu0
      %7340 = vxpose.xlu0.c.b16.start [1/8] %v6590, 128
      %7341 = vxpose.xlu0.c.b16.cont [2/8] %v6862, 128
      %7342 = vxpose.xlu0.c.b16.cont [3/8] %v6983, 128
      %7343 = vxpose.xlu0.c.b16.cont [4/8] 0, 128
      %7344 = vxpose.xlu0.c.b16.cont [5/8] 0, 128
      %7345 = vxpose.xlu0.c.b16.cont [6/8] 0, 128
      %7346 = vxpose.xlu0.c.b16.cont [7/8] 0, 128
      %7347 = vxpose.xlu0.c.b16.end [8/8] 0, 128
      %v7348 = vpop.trf.xlu0
      %v7349 = vpop.trf.xlu0
      %v7350 = vpop.trf.xlu0
      %v7351 = vpop.trf.xlu0
      %v7352 = vpop.trf.xlu0
      %v7353 = vpop.trf.xlu0
      %v7354 = vpop.trf.xlu0
      %v7355 = vpop.trf.xlu0
      %7356 = vxpose.xlu0.c.b16.start [1/8] %v6455, 128
      %7357 = vxpose.xlu0.c.b16.cont [2/8] %v6727, 128
      %7358 = vxpose.xlu0.c.b16.cont [3/8] %v6933, 128
      %7359 = vxpose.xlu0.c.b16.cont [4/8] 0, 128
      %7360 = vxpose.xlu0.c.b16.cont [5/8] 0, 128
      %7361 = vxpose.xlu0.c.b16.cont [6/8] 0, 128
      %7362 = vxpose.xlu0.c.b16.cont [7/8] 0, 128
      %7363 = vxpose.xlu0.c.b16.end [8/8] 0, 128
      %v7364 = vpop.trf.xlu0
      %v7365 = vpop.trf.xlu0
      %v7366 = vpop.trf.xlu0
      %v7367 = vpop.trf.xlu0
      %v7368 = vpop.trf.xlu0
      %v7369 = vpop.trf.xlu0
      %v7370 = vpop.trf.xlu0
      %v7371 = vpop.trf.xlu0
      %7372 = vxpose.xlu0.c.b16.start [1/8] %v6591, 128
      %7373 = vxpose.xlu0.c.b16.cont [2/8] %v6863, 128
      %7374 = vxpose.xlu0.c.b16.cont [3/8] %v7001, 128
      %7375 = vxpose.xlu0.c.b16.cont [4/8] 0, 128
      %7376 = vxpose.xlu0.c.b16.cont [5/8] 0, 128
      %7377 = vxpose.xlu0.c.b16.cont [6/8] 0, 128
      %7378 = vxpose.xlu0.c.b16.cont [7/8] 0, 128
      %7379 = vxpose.xlu0.c.b16.end [8/8] 0, 128
      %v7380 = vpop.trf.xlu0
      %v7381 = vpop.trf.xlu0
      %v7382 = vpop.trf.xlu0
      %v7383 = vpop.trf.xlu0
      %v7384 = vpop.trf.xlu0
      %v7385 = vpop.trf.xlu0
      %v7386 = vpop.trf.xlu0
      %v7387 = vpop.trf.xlu0
      %7388 = vxpose.xlu0.c.b16.start [1/8] %v6456, 128
      %7389 = vxpose.xlu0.c.b16.cont [2/8] %v6728, 128
      %7390 = vxpose.xlu0.c.b16.cont [3/8] %v6924, 128
      %7391 = vxpose.xlu0.c.b16.cont [4/8] 0, 128
      %7392 = vxpose.xlu0.c.b16.cont [5/8] 0, 128
      %7393 = vxpose.xlu0.c.b16.cont [6/8] 0, 128
      %7394 = vxpose.xlu0.c.b16.cont [7/8] 0, 128
      %7395 = vxpose.xlu0.c.b16.end [8/8] 0, 128
      %v7396 = vpop.trf.xlu0
      %v7397 = vpop.trf.xlu0
      %v7398 = vpop.trf.xlu0
      %v7399 = vpop.trf.xlu0
      %v7400 = vpop.trf.xlu0
      %v7401 = vpop.trf.xlu0
      %v7402 = vpop.trf.xlu0
      %v7403 = vpop.trf.xlu0
      %7404 = vxpose.xlu0.c.b16.start [1/8] %v6592, 128
      %7405 = vxpose.xlu0.c.b16.cont [2/8] %v6864, 128
      %7406 = vxpose.xlu0.c.b16.cont [3/8] %v6992, 128
      %7407 = vxpose.xlu0.c.b16.cont [4/8] 0, 128
      %7408 = vxpose.xlu0.c.b16.cont [5/8] 0, 128
      %7409 = vxpose.xlu0.c.b16.cont [6/8] 0, 128
      %7410 = vxpose.xlu0.c.b16.cont [7/8] 0, 128
      %7411 = vxpose.xlu0.c.b16.end [8/8] 0, 128
      %v7412 = vpop.trf.xlu0
      %v7413 = vpop.trf.xlu0
      %v7414 = vpop.trf.xlu0
      %v7415 = vpop.trf.xlu0
      %v7416 = vpop.trf.xlu0
      %v7417 = vpop.trf.xlu0
      %v7418 = vpop.trf.xlu0
      %v7419 = vpop.trf.xlu0
      %7420 = vxpose.xlu0.c.b16.start [1/8] %v6457, 128
      %7421 = vxpose.xlu0.c.b16.cont [2/8] %v6729, 128
      %7422 = vxpose.xlu0.c.b16.cont [3/8] %v6934, 128
      %7423 = vxpose.xlu0.c.b16.cont [4/8] 0, 128
      %7424 = vxpose.xlu0.c.b16.cont [5/8] 0, 128
      %7425 = vxpose.xlu0.c.b16.cont [6/8] 0, 128
      %7426 = vxpose.xlu0.c.b16.cont [7/8] 0, 128
      %7427 = vxpose.xlu0.c.b16.end [8/8] 0, 128
      %v7428 = vpop.trf.xlu0
      %v7429 = vpop.trf.xlu0
      %v7430 = vpop.trf.xlu0
      %v7431 = vpop.trf.xlu0
      %v7432 = vpop.trf.xlu0
      %v7433 = vpop.trf.xlu0
      %v7434 = vpop.trf.xlu0
      %v7435 = vpop.trf.xlu0
      %7436 = vxpose.xlu0.c.b16.start [1/8] %v6593, 128
      %7437 = vxpose.xlu0.c.b16.cont [2/8] %v6865, 128
      %7438 = vxpose.xlu0.c.b16.cont [3/8] %v7002, 128
      %7439 = vxpose.xlu0.c.b16.cont [4/8] 0, 128
      %7440 = vxpose.xlu0.c.b16.cont [5/8] 0, 128
      %7441 = vxpose.xlu0.c.b16.cont [6/8] 0, 128
      %7442 = vxpose.xlu0.c.b16.cont [7/8] 0, 128
      %7443 = vxpose.xlu0.c.b16.end [8/8] 0, 128
      %v7444 = vpop.trf.xlu0
      %v7445 = vpop.trf.xlu0
      %v7446 = vpop.trf.xlu0
      %v7447 = vpop.trf.xlu0
      %v7448 = vpop.trf.xlu0
      %v7449 = vpop.trf.xlu0
      %v7450 = vpop.trf.xlu0
      %v7451 = vpop.trf.xlu0
      %7452 = vxpose.xlu0.c.b16.start [1/8] %v6458, 128
      %7453 = vxpose.xlu0.c.b16.cont [2/8] %v6730, 128
      %7454 = vxpose.xlu0.c.b16.cont [3/8] %v6931, 128
      %7455 = vxpose.xlu0.c.b16.cont [4/8] 0, 128
      %7456 = vxpose.xlu0.c.b16.cont [5/8] 0, 128
      %7457 = vxpose.xlu0.c.b16.cont [6/8] 0, 128
      %7458 = vxpose.xlu0.c.b16.cont [7/8] 0, 128
      %7459 = vxpose.xlu0.c.b16.end [8/8] 0, 128
      %v7460 = vpop.trf.xlu0
      %v7461 = vpop.trf.xlu0
      %v7462 = vpop.trf.xlu0
      %v7463 = vpop.trf.xlu0
      %v7464 = vpop.trf.xlu0
      %v7465 = vpop.trf.xlu0
      %v7466 = vpop.trf.xlu0
      %v7467 = vpop.trf.xlu0
      %7468 = vxpose.xlu0.c.b16.start [1/8] %v6594, 128
      %7469 = vxpose.xlu0.c.b16.cont [2/8] %v6866, 128
      %7470 = vxpose.xlu0.c.b16.cont [3/8] %v6999, 128
      %7471 = vxpose.xlu0.c.b16.cont [4/8] 0, 128
      %7472 = vxpose.xlu0.c.b16.cont [5/8] 0, 128
      %7473 = vxpose.xlu0.c.b16.cont [6/8] 0, 128
      %7474 = vxpose.xlu0.c.b16.cont [7/8] 0, 128
      %7475 = vxpose.xlu0.c.b16.end [8/8] 0, 128
      %v7476 = vpop.trf.xlu0
      %v7477 = vpop.trf.xlu0
      %v7478 = vpop.trf.xlu0
      %v7479 = vpop.trf.xlu0
      %v7480 = vpop.trf.xlu0
      %v7481 = vpop.trf.xlu0
      %v7482 = vpop.trf.xlu0
      %v7483 = vpop.trf.xlu0
      %7484 = vxpose.xlu0.c.b16.start [1/8] %v6459, 128
      %7485 = vxpose.xlu0.c.b16.cont [2/8] %v6731, 128
      %7486 = vxpose.xlu0.c.b16.cont [3/8] %v6935, 128
      %7487 = vxpose.xlu0.c.b16.cont [4/8] 0, 128
      %7488 = vxpose.xlu0.c.b16.cont [5/8] 0, 128
      %7489 = vxpose.xlu0.c.b16.cont [6/8] 0, 128
      %7490 = vxpose.xlu0.c.b16.cont [7/8] 0, 128
      %7491 = vxpose.xlu0.c.b16.end [8/8] 0, 128
      %v7492 = vpop.trf.xlu0
      %v7493 = vpop.trf.xlu0
      %v7494 = vpop.trf.xlu0
      %v7495 = vpop.trf.xlu0
      %v7496 = vpop.trf.xlu0
      %v7497 = vpop.trf.xlu0
      %v7498 = vpop.trf.xlu0
      %v7499 = vpop.trf.xlu0
      %7500 = vxpose.xlu0.c.b16.start [1/8] %v6595, 128
      %7501 = vxpose.xlu0.c.b16.cont [2/8] %v6867, 128
      %7502 = vxpose.xlu0.c.b16.cont [3/8] %v7003, 128
      %7503 = vxpose.xlu0.c.b16.cont [4/8] 0, 128
      %7504 = vxpose.xlu0.c.b16.cont [5/8] 0, 128
      %7505 = vxpose.xlu0.c.b16.cont [6/8] 0, 128
      %7506 = vxpose.xlu0.c.b16.cont [7/8] 0, 128
      %7507 = vxpose.xlu0.c.b16.end [8/8] 0, 128
      %v7508 = vpop.trf.xlu0
      %v7509 = vpop.trf.xlu0
      %v7510 = vpop.trf.xlu0
      %v7511 = vpop.trf.xlu0
      %v7512 = vpop.trf.xlu0
      %v7513 = vpop.trf.xlu0
      %v7514 = vpop.trf.xlu0
      %v7515 = vpop.trf.xlu0
      %v7516 = vcombine.low %v7012, %v7076
      %v7518 = vunpack.c.l.s4 1983009808
      %v7519 = vunpack.c.0.s8 %v7518
      %v7520 = vlaneseq
      %v7521 = vshrl.u32 %v7520, 7
      %v7522 = vsub.s32 %v7519, %v7521
      %v7523 = vrot.slane %v7516, %v7522
      %v7524 = vcombine.low %v7044, %v7108
      %v7526 = vunpack.c.l.s4 1983009808
      %v7527 = vunpack.c.0.s8 %v7526
      %v7528 = vlaneseq
      %v7529 = vshrl.u32 %v7528, 7
      %v7530 = vsub.s32 %v7527, %v7529
      %v7531 = vrot.slane %v7524, %v7530
      %v7532 = vcombine.low %v7140, %v7204
      %v7534 = vunpack.c.l.s4 1983009808
      %v7535 = vunpack.c.0.s8 %v7534
      %v7536 = vlaneseq
      %v7537 = vshrl.u32 %v7536, 7
      %v7538 = vsub.s32 %v7535, %v7537
      %v7539 = vrot.slane %v7532, %v7538
      %v7540 = vcombine.low %v7172, %v7236
      %v7542 = vunpack.c.l.s4 1983009808
      %v7543 = vunpack.c.0.s8 %v7542
      %v7544 = vlaneseq
      %v7545 = vshrl.u32 %v7544, 7
      %v7546 = vsub.s32 %v7543, %v7545
      %v7547 = vrot.slane %v7540, %v7546
      %v7548 = vcombine.low %v7523, %v7531
      %v7550 = vunpack.c.l.s4 1934713408
      %v7551 = vunpack.c.0.s8 %v7550
      %v7552 = vlaneseq
      %v7553 = vshrl.u32 %v7552, 7
      %v7554 = vsub.s32 %v7551, %v7553
      %v7555 = vrot.slane %v7548, %v7554
      %v7556 = vcombine.low %v7539, %v7547
      %v7558 = vunpack.c.l.s4 1934713408
      %v7559 = vunpack.c.0.s8 %v7558
      %v7560 = vlaneseq
      %v7561 = vshrl.u32 %v7560, 7
      %v7562 = vsub.s32 %v7559, %v7561
      %v7563 = vrot.slane %v7556, %v7562
      %v7564 = vcombine.low %v7555, %v7563
      %v7565 = vcombine.high %v7555, %v7563
      %v7566 = vcombine.low %v7028, %v7092
      %v7568 = vunpack.c.l.s4 1983009808
      %v7569 = vunpack.c.0.s8 %v7568
      %v7570 = vlaneseq
      %v7571 = vshrl.u32 %v7570, 7
      %v7572 = vsub.s32 %v7569, %v7571
      %v7573 = vrot.slane %v7566, %v7572
      %v7574 = vcombine.low %v7060, %v7124
      %v7576 = vunpack.c.l.s4 1983009808
      %v7577 = vunpack.c.0.s8 %v7576
      %v7578 = vlaneseq
      %v7579 = vshrl.u32 %v7578, 7
      %v7580 = vsub.s32 %v7577, %v7579
      %v7581 = vrot.slane %v7574, %v7580
      %v7582 = vcombine.low %v7156, %v7220
      %v7584 = vunpack.c.l.s4 1983009808
      %v7585 = vunpack.c.0.s8 %v7584
      %v7586 = vlaneseq
      %v7587 = vshrl.u32 %v7586, 7
      %v7588 = vsub.s32 %v7585, %v7587
      %v7589 = vrot.slane %v7582, %v7588
      %v7590 = vcombine.low %v7188, %v7252
      %v7592 = vunpack.c.l.s4 1983009808
      %v7593 = vunpack.c.0.s8 %v7592
      %v7594 = vlaneseq
      %v7595 = vshrl.u32 %v7594, 7
      %v7596 = vsub.s32 %v7593, %v7595
      %v7597 = vrot.slane %v7590, %v7596
      %v7598 = vcombine.low %v7573, %v7581
      %v7600 = vunpack.c.l.s4 1934713408
      %v7601 = vunpack.c.0.s8 %v7600
      %v7602 = vlaneseq
      %v7603 = vshrl.u32 %v7602, 7
      %v7604 = vsub.s32 %v7601, %v7603
      %v7605 = vrot.slane %v7598, %v7604
      %v7606 = vcombine.low %v7589, %v7597
      %v7608 = vunpack.c.l.s4 1934713408
      %v7609 = vunpack.c.0.s8 %v7608
      %v7610 = vlaneseq
      %v7611 = vshrl.u32 %v7610, 7
      %v7612 = vsub.s32 %v7609, %v7611
      %v7613 = vrot.slane %v7606, %v7612
      %v7614 = vcombine.low %v7605, %v7613
      %v7615 = vcombine.high %v7605, %v7613
      %v7616 = vcombine.low %v7268, %v7332
      %v7618 = vunpack.c.l.s4 1983009808
      %v7619 = vunpack.c.0.s8 %v7618
      %v7620 = vlaneseq
      %v7621 = vshrl.u32 %v7620, 7
      %v7622 = vsub.s32 %v7619, %v7621
      %v7623 = vrot.slane %v7616, %v7622
      %v7624 = vcombine.low %v7300, %v7364
      %v7626 = vunpack.c.l.s4 1983009808
      %v7627 = vunpack.c.0.s8 %v7626
      %v7628 = vlaneseq
      %v7629 = vshrl.u32 %v7628, 7
      %v7630 = vsub.s32 %v7627, %v7629
      %v7631 = vrot.slane %v7624, %v7630
      %v7632 = vcombine.low %v7396, %v7460
      %v7634 = vunpack.c.l.s4 1983009808
      %v7635 = vunpack.c.0.s8 %v7634
      %v7636 = vlaneseq
      %v7637 = vshrl.u32 %v7636, 7
      %v7638 = vsub.s32 %v7635, %v7637
      %v7639 = vrot.slane %v7632, %v7638
      %v7640 = vcombine.low %v7428, %v7492
      %v7642 = vunpack.c.l.s4 1983009808
      %v7643 = vunpack.c.0.s8 %v7642
      %v7644 = vlaneseq
      %v7645 = vshrl.u32 %v7644, 7
      %v7646 = vsub.s32 %v7643, %v7645
      %v7647 = vrot.slane %v7640, %v7646
      %v7648 = vcombine.low %v7623, %v7631
      %v7650 = vunpack.c.l.s4 1934713408
      %v7651 = vunpack.c.0.s8 %v7650
      %v7652 = vlaneseq
      %v7653 = vshrl.u32 %v7652, 7
      %v7654 = vsub.s32 %v7651, %v7653
      %v7655 = vrot.slane %v7648, %v7654
      %v7656 = vcombine.low %v7639, %v7647
      %v7658 = vunpack.c.l.s4 1934713408
      %v7659 = vunpack.c.0.s8 %v7658
      %v7660 = vlaneseq
      %v7661 = vshrl.u32 %v7660, 7
      %v7662 = vsub.s32 %v7659, %v7661
      %v7663 = vrot.slane %v7656, %v7662
      %v7664 = vcombine.low %v7655, %v7663
      %v7665 = vcombine.high %v7655, %v7663
      %v7666 = vcombine.low %v7284, %v7348
      %v7668 = vunpack.c.l.s4 1983009808
      %v7669 = vunpack.c.0.s8 %v7668
      %v7670 = vlaneseq
      %v7671 = vshrl.u32 %v7670, 7
      %v7672 = vsub.s32 %v7669, %v7671
      %v7673 = vrot.slane %v7666, %v7672
      %v7674 = vcombine.low %v7316, %v7380
      %v7676 = vunpack.c.l.s4 1983009808
      %v7677 = vunpack.c.0.s8 %v7676
      %v7678 = vlaneseq
      %v7679 = vshrl.u32 %v7678, 7
      %v7680 = vsub.s32 %v7677, %v7679
      %v7681 = vrot.slane %v7674, %v7680
      %v7682 = vcombine.low %v7412, %v7476
      %v7684 = vunpack.c.l.s4 1983009808
      %v7685 = vunpack.c.0.s8 %v7684
      %v7686 = vlaneseq
      %v7687 = vshrl.u32 %v7686, 7
      %v7688 = vsub.s32 %v7685, %v7687
      %v7689 = vrot.slane %v7682, %v7688
      %v7690 = vcombine.low %v7444, %v7508
      %v7692 = vunpack.c.l.s4 1983009808
      %v7693 = vunpack.c.0.s8 %v7692
      %v7694 = vlaneseq
      %v7695 = vshrl.u32 %v7694, 7
      %v7696 = vsub.s32 %v7693, %v7695
      %v7697 = vrot.slane %v7690, %v7696
      %v7698 = vcombine.low %v7673, %v7681
      %v7700 = vunpack.c.l.s4 1934713408
      %v7701 = vunpack.c.0.s8 %v7700
      %v7702 = vlaneseq
      %v7703 = vshrl.u32 %v7702, 7
      %v7704 = vsub.s32 %v7701, %v7703
      %v7705 = vrot.slane %v7698, %v7704
      %v7706 = vcombine.low %v7689, %v7697
      %v7708 = vunpack.c.l.s4 1934713408
      %v7709 = vunpack.c.0.s8 %v7708
      %v7710 = vlaneseq
      %v7711 = vshrl.u32 %v7710, 7
      %v7712 = vsub.s32 %v7709, %v7711
      %v7713 = vrot.slane %v7706, %v7712
      %v7714 = vcombine.low %v7705, %v7713
      %v7715 = vcombine.high %v7705, %v7713
      %v7718 = vpack.i.b16 %v7614, %v7564
      %v7719 = vshrl.u32 %v7564, 16
      %v7720 = vshrl.u32 %v7614, 16
      %v7721 = vpack.i.b16 %v7720, %v7719
      %v7724 = vpack.i.b16 %v7615, %v7565
      %v7725 = vshrl.u32 %v7565, 16
      %v7726 = vshrl.u32 %v7615, 16
      %v7727 = vpack.i.b16 %v7726, %v7725
      %v7730 = vpack.i.b16 %v7714, %v7664
      %v7731 = vshrl.u32 %v7664, 16
      %v7732 = vshrl.u32 %v7714, 16
      %v7733 = vpack.i.b16 %v7732, %v7731
      %v7736 = vpack.i.b16 %v7715, %v7665
      %v7737 = vshrl.u32 %v7665, 16
      %v7738 = vshrl.u32 %v7715, 16
      %v7739 = vpack.i.b16 %v7738, %v7737
      %v7741 = vsel %vm4551, %v7718, 0
      %v7744 = vsel %vm4551, %v7730, 0
      %v7747 = vsel %vm4551, %v4640, 0
      %7749 = vmatprep.subr.bf16.mxu0 0
      %7750 = vmatpush1.bf16.xpose.msra.mxu0 %v7747
      %7751 = vmatprep.subr.bf16.mxu0 0
      %7752 = vmatpush1.bf16.xpose.msra.mxu0 0
      %7753 = vmatprep.subr.bf16.mxu0 0
      %7754 = vmatpush1.bf16.xpose.msra.mxu0 0
      %7755 = vmatprep.subr.bf16.mxu0 0
      %7756 = vmatpush1.bf16.xpose.msra.mxu0 0
      %7757 = vmatprep.subr.bf16.mxu0 0
      %7758 = vmatpush1.bf16.xpose.msra.mxu0 0
      %7759 = vmatprep.subr.bf16.mxu0 0
      %7760 = vmatpush1.bf16.xpose.msra.mxu0 0
      %7761 = vmatprep.subr.bf16.mxu0 0
      %7762 = vmatpush1.bf16.xpose.msra.mxu0 0
      %7763 = vmatprep.subr.bf16.mxu0 0
      %7764 = vmatpush1.bf16.xpose.msra.mxu0 0
      %7765 = vmatprep.subr.bf16.mxu0 0
      %7766 = vmatpush1.bf16.xpose.msra.mxu0 0
      %7767 = vmatprep.subr.bf16.mxu0 0
      %7768 = vmatpush1.bf16.xpose.msra.mxu0 0
      %7769 = vmatprep.subr.bf16.mxu0 0
      %7770 = vmatpush1.bf16.xpose.msra.mxu0 0
      %7771 = vmatprep.subr.bf16.mxu0 0
      %7772 = vmatpush1.bf16.xpose.msra.mxu0 0
      %7773 = vmatprep.subr.bf16.mxu0 0
      %7774 = vmatpush1.bf16.xpose.msra.mxu0 0
      %7775 = vmatprep.subr.bf16.mxu0 0
      %7776 = vmatpush1.bf16.xpose.msra.mxu0 0
      %7777 = vmatprep.subr.bf16.mxu0 0
      %7778 = vmatpush1.bf16.xpose.msra.mxu0 0
      %7779 = vmatprep.subr.bf16.mxu0 0
      %7780 = vmatpush1.bf16.xpose.msra.mxu0 0
      %7781 = vmatprep.mubr.bf16.mxu0 0
      %7782 = vmatmul.mubr.bf16.gmra.mrb[0].mxu0 %v7741
      %v7783 = vpop.f32.mrb[0].mxu0
      %v7784 = vadd.f32 0.0, %v7783
      %v7785 = vpop.f32.mrb[0].mxu0
      %v7786 = vpop.f32.mrb[0].mxu0
      %v7787 = vadd.f32 0.0, %v7786
      %v7788 = vpop.f32.mrb[0].mxu0
      %7789 = vmatprep.mubr.bf16.mxu0 0
      %7790 = vmatmul.mubr.bf16.gmra.mrb[0].mxu0 %v7744
      %v7791 = vpop.f32.mrb[0].mxu0
      %v7792 = vadd.f32 0.0, %v7791
      %v7793 = vpop.f32.mrb[0].mxu0
      %v7794 = vpop.f32.mrb[0].mxu0
      %v7795 = vadd.f32 0.0, %v7794
      %v7796 = vpop.f32.mrb[0].mxu0
      %7797 = vdwg.mxu0
      %v7799 = vsel %vm4551, %v7721, 0
      %v7802 = vsel %vm4551, %v7733, 0
      %v7805 = vsel %vm4551, %v4641, 0
      %7807 = vmatprep.subr.bf16.mxu0 0
      %7808 = vmatpush1.bf16.xpose.msra.mxu0 %v7805
      %7809 = vmatprep.subr.bf16.mxu0 0
      %7810 = vmatpush1.bf16.xpose.msra.mxu0 0
      %7811 = vmatprep.subr.bf16.mxu0 0
      %7812 = vmatpush1.bf16.xpose.msra.mxu0 0
      %7813 = vmatprep.subr.bf16.mxu0 0
      %7814 = vmatpush1.bf16.xpose.msra.mxu0 0
      %7815 = vmatprep.subr.bf16.mxu0 0
      %7816 = vmatpush1.bf16.xpose.msra.mxu0 0
      %7817 = vmatprep.subr.bf16.mxu0 0
      %7818 = vmatpush1.bf16.xpose.msra.mxu0 0
      %7819 = vmatprep.subr.bf16.mxu0 0
      %7820 = vmatpush1.bf16.xpose.msra.mxu0 0
      %7821 = vmatprep.subr.bf16.mxu0 0
      %7822 = vmatpush1.bf16.xpose.msra.mxu0 0
      %7823 = vmatprep.subr.bf16.mxu0 0
      %7824 = vmatpush1.bf16.xpose.msra.mxu0 0
      %7825 = vmatprep.subr.bf16.mxu0 0
      %7826 = vmatpush1.bf16.xpose.msra.mxu0 0
      %7827 = vmatprep.subr.bf16.mxu0 0
      %7828 = vmatpush1.bf16.xpose.msra.mxu0 0
      %7829 = vmatprep.subr.bf16.mxu0 0
      %7830 = vmatpush1.bf16.xpose.msra.mxu0 0
      %7831 = vmatprep.subr.bf16.mxu0 0
      %7832 = vmatpush1.bf16.xpose.msra.mxu0 0
      %7833 = vmatprep.subr.bf16.mxu0 0
      %7834 = vmatpush1.bf16.xpose.msra.mxu0 0
      %7835 = vmatprep.subr.bf16.mxu0 0
      %7836 = vmatpush1.bf16.xpose.msra.mxu0 0
      %7837 = vmatprep.subr.bf16.mxu0 0
      %7838 = vmatpush1.bf16.xpose.msra.mxu0 0
      %7839 = vmatprep.mubr.bf16.mxu0 0
      %7840 = vmatmul.mubr.bf16.gmra.mrb[0].mxu0 %v7799
      %v7841 = vpop.f32.mrb[0].mxu0
      %v7842 = vadd.f32 0.0, %v7841
      %v7843 = vpop.f32.mrb[0].mxu0
      %v7844 = vpop.f32.mrb[0].mxu0
      %v7845 = vadd.f32 0.0, %v7844
      %v7846 = vpop.f32.mrb[0].mxu0
      %7847 = vmatprep.mubr.bf16.mxu0 0
      %7848 = vmatmul.mubr.bf16.gmra.mrb[0].mxu0 %v7802
      %v7849 = vpop.f32.mrb[0].mxu0
      %v7850 = vadd.f32 0.0, %v7849
      %v7851 = vpop.f32.mrb[0].mxu0
      %v7852 = vpop.f32.mrb[0].mxu0
      %v7853 = vadd.f32 0.0, %v7852
      %v7854 = vpop.f32.mrb[0].mxu0
      %7855 = vdwg.mxu0
      %v7857 = vsel %vm4551, %v7724, 0
      %v7860 = vsel %vm4551, %v7736, 0
      %v7863 = vsel %vm4551, %v4642, 0
      %7865 = vmatprep.subr.bf16.mxu0 0
      %7866 = vmatpush1.bf16.xpose.msra.mxu0 %v7863
      %7867 = vmatprep.subr.bf16.mxu0 0
      %7868 = vmatpush1.bf16.xpose.msra.mxu0 0
      %7869 = vmatprep.subr.bf16.mxu0 0
      %7870 = vmatpush1.bf16.xpose.msra.mxu0 0
      %7871 = vmatprep.subr.bf16.mxu0 0
      %7872 = vmatpush1.bf16.xpose.msra.mxu0 0
      %7873 = vmatprep.subr.bf16.mxu0 0
      %7874 = vmatpush1.bf16.xpose.msra.mxu0 0
      %7875 = vmatprep.subr.bf16.mxu0 0
      %7876 = vmatpush1.bf16.xpose.msra.mxu0 0
      %7877 = vmatprep.subr.bf16.mxu0 0
      %7878 = vmatpush1.bf16.xpose.msra.mxu0 0
      %7879 = vmatprep.subr.bf16.mxu0 0
      %7880 = vmatpush1.bf16.xpose.msra.mxu0 0
      %7881 = vmatprep.subr.bf16.mxu0 0
      %7882 = vmatpush1.bf16.xpose.msra.mxu0 0
      %7883 = vmatprep.subr.bf16.mxu0 0
      %7884 = vmatpush1.bf16.xpose.msra.mxu0 0
      %7885 = vmatprep.subr.bf16.mxu0 0
      %7886 = vmatpush1.bf16.xpose.msra.mxu0 0
      %7887 = vmatprep.subr.bf16.mxu0 0
      %7888 = vmatpush1.bf16.xpose.msra.mxu0 0
      %7889 = vmatprep.subr.bf16.mxu0 0
      %7890 = vmatpush1.bf16.xpose.msra.mxu0 0
      %7891 = vmatprep.subr.bf16.mxu0 0
      %7892 = vmatpush1.bf16.xpose.msra.mxu0 0
      %7893 = vmatprep.subr.bf16.mxu0 0
      %7894 = vmatpush1.bf16.xpose.msra.mxu0 0
      %7895 = vmatprep.subr.bf16.mxu0 0
      %7896 = vmatpush1.bf16.xpose.msra.mxu0 0
      %7897 = vmatprep.mubr.bf16.mxu0 0
      %7898 = vmatmul.mubr.bf16.gmra.mrb[0].mxu0 %v7857
      %v7899 = vpop.f32.mrb[0].mxu0
      %v7900 = vadd.f32 0.0, %v7899
      %v7901 = vpop.f32.mrb[0].mxu0
      %v7902 = vpop.f32.mrb[0].mxu0
      %v7903 = vadd.f32 0.0, %v7902
      %v7904 = vpop.f32.mrb[0].mxu0
      %7905 = vmatprep.mubr.bf16.mxu0 0
      %7906 = vmatmul.mubr.bf16.gmra.mrb[0].mxu0 %v7860
      %v7907 = vpop.f32.mrb[0].mxu0
      %v7908 = vadd.f32 0.0, %v7907
      %v7909 = vpop.f32.mrb[0].mxu0
      %v7910 = vpop.f32.mrb[0].mxu0
      %v7911 = vadd.f32 0.0, %v7910
      %v7912 = vpop.f32.mrb[0].mxu0
      %7913 = vdwg.mxu0
      %v7915 = vsel %vm4551, %v7727, 0
      %v7918 = vsel %vm4551, %v7739, 0
      %v7921 = vsel %vm4551, %v4643, 0
      %7923 = vmatprep.subr.bf16.mxu0 0
      %7924 = vmatpush1.bf16.xpose.msra.mxu0 %v7921
      %7925 = vmatprep.subr.bf16.mxu0 0
      %7926 = vmatpush1.bf16.xpose.msra.mxu0 0
      %7927 = vmatprep.subr.bf16.mxu0 0
      %7928 = vmatpush1.bf16.xpose.msra.mxu0 0
      %7929 = vmatprep.subr.bf16.mxu0 0
      %7930 = vmatpush1.bf16.xpose.msra.mxu0 0
      %7931 = vmatprep.subr.bf16.mxu0 0
      %7932 = vmatpush1.bf16.xpose.msra.mxu0 0
      %7933 = vmatprep.subr.bf16.mxu0 0
      %7934 = vmatpush1.bf16.xpose.msra.mxu0 0
      %7935 = vmatprep.subr.bf16.mxu0 0
      %7936 = vmatpush1.bf16.xpose.msra.mxu0 0
      %7937 = vmatprep.subr.bf16.mxu0 0
      %7938 = vmatpush1.bf16.xpose.msra.mxu0 0
      %7939 = vmatprep.subr.bf16.mxu0 0
      %7940 = vmatpush1.bf16.xpose.msra.mxu0 0
      %7941 = vmatprep.subr.bf16.mxu0 0
      %7942 = vmatpush1.bf16.xpose.msra.mxu0 0
      %7943 = vmatprep.subr.bf16.mxu0 0
      %7944 = vmatpush1.bf16.xpose.msra.mxu0 0
      %7945 = vmatprep.subr.bf16.mxu0 0
      %7946 = vmatpush1.bf16.xpose.msra.mxu0 0
      %7947 = vmatprep.subr.bf16.mxu0 0
      %7948 = vmatpush1.bf16.xpose.msra.mxu0 0
      %7949 = vmatprep.subr.bf16.mxu0 0
      %7950 = vmatpush1.bf16.xpose.msra.mxu0 0
      %7951 = vmatprep.subr.bf16.mxu0 0
      %7952 = vmatpush1.bf16.xpose.msra.mxu0 0
      %7953 = vmatprep.subr.bf16.mxu0 0
      %7954 = vmatpush1.bf16.xpose.msra.mxu0 0
      %7955 = vmatprep.mubr.bf16.mxu0 0
      %7956 = vmatmul.mubr.bf16.gmra.mrb[0].mxu0 %v7915
      %v7957 = vpop.f32.mrb[0].mxu0
      %v7958 = vadd.f32 0.0, %v7957
      %v7959 = vpop.f32.mrb[0].mxu0
      %v7960 = vpop.f32.mrb[0].mxu0
      %v7961 = vadd.f32 0.0, %v7960
      %v7962 = vpop.f32.mrb[0].mxu0
      %7963 = vmatprep.mubr.bf16.mxu0 0
      %7964 = vmatmul.mubr.bf16.gmra.mrb[0].mxu0 %v7918
      %v7965 = vpop.f32.mrb[0].mxu0
      %v7966 = vadd.f32 0.0, %v7965
      %v7967 = vpop.f32.mrb[0].mxu0
      %v7968 = vpop.f32.mrb[0].mxu0
      %v7969 = vadd.f32 0.0, %v7968
      %v7970 = vpop.f32.mrb[0].mxu0
      %7971 = vdwg.mxu0
      %7972 = vxpose.xlu0.b32.start [1/16] %v7784, 128
      %7973 = vxpose.xlu0.b32.cont [2/16] %v7787, 128
      %7974 = vxpose.xlu0.b32.cont [3/16] %v7792, 128
      %7975 = vxpose.xlu0.b32.cont [4/16] %v7795, 128
      %7976 = vxpose.xlu0.b32.cont [5/16] 0.0, 128
      %7977 = vxpose.xlu0.b32.cont [6/16] 0.0, 128
      %7978 = vxpose.xlu0.b32.cont [7/16] 0.0, 128
      %7979 = vxpose.xlu0.b32.cont [8/16] 0.0, 128
      %7980 = vxpose.xlu0.b32.cont [9/16] 0.0, 128
      %7981 = vxpose.xlu0.b32.cont [10/16] 0.0, 128
      %7982 = vxpose.xlu0.b32.cont [11/16] 0.0, 128
      %7983 = vxpose.xlu0.b32.cont [12/16] 0.0, 128
      %7984 = vxpose.xlu0.b32.cont [13/16] 0.0, 128
      %7985 = vxpose.xlu0.b32.cont [14/16] 0.0, 128
      %7986 = vxpose.xlu0.b32.cont [15/16] 0.0, 128
      %7987 = vxpose.xlu0.b32.end [16/16] 0.0, 128
      %v7988 = vpop.trf.xlu0
      %v7989 = vpop.trf.xlu0
      %v7990 = vpop.trf.xlu0
      %v7991 = vpop.trf.xlu0
      %v7992 = vpop.trf.xlu0
      %v7993 = vpop.trf.xlu0
      %v7994 = vpop.trf.xlu0
      %v7995 = vpop.trf.xlu0
      %v7996 = vpop.trf.xlu0
      %v7997 = vpop.trf.xlu0
      %v7998 = vpop.trf.xlu0
      %v7999 = vpop.trf.xlu0
      %v8000 = vpop.trf.xlu0
      %v8001 = vpop.trf.xlu0
      %v8002 = vpop.trf.xlu0
      %v8003 = vpop.trf.xlu0
      %8004 = vxpose.xlu0.b32.start [1/16] %v7842, 128
      %8005 = vxpose.xlu0.b32.cont [2/16] %v7845, 128
      %8006 = vxpose.xlu0.b32.cont [3/16] %v7850, 128
      %8007 = vxpose.xlu0.b32.cont [4/16] %v7853, 128
      %8008 = vxpose.xlu0.b32.cont [5/16] 0.0, 128
      %8009 = vxpose.xlu0.b32.cont [6/16] 0.0, 128
      %8010 = vxpose.xlu0.b32.cont [7/16] 0.0, 128
      %8011 = vxpose.xlu0.b32.cont [8/16] 0.0, 128
      %8012 = vxpose.xlu0.b32.cont [9/16] 0.0, 128
      %8013 = vxpose.xlu0.b32.cont [10/16] 0.0, 128
      %8014 = vxpose.xlu0.b32.cont [11/16] 0.0, 128
      %8015 = vxpose.xlu0.b32.cont [12/16] 0.0, 128
      %8016 = vxpose.xlu0.b32.cont [13/16] 0.0, 128
      %8017 = vxpose.xlu0.b32.cont [14/16] 0.0, 128
      %8018 = vxpose.xlu0.b32.cont [15/16] 0.0, 128
      %8019 = vxpose.xlu0.b32.end [16/16] 0.0, 128
      %v8020 = vpop.trf.xlu0
      %v8021 = vpop.trf.xlu0
      %v8022 = vpop.trf.xlu0
      %v8023 = vpop.trf.xlu0
      %v8024 = vpop.trf.xlu0
      %v8025 = vpop.trf.xlu0
      %v8026 = vpop.trf.xlu0
      %v8027 = vpop.trf.xlu0
      %v8028 = vpop.trf.xlu0
      %v8029 = vpop.trf.xlu0
      %v8030 = vpop.trf.xlu0
      %v8031 = vpop.trf.xlu0
      %v8032 = vpop.trf.xlu0
      %v8033 = vpop.trf.xlu0
      %v8034 = vpop.trf.xlu0
      %v8035 = vpop.trf.xlu0
      %8036 = vxpose.xlu0.b32.start [1/16] %v7900, 128
      %8037 = vxpose.xlu0.b32.cont [2/16] %v7903, 128
      %8038 = vxpose.xlu0.b32.cont [3/16] %v7908, 128
      %8039 = vxpose.xlu0.b32.cont [4/16] %v7911, 128
      %8040 = vxpose.xlu0.b32.cont [5/16] 0.0, 128
      %8041 = vxpose.xlu0.b32.cont [6/16] 0.0, 128
      %8042 = vxpose.xlu0.b32.cont [7/16] 0.0, 128
      %8043 = vxpose.xlu0.b32.cont [8/16] 0.0, 128
      %8044 = vxpose.xlu0.b32.cont [9/16] 0.0, 128
      %8045 = vxpose.xlu0.b32.cont [10/16] 0.0, 128
      %8046 = vxpose.xlu0.b32.cont [11/16] 0.0, 128
      %8047 = vxpose.xlu0.b32.cont [12/16] 0.0, 128
      %8048 = vxpose.xlu0.b32.cont [13/16] 0.0, 128
      %8049 = vxpose.xlu0.b32.cont [14/16] 0.0, 128
      %8050 = vxpose.xlu0.b32.cont [15/16] 0.0, 128
      %8051 = vxpose.xlu0.b32.end [16/16] 0.0, 128
      %v8052 = vpop.trf.xlu0
      %v8053 = vpop.trf.xlu0
      %v8054 = vpop.trf.xlu0
      %v8055 = vpop.trf.xlu0
      %v8056 = vpop.trf.xlu0
      %v8057 = vpop.trf.xlu0
      %v8058 = vpop.trf.xlu0
      %v8059 = vpop.trf.xlu0
      %v8060 = vpop.trf.xlu0
      %v8061 = vpop.trf.xlu0
      %v8062 = vpop.trf.xlu0
      %v8063 = vpop.trf.xlu0
      %v8064 = vpop.trf.xlu0
      %v8065 = vpop.trf.xlu0
      %v8066 = vpop.trf.xlu0
      %v8067 = vpop.trf.xlu0
      %8068 = vxpose.xlu0.b32.start [1/16] %v7958, 128
      %8069 = vxpose.xlu0.b32.cont [2/16] %v7961, 128
      %8070 = vxpose.xlu0.b32.cont [3/16] %v7966, 128
      %8071 = vxpose.xlu0.b32.cont [4/16] %v7969, 128
      %8072 = vxpose.xlu0.b32.cont [5/16] 0.0, 128
      %8073 = vxpose.xlu0.b32.cont [6/16] 0.0, 128
      %8074 = vxpose.xlu0.b32.cont [7/16] 0.0, 128
      %8075 = vxpose.xlu0.b32.cont [8/16] 0.0, 128
      %8076 = vxpose.xlu0.b32.cont [9/16] 0.0, 128
      %8077 = vxpose.xlu0.b32.cont [10/16] 0.0, 128
      %8078 = vxpose.xlu0.b32.cont [11/16] 0.0, 128
      %8079 = vxpose.xlu0.b32.cont [12/16] 0.0, 128
      %8080 = vxpose.xlu0.b32.cont [13/16] 0.0, 128
      %8081 = vxpose.xlu0.b32.cont [14/16] 0.0, 128
      %8082 = vxpose.xlu0.b32.cont [15/16] 0.0, 128
      %8083 = vxpose.xlu0.b32.end [16/16] 0.0, 128
      %v8084 = vpop.trf.xlu0
      %v8085 = vpop.trf.xlu0
      %v8086 = vpop.trf.xlu0
      %v8087 = vpop.trf.xlu0
      %v8088 = vpop.trf.xlu0
      %v8089 = vpop.trf.xlu0
      %v8090 = vpop.trf.xlu0
      %v8091 = vpop.trf.xlu0
      %v8092 = vpop.trf.xlu0
      %v8093 = vpop.trf.xlu0
      %v8094 = vpop.trf.xlu0
      %v8095 = vpop.trf.xlu0
      %v8096 = vpop.trf.xlu0
      %v8097 = vpop.trf.xlu0
      %v8098 = vpop.trf.xlu0
      %v8099 = vpop.trf.xlu0
      %v8100 = vcombine.low %v7988, %v8052
      %v8101 = vcombine.high %v7988, %v8052
      %v8103 = vunpack.c.l.s4 1983009808
      %v8104 = vunpack.c.0.s8 %v8103
      %v8105 = vlaneseq
      %v8106 = vshrl.u32 %v8105, 7
      %v8107 = vsub.s32 %v8104, %v8106
      %v8108 = vrot.slane %v8100, %v8107
      %v8110 = vunpack.c.l.s4 1983009808
      %v8111 = vunpack.c.0.s8 %v8110
      %v8112 = vlaneseq
      %v8113 = vshrl.u32 %v8112, 7
      %v8114 = vsub.s32 %v8111, %v8113
      %v8115 = vrot.slane %v8101, %v8114
      %v8116 = vcombine.low %v8020, %v8084
      %v8117 = vcombine.high %v8020, %v8084
      %v8119 = vunpack.c.l.s4 1983009808
      %v8120 = vunpack.c.0.s8 %v8119
      %v8121 = vlaneseq
      %v8122 = vshrl.u32 %v8121, 7
      %v8123 = vsub.s32 %v8120, %v8122
      %v8124 = vrot.slane %v8116, %v8123
      %v8126 = vunpack.c.l.s4 1983009808
      %v8127 = vunpack.c.0.s8 %v8126
      %v8128 = vlaneseq
      %v8129 = vshrl.u32 %v8128, 7
      %v8130 = vsub.s32 %v8127, %v8129
      %v8131 = vrot.slane %v8117, %v8130
      %v8132 = vcombine.low %v8108, %v8124
      %v8133 = vcombine.high %v8108, %v8124
      %v8135 = vunpack.c.l.s4 1934713408
      %v8136 = vunpack.c.0.s8 %v8135
      %v8137 = vlaneseq
      %v8138 = vshrl.u32 %v8137, 7
      %v8139 = vsub.s32 %v8136, %v8138
      %v8140 = vrot.slane %v8132, %v8139
      %v8142 = vunpack.c.l.s4 1934713408
      %v8143 = vunpack.c.0.s8 %v8142
      %v8144 = vlaneseq
      %v8145 = vshrl.u32 %v8144, 7
      %v8146 = vsub.s32 %v8143, %v8145
      %v8147 = vrot.slane %v8133, %v8146
      %v8148 = vcombine.low %v8115, %v8131
      %v8149 = vcombine.high %v8115, %v8131
      %v8151 = vunpack.c.l.s4 1934713408
      %v8152 = vunpack.c.0.s8 %v8151
      %v8153 = vlaneseq
      %v8154 = vshrl.u32 %v8153, 7
      %v8155 = vsub.s32 %v8152, %v8154
      %v8156 = vrot.slane %v8148, %v8155
      %v8158 = vunpack.c.l.s4 1934713408
      %v8159 = vunpack.c.0.s8 %v8158
      %v8160 = vlaneseq
      %v8161 = vshrl.u32 %v8160, 7
      %v8162 = vsub.s32 %v8159, %v8161
      %v8163 = vrot.slane %v8149, %v8162
      %v8164 = vcombine.high %v8140, 0.0
      %v8165 = vcombine.high %v8147, 0.0
      %v8166 = vcombine.high %v8156, 0.0
      %v8167 = vcombine.high %v8163, 0.0
      %v8168 = vcombine.low %v7989, %v8053
      %v8169 = vcombine.high %v7989, %v8053
      %v8171 = vunpack.c.l.s4 1983009808
      %v8172 = vunpack.c.0.s8 %v8171
      %v8173 = vlaneseq
      %v8174 = vshrl.u32 %v8173, 7
      %v8175 = vsub.s32 %v8172, %v8174
      %v8176 = vrot.slane %v8168, %v8175
      %v8178 = vunpack.c.l.s4 1983009808
      %v8179 = vunpack.c.0.s8 %v8178
      %v8180 = vlaneseq
      %v8181 = vshrl.u32 %v8180, 7
      %v8182 = vsub.s32 %v8179, %v8181
      %v8183 = vrot.slane %v8169, %v8182
      %v8184 = vcombine.low %v8021, %v8085
      %v8185 = vcombine.high %v8021, %v8085
      %v8187 = vunpack.c.l.s4 1983009808
      %v8188 = vunpack.c.0.s8 %v8187
      %v8189 = vlaneseq
      %v8190 = vshrl.u32 %v8189, 7
      %v8191 = vsub.s32 %v8188, %v8190
      %v8192 = vrot.slane %v8184, %v8191
      %v8194 = vunpack.c.l.s4 1983009808
      %v8195 = vunpack.c.0.s8 %v8194
      %v8196 = vlaneseq
      %v8197 = vshrl.u32 %v8196, 7
      %v8198 = vsub.s32 %v8195, %v8197
      %v8199 = vrot.slane %v8185, %v8198
      %v8200 = vcombine.low %v8176, %v8192
      %v8201 = vcombine.high %v8176, %v8192
      %v8203 = vunpack.c.l.s4 1934713408
      %v8204 = vunpack.c.0.s8 %v8203
      %v8205 = vlaneseq
      %v8206 = vshrl.u32 %v8205, 7
      %v8207 = vsub.s32 %v8204, %v8206
      %v8208 = vrot.slane %v8200, %v8207
      %v8210 = vunpack.c.l.s4 1934713408
      %v8211 = vunpack.c.0.s8 %v8210
      %v8212 = vlaneseq
      %v8213 = vshrl.u32 %v8212, 7
      %v8214 = vsub.s32 %v8211, %v8213
      %v8215 = vrot.slane %v8201, %v8214
      %v8216 = vcombine.low %v8183, %v8199
      %v8217 = vcombine.high %v8183, %v8199
      %v8219 = vunpack.c.l.s4 1934713408
      %v8220 = vunpack.c.0.s8 %v8219
      %v8221 = vlaneseq
      %v8222 = vshrl.u32 %v8221, 7
      %v8223 = vsub.s32 %v8220, %v8222
      %v8224 = vrot.slane %v8216, %v8223
      %v8226 = vunpack.c.l.s4 1934713408
      %v8227 = vunpack.c.0.s8 %v8226
      %v8228 = vlaneseq
      %v8229 = vshrl.u32 %v8228, 7
      %v8230 = vsub.s32 %v8227, %v8229
      %v8231 = vrot.slane %v8217, %v8230
      %v8232 = vcombine.high %v8208, 0.0
      %v8233 = vcombine.high %v8215, 0.0
      %v8234 = vcombine.high %v8224, 0.0
      %v8235 = vcombine.high %v8231, 0.0
      %v8236 = vcombine.low %v8140, %v8147
      %v8238 = vunpack.c.l.s4 1983009808
      %v8239 = vunpack.c.0.s8 %v8238
      %v8240 = vlaneseq
      %v8241 = vshrl.u32 %v8240, 7
      %v8242 = vsub.s32 %v8239, %v8241
      %v8243 = vrot.slane %v8236, %v8242
      %v8244 = vcombine.low %v8164, %v8165
      %v8246 = vunpack.c.l.s4 1983009808
      %v8247 = vunpack.c.0.s8 %v8246
      %v8248 = vlaneseq
      %v8249 = vshrl.u32 %v8248, 7
      %v8250 = vsub.s32 %v8247, %v8249
      %v8251 = vrot.slane %v8244, %v8250
      %v8252 = vcombine.low %v8156, %v8163
      %v8254 = vunpack.c.l.s4 1983009808
      %v8255 = vunpack.c.0.s8 %v8254
      %v8256 = vlaneseq
      %v8257 = vshrl.u32 %v8256, 7
      %v8258 = vsub.s32 %v8255, %v8257
      %v8259 = vrot.slane %v8252, %v8258
      %v8260 = vcombine.low %v8166, %v8167
      %v8262 = vunpack.c.l.s4 1983009808
      %v8263 = vunpack.c.0.s8 %v8262
      %v8264 = vlaneseq
      %v8265 = vshrl.u32 %v8264, 7
      %v8266 = vsub.s32 %v8263, %v8265
      %v8267 = vrot.slane %v8260, %v8266
      %v8268 = vcombine.low %v8243, %v8251
      %v8269 = vcombine.high %v8243, %v8251
      %v8271 = vunpack.c.l.s4 1934713408
      %v8272 = vunpack.c.0.s8 %v8271
      %v8273 = vlaneseq
      %v8274 = vshrl.u32 %v8273, 7
      %v8275 = vsub.s32 %v8272, %v8274
      %v8276 = vrot.slane %v8268, %v8275
      %v8278 = vunpack.c.l.s4 1934713408
      %v8279 = vunpack.c.0.s8 %v8278
      %v8280 = vlaneseq
      %v8281 = vshrl.u32 %v8280, 7
      %v8282 = vsub.s32 %v8279, %v8281
      %v8283 = vrot.slane %v8269, %v8282
      %v8284 = vcombine.low %v8259, %v8267
      %v8285 = vcombine.high %v8259, %v8267
      %v8287 = vunpack.c.l.s4 1934713408
      %v8288 = vunpack.c.0.s8 %v8287
      %v8289 = vlaneseq
      %v8290 = vshrl.u32 %v8289, 7
      %v8291 = vsub.s32 %v8288, %v8290
      %v8292 = vrot.slane %v8284, %v8291
      %v8294 = vunpack.c.l.s4 1934713408
      %v8295 = vunpack.c.0.s8 %v8294
      %v8296 = vlaneseq
      %v8297 = vshrl.u32 %v8296, 7
      %v8298 = vsub.s32 %v8295, %v8297
      %v8299 = vrot.slane %v8285, %v8298
      %v8300 = vcombine.low %v8276, %v8292
      %v8301 = vcombine.high %v8276, %v8292
      %v8302 = vcombine.low %v8283, %v8299
      %v8303 = vcombine.high %v8283, %v8299
      %v8304 = vcombine.low %v8208, %v8215
      %v8306 = vunpack.c.l.s4 1983009808
      %v8307 = vunpack.c.0.s8 %v8306
      %v8308 = vlaneseq
      %v8309 = vshrl.u32 %v8308, 7
      %v8310 = vsub.s32 %v8307, %v8309
      %v8311 = vrot.slane %v8304, %v8310
      %v8312 = vcombine.low %v8232, %v8233
      %v8314 = vunpack.c.l.s4 1983009808
      %v8315 = vunpack.c.0.s8 %v8314
      %v8316 = vlaneseq
      %v8317 = vshrl.u32 %v8316, 7
      %v8318 = vsub.s32 %v8315, %v8317
      %v8319 = vrot.slane %v8312, %v8318
      %v8320 = vcombine.low %v8224, %v8231
      %v8322 = vunpack.c.l.s4 1983009808
      %v8323 = vunpack.c.0.s8 %v8322
      %v8324 = vlaneseq
      %v8325 = vshrl.u32 %v8324, 7
      %v8326 = vsub.s32 %v8323, %v8325
      %v8327 = vrot.slane %v8320, %v8326
      %v8328 = vcombine.low %v8234, %v8235
      %v8330 = vunpack.c.l.s4 1983009808
      %v8331 = vunpack.c.0.s8 %v8330
      %v8332 = vlaneseq
      %v8333 = vshrl.u32 %v8332, 7
      %v8334 = vsub.s32 %v8331, %v8333
      %v8335 = vrot.slane %v8328, %v8334
      %v8336 = vcombine.low %v8311, %v8319
      %v8337 = vcombine.high %v8311, %v8319
      %v8339 = vunpack.c.l.s4 1934713408
      %v8340 = vunpack.c.0.s8 %v8339
      %v8341 = vlaneseq
      %v8342 = vshrl.u32 %v8341, 7
      %v8343 = vsub.s32 %v8340, %v8342
      %v8344 = vrot.slane %v8336, %v8343
      %v8346 = vunpack.c.l.s4 1934713408
      %v8347 = vunpack.c.0.s8 %v8346
      %v8348 = vlaneseq
      %v8349 = vshrl.u32 %v8348, 7
      %v8350 = vsub.s32 %v8347, %v8349
      %v8351 = vrot.slane %v8337, %v8350
      %v8352 = vcombine.low %v8327, %v8335
      %v8353 = vcombine.high %v8327, %v8335
      %v8355 = vunpack.c.l.s4 1934713408
      %v8356 = vunpack.c.0.s8 %v8355
      %v8357 = vlaneseq
      %v8358 = vshrl.u32 %v8357, 7
      %v8359 = vsub.s32 %v8356, %v8358
      %v8360 = vrot.slane %v8352, %v8359
      %v8362 = vunpack.c.l.s4 1934713408
      %v8363 = vunpack.c.0.s8 %v8362
      %v8364 = vlaneseq
      %v8365 = vshrl.u32 %v8364, 7
      %v8366 = vsub.s32 %v8363, %v8365
      %v8367 = vrot.slane %v8353, %v8366
      %v8368 = vcombine.low %v8344, %v8360
      %v8369 = vcombine.high %v8344, %v8360
      %v8370 = vcombine.low %v8351, %v8367
      %v8371 = vcombine.high %v8351, %v8367
      %8374 = vrot.lane.b32.xlu0 %v8301, 32
      %v8375 = vpop.permute.xlu0 %8374
      %8376 = vrot.lane.b32.xlu0 %v8369, 32
      %v8377 = vpop.permute.xlu0 %8376
      %8382 = vrot.lane.b32.xlu0 %v8302, 64
      %v8383 = vpop.permute.xlu0 %8382
      %8384 = vrot.lane.b32.xlu0 %v8370, 64
      %v8385 = vpop.permute.xlu0 %8384
      %8390 = vrot.lane.b32.xlu0 %v8303, 96
      %v8391 = vpop.permute.xlu0 %8390
      %8392 = vrot.lane.b32.xlu0 %v8371, 96
      %v8393 = vpop.permute.xlu0 %8392
      %v8396 = vsel %vm4345, %v8300, %v8375
      %v8397 = vsel %vm4345, %v8368, %v8377
      %vm8398 = vcmask 523264
      %v8399 = vsel %vm8398, %v8396, %v8383
      %v8400 = vsel %vm8398, %v8397, %v8385
      %vm8401 = vcmask 785408
      %v8402 = vsel %vm8401, %v8399, %v8391
      %v8403 = vsel %vm8401, %v8400, %v8393
      %8404 = vst [vmem:[%s163] sm:$0xff] %v8402
      %8405 = vst [vmem:[%s163 + $0x8] sm:$0xff] %v8403
      %p8406 = scmp.lt.s32.totalorder %s13, 1
      %s8407 = scalar_select %p8406, %s13, 1
      %s8408 = smul.addr %s8407, 2
      %s8409 = smul.addr %s8408, 8
      %s8410 = scalar_lea.vmem %s2, %s8409
      // Predicated region
      $region29: #{autoregressive_forward.13} parent=27 // pred_check
        %p8411 = pneg %p83
      $region30: #{autoregressive_forward.13} parent=27 // pred_check_branch
        %8413 = sbr.rel (%p8411) target = $region32
      $region31: #{autoregressive_forward.13} parent=27 // pred_region
        _
      $region32: #{autoregressive_forward.13} parent=27 // pred_fallthru
        _
    $region28: #{autoregressive_forward.13} parent=5 // pred_fallthru
      _
    %p8414 = scmp.le.s32.totalorder 2, %s8
    // Predicated region
    $region33: #{autoregressive_forward.13} parent=5 // pred_check
      %p8415 = pneg %p8414
    $region34: #{autoregressive_forward.13} parent=5 // pred_check_branch
      %8417 = sbr.rel (%p8415) target = $region36
    $region35: #{autoregressive_forward.13} parent=5 // pred_region
      %s8418 = ssub.s32 %s8, 2
      // Predicated region
      $region37: #{autoregressive_forward.13} parent=35 // pred_check
        %p8419 = pneg %p89
      $region38: #{autoregressive_forward.13} parent=35 // pred_check_branch
        %8421 = sbr.rel (%p8419) target = $region40
      $region39: #{autoregressive_forward.13} parent=35 // pred_region
        %p8422 = scmp.lt.s32.totalorder %s14, 1
        %s8423 = scalar_select %p8422, %s14, 1
        %s8424 = smul.addr %s8423, 2
        %s8425 = smul.addr %s8424, 8
        %s8426 = scalar_lea.vmem %s2, %s8425
      $region40: #{autoregressive_forward.13} parent=35 // pred_fallthru
        _
    $region36: #{autoregressive_forward.13} parent=5 // pred_fallthru
      _
  $region6: #{autoregressive_forward.13} parent=0 // loop_footer
    %s12 = sadd.s32 1, %s8
  $region7: #{autoregressive_forward.13} parent=0 // loop_footer_branch
    %7 = sbr.rel target = $region3
  $region8: #{autoregressive_forward.13} parent=0 // loop_exit
    _

</llo_original>
